<compile_context>
chip_gen: v5e
topology: v5e:2x2
jax: 0.10.0
libtpu: 0.0.40
codegen_flags: <defaults>
</compile_context>

<pallas_src>
import functools
import math

import jax
import jax.numpy as jnp
from jax.experimental import pallas as pl
from jax.experimental.pallas import tpu as pltpu

_LN_EPS = 1e-5


def _vmem_limit_bytes():
    """Generation-aware VMEM budget (v5e/v6e: 128 MiB physical, v7x: 64 MiB)."""
    try:
        phys = int(pltpu.get_tpu_info().vmem_capacity_bytes)
    except Exception:
        phys = 64 << 20  # conservative fallback (safe on every generation)
    return int(min(phys * 3 // 4, 100 << 20))


# ----------------------------- in-kernel helpers -----------------------------

def _layer_norm(x, gamma, beta, eps=_LN_EPS):
    # PyTorch nn.LayerNorm over the last dim (biased variance, eps inside sqrt).
    mu = jnp.mean(x, axis=-1, keepdims=True)
    xc = x - mu
    var = jnp.mean(xc * xc, axis=-1, keepdims=True)
    return xc * jax.lax.rsqrt(var + eps) * gamma + beta


def _ffn(x, w1, b1, w2, b2):
    # bf16 matmul operands, f32 accumulation, f32 elementwise (ReLU / bias).
    h = jnp.maximum(
        jnp.dot(x.astype(w1.dtype), w1, preferred_element_type=jnp.float32) + b1, 0.0)
    return jnp.dot(h.astype(w2.dtype), w2, preferred_element_type=jnp.float32) + b2


# ----------------------------- Pallas kernels --------------------------------

def _freq_branch_kernel(*refs, n_layers, n_heads, head_dim, tm, n_bin):
    """All freq DecoderLayer(Zero)s for a tile of TM frames (query length 1)."""
    H = n_heads * head_dim
    S = n_bin
    it = iter(refs)
    spec_ref = next(it)                       # (TM, S, H) f32
    pos_ref = next(it)                        # (1, H)     f32
    layer_refs = []
    for l in range(n_layers):
        n_w = 12 if l == 0 else 16
        layer_refs.append([next(it) for _ in range(n_w)])
    midi_out = next(it)                       # (TM, H)          f32
    attn_out = next(it)                       # (TM, n_heads, S) f32 (last layer)

    # spec read from HBM once per tile; bf16 copy feeds every MXU matmul.
    spec2d_bf = spec_ref[...].astype(jnp.bfloat16).reshape(tm * S, H)
    tgt = jnp.broadcast_to(pos_ref[...], (tm, H)).astype(jnp.float32)
    inv_scale = 1.0 / math.sqrt(head_dim)

    for l in range(n_layers):
        # lazy per-layer weight loads (keeps live ranges short across layers)
        w = [r[...] for r in layer_refs[l]]
        if l > 0:
            sv_w, sv_b, so_w, so_b = w[:4]
            w = w[4:]
        (cq_w, cq_b, ckv_w, ckv_b, co_w, co_b,
         ln_g, ln_b, f1_w, f1_b, f2_w, f2_b) = w

        if l > 0:
            # length-1 self-attention: softmax over one key == 1 exactly, so the
            # block reduces to fc_o(fc_v(tgt)).
            sv = jnp.dot(tgt.astype(jnp.bfloat16), sv_w,
                         preferred_element_type=jnp.float32) + sv_b
            sa = jnp.dot(sv.astype(jnp.bfloat16), so_w,
                         preferred_element_type=jnp.float32) + so_b
            tgt = _layer_norm(tgt + sa, ln_g, ln_b)

        # ---- cross-attention (Lq = 1 per frame, keys = n_bin spectrogram rows)
        q = (jnp.dot(tgt.astype(jnp.bfloat16), cq_w,
                     preferred_element_type=jnp.float32) + cq_b) * inv_scale
        kv = (jnp.dot(spec2d_bf, ckv_w, preferred_element_type=jnp.float32)
              + ckv_b).reshape(tm, S, 2 * H)                  # K | V packed

        ca = co_b                                             # (1, H) broadcast
        attn_parts = []
        for h in range(n_heads):
            lo = h * head_dim
            qh = q[:, lo:lo + head_dim]                       # (TM, hd)
            kh = kv[:, :, lo:lo + head_dim]                   # (TM, S, hd)
            vh = kv[:, :, H + lo:H + lo + head_dim]           # (TM, S, hd)
            # lane-dense per-head energy / softmax: S is the lane axis.
            e = jnp.sum(qh[:, None, :] * kh, axis=-1)         # (TM, S)
            m = jnp.max(e, axis=-1, keepdims=True)
            p = jnp.exp(e - m)
            a = p * pl.reciprocal(jnp.sum(p, axis=-1, keepdims=True), approx=True)
            ctx = jnp.sum(a[:, :, None] * vh, axis=1)         # (TM, hd)
            # accumulate through fc_o row-block (== concat(heads) @ co_w)
            ca = ca + jnp.dot(ctx.astype(jnp.bfloat16), co_w[lo:lo + head_dim, :],
                              preferred_element_type=jnp.float32)
            if l == n_layers - 1:
                attn_parts.append(a[:, None, :])

        if l == n_layers - 1:
            attn_out[...] = jnp.concatenate(attn_parts, axis=1).astype(attn_out.dtype)

        tgt = _layer_norm(tgt + ca, ln_g, ln_b)
        tgt = _layer_norm(tgt + _ffn(tgt, f1_w, f1_b, f2_w, f2_b), ln_g, ln_b)

    midi_out[...] = tgt.astype(midi_out.dtype)


def _time_branch_kernel(*refs, n_layers, n_heads, head_dim, scale):
    """pos-embedding + all time EncoderLayers for one batch item."""
    H = n_heads * head_dim
    it = iter(refs)
    x_ref = next(it)                          # (T, H) f32
    pos_ref = next(it)                        # (T, H) f32
    layer_refs = [[next(it) for _ in range(10)] for _ in range(n_layers)]
    x_out = next(it)                          # (T, H) f32

    x = x_ref[...].astype(jnp.float32) * scale + pos_ref[...]
    inv_scale = 1.0 / math.sqrt(head_dim)

    # TODO(synk): flash-style K-tiling of the (T, T) scores before scaling
    # n_frame past ~512 (tighter threshold on v7x's 64 MiB VMEM).
    for l in range(n_layers):
        (wqkv, bqkv, wo, bo, ln_g, ln_b,
         f1_w, f1_b, f2_w, f2_b) = [r[...] for r in layer_refs[l]]

        qkv = jnp.dot(x.astype(jnp.bfloat16), wqkv,
                      preferred_element_type=jnp.float32) + bqkv       # (T, 3H)
        q = (qkv[:, :H] * inv_scale).astype(jnp.bfloat16)
        k = qkv[:, H:2 * H].astype(jnp.bfloat16)
        v = qkv[:, 2 * H:].astype(jnp.bfloat16)

        sa = bo                                                        # (1, H)
        for h in range(n_heads):
            lo = h * head_dim
            qh = q[:, lo:lo + head_dim]
            kh = k[:, lo:lo + head_dim]
            vh = v[:, lo:lo + head_dim]
            e = jax.lax.dot_general(qh, kh, (((1,), (1,)), ((), ())),
                                    preferred_element_type=jnp.float32)  # (T, T)
            m = jnp.max(e, axis=-1, keepdims=True)
            p = jnp.exp(e - m)
            a = p * pl.reciprocal(jnp.sum(p, axis=-1, keepdims=True), approx=True)
            ctx = jnp.dot(a.astype(jnp.bfloat16), vh,
                          preferred_element_type=jnp.float32)            # (T, hd)
            # accumulate through fc_o row-block (== concat(heads) @ wo)
            sa = sa + jnp.dot(ctx.astype(jnp.bfloat16), wo[lo:lo + head_dim, :],
                              preferred_element_type=jnp.float32)

        x = _layer_norm(x + sa, ln_g, ln_b)
        x = _layer_norm(x + _ffn(x, f1_w, f1_b, f2_w, f2_b), ln_g, ln_b)

    x_out[...] = x.astype(x_out.dtype)


# ----------------------------- pallas_call wrappers --------------------------

def _const_spec(arr):
    nd = arr.ndim
    return pl.BlockSpec(arr.shape, lambda *g, _nd=nd: (0,) * _nd)


def _pick_tm(n_rows, s, h, pf, weight_bytes, vmem_limit):
    """Frame-tile size from the real VMEM budget (spec dbuf + bf16 copy + packed
    K/V + per-head temporaries + resident double-buffered weights + headroom)."""
    headroom = 6 << 20
    per_row = 7 * s * h * 4 + 6 * pf + 16 * h + 8 * s
    budget = vmem_limit - 2 * weight_bytes - headroom
    tm_cap = max(8, budget // per_row)
    cands = [t for t in (512, 256, 128, 64, 32, 16, 8)
             if t <= tm_cap and t <= max(n_rows, 8)] or [8]
    t0 = cands[0]
    nt = lambda t: pl.cdiv(n_rows, t)
    # prefer an even grid of >= 2 tiles (v7x has 2 TensorCores) as long as it
    # costs at most a factor 2 in tile size; otherwise take the largest tile.
    for t in cands:
        if t * 2 >= t0 and nt(t) >= 2 and nt(t) % 2 == 0:
            return t
    for t in cands:
        if t * 2 >= t0 and nt(t) >= 2:
            return t
    return t0


def _freq_cost(n_rows, s, h, pf, n_layers, n_heads):
    per = 0
    for l in range(n_layers):
        per += 2 * h * h                  # q projection
        per += 2 * s * h * (2 * h)        # packed k/v projection
        per += 4 * s * h                  # per-head energies + context (VPU)
        per += 2 * h * h                  # cross-attn output projection
        per += 4 * h * pf                 # FFN
        if l > 0:
            per += 4 * h * h              # length-1 self-attention (V + O)
    return pl.CostEstimate(
        flops=int(n_rows * per),
        transcendentals=int(n_rows * n_layers * n_heads * s),
        bytes_accessed=int(n_rows * (s * h + h + n_heads * s) * 4))


def _time_cost(b, t, h, pf, n_layers, n_heads):
    per_tok = n_layers * (2 * h * 3 * h + 2 * h * h + 4 * h * pf + 4 * t * h)
    return pl.CostEstimate(
        flops=int(b * t * per_tok),
        transcendentals=int(b * n_layers * n_heads * t * t),
        bytes_accessed=int(b * t * h * 4 * 2))


def freq_branch(spec_f, pos_vec, layer_weights, *, n_heads, tm, vmem_limit, pf_dim):
    # spec_f: (N, S, H) with N = padded B * n_frame (multiple of tm)
    N, S, H = spec_f.shape
    head_dim = H // n_heads
    n_layers = len(layer_weights)
    flat_w = [w for lw in layer_weights for w in lw]

    in_specs = ([pl.BlockSpec((tm, S, H), lambda i: (i, 0, 0)), _const_spec(pos_vec)]
                + [_const_spec(w) for w in flat_w])
    out_specs = [pl.BlockSpec((tm, H), lambda i: (i, 0)),
                 pl.BlockSpec((tm, n_heads, S), lambda i: (i, 0, 0))]
    out_shape = [jax.ShapeDtypeStruct((N, H), jnp.float32),
                 jax.ShapeDtypeStruct((N, n_heads, S), jnp.float32)]

    kernel = functools.partial(_freq_branch_kernel, n_layers=n_layers,
                               n_heads=n_heads, head_dim=head_dim, tm=tm, n_bin=S)
    return pl.pallas_call(
        kernel,
        out_shape=out_shape,
        grid=(N // tm,),
        in_specs=in_specs,
        out_specs=out_specs,
        compiler_params=pltpu.CompilerParams(
            dimension_semantics=("parallel",),
            vmem_limit_bytes=vmem_limit),
        cost_estimate=_freq_cost(N, S, H, pf_dim, n_layers, n_heads),
    )(spec_f, pos_vec, *flat_w)


def time_branch(midi_time, pos_emb, layer_weights, *, n_heads, vmem_limit, pf_dim):
    # midi_time: (B, T, H)
    B, T, H = midi_time.shape
    head_dim = H // n_heads
    n_layers = len(layer_weights)
    flat_w = [w for lw in layer_weights for w in lw]

    # TODO(synk): when B is 1 or odd on v7x, add a second parallel grid axis so
    # both TensorCores stay busy (B=2 here already shards evenly).
    in_specs = ([pl.BlockSpec((None, T, H), lambda b: (b, 0, 0)), _const_spec(pos_emb)]
                + [_const_spec(w) for w in flat_w])
    out_specs = pl.BlockSpec((None, T, H), lambda b: (b, 0, 0))

    kernel = functools.partial(_time_branch_kernel, n_layers=n_layers,
                               n_heads=n_heads, head_dim=head_dim,
                               scale=float(math.sqrt(H)))
    return pl.pallas_call(
        kernel,
        out_shape=jax.ShapeDtypeStruct((B, T, H), jnp.float32),
        grid=(B,),
        in_specs=in_specs,
        out_specs=out_specs,
        compiler_params=pltpu.CompilerParams(
            dimension_semantics=("parallel",),
            vmem_limit_bytes=vmem_limit),
        cost_estimate=_time_cost(B, T, H, pf_dim, n_layers, n_heads),
    )(midi_time, pos_emb, *flat_w)


# ----------------------------- parameters ------------------------------------

def _init_linear(key, din, dout, wscale=0.05, bscale=0.01):
    kw, kb = jax.random.split(key)
    w = jax.random.normal(kw, (din, dout), jnp.float32) * wscale
    b = jax.random.normal(kb, (1, dout), jnp.float32) * bscale
    return w, b


def _init_mha(key, H):
    ks = jax.random.split(key, 4)
    wq, bq = _init_linear(ks[0], H, H)
    wk, bk = _init_linear(ks[1], H, H)
    wv, bv = _init_linear(ks[2], H, H)
    wo, bo = _init_linear(ks[3], H, H)
    return (wq, bq, wk, bk, wv, bv, wo, bo)


def _init_ffn(key, H, pf):
    k1, k2 = jax.random.split(key)
    w1, b1 = _init_linear(k1, H, pf)
    w2, b2 = _init_linear(k2, pf, H)
    return (w1, b1, w2, b2)


def init_params(key, *, n_frame, hid_dim, n_layers, pf_dim):
    H = hid_dim
    kit = iter(jax.random.split(key, 8 + 8 * n_layers * 2))
    ln = lambda: (jnp.ones((1, H), jnp.float32), jnp.zeros((1, H), jnp.float32))

    layers_freq = []
    # DecoderLayerZero: cross-attention only
    g, b = ln()
    layers_freq.append(dict(cross_attn=_init_mha(next(kit), H),
                            ln_g=g, ln_b=b, ffn=_init_ffn(next(kit), H, pf_dim)))
    # DecoderLayer x (n_layers - 1): self + cross attention
    for _ in range(n_layers - 1):
        g, b = ln()
        layers_freq.append(dict(self_attn=_init_mha(next(kit), H),
                                cross_attn=_init_mha(next(kit), H),
                                ln_g=g, ln_b=b,
                                ffn=_init_ffn(next(kit), H, pf_dim)))

    layers_time = []
    for _ in range(n_layers):
        g, b = ln()
        layers_time.append(dict(self_attn=_init_mha(next(kit), H),
                                ln_g=g, ln_b=b,
                                ffn=_init_ffn(next(kit), H, pf_dim)))

    # three Linear(H,1) heads per branch, packed column-wise into (H,3)
    hf_w, hf_b = _init_linear(next(kit), H, 3)
    ht_w, ht_b = _init_linear(next(kit), H, 3)

    return dict(
        pos_emb_freq=jax.random.normal(next(kit), (1, H), jnp.float32) * 0.05,
        pos_emb_time=jax.random.normal(next(kit), (n_frame, H), jnp.float32) * 0.05,
        layers_freq=layers_freq,
        layers_time=layers_time,
        heads_freq_w=hf_w, heads_freq_b=hf_b,
        heads_time_w=ht_w, heads_time_b=ht_b,
    )


# ----------------------------- full forward ----------------------------------

def decoder_pedal_forward(spec, params, *, n_frame, n_bin, hid_dim, n_heads):
    B = spec.shape[0]
    H = hid_dim
    N = B * n_frame
    bf16 = jnp.bfloat16
    spec_f = spec.reshape(N, n_bin, H)

    # --- pack freq-branch weights: bf16 matmul operands, f32 biases / LN ---
    freq_lw = []
    for l, lp in enumerate(params["layers_freq"]):
        w = []
        if l > 0:
            sw = lp["self_attn"]
            # only fc_v / fc_o are needed at query length 1
            w += [sw[4].astype(bf16), sw[5], sw[6].astype(bf16), sw[7]]
        cq_w, cq_b, ck_w, ck_b, cv_w, cv_b, co_w, co_b = lp["cross_attn"]
        ckv_w = jnp.concatenate([ck_w, cv_w], axis=1).astype(bf16)   # (H, 2H)
        ckv_b = jnp.concatenate([ck_b, cv_b], axis=1)                # (1, 2H)
        f1_w, f1_b, f2_w, f2_b = lp["ffn"]
        w += [cq_w.astype(bf16), cq_b, ckv_w, ckv_b, co_w.astype(bf16), co_b,
              lp["ln_g"], lp["ln_b"],
              f1_w.astype(bf16), f1_b, f2_w.astype(bf16), f2_b]
        freq_lw.append(w)

    pf_dim = params["layers_freq"][0]["ffn"][0].shape[1]
    weight_bytes = sum(int(x.size) * x.dtype.itemsize for lw in freq_lw for x in lw)
    vmem_limit = _vmem_limit_bytes()
    tm = _pick_tm(N, n_bin, H, pf_dim, weight_bytes, vmem_limit)
    n_pad = int(pl.cdiv(N, tm)) * tm
    spec_in = spec_f if n_pad == N else jnp.pad(
        spec_f, ((0, n_pad - N), (0, 0), (0, 0)))

    midi_freq, attn = freq_branch(
        spec_in, params["pos_emb_freq"], freq_lw,
        n_heads=n_heads, tm=tm, vmem_limit=vmem_limit, pf_dim=pf_dim)
    midi_freq = midi_freq[:N]                                  # (N, H)
    attn = attn[:N]                                            # (N, n_heads, S)

    # attention already in (N, n_heads, S) -> no transpose needed
    attention_freq = attn.reshape(B, n_frame, n_heads, 1, n_bin)

    # freq heads in plain XLA (lane-dense (N,H)x(H,3); keeps the kernel free of
    # masked 3-wide stores)
    heads_f = midi_freq @ params["heads_freq_w"] + params["heads_freq_b"]
    out_onpedal_freq = heads_f[:, 0].reshape(B, n_frame)
    out_offpedal_freq = heads_f[:, 1].reshape(B, n_frame)
    out_mpe_pedal_freq = heads_f[:, 2].reshape(B, n_frame)

    # --- pack time-branch weights: Q|K|V fused into one (H, 3H) matmul ---
    time_lw = []
    for lp in params["layers_time"]:
        wq, bq, wk, bk, wv, bv, wo, bo = lp["self_attn"]
        wqkv = jnp.concatenate([wq, wk, wv], axis=1).astype(bf16)    # (H, 3H)
        bqkv = jnp.concatenate([bq, bk, bv], axis=1)                 # (1, 3H)
        f1_w, f1_b, f2_w, f2_b = lp["ffn"]
        time_lw.append([wqkv, bqkv, wo.astype(bf16), bo,
                        lp["ln_g"], lp["ln_b"],
                        f1_w.astype(bf16), f1_b, f2_w.astype(bf16), f2_b])

    midi_time = midi_freq.reshape(B, n_frame, H)
    x_time = time_branch(midi_time, params["pos_emb_time"], time_lw,
                         n_heads=n_heads, vmem_limit=vmem_limit, pf_dim=pf_dim)

    heads_t = x_time @ params["heads_time_w"] + params["heads_time_b"]  # (B,T,3)
    out_onpedal_time = heads_t[:, :, 0]
    out_offpedal_time = heads_t[:, :, 1]
    out_mpe_pedal_time = heads_t[:, :, 2]

    return (out_onpedal_freq, out_offpedal_freq, out_mpe_pedal_freq,
            attention_freq,
            out_onpedal_time, out_offpedal_time, out_mpe_pedal_time)


# ----------------------------- demo ------------------------------------------

if __name__ == "__main__":
    B, n_frame, n_bin, hid_dim = 2, 8, 16, 32
    n_layers, n_heads, pf_dim = 2, 4, 64

    key = jax.random.PRNGKey(0)
    k_spec, k_par = jax.random.split(key)
    spec = jax.random.normal(k_spec, (B, n_frame, n_bin, hid_dim), jnp.float32)
    params = init_params(k_par, n_frame=n_frame, hid_dim=hid_dim,
                         n_layers=n_layers, pf_dim=pf_dim)

    fwd = jax.jit(functools.partial(decoder_pedal_forward, n_frame=n_frame,
                                    n_bin=n_bin, hid_dim=hid_dim, n_heads=n_heads))
    outs = fwd(spec, params)
    outs = jax.block_until_ready(outs)

    assert outs[0].shape == (B, n_frame)
    assert outs[3].shape == (B, n_frame, n_heads, 1, n_bin)
    assert outs[4].shape == (B, n_frame)
    assert all(bool(jnp.all(jnp.isfinite(o))) for o in outs)
    print("KERNEL_OK")
</pallas_src>

<mosaic_0001>
module attributes {stable_mosaic.version = 11 : i64} {
  func.func @_time_branch_kernel(%arg0: i32, %arg1: memref<1x8x32xf32, #tpu.memory_space<vmem>>, %arg2: memref<8x32xf32, #tpu.memory_space<vmem>>, %arg3: memref<32x96xbf16, #tpu.memory_space<vmem>>, %arg4: memref<1x96xf32, #tpu.memory_space<vmem>>, %arg5: memref<32x32xbf16, #tpu.memory_space<vmem>>, %arg6: memref<1x32xf32, #tpu.memory_space<vmem>>, %arg7: memref<1x32xf32, #tpu.memory_space<vmem>>, %arg8: memref<1x32xf32, #tpu.memory_space<vmem>>, %arg9: memref<32x64xbf16, #tpu.memory_space<vmem>>, %arg10: memref<1x64xf32, #tpu.memory_space<vmem>>, %arg11: memref<64x32xbf16, #tpu.memory_space<vmem>>, %arg12: memref<1x32xf32, #tpu.memory_space<vmem>>, %arg13: memref<32x96xbf16, #tpu.memory_space<vmem>>, %arg14: memref<1x96xf32, #tpu.memory_space<vmem>>, %arg15: memref<32x32xbf16, #tpu.memory_space<vmem>>, %arg16: memref<1x32xf32, #tpu.memory_space<vmem>>, %arg17: memref<1x32xf32, #tpu.memory_space<vmem>>, %arg18: memref<1x32xf32, #tpu.memory_space<vmem>>, %arg19: memref<32x64xbf16, #tpu.memory_space<vmem>>, %arg20: memref<1x64xf32, #tpu.memory_space<vmem>>, %arg21: memref<64x32xbf16, #tpu.memory_space<vmem>>, %arg22: memref<1x32xf32, #tpu.memory_space<vmem>>, %arg23: memref<1x8x32xf32, #tpu.memory_space<vmem>>) attributes {dimension_semantics = [#tpu.dimension_semantics<parallel>], iteration_bounds = array<i64: 2>, scalar_prefetch = 0 : i64, scratch_operands = 0 : i64, tpu.core_type = #tpu.core_type<tc>, window_params = [{transform_indices = @transform_0, window_bounds = array<i64: 1, 8, 32>}, {pipeline_mode = #tpu.pipeline_mode<synchronous>, transform_indices = @transform_1, window_bounds = array<i64: 8, 32>}, {pipeline_mode = #tpu.pipeline_mode<synchronous>, transform_indices = @transform_2, window_bounds = array<i64: 32, 96>}, {pipeline_mode = #tpu.pipeline_mode<synchronous>, transform_indices = @transform_3, window_bounds = array<i64: 1, 96>}, {pipeline_mode = #tpu.pipeline_mode<synchronous>, transform_indices = @transform_4, window_bounds = array<i64: 32, 32>}, {pipeline_mode = #tpu.pipeline_mode<synchronous>, transform_indices = @transform_5, window_bounds = array<i64: 1, 32>}, {pipeline_mode = #tpu.pipeline_mode<synchronous>, transform_indices = @transform_6, window_bounds = array<i64: 1, 32>}, {pipeline_mode = #tpu.pipeline_mode<synchronous>, transform_indices = @transform_7, window_bounds = array<i64: 1, 32>}, {pipeline_mode = #tpu.pipeline_mode<synchronous>, transform_indices = @transform_8, window_bounds = array<i64: 32, 64>}, {pipeline_mode = #tpu.pipeline_mode<synchronous>, transform_indices = @transform_9, window_bounds = array<i64: 1, 64>}, {pipeline_mode = #tpu.pipeline_mode<synchronous>, transform_indices = @transform_10, window_bounds = array<i64: 64, 32>}, {pipeline_mode = #tpu.pipeline_mode<synchronous>, transform_indices = @transform_11, window_bounds = array<i64: 1, 32>}, {pipeline_mode = #tpu.pipeline_mode<synchronous>, transform_indices = @transform_12, window_bounds = array<i64: 32, 96>}, {pipeline_mode = #tpu.pipeline_mode<synchronous>, transform_indices = @transform_13, window_bounds = array<i64: 1, 96>}, {pipeline_mode = #tpu.pipeline_mode<synchronous>, transform_indices = @transform_14, window_bounds = array<i64: 32, 32>}, {pipeline_mode = #tpu.pipeline_mode<synchronous>, transform_indices = @transform_15, window_bounds = array<i64: 1, 32>}, {pipeline_mode = #tpu.pipeline_mode<synchronous>, transform_indices = @transform_16, window_bounds = array<i64: 1, 32>}, {pipeline_mode = #tpu.pipeline_mode<synchronous>, transform_indices = @transform_17, window_bounds = array<i64: 1, 32>}, {pipeline_mode = #tpu.pipeline_mode<synchronous>, transform_indices = @transform_18, window_bounds = array<i64: 32, 64>}, {pipeline_mode = #tpu.pipeline_mode<synchronous>, transform_indices = @transform_19, window_bounds = array<i64: 1, 64>}, {pipeline_mode = #tpu.pipeline_mode<synchronous>, transform_indices = @transform_20, window_bounds = array<i64: 64, 32>}, {pipeline_mode = #tpu.pipeline_mode<synchronous>, transform_indices = @transform_21, window_bounds = array<i64: 1, 32>}, {transform_indices = @transform_22, window_bounds = array<i64: 1, 8, 32>}]} {
    %c0 = arith.constant 0 : index
    %c0_0 = arith.constant 0 : index
    %c0_1 = arith.constant 0 : index
    %0 = vector.load %arg1[%c0, %c0_0, %c0_1] : memref<1x8x32xf32, #tpu.memory_space<vmem>>, vector<1x8x32xf32>
    %1 = vector.shape_cast %0 : vector<1x8x32xf32> to vector<8x32xf32>
    %cst = arith.constant 5.65685415 : f32
    %2 = vector.broadcast %cst : f32 to vector<8x32xf32>
    %3 = arith.mulf %1, %2 : vector<8x32xf32>
    %c0_2 = arith.constant 0 : index
    %c0_3 = arith.constant 0 : index
    %4 = vector.load %arg2[%c0_2, %c0_3] : memref<8x32xf32, #tpu.memory_space<vmem>>, vector<8x32xf32>
    %5 = arith.addf %3, %4 : vector<8x32xf32>
    %c0_4 = arith.constant 0 : index
    %c0_5 = arith.constant 0 : index
    %6 = vector.load %arg3[%c0_4, %c0_5] : memref<32x96xbf16, #tpu.memory_space<vmem>>, vector<32x96xbf16>
    %c0_6 = arith.constant 0 : index
    %c0_7 = arith.constant 0 : index
    %7 = vector.load %arg4[%c0_6, %c0_7] : memref<1x96xf32, #tpu.memory_space<vmem>>, vector<1x96xf32>
    %c0_8 = arith.constant 0 : index
    %c0_9 = arith.constant 0 : index
    %8 = vector.load %arg5[%c0_8, %c0_9] : memref<32x32xbf16, #tpu.memory_space<vmem>>, vector<32x32xbf16>
    %c0_10 = arith.constant 0 : index
    %c0_11 = arith.constant 0 : index
    %9 = vector.load %arg6[%c0_10, %c0_11] : memref<1x32xf32, #tpu.memory_space<vmem>>, vector<1x32xf32>
    %c0_12 = arith.constant 0 : index
    %c0_13 = arith.constant 0 : index
    %10 = vector.load %arg7[%c0_12, %c0_13] : memref<1x32xf32, #tpu.memory_space<vmem>>, vector<1x32xf32>
    %c0_14 = arith.constant 0 : index
    %c0_15 = arith.constant 0 : index
    %11 = vector.load %arg8[%c0_14, %c0_15] : memref<1x32xf32, #tpu.memory_space<vmem>>, vector<1x32xf32>
    %c0_16 = arith.constant 0 : index
    %c0_17 = arith.constant 0 : index
    %12 = vector.load %arg9[%c0_16, %c0_17] : memref<32x64xbf16, #tpu.memory_space<vmem>>, vector<32x64xbf16>
    %c0_18 = arith.constant 0 : index
    %c0_19 = arith.constant 0 : index
    %13 = vector.load %arg10[%c0_18, %c0_19] : memref<1x64xf32, #tpu.memory_space<vmem>>, vector<1x64xf32>
    %c0_20 = arith.constant 0 : index
    %c0_21 = arith.constant 0 : index
    %14 = vector.load %arg11[%c0_20, %c0_21] : memref<64x32xbf16, #tpu.memory_space<vmem>>, vector<64x32xbf16>
    %c0_22 = arith.constant 0 : index
    %c0_23 = arith.constant 0 : index
    %15 = vector.load %arg12[%c0_22, %c0_23] : memref<1x32xf32, #tpu.memory_space<vmem>>, vector<1x32xf32>
    %16 = arith.truncf %5 : vector<8x32xf32> to vector<8x32xbf16>
    %cst_24 = arith.constant dense<0.000000e+00> : vector<8x96xf32>
    %17 = tpu.matmul %16, %6, %cst_24 {dimension_numbers = #tpu.dot_dimension_numbers<[1], [0], [0], [1], [0, 0, 1, 1], [], []>} : vector<8x32xbf16>, vector<32x96xbf16>, vector<8x96xf32> -> vector<8x96xf32>
    %18 = vector.broadcast %7 : vector<1x96xf32> to vector<8x96xf32>
    %19 = arith.addf %17, %18 : vector<8x96xf32>
    %20 = vector.extract_strided_slice %19 {offsets = [0, 0], sizes = [8, 32], strides = [1, 1]} : vector<8x96xf32> to vector<8x32xf32>
    %cst_25 = arith.constant 0.353553385 : f32
    %21 = vector.broadcast %cst_25 : f32 to vector<8x32xf32>
    %22 = arith.mulf %20, %21 : vector<8x32xf32>
    %23 = arith.truncf %22 : vector<8x32xf32> to vector<8x32xbf16>
    %24 = vector.extract_strided_slice %19 {offsets = [0, 32], sizes = [8, 32], strides = [1, 1]} : vector<8x96xf32> to vector<8x32xf32>
    %25 = arith.truncf %24 : vector<8x32xf32> to vector<8x32xbf16>
    %26 = vector.extract_strided_slice %19 {offsets = [0, 64], sizes = [8, 32], strides = [1, 1]} : vector<8x96xf32> to vector<8x32xf32>
    %27 = arith.truncf %26 : vector<8x32xf32> to vector<8x32xbf16>
    %28 = vector.extract_strided_slice %23 {offsets = [0, 0], sizes = [8, 8], strides = [1, 1]} : vector<8x32xbf16> to vector<8x8xbf16>
    %29 = vector.extract_strided_slice %25 {offsets = [0, 0], sizes = [8, 8], strides = [1, 1]} : vector<8x32xbf16> to vector<8x8xbf16>
    %30 = vector.extract_strided_slice %27 {offsets = [0, 0], sizes = [8, 8], strides = [1, 1]} : vector<8x32xbf16> to vector<8x8xbf16>
    %cst_26 = arith.constant dense<0.000000e+00> : vector<8x8xf32>
    %31 = tpu.matmul %28, %29, %cst_26 {dimension_numbers = #tpu.dot_dimension_numbers<[1], [1], [0], [0], [0, 0, 1, 0], [], []>} : vector<8x8xbf16>, vector<8x8xbf16>, vector<8x8xf32> -> vector<8x8xf32>
    %cst_27 = arith.constant dense<0xFF800000> : vector<8xf32>
    %32 = vector.multi_reduction <maximumf>, %31, %cst_27 [1] : vector<8x8xf32> to vector<8xf32>
    %33 = vector.shape_cast %32 : vector<8xf32> to vector<8x1xf32>
    %34 = vector.broadcast %33 : vector<8x1xf32> to vector<8x8xf32>
    %35 = arith.subf %31, %34 : vector<8x8xf32>
    %36 = math.exp %35 : vector<8x8xf32>
    %cst_28 = arith.constant dense<0.000000e+00> : vector<8xf32>
    %37 = vector.multi_reduction <add>, %36, %cst_28 [1] : vector<8x8xf32> to vector<8xf32>
    %38 = vector.shape_cast %37 : vector<8xf32> to vector<8x1xf32>
    %39 = tpu.reciprocal %38 {approx = true} : vector<8x1xf32> -> vector<8x1xf32>
    %40 = vector.broadcast %39 : vector<8x1xf32> to vector<8x8xf32>
    %41 = arith.mulf %36, %40 : vector<8x8xf32>
    %42 = arith.truncf %41 : vector<8x8xf32> to vector<8x8xbf16>
    %cst_29 = arith.constant dense<0.000000e+00> : vector<8x8xf32>
    %43 = tpu.matmul %42, %30, %cst_29 {dimension_numbers = #tpu.dot_dimension_numbers<[1], [0], [0], [1], [0, 0, 1, 1], [], []>} : vector<8x8xbf16>, vector<8x8xbf16>, vector<8x8xf32> -> vector<8x8xf32>
    %44 = arith.truncf %43 : vector<8x8xf32> to vector<8x8xbf16>
    %45 = vector.extract_strided_slice %8 {offsets = [0, 0], sizes = [8, 32], strides = [1, 1]} : vector<32x32xbf16> to vector<8x32xbf16>
    %cst_30 = arith.constant dense<0.000000e+00> : vector<8x32xf32>
    %46 = tpu.matmul %44, %45, %cst_30 {dimension_numbers = #tpu.dot_dimension_numbers<[1], [0], [0], [1], [0, 0, 1, 1], [], []>} : vector<8x8xbf16>, vector<8x32xbf16>, vector<8x32xf32> -> vector<8x32xf32>
    %47 = vector.broadcast %9 : vector<1x32xf32> to vector<8x32xf32>
    %48 = arith.addf %47, %46 : vector<8x32xf32>
    %49 = vector.extract_strided_slice %23 {offsets = [0, 8], sizes = [8, 8], strides = [1, 1]} : vector<8x32xbf16> to vector<8x8xbf16>
    %50 = vector.extract_strided_slice %25 {offsets = [0, 8], sizes = [8, 8], strides = [1, 1]} : vector<8x32xbf16> to vector<8x8xbf16>
    %51 = vector.extract_strided_slice %27 {offsets = [0, 8], sizes = [8, 8], strides = [1, 1]} : vector<8x32xbf16> to vector<8x8xbf16>
    %cst_31 = arith.constant dense<0.000000e+00> : vector<8x8xf32>
    %52 = tpu.matmul %49, %50, %cst_31 {dimension_numbers = #tpu.dot_dimension_numbers<[1], [1], [0], [0], [0, 0, 1, 0], [], []>} : vector<8x8xbf16>, vector<8x8xbf16>, vector<8x8xf32> -> vector<8x8xf32>
    %cst_32 = arith.constant dense<0xFF800000> : vector<8xf32>
    %53 = vector.multi_reduction <maximumf>, %52, %cst_32 [1] : vector<8x8xf32> to vector<8xf32>
    %54 = vector.shape_cast %53 : vector<8xf32> to vector<8x1xf32>
    %55 = vector.broadcast %54 : vector<8x1xf32> to vector<8x8xf32>
    %56 = arith.subf %52, %55 : vector<8x8xf32>
    %57 = math.exp %56 : vector<8x8xf32>
    %cst_33 = arith.constant dense<0.000000e+00> : vector<8xf32>
    %58 = vector.multi_reduction <add>, %57, %cst_33 [1] : vector<8x8xf32> to vector<8xf32>
    %59 = vector.shape_cast %58 : vector<8xf32> to vector<8x1xf32>
    %60 = tpu.reciprocal %59 {approx = true} : vector<8x1xf32> -> vector<8x1xf32>
    %61 = vector.broadcast %60 : vector<8x1xf32> to vector<8x8xf32>
    %62 = arith.mulf %57, %61 : vector<8x8xf32>
    %63 = arith.truncf %62 : vector<8x8xf32> to vector<8x8xbf16>
    %cst_34 = arith.constant dense<0.000000e+00> : vector<8x8xf32>
    %64 = tpu.matmul %63, %51, %cst_34 {dimension_numbers = #tpu.dot_dimension_numbers<[1], [0], [0], [1], [0, 0, 1, 1], [], []>} : vector<8x8xbf16>, vector<8x8xbf16>, vector<8x8xf32> -> vector<8x8xf32>
    %65 = arith.truncf %64 : vector<8x8xf32> to vector<8x8xbf16>
    %66 = vector.extract_strided_slice %8 {offsets = [8, 0], sizes = [8, 32], strides = [1, 1]} : vector<32x32xbf16> to vector<8x32xbf16>
    %cst_35 = arith.constant dense<0.000000e+00> : vector<8x32xf32>
    %67 = tpu.matmul %65, %66, %cst_35 {dimension_numbers = #tpu.dot_dimension_numbers<[1], [0], [0], [1], [0, 0, 1, 1], [], []>} : vector<8x8xbf16>, vector<8x32xbf16>, vector<8x32xf32> -> vector<8x32xf32>
    %68 = arith.addf %48, %67 : vector<8x32xf32>
    %69 = vector.extract_strided_slice %23 {offsets = [0, 16], sizes = [8, 8], strides = [1, 1]} : vector<8x32xbf16> to vector<8x8xbf16>
    %70 = vector.extract_strided_slice %25 {offsets = [0, 16], sizes = [8, 8], strides = [1, 1]} : vector<8x32xbf16> to vector<8x8xbf16>
    %71 = vector.extract_strided_slice %27 {offsets = [0, 16], sizes = [8, 8], strides = [1, 1]} : vector<8x32xbf16> to vector<8x8xbf16>
    %cst_36 = arith.constant dense<0.000000e+00> : vector<8x8xf32>
    %72 = tpu.matmul %69, %70, %cst_36 {dimension_numbers = #tpu.dot_dimension_numbers<[1], [1], [0], [0], [0, 0, 1, 0], [], []>} : vector<8x8xbf16>, vector<8x8xbf16>, vector<8x8xf32> -> vector<8x8xf32>
    %cst_37 = arith.constant dense<0xFF800000> : vector<8xf32>
    %73 = vector.multi_reduction <maximumf>, %72, %cst_37 [1] : vector<8x8xf32> to vector<8xf32>
    %74 = vector.shape_cast %73 : vector<8xf32> to vector<8x1xf32>
    %75 = vector.broadcast %74 : vector<8x1xf32> to vector<8x8xf32>
    %76 = arith.subf %72, %75 : vector<8x8xf32>
    %77 = math.exp %76 : vector<8x8xf32>
    %cst_38 = arith.constant dense<0.000000e+00> : vector<8xf32>
    %78 = vector.multi_reduction <add>, %77, %cst_38 [1] : vector<8x8xf32> to vector<8xf32>
    %79 = vector.shape_cast %78 : vector<8xf32> to vector<8x1xf32>
    %80 = tpu.reciprocal %79 {approx = true} : vector<8x1xf32> -> vector<8x1xf32>
    %81 = vector.broadcast %80 : vector<8x1xf32> to vector<8x8xf32>
    %82 = arith.mulf %77, %81 : vector<8x8xf32>
    %83 = arith.truncf %82 : vector<8x8xf32> to vector<8x8xbf16>
    %cst_39 = arith.constant dense<0.000000e+00> : vector<8x8xf32>
    %84 = tpu.matmul %83, %71, %cst_39 {dimension_numbers = #tpu.dot_dimension_numbers<[1], [0], [0], [1], [0, 0, 1, 1], [], []>} : vector<8x8xbf16>, vector<8x8xbf16>, vector<8x8xf32> -> vector<8x8xf32>
    %85 = arith.truncf %84 : vector<8x8xf32> to vector<8x8xbf16>
    %86 = vector.extract_strided_slice %8 {offsets = [16, 0], sizes = [8, 32], strides = [1, 1]} : vector<32x32xbf16> to vector<8x32xbf16>
    %cst_40 = arith.constant dense<0.000000e+00> : vector<8x32xf32>
    %87 = tpu.matmul %85, %86, %cst_40 {dimension_numbers = #tpu.dot_dimension_numbers<[1], [0], [0], [1], [0, 0, 1, 1], [], []>} : vector<8x8xbf16>, vector<8x32xbf16>, vector<8x32xf32> -> vector<8x32xf32>
    %88 = arith.addf %68, %87 : vector<8x32xf32>
    %89 = vector.extract_strided_slice %23 {offsets = [0, 24], sizes = [8, 8], strides = [1, 1]} : vector<8x32xbf16> to vector<8x8xbf16>
    %90 = vector.extract_strided_slice %25 {offsets = [0, 24], sizes = [8, 8], strides = [1, 1]} : vector<8x32xbf16> to vector<8x8xbf16>
    %91 = vector.extract_strided_slice %27 {offsets = [0, 24], sizes = [8, 8], strides = [1, 1]} : vector<8x32xbf16> to vector<8x8xbf16>
    %cst_41 = arith.constant dense<0.000000e+00> : vector<8x8xf32>
    %92 = tpu.matmul %89, %90, %cst_41 {dimension_numbers = #tpu.dot_dimension_numbers<[1], [1], [0], [0], [0, 0, 1, 0], [], []>} : vector<8x8xbf16>, vector<8x8xbf16>, vector<8x8xf32> -> vector<8x8xf32>
    %cst_42 = arith.constant dense<0xFF800000> : vector<8xf32>
    %93 = vector.multi_reduction <maximumf>, %92, %cst_42 [1] : vector<8x8xf32> to vector<8xf32>
    %94 = vector.shape_cast %93 : vector<8xf32> to vector<8x1xf32>
    %95 = vector.broadcast %94 : vector<8x1xf32> to vector<8x8xf32>
    %96 = arith.subf %92, %95 : vector<8x8xf32>
    %97 = math.exp %96 : vector<8x8xf32>
    %cst_43 = arith.constant dense<0.000000e+00> : vector<8xf32>
    %98 = vector.multi_reduction <add>, %97, %cst_43 [1] : vector<8x8xf32> to vector<8xf32>
    %99 = vector.shape_cast %98 : vector<8xf32> to vector<8x1xf32>
    %100 = tpu.reciprocal %99 {approx = true} : vector<8x1xf32> -> vector<8x1xf32>
    %101 = vector.broadcast %100 : vector<8x1xf32> to vector<8x8xf32>
    %102 = arith.mulf %97, %101 : vector<8x8xf32>
    %103 = arith.truncf %102 : vector<8x8xf32> to vector<8x8xbf16>
    %cst_44 = arith.constant dense<0.000000e+00> : vector<8x8xf32>
    %104 = tpu.matmul %103, %91, %cst_44 {dimension_numbers = #tpu.dot_dimension_numbers<[1], [0], [0], [1], [0, 0, 1, 1], [], []>} : vector<8x8xbf16>, vector<8x8xbf16>, vector<8x8xf32> -> vector<8x8xf32>
    %105 = arith.truncf %104 : vector<8x8xf32> to vector<8x8xbf16>
    %106 = vector.extract_strided_slice %8 {offsets = [24, 0], sizes = [8, 32], strides = [1, 1]} : vector<32x32xbf16> to vector<8x32xbf16>
    %cst_45 = arith.constant dense<0.000000e+00> : vector<8x32xf32>
    %107 = tpu.matmul %105, %106, %cst_45 {dimension_numbers = #tpu.dot_dimension_numbers<[1], [0], [0], [1], [0, 0, 1, 1], [], []>} : vector<8x8xbf16>, vector<8x32xbf16>, vector<8x32xf32> -> vector<8x32xf32>
    %108 = arith.addf %88, %107 : vector<8x32xf32>
    %109 = arith.addf %5, %108 : vector<8x32xf32>
    %cst_46 = arith.constant dense<0.000000e+00> : vector<8xf32>
    %110 = vector.multi_reduction <add>, %109, %cst_46 [1] : vector<8x32xf32> to vector<8xf32>
    %111 = vector.shape_cast %110 : vector<8xf32> to vector<8x1xf32>
    %cst_47 = arith.constant 3.200000e+01 : f32
    %112 = vector.broadcast %cst_47 : f32 to vector<8x1xf32>
    %113 = arith.divf %111, %112 : vector<8x1xf32>
    %114 = vector.broadcast %113 : vector<8x1xf32> to vector<8x32xf32>
    %115 = arith.subf %109, %114 : vector<8x32xf32>
    %116 = arith.mulf %115, %115 : vector<8x32xf32>
    %cst_48 = arith.constant dense<0.000000e+00> : vector<8xf32>
    %117 = vector.multi_reduction <add>, %116, %cst_48 [1] : vector<8x32xf32> to vector<8xf32>
    %118 = vector.shape_cast %117 : vector<8xf32> to vector<8x1xf32>
    %cst_49 = arith.constant 3.200000e+01 : f32
    %119 = vector.broadcast %cst_49 : f32 to vector<8x1xf32>
    %120 = arith.divf %118, %119 : vector<8x1xf32>
    %cst_50 = arith.constant 9.99999974E-6 : f32
    %121 = vector.broadcast %cst_50 : f32 to vector<8x1xf32>
    %122 = arith.addf %120, %121 : vector<8x1xf32>
    %123 = math.rsqrt %122 : vector<8x1xf32>
    %124 = vector.broadcast %123 : vector<8x1xf32> to vector<8x32xf32>
    %125 = arith.mulf %115, %124 : vector<8x32xf32>
    %126 = vector.broadcast %10 : vector<1x32xf32> to vector<8x32xf32>
    %127 = arith.mulf %125, %126 : vector<8x32xf32>
    %128 = vector.broadcast %11 : vector<1x32xf32> to vector<8x32xf32>
    %129 = arith.addf %127, %128 : vector<8x32xf32>
    %130 = arith.truncf %129 : vector<8x32xf32> to vector<8x32xbf16>
    %cst_51 = arith.constant dense<0.000000e+00> : vector<8x64xf32>
    %131 = tpu.matmul %130, %12, %cst_51 {dimension_numbers = #tpu.dot_dimension_numbers<[1], [0], [0], [1], [0, 0, 1, 1], [], []>} : vector<8x32xbf16>, vector<32x64xbf16>, vector<8x64xf32> -> vector<8x64xf32>
    %132 = vector.broadcast %13 : vector<1x64xf32> to vector<8x64xf32>
    %133 = arith.addf %131, %132 : vector<8x64xf32>
    %cst_52 = arith.constant 0.000000e+00 : f32
    %134 = vector.broadcast %cst_52 : f32 to vector<8x64xf32>
    %135 = arith.maximumf %133, %134 : vector<8x64xf32>
    %136 = arith.truncf %135 : vector<8x64xf32> to vector<8x64xbf16>
    %cst_53 = arith.constant dense<0.000000e+00> : vector<8x32xf32>
    %137 = tpu.matmul %136, %14, %cst_53 {dimension_numbers = #tpu.dot_dimension_numbers<[1], [0], [0], [1], [0, 0, 1, 1], [], []>} : vector<8x64xbf16>, vector<64x32xbf16>, vector<8x32xf32> -> vector<8x32xf32>
    %138 = vector.broadcast %15 : vector<1x32xf32> to vector<8x32xf32>
    %139 = arith.addf %137, %138 : vector<8x32xf32>
    %140 = arith.addf %129, %139 : vector<8x32xf32>
    %cst_54 = arith.constant dense<0.000000e+00> : vector<8xf32>
    %141 = vector.multi_reduction <add>, %140, %cst_54 [1] : vector<8x32xf32> to vector<8xf32>
    %142 = vector.shape_cast %141 : vector<8xf32> to vector<8x1xf32>
    %cst_55 = arith.constant 3.200000e+01 : f32
    %143 = vector.broadcast %cst_55 : f32 to vector<8x1xf32>
    %144 = arith.divf %142, %143 : vector<8x1xf32>
    %145 = vector.broadcast %144 : vector<8x1xf32> to vector<8x32xf32>
    %146 = arith.subf %140, %145 : vector<8x32xf32>
    %147 = arith.mulf %146, %146 : vector<8x32xf32>
    %cst_56 = arith.constant dense<0.000000e+00> : vector<8xf32>
    %148 = vector.multi_reduction <add>, %147, %cst_56 [1] : vector<8x32xf32> to vector<8xf32>
    %149 = vector.shape_cast %148 : vector<8xf32> to vector<8x1xf32>
    %cst_57 = arith.constant 3.200000e+01 : f32
    %150 = vector.broadcast %cst_57 : f32 to vector<8x1xf32>
    %151 = arith.divf %149, %150 : vector<8x1xf32>
    %cst_58 = arith.constant 9.99999974E-6 : f32
    %152 = vector.broadcast %cst_58 : f32 to vector<8x1xf32>
    %153 = arith.addf %151, %152 : vector<8x1xf32>
    %154 = math.rsqrt %153 : vector<8x1xf32>
    %155 = vector.broadcast %154 : vector<8x1xf32> to vector<8x32xf32>
    %156 = arith.mulf %146, %155 : vector<8x32xf32>
    %157 = vector.broadcast %10 : vector<1x32xf32> to vector<8x32xf32>
    %158 = arith.mulf %156, %157 : vector<8x32xf32>
    %159 = vector.broadcast %11 : vector<1x32xf32> to vector<8x32xf32>
    %160 = arith.addf %158, %159 : vector<8x32xf32>
    %c0_59 = arith.constant 0 : index
    %c0_60 = arith.constant 0 : index
    %161 = vector.load %arg13[%c0_59, %c0_60] : memref<32x96xbf16, #tpu.memory_space<vmem>>, vector<32x96xbf16>
    %c0_61 = arith.constant 0 : index
    %c0_62 = arith.constant 0 : index
    %162 = vector.load %arg14[%c0_61, %c0_62] : memref<1x96xf32, #tpu.memory_space<vmem>>, vector<1x96xf32>
    %c0_63 = arith.constant 0 : index
    %c0_64 = arith.constant 0 : index
    %163 = vector.load %arg15[%c0_63, %c0_64] : memref<32x32xbf16, #tpu.memory_space<vmem>>, vector<32x32xbf16>
    %c0_65 = arith.constant 0 : index
    %c0_66 = arith.constant 0 : index
    %164 = vector.load %arg16[%c0_65, %c0_66] : memref<1x32xf32, #tpu.memory_space<vmem>>, vector<1x32xf32>
    %c0_67 = arith.constant 0 : index
    %c0_68 = arith.constant 0 : index
    %165 = vector.load %arg17[%c0_67, %c0_68] : memref<1x32xf32, #tpu.memory_space<vmem>>, vector<1x32xf32>
    %c0_69 = arith.constant 0 : index
    %c0_70 = arith.constant 0 : index
    %166 = vector.load %arg18[%c0_69, %c0_70] : memref<1x32xf32, #tpu.memory_space<vmem>>, vector<1x32xf32>
    %c0_71 = arith.constant 0 : index
    %c0_72 = arith.constant 0 : index
    %167 = vector.load %arg19[%c0_71, %c0_72] : memref<32x64xbf16, #tpu.memory_space<vmem>>, vector<32x64xbf16>
    %c0_73 = arith.constant 0 : index
    %c0_74 = arith.constant 0 : index
    %168 = vector.load %arg20[%c0_73, %c0_74] : memref<1x64xf32, #tpu.memory_space<vmem>>, vector<1x64xf32>
    %c0_75 = arith.constant 0 : index
    %c0_76 = arith.constant 0 : index
    %169 = vector.load %arg21[%c0_75, %c0_76] : memref<64x32xbf16, #tpu.memory_space<vmem>>, vector<64x32xbf16>
    %c0_77 = arith.constant 0 : index
    %c0_78 = arith.constant 0 : index
    %170 = vector.load %arg22[%c0_77, %c0_78] : memref<1x32xf32, #tpu.memory_space<vmem>>, vector<1x32xf32>
    %171 = arith.truncf %160 : vector<8x32xf32> to vector<8x32xbf16>
    %cst_79 = arith.constant dense<0.000000e+00> : vector<8x96xf32>
    %172 = tpu.matmul %171, %161, %cst_79 {dimension_numbers = #tpu.dot_dimension_numbers<[1], [0], [0], [1], [0, 0, 1, 1], [], []>} : vector<8x32xbf16>, vector<32x96xbf16>, vector<8x96xf32> -> vector<8x96xf32>
    %173 = vector.broadcast %162 : vector<1x96xf32> to vector<8x96xf32>
    %174 = arith.addf %172, %173 : vector<8x96xf32>
    %175 = vector.extract_strided_slice %174 {offsets = [0, 0], sizes = [8, 32], strides = [1, 1]} : vector<8x96xf32> to vector<8x32xf32>
    %cst_80 = arith.constant 0.353553385 : f32
    %176 = vector.broadcast %cst_80 : f32 to vector<8x32xf32>
    %177 = arith.mulf %175, %176 : vector<8x32xf32>
    %178 = arith.truncf %177 : vector<8x32xf32> to vector<8x32xbf16>
    %179 = vector.extract_strided_slice %174 {offsets = [0, 32], sizes = [8, 32], strides = [1, 1]} : vector<8x96xf32> to vector<8x32xf32>
    %180 = arith.truncf %179 : vector<8x32xf32> to vector<8x32xbf16>
    %181 = vector.extract_strided_slice %174 {offsets = [0, 64], sizes = [8, 32], strides = [1, 1]} : vector<8x96xf32> to vector<8x32xf32>
    %182 = arith.truncf %181 : vector<8x32xf32> to vector<8x32xbf16>
    %183 = vector.extract_strided_slice %178 {offsets = [0, 0], sizes = [8, 8], strides = [1, 1]} : vector<8x32xbf16> to vector<8x8xbf16>
    %184 = vector.extract_strided_slice %180 {offsets = [0, 0], sizes = [8, 8], strides = [1, 1]} : vector<8x32xbf16> to vector<8x8xbf16>
    %185 = vector.extract_strided_slice %182 {offsets = [0, 0], sizes = [8, 8], strides = [1, 1]} : vector<8x32xbf16> to vector<8x8xbf16>
    %cst_81 = arith.constant dense<0.000000e+00> : vector<8x8xf32>
    %186 = tpu.matmul %183, %184, %cst_81 {dimension_numbers = #tpu.dot_dimension_numbers<[1], [1], [0], [0], [0, 0, 1, 0], [], []>} : vector<8x8xbf16>, vector<8x8xbf16>, vector<8x8xf32> -> vector<8x8xf32>
    %cst_82 = arith.constant dense<0xFF800000> : vector<8xf32>
    %187 = vector.multi_reduction <maximumf>, %186, %cst_82 [1] : vector<8x8xf32> to vector<8xf32>
    %188 = vector.shape_cast %187 : vector<8xf32> to vector<8x1xf32>
    %189 = vector.broadcast %188 : vector<8x1xf32> to vector<8x8xf32>
    %190 = arith.subf %186, %189 : vector<8x8xf32>
    %191 = math.exp %190 : vector<8x8xf32>
    %cst_83 = arith.constant dense<0.000000e+00> : vector<8xf32>
    %192 = vector.multi_reduction <add>, %191, %cst_83 [1] : vector<8x8xf32> to vector<8xf32>
    %193 = vector.shape_cast %192 : vector<8xf32> to vector<8x1xf32>
    %194 = tpu.reciprocal %193 {approx = true} : vector<8x1xf32> -> vector<8x1xf32>
    %195 = vector.broadcast %194 : vector<8x1xf32> to vector<8x8xf32>
    %196 = arith.mulf %191, %195 : vector<8x8xf32>
    %197 = arith.truncf %196 : vector<8x8xf32> to vector<8x8xbf16>
    %cst_84 = arith.constant dense<0.000000e+00> : vector<8x8xf32>
    %198 = tpu.matmul %197, %185, %cst_84 {dimension_numbers = #tpu.dot_dimension_numbers<[1], [0], [0], [1], [0, 0, 1, 1], [], []>} : vector<8x8xbf16>, vector<8x8xbf16>, vector<8x8xf32> -> vector<8x8xf32>
    %199 = arith.truncf %198 : vector<8x8xf32> to vector<8x8xbf16>
    %200 = vector.extract_strided_slice %163 {offsets = [0, 0], sizes = [8, 32], strides = [1, 1]} : vector<32x32xbf16> to vector<8x32xbf16>
    %cst_85 = arith.constant dense<0.000000e+00> : vector<8x32xf32>
    %201 = tpu.matmul %199, %200, %cst_85 {dimension_numbers = #tpu.dot_dimension_numbers<[1], [0], [0], [1], [0, 0, 1, 1], [], []>} : vector<8x8xbf16>, vector<8x32xbf16>, vector<8x32xf32> -> vector<8x32xf32>
    %202 = vector.broadcast %164 : vector<1x32xf32> to vector<8x32xf32>
    %203 = arith.addf %202, %201 : vector<8x32xf32>
    %204 = vector.extract_strided_slice %178 {offsets = [0, 8], sizes = [8, 8], strides = [1, 1]} : vector<8x32xbf16> to vector<8x8xbf16>
    %205 = vector.extract_strided_slice %180 {offsets = [0, 8], sizes = [8, 8], strides = [1, 1]} : vector<8x32xbf16> to vector<8x8xbf16>
    %206 = vector.extract_strided_slice %182 {offsets = [0, 8], sizes = [8, 8], strides = [1, 1]} : vector<8x32xbf16> to vector<8x8xbf16>
    %cst_86 = arith.constant dense<0.000000e+00> : vector<8x8xf32>
    %207 = tpu.matmul %204, %205, %cst_86 {dimension_numbers = #tpu.dot_dimension_numbers<[1], [1], [0], [0], [0, 0, 1, 0], [], []>} : vector<8x8xbf16>, vector<8x8xbf16>, vector<8x8xf32> -> vector<8x8xf32>
    %cst_87 = arith.constant dense<0xFF800000> : vector<8xf32>
    %208 = vector.multi_reduction <maximumf>, %207, %cst_87 [1] : vector<8x8xf32> to vector<8xf32>
    %209 = vector.shape_cast %208 : vector<8xf32> to vector<8x1xf32>
    %210 = vector.broadcast %209 : vector<8x1xf32> to vector<8x8xf32>
    %211 = arith.subf %207, %210 : vector<8x8xf32>
    %212 = math.exp %211 : vector<8x8xf32>
    %cst_88 = arith.constant dense<0.000000e+00> : vector<8xf32>
    %213 = vector.multi_reduction <add>, %212, %cst_88 [1] : vector<8x8xf32> to vector<8xf32>
    %214 = vector.shape_cast %213 : vector<8xf32> to vector<8x1xf32>
    %215 = tpu.reciprocal %214 {approx = true} : vector<8x1xf32> -> vector<8x1xf32>
    %216 = vector.broadcast %215 : vector<8x1xf32> to vector<8x8xf32>
    %217 = arith.mulf %212, %216 : vector<8x8xf32>
    %218 = arith.truncf %217 : vector<8x8xf32> to vector<8x8xbf16>
    %cst_89 = arith.constant dense<0.000000e+00> : vector<8x8xf32>
    %219 = tpu.matmul %218, %206, %cst_89 {dimension_numbers = #tpu.dot_dimension_numbers<[1], [0], [0], [1], [0, 0, 1, 1], [], []>} : vector<8x8xbf16>, vector<8x8xbf16>, vector<8x8xf32> -> vector<8x8xf32>
    %220 = arith.truncf %219 : vector<8x8xf32> to vector<8x8xbf16>
    %221 = vector.extract_strided_slice %163 {offsets = [8, 0], sizes = [8, 32], strides = [1, 1]} : vector<32x32xbf16> to vector<8x32xbf16>
    %cst_90 = arith.constant dense<0.000000e+00> : vector<8x32xf32>
    %222 = tpu.matmul %220, %221, %cst_90 {dimension_numbers = #tpu.dot_dimension_numbers<[1], [0], [0], [1], [0, 0, 1, 1], [], []>} : vector<8x8xbf16>, vector<8x32xbf16>, vector<8x32xf32> -> vector<8x32xf32>
    %223 = arith.addf %203, %222 : vector<8x32xf32>
    %224 = vector.extract_strided_slice %178 {offsets = [0, 16], sizes = [8, 8], strides = [1, 1]} : vector<8x32xbf16> to vector<8x8xbf16>
    %225 = vector.extract_strided_slice %180 {offsets = [0, 16], sizes = [8, 8], strides = [1, 1]} : vector<8x32xbf16> to vector<8x8xbf16>
    %226 = vector.extract_strided_slice %182 {offsets = [0, 16], sizes = [8, 8], strides = [1, 1]} : vector<8x32xbf16> to vector<8x8xbf16>
    %cst_91 = arith.constant dense<0.000000e+00> : vector<8x8xf32>
    %227 = tpu.matmul %224, %225, %cst_91 {dimension_numbers = #tpu.dot_dimension_numbers<[1], [1], [0], [0], [0, 0, 1, 0], [], []>} : vector<8x8xbf16>, vector<8x8xbf16>, vector<8x8xf32> -> vector<8x8xf32>
    %cst_92 = arith.constant dense<0xFF800000> : vector<8xf32>
    %228 = vector.multi_reduction <maximumf>, %227, %cst_92 [1] : vector<8x8xf32> to vector<8xf32>
    %229 = vector.shape_cast %228 : vector<8xf32> to vector<8x1xf32>
    %230 = vector.broadcast %229 : vector<8x1xf32> to vector<8x8xf32>
    %231 = arith.subf %227, %230 : vector<8x8xf32>
    %232 = math.exp %231 : vector<8x8xf32>
    %cst_93 = arith.constant dense<0.000000e+00> : vector<8xf32>
    %233 = vector.multi_reduction <add>, %232, %cst_93 [1] : vector<8x8xf32> to vector<8xf32>
    %234 = vector.shape_cast %233 : vector<8xf32> to vector<8x1xf32>
    %235 = tpu.reciprocal %234 {approx = true} : vector<8x1xf32> -> vector<8x1xf32>
    %236 = vector.broadcast %235 : vector<8x1xf32> to vector<8x8xf32>
    %237 = arith.mulf %232, %236 : vector<8x8xf32>
    %238 = arith.truncf %237 : vector<8x8xf32> to vector<8x8xbf16>
    %cst_94 = arith.constant dense<0.000000e+00> : vector<8x8xf32>
    %239 = tpu.matmul %238, %226, %cst_94 {dimension_numbers = #tpu.dot_dimension_numbers<[1], [0], [0], [1], [0, 0, 1, 1], [], []>} : vector<8x8xbf16>, vector<8x8xbf16>, vector<8x8xf32> -> vector<8x8xf32>
    %240 = arith.truncf %239 : vector<8x8xf32> to vector<8x8xbf16>
    %241 = vector.extract_strided_slice %163 {offsets = [16, 0], sizes = [8, 32], strides = [1, 1]} : vector<32x32xbf16> to vector<8x32xbf16>
    %cst_95 = arith.constant dense<0.000000e+00> : vector<8x32xf32>
    %242 = tpu.matmul %240, %241, %cst_95 {dimension_numbers = #tpu.dot_dimension_numbers<[1], [0], [0], [1], [0, 0, 1, 1], [], []>} : vector<8x8xbf16>, vector<8x32xbf16>, vector<8x32xf32> -> vector<8x32xf32>
    %243 = arith.addf %223, %242 : vector<8x32xf32>
    %244 = vector.extract_strided_slice %178 {offsets = [0, 24], sizes = [8, 8], strides = [1, 1]} : vector<8x32xbf16> to vector<8x8xbf16>
    %245 = vector.extract_strided_slice %180 {offsets = [0, 24], sizes = [8, 8], strides = [1, 1]} : vector<8x32xbf16> to vector<8x8xbf16>
    %246 = vector.extract_strided_slice %182 {offsets = [0, 24], sizes = [8, 8], strides = [1, 1]} : vector<8x32xbf16> to vector<8x8xbf16>
    %cst_96 = arith.constant dense<0.000000e+00> : vector<8x8xf32>
    %247 = tpu.matmul %244, %245, %cst_96 {dimension_numbers = #tpu.dot_dimension_numbers<[1], [1], [0], [0], [0, 0, 1, 0], [], []>} : vector<8x8xbf16>, vector<8x8xbf16>, vector<8x8xf32> -> vector<8x8xf32>
    %cst_97 = arith.constant dense<0xFF800000> : vector<8xf32>
    %248 = vector.multi_reduction <maximumf>, %247, %cst_97 [1] : vector<8x8xf32> to vector<8xf32>
    %249 = vector.shape_cast %248 : vector<8xf32> to vector<8x1xf32>
    %250 = vector.broadcast %249 : vector<8x1xf32> to vector<8x8xf32>
    %251 = arith.subf %247, %250 : vector<8x8xf32>
    %252 = math.exp %251 : vector<8x8xf32>
    %cst_98 = arith.constant dense<0.000000e+00> : vector<8xf32>
    %253 = vector.multi_reduction <add>, %252, %cst_98 [1] : vector<8x8xf32> to vector<8xf32>
    %254 = vector.shape_cast %253 : vector<8xf32> to vector<8x1xf32>
    %255 = tpu.reciprocal %254 {approx = true} : vector<8x1xf32> -> vector<8x1xf32>
    %256 = vector.broadcast %255 : vector<8x1xf32> to vector<8x8xf32>
    %257 = arith.mulf %252, %256 : vector<8x8xf32>
    %258 = arith.truncf %257 : vector<8x8xf32> to vector<8x8xbf16>
    %cst_99 = arith.constant dense<0.000000e+00> : vector<8x8xf32>
    %259 = tpu.matmul %258, %246, %cst_99 {dimension_numbers = #tpu.dot_dimension_numbers<[1], [0], [0], [1], [0, 0, 1, 1], [], []>} : vector<8x8xbf16>, vector<8x8xbf16>, vector<8x8xf32> -> vector<8x8xf32>
    %260 = arith.truncf %259 : vector<8x8xf32> to vector<8x8xbf16>
    %261 = vector.extract_strided_slice %163 {offsets = [24, 0], sizes = [8, 32], strides = [1, 1]} : vector<32x32xbf16> to vector<8x32xbf16>
    %cst_100 = arith.constant dense<0.000000e+00> : vector<8x32xf32>
    %262 = tpu.matmul %260, %261, %cst_100 {dimension_numbers = #tpu.dot_dimension_numbers<[1], [0], [0], [1], [0, 0, 1, 1], [], []>} : vector<8x8xbf16>, vector<8x32xbf16>, vector<8x32xf32> -> vector<8x32xf32>
    %263 = arith.addf %243, %262 : vector<8x32xf32>
    %264 = arith.addf %160, %263 : vector<8x32xf32>
    %cst_101 = arith.constant dense<0.000000e+00> : vector<8xf32>
    %265 = vector.multi_reduction <add>, %264, %cst_101 [1] : vector<8x32xf32> to vector<8xf32>
    %266 = vector.shape_cast %265 : vector<8xf32> to vector<8x1xf32>
    %cst_102 = arith.constant 3.200000e+01 : f32
    %267 = vector.broadcast %cst_102 : f32 to vector<8x1xf32>
    %268 = arith.divf %266, %267 : vector<8x1xf32>
    %269 = vector.broadcast %268 : vector<8x1xf32> to vector<8x32xf32>
    %270 = arith.subf %264, %269 : vector<8x32xf32>
    %271 = arith.mulf %270, %270 : vector<8x32xf32>
    %cst_103 = arith.constant dense<0.000000e+00> : vector<8xf32>
    %272 = vector.multi_reduction <add>, %271, %cst_103 [1] : vector<8x32xf32> to vector<8xf32>
    %273 = vector.shape_cast %272 : vector<8xf32> to vector<8x1xf32>
    %cst_104 = arith.constant 3.200000e+01 : f32
    %274 = vector.broadcast %cst_104 : f32 to vector<8x1xf32>
    %275 = arith.divf %273, %274 : vector<8x1xf32>
    %cst_105 = arith.constant 9.99999974E-6 : f32
    %276 = vector.broadcast %cst_105 : f32 to vector<8x1xf32>
    %277 = arith.addf %275, %276 : vector<8x1xf32>
    %278 = math.rsqrt %277 : vector<8x1xf32>
    %279 = vector.broadcast %278 : vector<8x1xf32> to vector<8x32xf32>
    %280 = arith.mulf %270, %279 : vector<8x32xf32>
    %281 = vector.broadcast %165 : vector<1x32xf32> to vector<8x32xf32>
    %282 = arith.mulf %280, %281 : vector<8x32xf32>
    %283 = vector.broadcast %166 : vector<1x32xf32> to vector<8x32xf32>
    %284 = arith.addf %282, %283 : vector<8x32xf32>
    %285 = arith.truncf %284 : vector<8x32xf32> to vector<8x32xbf16>
    %cst_106 = arith.constant dense<0.000000e+00> : vector<8x64xf32>
    %286 = tpu.matmul %285, %167, %cst_106 {dimension_numbers = #tpu.dot_dimension_numbers<[1], [0], [0], [1], [0, 0, 1, 1], [], []>} : vector<8x32xbf16>, vector<32x64xbf16>, vector<8x64xf32> -> vector<8x64xf32>
    %287 = vector.broadcast %168 : vector<1x64xf32> to vector<8x64xf32>
    %288 = arith.addf %286, %287 : vector<8x64xf32>
    %cst_107 = arith.constant 0.000000e+00 : f32
    %289 = vector.broadcast %cst_107 : f32 to vector<8x64xf32>
    %290 = arith.maximumf %288, %289 : vector<8x64xf32>
    %291 = arith.truncf %290 : vector<8x64xf32> to vector<8x64xbf16>
    %cst_108 = arith.constant dense<0.000000e+00> : vector<8x32xf32>
    %292 = tpu.matmul %291, %169, %cst_108 {dimension_numbers = #tpu.dot_dimension_numbers<[1], [0], [0], [1], [0, 0, 1, 1], [], []>} : vector<8x64xbf16>, vector<64x32xbf16>, vector<8x32xf32> -> vector<8x32xf32>
    %293 = vector.broadcast %170 : vector<1x32xf32> to vector<8x32xf32>
    %294 = arith.addf %292, %293 : vector<8x32xf32>
    %295 = arith.addf %284, %294 : vector<8x32xf32>
    %cst_109 = arith.constant dense<0.000000e+00> : vector<8xf32>
    %296 = vector.multi_reduction <add>, %295, %cst_109 [1] : vector<8x32xf32> to vector<8xf32>
    %297 = vector.shape_cast %296 : vector<8xf32> to vector<8x1xf32>
    %cst_110 = arith.constant 3.200000e+01 : f32
    %298 = vector.broadcast %cst_110 : f32 to vector<8x1xf32>
    %299 = arith.divf %297, %298 : vector<8x1xf32>
    %300 = vector.broadcast %299 : vector<8x1xf32> to vector<8x32xf32>
    %301 = arith.subf %295, %300 : vector<8x32xf32>
    %302 = arith.mulf %301, %301 : vector<8x32xf32>
    %cst_111 = arith.constant dense<0.000000e+00> : vector<8xf32>
    %303 = vector.multi_reduction <add>, %302, %cst_111 [1] : vector<8x32xf32> to vector<8xf32>
    %304 = vector.shape_cast %303 : vector<8xf32> to vector<8x1xf32>
    %cst_112 = arith.constant 3.200000e+01 : f32
    %305 = vector.broadcast %cst_112 : f32 to vector<8x1xf32>
    %306 = arith.divf %304, %305 : vector<8x1xf32>
    %cst_113 = arith.constant 9.99999974E-6 : f32
    %307 = vector.broadcast %cst_113 : f32 to vector<8x1xf32>
    %308 = arith.addf %306, %307 : vector<8x1xf32>
    %309 = math.rsqrt %308 : vector<8x1xf32>
    %310 = vector.broadcast %309 : vector<8x1xf32> to vector<8x32xf32>
    %311 = arith.mulf %301, %310 : vector<8x32xf32>
    %312 = vector.broadcast %165 : vector<1x32xf32> to vector<8x32xf32>
    %313 = arith.mulf %311, %312 : vector<8x32xf32>
    %314 = vector.broadcast %166 : vector<1x32xf32> to vector<8x32xf32>
    %315 = arith.addf %313, %314 : vector<8x32xf32>
    %c0_114 = arith.constant 0 : index
    %c0_115 = arith.constant 0 : index
    %c0_116 = arith.constant 0 : index
    %316 = vector.load %arg23[%c0_114, %c0_115, %c0_116] : memref<1x8x32xf32, #tpu.memory_space<vmem>>, vector<1x8x32xf32>
    %317 = vector.shape_cast %316 : vector<1x8x32xf32> to vector<8x32xf32>
    %318 = vector.shape_cast %315 : vector<8x32xf32> to vector<1x8x32xf32>
    tpu.vector_store %arg23[%c0_114, %c0_115, %c0_116], %318 {strides = array<i32>} : memref<1x8x32xf32, #tpu.memory_space<vmem>>, vector<1x8x32xf32>,
    return
  }
  func.func @transform_0(%arg0: i32) -> (i32, i32, i32) {
    %c0_i32 = arith.constant 0 : i32
    %c0_i32_0 = arith.constant 0 : i32
    %c0_i32_1 = arith.constant 0 : i32
    return %arg0, %c0_i32, %c0_i32_0 : i32, i32, i32
  }
  func.func @transform_1(%arg0: i32) -> (i32, i32) {
    %c0_i32 = arith.constant 0 : i32
    %c0_i32_0 = arith.constant 0 : i32
    %c0_i32_1 = arith.constant 0 : i32
    return %c0_i32, %c0_i32_0 : i32, i32
  }
  func.func @transform_2(%arg0: i32) -> (i32, i32) {
    %c0_i32 = arith.constant 0 : i32
    %c0_i32_0 = arith.constant 0 : i32
    %c0_i32_1 = arith.constant 0 : i32
    return %c0_i32, %c0_i32_0 : i32, i32
  }
  func.func @transform_3(%arg0: i32) -> (i32, i32) {
    %c0_i32 = arith.constant 0 : i32
    %c0_i32_0 = arith.constant 0 : i32
    %c0_i32_1 = arith.constant 0 : i32
    return %c0_i32, %c0_i32_0 : i32, i32
  }
  func.func @transform_4(%arg0: i32) -> (i32, i32) {
    %c0_i32 = arith.constant 0 : i32
    %c0_i32_0 = arith.constant 0 : i32
    %c0_i32_1 = arith.constant 0 : i32
    return %c0_i32, %c0_i32_0 : i32, i32
  }
  func.func @transform_5(%arg0: i32) -> (i32, i32) {
    %c0_i32 = arith.constant 0 : i32
    %c0_i32_0 = arith.constant 0 : i32
    %c0_i32_1 = arith.constant 0 : i32
    return %c0_i32, %c0_i32_0 : i32, i32
  }
  func.func @transform_6(%arg0: i32) -> (i32, i32) {
    %c0_i32 = arith.constant 0 : i32
    %c0_i32_0 = arith.constant 0 : i32
    %c0_i32_1 = arith.constant 0 : i32
    return %c0_i32, %c0_i32_0 : i32, i32
  }
  func.func @transform_7(%arg0: i32) -> (i32, i32) {
    %c0_i32 = arith.constant 0 : i32
    %c0_i32_0 = arith.constant 0 : i32
    %c0_i32_1 = arith.constant 0 : i32
    return %c0_i32, %c0_i32_0 : i32, i32
  }
  func.func @transform_8(%arg0: i32) -> (i32, i32) {
    %c0_i32 = arith.constant 0 : i32
    %c0_i32_0 = arith.constant 0 : i32
    %c0_i32_1 = arith.constant 0 : i32
    return %c0_i32, %c0_i32_0 : i32, i32
  }
  func.func @transform_9(%arg0: i32) -> (i32, i32) {
    %c0_i32 = arith.constant 0 : i32
    %c0_i32_0 = arith.constant 0 : i32
    %c0_i32_1 = arith.constant 0 : i32
    return %c0_i32, %c0_i32_0 : i32, i32
  }
  func.func @transform_10(%arg0: i32) -> (i32, i32) {
    %c0_i32 = arith.constant 0 : i32
    %c0_i32_0 = arith.constant 0 : i32
    %c0_i32_1 = arith.constant 0 : i32
    return %c0_i32, %c0_i32_0 : i32, i32
  }
  func.func @transform_11(%arg0: i32) -> (i32, i32) {
    %c0_i32 = arith.constant 0 : i32
    %c0_i32_0 = arith.constant 0 : i32
    %c0_i32_1 = arith.constant 0 : i32
    return %c0_i32, %c0_i32_0 : i32, i32
  }
  func.func @transform_12(%arg0: i32) -> (i32, i32) {
    %c0_i32 = arith.constant 0 : i32
    %c0_i32_0 = arith.constant 0 : i32
    %c0_i32_1 = arith.constant 0 : i32
    return %c0_i32, %c0_i32_0 : i32, i32
  }
  func.func @transform_13(%arg0: i32) -> (i32, i32) {
    %c0_i32 = arith.constant 0 : i32
    %c0_i32_0 = arith.constant 0 : i32
    %c0_i32_1 = arith.constant 0 : i32
    return %c0_i32, %c0_i32_0 : i32, i32
  }
  func.func @transform_14(%arg0: i32) -> (i32, i32) {
    %c0_i32 = arith.constant 0 : i32
    %c0_i32_0 = arith.constant 0 : i32
    %c0_i32_1 = arith.constant 0 : i32
    return %c0_i32, %c0_i32_0 : i32, i32
  }
  func.func @transform_15(%arg0: i32) -> (i32, i32) {
    %c0_i32 = arith.constant 0 : i32
    %c0_i32_0 = arith.constant 0 : i32
    %c0_i32_1 = arith.constant 0 : i32
    return %c0_i32, %c0_i32_0 : i32, i32
  }
  func.func @transform_16(%arg0: i32) -> (i32, i32) {
    %c0_i32 = arith.constant 0 : i32
    %c0_i32_0 = arith.constant 0 : i32
    %c0_i32_1 = arith.constant 0 : i32
    return %c0_i32, %c0_i32_0 : i32, i32
  }
  func.func @transform_17(%arg0: i32) -> (i32, i32) {
    %c0_i32 = arith.constant 0 : i32
    %c0_i32_0 = arith.constant 0 : i32
    %c0_i32_1 = arith.constant 0 : i32
    return %c0_i32, %c0_i32_0 : i32, i32
  }
  func.func @transform_18(%arg0: i32) -> (i32, i32) {
    %c0_i32 = arith.constant 0 : i32
    %c0_i32_0 = arith.constant 0 : i32
    %c0_i32_1 = arith.constant 0 : i32
    return %c0_i32, %c0_i32_0 : i32, i32
  }
  func.func @transform_19(%arg0: i32) -> (i32, i32) {
    %c0_i32 = arith.constant 0 : i32
    %c0_i32_0 = arith.constant 0 : i32
    %c0_i32_1 = arith.constant 0 : i32
    return %c0_i32, %c0_i32_0 : i32, i32
  }
  func.func @transform_20(%arg0: i32) -> (i32, i32) {
    %c0_i32 = arith.constant 0 : i32
    %c0_i32_0 = arith.constant 0 : i32
    %c0_i32_1 = arith.constant 0 : i32
    return %c0_i32, %c0_i32_0 : i32, i32
  }
  func.func @transform_21(%arg0: i32) -> (i32, i32) {
    %c0_i32 = arith.constant 0 : i32
    %c0_i32_0 = arith.constant 0 : i32
    %c0_i32_1 = arith.constant 0 : i32
    return %c0_i32, %c0_i32_0 : i32, i32
  }
  func.func @transform_22(%arg0: i32) -> (i32, i32, i32) {
    %c0_i32 = arith.constant 0 : i32
    %c0_i32_0 = arith.constant 0 : i32
    %c0_i32_1 = arith.constant 0 : i32
    return %arg0, %c0_i32, %c0_i32_0 : i32, i32, i32
  }
}

module attributes {stable_mosaic.version = 11 : i64} {
  func.func @_freq_branch_kernel(%arg0: i32, %arg1: memref<8x16x32xf32, #tpu.memory_space<vmem>>, %arg2: memref<1x32xf32, #tpu.memory_space<vmem>>, %arg3: memref<32x32xbf16, #tpu.memory_space<vmem>>, %arg4: memref<1x32xf32, #tpu.memory_space<vmem>>, %arg5: memref<32x64xbf16, #tpu.memory_space<vmem>>, %arg6: memref<1x64xf32, #tpu.memory_space<vmem>>, %arg7: memref<32x32xbf16, #tpu.memory_space<vmem>>, %arg8: memref<1x32xf32, #tpu.memory_space<vmem>>, %arg9: memref<1x32xf32, #tpu.memory_space<vmem>>, %arg10: memref<1x32xf32, #tpu.memory_space<vmem>>, %arg11: memref<32x64xbf16, #tpu.memory_space<vmem>>, %arg12: memref<1x64xf32, #tpu.memory_space<vmem>>, %arg13: memref<64x32xbf16, #tpu.memory_space<vmem>>, %arg14: memref<1x32xf32, #tpu.memory_space<vmem>>, %arg15: memref<32x32xbf16, #tpu.memory_space<vmem>>, %arg16: memref<1x32xf32, #tpu.memory_space<vmem>>, %arg17: memref<32x32xbf16, #tpu.memory_space<vmem>>, %arg18: memref<1x32xf32, #tpu.memory_space<vmem>>, %arg19: memref<32x32xbf16, #tpu.memory_space<vmem>>, %arg20: memref<1x32xf32, #tpu.memory_space<vmem>>, %arg21: memref<32x64xbf16, #tpu.memory_space<vmem>>, %arg22: memref<1x64xf32, #tpu.memory_space<vmem>>, %arg23: memref<32x32xbf16, #tpu.memory_space<vmem>>, %arg24: memref<1x32xf32, #tpu.memory_space<vmem>>, %arg25: memref<1x32xf32, #tpu.memory_space<vmem>>, %arg26: memref<1x32xf32, #tpu.memory_space<vmem>>, %arg27: memref<32x64xbf16, #tpu.memory_space<vmem>>, %arg28: memref<1x64xf32, #tpu.memory_space<vmem>>, %arg29: memref<64x32xbf16, #tpu.memory_space<vmem>>, %arg30: memref<1x32xf32, #tpu.memory_space<vmem>>, %arg31: memref<8x32xf32, #tpu.memory_space<vmem>>, %arg32: memref<8x4x16xf32, #tpu.memory_space<vmem>>) attributes {dimension_semantics = [#tpu.dimension_semantics<parallel>], iteration_bounds = array<i64: 2>, scalar_prefetch = 0 : i64, scratch_operands = 0 : i64, tpu.core_type = #tpu.core_type<tc>, window_params = [{transform_indices = @transform_0, window_bounds = array<i64: 8, 16, 32>}, {pipeline_mode = #tpu.pipeline_mode<synchronous>, transform_indices = @transform_1, window_bounds = array<i64: 1, 32>}, {pipeline_mode = #tpu.pipeline_mode<synchronous>, transform_indices = @transform_2, window_bounds = array<i64: 32, 32>}, {pipeline_mode = #tpu.pipeline_mode<synchronous>, transform_indices = @transform_3, window_bounds = array<i64: 1, 32>}, {pipeline_mode = #tpu.pipeline_mode<synchronous>, transform_indices = @transform_4, window_bounds = array<i64: 32, 64>}, {pipeline_mode = #tpu.pipeline_mode<synchronous>, transform_indices = @transform_5, window_bounds = array<i64: 1, 64>}, {pipeline_mode = #tpu.pipeline_mode<synchronous>, transform_indices = @transform_6, window_bounds = array<i64: 32, 32>}, {pipeline_mode = #tpu.pipeline_mode<synchronous>, transform_indices = @transform_7, window_bounds = array<i64: 1, 32>}, {pipeline_mode = #tpu.pipeline_mode<synchronous>, transform_indices = @transform_8, window_bounds = array<i64: 1, 32>}, {pipeline_mode = #tpu.pipeline_mode<synchronous>, transform_indices = @transform_9, window_bounds = array<i64: 1, 32>}, {pipeline_mode = #tpu.pipeline_mode<synchronous>, transform_indices = @transform_10, window_bounds = array<i64: 32, 64>}, {pipeline_mode = #tpu.pipeline_mode<synchronous>, transform_indices = @transform_11, window_bounds = array<i64: 1, 64>}, {pipeline_mode = #tpu.pipeline_mode<synchronous>, transform_indices = @transform_12, window_bounds = array<i64: 64, 32>}, {pipeline_mode = #tpu.pipeline_mode<synchronous>, transform_indices = @transform_13, window_bounds = array<i64: 1, 32>}, {pipeline_mode = #tpu.pipeline_mode<synchronous>, transform_indices = @transform_14, window_bounds = array<i64: 32, 32>}, {pipeline_mode = #tpu.pipeline_mode<synchronous>, transform_indices = @transform_15, window_bounds = array<i64: 1, 32>}, {pipeline_mode = #tpu.pipeline_mode<synchronous>, transform_indices = @transform_16, window_bounds = array<i64: 32, 32>}, {pipeline_mode = #tpu.pipeline_mode<synchronous>, transform_indices = @transform_17, window_bounds = array<i64: 1, 32>}, {pipeline_mode = #tpu.pipeline_mode<synchronous>, transform_indices = @transform_18, window_bounds = array<i64: 32, 32>}, {pipeline_mode = #tpu.pipeline_mode<synchronous>, transform_indices = @transform_19, window_bounds = array<i64: 1, 32>}, {pipeline_mode = #tpu.pipeline_mode<synchronous>, transform_indices = @transform_20, window_bounds = array<i64: 32, 64>}, {pipeline_mode = #tpu.pipeline_mode<synchronous>, transform_indices = @transform_21, window_bounds = array<i64: 1, 64>}, {pipeline_mode = #tpu.pipeline_mode<synchronous>, transform_indices = @transform_22, window_bounds = array<i64: 32, 32>}, {pipeline_mode = #tpu.pipeline_mode<synchronous>, transform_indices = @transform_23, window_bounds = array<i64: 1, 32>}, {pipeline_mode = #tpu.pipeline_mode<synchronous>, transform_indices = @transform_24, window_bounds = array<i64: 1, 32>}, {pipeline_mode = #tpu.pipeline_mode<synchronous>, transform_indices = @transform_25, window_bounds = array<i64: 1, 32>}, {pipeline_mode = #tpu.pipeline_mode<synchronous>, transform_indices = @transform_26, window_bounds = array<i64: 32, 64>}, {pipeline_mode = #tpu.pipeline_mode<synchronous>, transform_indices = @transform_27, window_bounds = array<i64: 1, 64>}, {pipeline_mode = #tpu.pipeline_mode<synchronous>, transform_indices = @transform_28, window_bounds = array<i64: 64, 32>}, {pipeline_mode = #tpu.pipeline_mode<synchronous>, transform_indices = @transform_29, window_bounds = array<i64: 1, 32>}, {transform_indices = @transform_30, window_bounds = array<i64: 8, 32>}, {transform_indices = @transform_31, window_bounds = array<i64: 8, 4, 16>}]} {
    %c0 = arith.constant 0 : index
    %c0_0 = arith.constant 0 : index
    %c0_1 = arith.constant 0 : index
    %0 = vector.load %arg1[%c0, %c0_0, %c0_1] : memref<8x16x32xf32, #tpu.memory_space<vmem>>, vector<8x16x32xf32>
    %1 = arith.truncf %0 : vector<8x16x32xf32> to vector<8x16x32xbf16>
    %2 = vector.shape_cast %1 : vector<8x16x32xbf16> to vector<128x32xbf16>
    %c0_2 = arith.constant 0 : index
    %c0_3 = arith.constant 0 : index
    %3 = vector.load %arg2[%c0_2, %c0_3] : memref<1x32xf32, #tpu.memory_space<vmem>>, vector<1x32xf32>
    %4 = vector.shape_cast %3 : vector<1x32xf32> to vector<1x32xf32>
    %5 = vector.broadcast %4 : vector<1x32xf32> to vector<8x32xf32>
    %c0_4 = arith.constant 0 : index
    %c0_5 = arith.constant 0 : index
    %6 = vector.load %arg3[%c0_4, %c0_5] : memref<32x32xbf16, #tpu.memory_space<vmem>>, vector<32x32xbf16>
    %c0_6 = arith.constant 0 : index
    %c0_7 = arith.constant 0 : index
    %7 = vector.load %arg4[%c0_6, %c0_7] : memref<1x32xf32, #tpu.memory_space<vmem>>, vector<1x32xf32>
    %c0_8 = arith.constant 0 : index
    %c0_9 = arith.constant 0 : index
    %8 = vector.load %arg5[%c0_8, %c0_9] : memref<32x64xbf16, #tpu.memory_space<vmem>>, vector<32x64xbf16>
    %c0_10 = arith.constant 0 : index
    %c0_11 = arith.constant 0 : index
    %9 = vector.load %arg6[%c0_10, %c0_11] : memref<1x64xf32, #tpu.memory_space<vmem>>, vector<1x64xf32>
    %c0_12 = arith.constant 0 : index
    %c0_13 = arith.constant 0 : index
    %10 = vector.load %arg7[%c0_12, %c0_13] : memref<32x32xbf16, #tpu.memory_space<vmem>>, vector<32x32xbf16>
    %c0_14 = arith.constant 0 : index
    %c0_15 = arith.constant 0 : index
    %11 = vector.load %arg8[%c0_14, %c0_15] : memref<1x32xf32, #tpu.memory_space<vmem>>, vector<1x32xf32>
    %c0_16 = arith.constant 0 : index
    %c0_17 = arith.constant 0 : index
    %12 = vector.load %arg9[%c0_16, %c0_17] : memref<1x32xf32, #tpu.memory_space<vmem>>, vector<1x32xf32>
    %c0_18 = arith.constant 0 : index
    %c0_19 = arith.constant 0 : index
    %13 = vector.load %arg10[%c0_18, %c0_19] : memref<1x32xf32, #tpu.memory_space<vmem>>, vector<1x32xf32>
    %c0_20 = arith.constant 0 : index
    %c0_21 = arith.constant 0 : index
    %14 = vector.load %arg11[%c0_20, %c0_21] : memref<32x64xbf16, #tpu.memory_space<vmem>>, vector<32x64xbf16>
    %c0_22 = arith.constant 0 : index
    %c0_23 = arith.constant 0 : index
    %15 = vector.load %arg12[%c0_22, %c0_23] : memref<1x64xf32, #tpu.memory_space<vmem>>, vector<1x64xf32>
    %c0_24 = arith.constant 0 : index
    %c0_25 = arith.constant 0 : index
    %16 = vector.load %arg13[%c0_24, %c0_25] : memref<64x32xbf16, #tpu.memory_space<vmem>>, vector<64x32xbf16>
    %c0_26 = arith.constant 0 : index
    %c0_27 = arith.constant 0 : index
    %17 = vector.load %arg14[%c0_26, %c0_27] : memref<1x32xf32, #tpu.memory_space<vmem>>, vector<1x32xf32>
    %18 = arith.truncf %5 : vector<8x32xf32> to vector<8x32xbf16>
    %cst = arith.constant dense<0.000000e+00> : vector<8x32xf32>
    %19 = tpu.matmul %18, %6, %cst {dimension_numbers = #tpu.dot_dimension_numbers<[1], [0], [0], [1], [0, 0, 1, 1], [], []>} : vector<8x32xbf16>, vector<32x32xbf16>, vector<8x32xf32> -> vector<8x32xf32>
    %20 = vector.broadcast %7 : vector<1x32xf32> to vector<8x32xf32>
    %21 = arith.addf %19, %20 : vector<8x32xf32>
    %cst_28 = arith.constant 0.353553385 : f32
    %22 = vector.broadcast %cst_28 : f32 to vector<8x32xf32>
    %23 = arith.mulf %21, %22 : vector<8x32xf32>
    %cst_29 = arith.constant dense<0.000000e+00> : vector<128x64xf32>
    %24 = tpu.matmul %2, %8, %cst_29 {dimension_numbers = #tpu.dot_dimension_numbers<[1], [0], [0], [1], [0, 0, 1, 1], [], []>} : vector<128x32xbf16>, vector<32x64xbf16>, vector<128x64xf32> -> vector<128x64xf32>
    %25 = vector.broadcast %9 : vector<1x64xf32> to vector<128x64xf32>
    %26 = arith.addf %24, %25 : vector<128x64xf32>
    %27 = vector.shape_cast %26 : vector<128x64xf32> to vector<8x16x64xf32>
    %28 = vector.extract_strided_slice %23 {offsets = [0, 0], sizes = [8, 8], strides = [1, 1]} : vector<8x32xf32> to vector<8x8xf32>
    %29 = vector.extract_strided_slice %27 {offsets = [0, 0, 0], sizes = [8, 16, 8], strides = [1, 1, 1]} : vector<8x16x64xf32> to vector<8x16x8xf32>
    %30 = vector.extract_strided_slice %27 {offsets = [0, 0, 32], sizes = [8, 16, 8], strides = [1, 1, 1]} : vector<8x16x64xf32> to vector<8x16x8xf32>
    %31 = vector.shape_cast %28 : vector<8x8xf32> to vector<8x1x8xf32>
    %32 = vector.broadcast %31 : vector<8x1x8xf32> to vector<8x16x8xf32>
    %33 = arith.mulf %32, %29 : vector<8x16x8xf32>
    %cst_30 = arith.constant dense<0.000000e+00> : vector<8x16xf32>
    %34 = vector.multi_reduction <add>, %33, %cst_30 [2] : vector<8x16x8xf32> to vector<8x16xf32>
    %cst_31 = arith.constant dense<0xFF800000> : vector<8xf32>
    %35 = vector.multi_reduction <maximumf>, %34, %cst_31 [1] : vector<8x16xf32> to vector<8xf32>
    %36 = vector.shape_cast %35 : vector<8xf32> to vector<8x1xf32>
    %37 = vector.broadcast %36 : vector<8x1xf32> to vector<8x16xf32>
    %38 = arith.subf %34, %37 : vector<8x16xf32>
    %39 = math.exp %38 : vector<8x16xf32>
    %cst_32 = arith.constant dense<0.000000e+00> : vector<8xf32>
    %40 = vector.multi_reduction <add>, %39, %cst_32 [1] : vector<8x16xf32> to vector<8xf32>
    %41 = vector.shape_cast %40 : vector<8xf32> to vector<8x1xf32>
    %42 = tpu.reciprocal %41 {approx = true} : vector<8x1xf32> -> vector<8x1xf32>
    %43 = vector.broadcast %42 : vector<8x1xf32> to vector<8x16xf32>
    %44 = arith.mulf %39, %43 : vector<8x16xf32>
    %45 = vector.shape_cast %44 : vector<8x16xf32> to vector<8x16x1xf32>
    %46 = vector.broadcast %45 : vector<8x16x1xf32> to vector<8x16x8xf32>
    %47 = arith.mulf %46, %30 : vector<8x16x8xf32>
    %cst_33 = arith.constant dense<0.000000e+00> : vector<8x8xf32>
    %48 = vector.multi_reduction <add>, %47, %cst_33 [1] : vector<8x16x8xf32> to vector<8x8xf32>
    %49 = arith.truncf %48 : vector<8x8xf32> to vector<8x8xbf16>
    %50 = vector.extract_strided_slice %10 {offsets = [0, 0], sizes = [8, 32], strides = [1, 1]} : vector<32x32xbf16> to vector<8x32xbf16>
    %cst_34 = arith.constant dense<0.000000e+00> : vector<8x32xf32>
    %51 = tpu.matmul %49, %50, %cst_34 {dimension_numbers = #tpu.dot_dimension_numbers<[1], [0], [0], [1], [0, 0, 1, 1], [], []>} : vector<8x8xbf16>, vector<8x32xbf16>, vector<8x32xf32> -> vector<8x32xf32>
    %52 = vector.broadcast %11 : vector<1x32xf32> to vector<8x32xf32>
    %53 = arith.addf %52, %51 : vector<8x32xf32>
    %54 = vector.extract_strided_slice %23 {offsets = [0, 8], sizes = [8, 8], strides = [1, 1]} : vector<8x32xf32> to vector<8x8xf32>
    %55 = vector.extract_strided_slice %27 {offsets = [0, 0, 8], sizes = [8, 16, 8], strides = [1, 1, 1]} : vector<8x16x64xf32> to vector<8x16x8xf32>
    %56 = vector.extract_strided_slice %27 {offsets = [0, 0, 40], sizes = [8, 16, 8], strides = [1, 1, 1]} : vector<8x16x64xf32> to vector<8x16x8xf32>
    %57 = vector.shape_cast %54 : vector<8x8xf32> to vector<8x1x8xf32>
    %58 = vector.broadcast %57 : vector<8x1x8xf32> to vector<8x16x8xf32>
    %59 = arith.mulf %58, %55 : vector<8x16x8xf32>
    %cst_35 = arith.constant dense<0.000000e+00> : vector<8x16xf32>
    %60 = vector.multi_reduction <add>, %59, %cst_35 [2] : vector<8x16x8xf32> to vector<8x16xf32>
    %cst_36 = arith.constant dense<0xFF800000> : vector<8xf32>
    %61 = vector.multi_reduction <maximumf>, %60, %cst_36 [1] : vector<8x16xf32> to vector<8xf32>
    %62 = vector.shape_cast %61 : vector<8xf32> to vector<8x1xf32>
    %63 = vector.broadcast %62 : vector<8x1xf32> to vector<8x16xf32>
    %64 = arith.subf %60, %63 : vector<8x16xf32>
    %65 = math.exp %64 : vector<8x16xf32>
    %cst_37 = arith.constant dense<0.000000e+00> : vector<8xf32>
    %66 = vector.multi_reduction <add>, %65, %cst_37 [1] : vector<8x16xf32> to vector<8xf32>
    %67 = vector.shape_cast %66 : vector<8xf32> to vector<8x1xf32>
    %68 = tpu.reciprocal %67 {approx = true} : vector<8x1xf32> -> vector<8x1xf32>
    %69 = vector.broadcast %68 : vector<8x1xf32> to vector<8x16xf32>
    %70 = arith.mulf %65, %69 : vector<8x16xf32>
    %71 = vector.shape_cast %70 : vector<8x16xf32> to vector<8x16x1xf32>
    %72 = vector.broadcast %71 : vector<8x16x1xf32> to vector<8x16x8xf32>
    %73 = arith.mulf %72, %56 : vector<8x16x8xf32>
    %cst_38 = arith.constant dense<0.000000e+00> : vector<8x8xf32>
    %74 = vector.multi_reduction <add>, %73, %cst_38 [1] : vector<8x16x8xf32> to vector<8x8xf32>
    %75 = arith.truncf %74 : vector<8x8xf32> to vector<8x8xbf16>
    %76 = vector.extract_strided_slice %10 {offsets = [8, 0], sizes = [8, 32], strides = [1, 1]} : vector<32x32xbf16> to vector<8x32xbf16>
    %cst_39 = arith.constant dense<0.000000e+00> : vector<8x32xf32>
    %77 = tpu.matmul %75, %76, %cst_39 {dimension_numbers = #tpu.dot_dimension_numbers<[1], [0], [0], [1], [0, 0, 1, 1], [], []>} : vector<8x8xbf16>, vector<8x32xbf16>, vector<8x32xf32> -> vector<8x32xf32>
    %78 = arith.addf %53, %77 : vector<8x32xf32>
    %79 = vector.extract_strided_slice %23 {offsets = [0, 16], sizes = [8, 8], strides = [1, 1]} : vector<8x32xf32> to vector<8x8xf32>
    %80 = vector.extract_strided_slice %27 {offsets = [0, 0, 16], sizes = [8, 16, 8], strides = [1, 1, 1]} : vector<8x16x64xf32> to vector<8x16x8xf32>
    %81 = vector.extract_strided_slice %27 {offsets = [0, 0, 48], sizes = [8, 16, 8], strides = [1, 1, 1]} : vector<8x16x64xf32> to vector<8x16x8xf32>
    %82 = vector.shape_cast %79 : vector<8x8xf32> to vector<8x1x8xf32>
    %83 = vector.broadcast %82 : vector<8x1x8xf32> to vector<8x16x8xf32>
    %84 = arith.mulf %83, %80 : vector<8x16x8xf32>
    %cst_40 = arith.constant dense<0.000000e+00> : vector<8x16xf32>
    %85 = vector.multi_reduction <add>, %84, %cst_40 [2] : vector<8x16x8xf32> to vector<8x16xf32>
    %cst_41 = arith.constant dense<0xFF800000> : vector<8xf32>
    %86 = vector.multi_reduction <maximumf>, %85, %cst_41 [1] : vector<8x16xf32> to vector<8xf32>
    %87 = vector.shape_cast %86 : vector<8xf32> to vector<8x1xf32>
    %88 = vector.broadcast %87 : vector<8x1xf32> to vector<8x16xf32>
    %89 = arith.subf %85, %88 : vector<8x16xf32>
    %90 = math.exp %89 : vector<8x16xf32>
    %cst_42 = arith.constant dense<0.000000e+00> : vector<8xf32>
    %91 = vector.multi_reduction <add>, %90, %cst_42 [1] : vector<8x16xf32> to vector<8xf32>
    %92 = vector.shape_cast %91 : vector<8xf32> to vector<8x1xf32>
    %93 = tpu.reciprocal %92 {approx = true} : vector<8x1xf32> -> vector<8x1xf32>
    %94 = vector.broadcast %93 : vector<8x1xf32> to vector<8x16xf32>
    %95 = arith.mulf %90, %94 : vector<8x16xf32>
    %96 = vector.shape_cast %95 : vector<8x16xf32> to vector<8x16x1xf32>
    %97 = vector.broadcast %96 : vector<8x16x1xf32> to vector<8x16x8xf32>
    %98 = arith.mulf %97, %81 : vector<8x16x8xf32>
    %cst_43 = arith.constant dense<0.000000e+00> : vector<8x8xf32>
    %99 = vector.multi_reduction <add>, %98, %cst_43 [1] : vector<8x16x8xf32> to vector<8x8xf32>
    %100 = arith.truncf %99 : vector<8x8xf32> to vector<8x8xbf16>
    %101 = vector.extract_strided_slice %10 {offsets = [16, 0], sizes = [8, 32], strides = [1, 1]} : vector<32x32xbf16> to vector<8x32xbf16>
    %cst_44 = arith.constant dense<0.000000e+00> : vector<8x32xf32>
    %102 = tpu.matmul %100, %101, %cst_44 {dimension_numbers = #tpu.dot_dimension_numbers<[1], [0], [0], [1], [0, 0, 1, 1], [], []>} : vector<8x8xbf16>, vector<8x32xbf16>, vector<8x32xf32> -> vector<8x32xf32>
    %103 = arith.addf %78, %102 : vector<8x32xf32>
    %104 = vector.extract_strided_slice %23 {offsets = [0, 24], sizes = [8, 8], strides = [1, 1]} : vector<8x32xf32> to vector<8x8xf32>
    %105 = vector.extract_strided_slice %27 {offsets = [0, 0, 24], sizes = [8, 16, 8], strides = [1, 1, 1]} : vector<8x16x64xf32> to vector<8x16x8xf32>
    %106 = vector.extract_strided_slice %27 {offsets = [0, 0, 56], sizes = [8, 16, 8], strides = [1, 1, 1]} : vector<8x16x64xf32> to vector<8x16x8xf32>
    %107 = vector.shape_cast %104 : vector<8x8xf32> to vector<8x1x8xf32>
    %108 = vector.broadcast %107 : vector<8x1x8xf32> to vector<8x16x8xf32>
    %109 = arith.mulf %108, %105 : vector<8x16x8xf32>
    %cst_45 = arith.constant dense<0.000000e+00> : vector<8x16xf32>
    %110 = vector.multi_reduction <add>, %109, %cst_45 [2] : vector<8x16x8xf32> to vector<8x16xf32>
    %cst_46 = arith.constant dense<0xFF800000> : vector<8xf32>
    %111 = vector.multi_reduction <maximumf>, %110, %cst_46 [1] : vector<8x16xf32> to vector<8xf32>
    %112 = vector.shape_cast %111 : vector<8xf32> to vector<8x1xf32>
    %113 = vector.broadcast %112 : vector<8x1xf32> to vector<8x16xf32>
    %114 = arith.subf %110, %113 : vector<8x16xf32>
    %115 = math.exp %114 : vector<8x16xf32>
    %cst_47 = arith.constant dense<0.000000e+00> : vector<8xf32>
    %116 = vector.multi_reduction <add>, %115, %cst_47 [1] : vector<8x16xf32> to vector<8xf32>
    %117 = vector.shape_cast %116 : vector<8xf32> to vector<8x1xf32>
    %118 = tpu.reciprocal %117 {approx = true} : vector<8x1xf32> -> vector<8x1xf32>
    %119 = vector.broadcast %118 : vector<8x1xf32> to vector<8x16xf32>
    %120 = arith.mulf %115, %119 : vector<8x16xf32>
    %121 = vector.shape_cast %120 : vector<8x16xf32> to vector<8x16x1xf32>
    %122 = vector.broadcast %121 : vector<8x16x1xf32> to vector<8x16x8xf32>
    %123 = arith.mulf %122, %106 : vector<8x16x8xf32>
    %cst_48 = arith.constant dense<0.000000e+00> : vector<8x8xf32>
    %124 = vector.multi_reduction <add>, %123, %cst_48 [1] : vector<8x16x8xf32> to vector<8x8xf32>
    %125 = arith.truncf %124 : vector<8x8xf32> to vector<8x8xbf16>
    %126 = vector.extract_strided_slice %10 {offsets = [24, 0], sizes = [8, 32], strides = [1, 1]} : vector<32x32xbf16> to vector<8x32xbf16>
    %cst_49 = arith.constant dense<0.000000e+00> : vector<8x32xf32>
    %127 = tpu.matmul %125, %126, %cst_49 {dimension_numbers = #tpu.dot_dimension_numbers<[1], [0], [0], [1], [0, 0, 1, 1], [], []>} : vector<8x8xbf16>, vector<8x32xbf16>, vector<8x32xf32> -> vector<8x32xf32>
    %128 = arith.addf %103, %127 : vector<8x32xf32>
    %129 = arith.addf %5, %128 : vector<8x32xf32>
    %cst_50 = arith.constant dense<0.000000e+00> : vector<8xf32>
    %130 = vector.multi_reduction <add>, %129, %cst_50 [1] : vector<8x32xf32> to vector<8xf32>
    %131 = vector.shape_cast %130 : vector<8xf32> to vector<8x1xf32>
    %cst_51 = arith.constant 3.200000e+01 : f32
    %132 = vector.broadcast %cst_51 : f32 to vector<8x1xf32>
    %133 = arith.divf %131, %132 : vector<8x1xf32>
    %134 = vector.broadcast %133 : vector<8x1xf32> to vector<8x32xf32>
    %135 = arith.subf %129, %134 : vector<8x32xf32>
    %136 = arith.mulf %135, %135 : vector<8x32xf32>
    %cst_52 = arith.constant dense<0.000000e+00> : vector<8xf32>
    %137 = vector.multi_reduction <add>, %136, %cst_52 [1] : vector<8x32xf32> to vector<8xf32>
    %138 = vector.shape_cast %137 : vector<8xf32> to vector<8x1xf32>
    %cst_53 = arith.constant 3.200000e+01 : f32
    %139 = vector.broadcast %cst_53 : f32 to vector<8x1xf32>
    %140 = arith.divf %138, %139 : vector<8x1xf32>
    %cst_54 = arith.constant 9.99999974E-6 : f32
    %141 = vector.broadcast %cst_54 : f32 to vector<8x1xf32>
    %142 = arith.addf %140, %141 : vector<8x1xf32>
    %143 = math.rsqrt %142 : vector<8x1xf32>
    %144 = vector.broadcast %143 : vector<8x1xf32> to vector<8x32xf32>
    %145 = arith.mulf %135, %144 : vector<8x32xf32>
    %146 = vector.broadcast %12 : vector<1x32xf32> to vector<8x32xf32>
    %147 = arith.mulf %145, %146 : vector<8x32xf32>
    %148 = vector.broadcast %13 : vector<1x32xf32> to vector<8x32xf32>
    %149 = arith.addf %147, %148 : vector<8x32xf32>
    %150 = arith.truncf %149 : vector<8x32xf32> to vector<8x32xbf16>
    %cst_55 = arith.constant dense<0.000000e+00> : vector<8x64xf32>
    %151 = tpu.matmul %150, %14, %cst_55 {dimension_numbers = #tpu.dot_dimension_numbers<[1], [0], [0], [1], [0, 0, 1, 1], [], []>} : vector<8x32xbf16>, vector<32x64xbf16>, vector<8x64xf32> -> vector<8x64xf32>
    %152 = vector.broadcast %15 : vector<1x64xf32> to vector<8x64xf32>
    %153 = arith.addf %151, %152 : vector<8x64xf32>
    %cst_56 = arith.constant 0.000000e+00 : f32
    %154 = vector.broadcast %cst_56 : f32 to vector<8x64xf32>
    %155 = arith.maximumf %153, %154 : vector<8x64xf32>
    %156 = arith.truncf %155 : vector<8x64xf32> to vector<8x64xbf16>
    %cst_57 = arith.constant dense<0.000000e+00> : vector<8x32xf32>
    %157 = tpu.matmul %156, %16, %cst_57 {dimension_numbers = #tpu.dot_dimension_numbers<[1], [0], [0], [1], [0, 0, 1, 1], [], []>} : vector<8x64xbf16>, vector<64x32xbf16>, vector<8x32xf32> -> vector<8x32xf32>
    %158 = vector.broadcast %17 : vector<1x32xf32> to vector<8x32xf32>
    %159 = arith.addf %157, %158 : vector<8x32xf32>
    %160 = arith.addf %149, %159 : vector<8x32xf32>
    %cst_58 = arith.constant dense<0.000000e+00> : vector<8xf32>
    %161 = vector.multi_reduction <add>, %160, %cst_58 [1] : vector<8x32xf32> to vector<8xf32>
    %162 = vector.shape_cast %161 : vector<8xf32> to vector<8x1xf32>
    %cst_59 = arith.constant 3.200000e+01 : f32
    %163 = vector.broadcast %cst_59 : f32 to vector<8x1xf32>
    %164 = arith.divf %162, %163 : vector<8x1xf32>
    %165 = vector.broadcast %164 : vector<8x1xf32> to vector<8x32xf32>
    %166 = arith.subf %160, %165 : vector<8x32xf32>
    %167 = arith.mulf %166, %166 : vector<8x32xf32>
    %cst_60 = arith.constant dense<0.000000e+00> : vector<8xf32>
    %168 = vector.multi_reduction <add>, %167, %cst_60 [1] : vector<8x32xf32> to vector<8xf32>
    %169 = vector.shape_cast %168 : vector<8xf32> to vector<8x1xf32>
    %cst_61 = arith.constant 3.200000e+01 : f32
    %170 = vector.broadcast %cst_61 : f32 to vector<8x1xf32>
    %171 = arith.divf %169, %170 : vector<8x1xf32>
    %cst_62 = arith.constant 9.99999974E-6 : f32
    %172 = vector.broadcast %cst_62 : f32 to vector<8x1xf32>
    %173 = arith.addf %171, %172 : vector<8x1xf32>
    %174 = math.rsqrt %173 : vector<8x1xf32>
    %175 = vector.broadcast %174 : vector<8x1xf32> to vector<8x32xf32>
    %176 = arith.mulf %166, %175 : vector<8x32xf32>
    %177 = vector.broadcast %12 : vector<1x32xf32> to vector<8x32xf32>
    %178 = arith.mulf %176, %177 : vector<8x32xf32>
    %179 = vector.broadcast %13 : vector<1x32xf32> to vector<8x32xf32>
    %180 = arith.addf %178, %179 : vector<8x32xf32>
    %c0_63 = arith.constant 0 : index
    %c0_64 = arith.constant 0 : index
    %181 = vector.load %arg15[%c0_63, %c0_64] : memref<32x32xbf16, #tpu.memory_space<vmem>>, vector<32x32xbf16>
    %c0_65 = arith.constant 0 : index
    %c0_66 = arith.constant 0 : index
    %182 = vector.load %arg16[%c0_65, %c0_66] : memref<1x32xf32, #tpu.memory_space<vmem>>, vector<1x32xf32>
    %c0_67 = arith.constant 0 : index
    %c0_68 = arith.constant 0 : index
    %183 = vector.load %arg17[%c0_67, %c0_68] : memref<32x32xbf16, #tpu.memory_space<vmem>>, vector<32x32xbf16>
    %c0_69 = arith.constant 0 : index
    %c0_70 = arith.constant 0 : index
    %184 = vector.load %arg18[%c0_69, %c0_70] : memref<1x32xf32, #tpu.memory_space<vmem>>, vector<1x32xf32>
    %c0_71 = arith.constant 0 : index
    %c0_72 = arith.constant 0 : index
    %185 = vector.load %arg19[%c0_71, %c0_72] : memref<32x32xbf16, #tpu.memory_space<vmem>>, vector<32x32xbf16>
    %c0_73 = arith.constant 0 : index
    %c0_74 = arith.constant 0 : index
    %186 = vector.load %arg20[%c0_73, %c0_74] : memref<1x32xf32, #tpu.memory_space<vmem>>, vector<1x32xf32>
    %c0_75 = arith.constant 0 : index
    %c0_76 = arith.constant 0 : index
    %187 = vector.load %arg21[%c0_75, %c0_76] : memref<32x64xbf16, #tpu.memory_space<vmem>>, vector<32x64xbf16>
    %c0_77 = arith.constant 0 : index
    %c0_78 = arith.constant 0 : index
    %188 = vector.load %arg22[%c0_77, %c0_78] : memref<1x64xf32, #tpu.memory_space<vmem>>, vector<1x64xf32>
    %c0_79 = arith.constant 0 : index
    %c0_80 = arith.constant 0 : index
    %189 = vector.load %arg23[%c0_79, %c0_80] : memref<32x32xbf16, #tpu.memory_space<vmem>>, vector<32x32xbf16>
    %c0_81 = arith.constant 0 : index
    %c0_82 = arith.constant 0 : index
    %190 = vector.load %arg24[%c0_81, %c0_82] : memref<1x32xf32, #tpu.memory_space<vmem>>, vector<1x32xf32>
    %c0_83 = arith.constant 0 : index
    %c0_84 = arith.constant 0 : index
    %191 = vector.load %arg25[%c0_83, %c0_84] : memref<1x32xf32, #tpu.memory_space<vmem>>, vector<1x32xf32>
    %c0_85 = arith.constant 0 : index
    %c0_86 = arith.constant 0 : index
    %192 = vector.load %arg26[%c0_85, %c0_86] : memref<1x32xf32, #tpu.memory_space<vmem>>, vector<1x32xf32>
    %c0_87 = arith.constant 0 : index
    %c0_88 = arith.constant 0 : index
    %193 = vector.load %arg27[%c0_87, %c0_88] : memref<32x64xbf16, #tpu.memory_space<vmem>>, vector<32x64xbf16>
    %c0_89 = arith.constant 0 : index
    %c0_90 = arith.constant 0 : index
    %194 = vector.load %arg28[%c0_89, %c0_90] : memref<1x64xf32, #tpu.memory_space<vmem>>, vector<1x64xf32>
    %c0_91 = arith.constant 0 : index
    %c0_92 = arith.constant 0 : index
    %195 = vector.load %arg29[%c0_91, %c0_92] : memref<64x32xbf16, #tpu.memory_space<vmem>>, vector<64x32xbf16>
    %c0_93 = arith.constant 0 : index
    %c0_94 = arith.constant 0 : index
    %196 = vector.load %arg30[%c0_93, %c0_94] : memref<1x32xf32, #tpu.memory_space<vmem>>, vector<1x32xf32>
    %197 = arith.truncf %180 : vector<8x32xf32> to vector<8x32xbf16>
    %cst_95 = arith.constant dense<0.000000e+00> : vector<8x32xf32>
    %198 = tpu.matmul %197, %181, %cst_95 {dimension_numbers = #tpu.dot_dimension_numbers<[1], [0], [0], [1], [0, 0, 1, 1], [], []>} : vector<8x32xbf16>, vector<32x32xbf16>, vector<8x32xf32> -> vector<8x32xf32>
    %199 = vector.broadcast %182 : vector<1x32xf32> to vector<8x32xf32>
    %200 = arith.addf %198, %199 : vector<8x32xf32>
    %201 = arith.truncf %200 : vector<8x32xf32> to vector<8x32xbf16>
    %cst_96 = arith.constant dense<0.000000e+00> : vector<8x32xf32>
    %202 = tpu.matmul %201, %183, %cst_96 {dimension_numbers = #tpu.dot_dimension_numbers<[1], [0], [0], [1], [0, 0, 1, 1], [], []>} : vector<8x32xbf16>, vector<32x32xbf16>, vector<8x32xf32> -> vector<8x32xf32>
    %203 = vector.broadcast %184 : vector<1x32xf32> to vector<8x32xf32>
    %204 = arith.addf %202, %203 : vector<8x32xf32>
    %205 = arith.addf %180, %204 : vector<8x32xf32>
    %cst_97 = arith.constant dense<0.000000e+00> : vector<8xf32>
    %206 = vector.multi_reduction <add>, %205, %cst_97 [1] : vector<8x32xf32> to vector<8xf32>
    %207 = vector.shape_cast %206 : vector<8xf32> to vector<8x1xf32>
    %cst_98 = arith.constant 3.200000e+01 : f32
    %208 = vector.broadcast %cst_98 : f32 to vector<8x1xf32>
    %209 = arith.divf %207, %208 : vector<8x1xf32>
    %210 = vector.broadcast %209 : vector<8x1xf32> to vector<8x32xf32>
    %211 = arith.subf %205, %210 : vector<8x32xf32>
    %212 = arith.mulf %211, %211 : vector<8x32xf32>
    %cst_99 = arith.constant dense<0.000000e+00> : vector<8xf32>
    %213 = vector.multi_reduction <add>, %212, %cst_99 [1] : vector<8x32xf32> to vector<8xf32>
    %214 = vector.shape_cast %213 : vector<8xf32> to vector<8x1xf32>
    %cst_100 = arith.constant 3.200000e+01 : f32
    %215 = vector.broadcast %cst_100 : f32 to vector<8x1xf32>
    %216 = arith.divf %214, %215 : vector<8x1xf32>
    %cst_101 = arith.constant 9.99999974E-6 : f32
    %217 = vector.broadcast %cst_101 : f32 to vector<8x1xf32>
    %218 = arith.addf %216, %217 : vector<8x1xf32>
    %219 = math.rsqrt %218 : vector<8x1xf32>
    %220 = vector.broadcast %219 : vector<8x1xf32> to vector<8x32xf32>
    %221 = arith.mulf %211, %220 : vector<8x32xf32>
    %222 = vector.broadcast %191 : vector<1x32xf32> to vector<8x32xf32>
    %223 = arith.mulf %221, %222 : vector<8x32xf32>
    %224 = vector.broadcast %192 : vector<1x32xf32> to vector<8x32xf32>
    %225 = arith.addf %223, %224 : vector<8x32xf32>
    %226 = arith.truncf %225 : vector<8x32xf32> to vector<8x32xbf16>
    %cst_102 = arith.constant dense<0.000000e+00> : vector<8x32xf32>
    %227 = tpu.matmul %226, %185, %cst_102 {dimension_numbers = #tpu.dot_dimension_numbers<[1], [0], [0], [1], [0, 0, 1, 1], [], []>} : vector<8x32xbf16>, vector<32x32xbf16>, vector<8x32xf32> -> vector<8x32xf32>
    %228 = vector.broadcast %186 : vector<1x32xf32> to vector<8x32xf32>
    %229 = arith.addf %227, %228 : vector<8x32xf32>
    %cst_103 = arith.constant 0.353553385 : f32
    %230 = vector.broadcast %cst_103 : f32 to vector<8x32xf32>
    %231 = arith.mulf %229, %230 : vector<8x32xf32>
    %cst_104 = arith.constant dense<0.000000e+00> : vector<128x64xf32>
    %232 = tpu.matmul %2, %187, %cst_104 {dimension_numbers = #tpu.dot_dimension_numbers<[1], [0], [0], [1], [0, 0, 1, 1], [], []>} : vector<128x32xbf16>, vector<32x64xbf16>, vector<128x64xf32> -> vector<128x64xf32>
    %233 = vector.broadcast %188 : vector<1x64xf32> to vector<128x64xf32>
    %234 = arith.addf %232, %233 : vector<128x64xf32>
    %235 = vector.shape_cast %234 : vector<128x64xf32> to vector<8x16x64xf32>
    %236 = vector.extract_strided_slice %231 {offsets = [0, 0], sizes = [8, 8], strides = [1, 1]} : vector<8x32xf32> to vector<8x8xf32>
    %237 = vector.extract_strided_slice %235 {offsets = [0, 0, 0], sizes = [8, 16, 8], strides = [1, 1, 1]} : vector<8x16x64xf32> to vector<8x16x8xf32>
    %238 = vector.extract_strided_slice %235 {offsets = [0, 0, 32], sizes = [8, 16, 8], strides = [1, 1, 1]} : vector<8x16x64xf32> to vector<8x16x8xf32>
    %239 = vector.shape_cast %236 : vector<8x8xf32> to vector<8x1x8xf32>
    %240 = vector.broadcast %239 : vector<8x1x8xf32> to vector<8x16x8xf32>
    %241 = arith.mulf %240, %237 : vector<8x16x8xf32>
    %cst_105 = arith.constant dense<0.000000e+00> : vector<8x16xf32>
    %242 = vector.multi_reduction <add>, %241, %cst_105 [2] : vector<8x16x8xf32> to vector<8x16xf32>
    %cst_106 = arith.constant dense<0xFF800000> : vector<8xf32>
    %243 = vector.multi_reduction <maximumf>, %242, %cst_106 [1] : vector<8x16xf32> to vector<8xf32>
    %244 = vector.shape_cast %243 : vector<8xf32> to vector<8x1xf32>
    %245 = vector.broadcast %244 : vector<8x1xf32> to vector<8x16xf32>
    %246 = arith.subf %242, %245 : vector<8x16xf32>
    %247 = math.exp %246 : vector<8x16xf32>
    %cst_107 = arith.constant dense<0.000000e+00> : vector<8xf32>
    %248 = vector.multi_reduction <add>, %247, %cst_107 [1] : vector<8x16xf32> to vector<8xf32>
    %249 = vector.shape_cast %248 : vector<8xf32> to vector<8x1xf32>
    %250 = tpu.reciprocal %249 {approx = true} : vector<8x1xf32> -> vector<8x1xf32>
    %251 = vector.broadcast %250 : vector<8x1xf32> to vector<8x16xf32>
    %252 = arith.mulf %247, %251 : vector<8x16xf32>
    %253 = vector.shape_cast %252 : vector<8x16xf32> to vector<8x16x1xf32>
    %254 = vector.broadcast %253 : vector<8x16x1xf32> to vector<8x16x8xf32>
    %255 = arith.mulf %254, %238 : vector<8x16x8xf32>
    %cst_108 = arith.constant dense<0.000000e+00> : vector<8x8xf32>
    %256 = vector.multi_reduction <add>, %255, %cst_108 [1] : vector<8x16x8xf32> to vector<8x8xf32>
    %257 = arith.truncf %256 : vector<8x8xf32> to vector<8x8xbf16>
    %258 = vector.extract_strided_slice %189 {offsets = [0, 0], sizes = [8, 32], strides = [1, 1]} : vector<32x32xbf16> to vector<8x32xbf16>
    %cst_109 = arith.constant dense<0.000000e+00> : vector<8x32xf32>
    %259 = tpu.matmul %257, %258, %cst_109 {dimension_numbers = #tpu.dot_dimension_numbers<[1], [0], [0], [1], [0, 0, 1, 1], [], []>} : vector<8x8xbf16>, vector<8x32xbf16>, vector<8x32xf32> -> vector<8x32xf32>
    %260 = vector.broadcast %190 : vector<1x32xf32> to vector<8x32xf32>
    %261 = arith.addf %260, %259 : vector<8x32xf32>
    %262 = vector.shape_cast %252 : vector<8x16xf32> to vector<8x1x16xf32>
    %263 = vector.extract_strided_slice %231 {offsets = [0, 8], sizes = [8, 8], strides = [1, 1]} : vector<8x32xf32> to vector<8x8xf32>
    %264 = vector.extract_strided_slice %235 {offsets = [0, 0, 8], sizes = [8, 16, 8], strides = [1, 1, 1]} : vector<8x16x64xf32> to vector<8x16x8xf32>
    %265 = vector.extract_strided_slice %235 {offsets = [0, 0, 40], sizes = [8, 16, 8], strides = [1, 1, 1]} : vector<8x16x64xf32> to vector<8x16x8xf32>
    %266 = vector.shape_cast %263 : vector<8x8xf32> to vector<8x1x8xf32>
    %267 = vector.broadcast %266 : vector<8x1x8xf32> to vector<8x16x8xf32>
    %268 = arith.mulf %267, %264 : vector<8x16x8xf32>
    %cst_110 = arith.constant dense<0.000000e+00> : vector<8x16xf32>
    %269 = vector.multi_reduction <add>, %268, %cst_110 [2] : vector<8x16x8xf32> to vector<8x16xf32>
    %cst_111 = arith.constant dense<0xFF800000> : vector<8xf32>
    %270 = vector.multi_reduction <maximumf>, %269, %cst_111 [1] : vector<8x16xf32> to vector<8xf32>
    %271 = vector.shape_cast %270 : vector<8xf32> to vector<8x1xf32>
    %272 = vector.broadcast %271 : vector<8x1xf32> to vector<8x16xf32>
    %273 = arith.subf %269, %272 : vector<8x16xf32>
    %274 = math.exp %273 : vector<8x16xf32>
    %cst_112 = arith.constant dense<0.000000e+00> : vector<8xf32>
    %275 = vector.multi_reduction <add>, %274, %cst_112 [1] : vector<8x16xf32> to vector<8xf32>
    %276 = vector.shape_cast %275 : vector<8xf32> to vector<8x1xf32>
    %277 = tpu.reciprocal %276 {approx = true} : vector<8x1xf32> -> vector<8x1xf32>
    %278 = vector.broadcast %277 : vector<8x1xf32> to vector<8x16xf32>
    %279 = arith.mulf %274, %278 : vector<8x16xf32>
    %280 = vector.shape_cast %279 : vector<8x16xf32> to vector<8x16x1xf32>
    %281 = vector.broadcast %280 : vector<8x16x1xf32> to vector<8x16x8xf32>
    %282 = arith.mulf %281, %265 : vector<8x16x8xf32>
    %cst_113 = arith.constant dense<0.000000e+00> : vector<8x8xf32>
    %283 = vector.multi_reduction <add>, %282, %cst_113 [1] : vector<8x16x8xf32> to vector<8x8xf32>
    %284 = arith.truncf %283 : vector<8x8xf32> to vector<8x8xbf16>
    %285 = vector.extract_strided_slice %189 {offsets = [8, 0], sizes = [8, 32], strides = [1, 1]} : vector<32x32xbf16> to vector<8x32xbf16>
    %cst_114 = arith.constant dense<0.000000e+00> : vector<8x32xf32>
    %286 = tpu.matmul %284, %285, %cst_114 {dimension_numbers = #tpu.dot_dimension_numbers<[1], [0], [0], [1], [0, 0, 1, 1], [], []>} : vector<8x8xbf16>, vector<8x32xbf16>, vector<8x32xf32> -> vector<8x32xf32>
    %287 = arith.addf %261, %286 : vector<8x32xf32>
    %288 = vector.shape_cast %279 : vector<8x16xf32> to vector<8x1x16xf32>
    %289 = vector.extract_strided_slice %231 {offsets = [0, 16], sizes = [8, 8], strides = [1, 1]} : vector<8x32xf32> to vector<8x8xf32>
    %290 = vector.extract_strided_slice %235 {offsets = [0, 0, 16], sizes = [8, 16, 8], strides = [1, 1, 1]} : vector<8x16x64xf32> to vector<8x16x8xf32>
    %291 = vector.extract_strided_slice %235 {offsets = [0, 0, 48], sizes = [8, 16, 8], strides = [1, 1, 1]} : vector<8x16x64xf32> to vector<8x16x8xf32>
    %292 = vector.shape_cast %289 : vector<8x8xf32> to vector<8x1x8xf32>
    %293 = vector.broadcast %292 : vector<8x1x8xf32> to vector<8x16x8xf32>
    %294 = arith.mulf %293, %290 : vector<8x16x8xf32>
    %cst_115 = arith.constant dense<0.000000e+00> : vector<8x16xf32>
    %295 = vector.multi_reduction <add>, %294, %cst_115 [2] : vector<8x16x8xf32> to vector<8x16xf32>
    %cst_116 = arith.constant dense<0xFF800000> : vector<8xf32>
    %296 = vector.multi_reduction <maximumf>, %295, %cst_116 [1] : vector<8x16xf32> to vector<8xf32>
    %297 = vector.shape_cast %296 : vector<8xf32> to vector<8x1xf32>
    %298 = vector.broadcast %297 : vector<8x1xf32> to vector<8x16xf32>
    %299 = arith.subf %295, %298 : vector<8x16xf32>
    %300 = math.exp %299 : vector<8x16xf32>
    %cst_117 = arith.constant dense<0.000000e+00> : vector<8xf32>
    %301 = vector.multi_reduction <add>, %300, %cst_117 [1] : vector<8x16xf32> to vector<8xf32>
    %302 = vector.shape_cast %301 : vector<8xf32> to vector<8x1xf32>
    %303 = tpu.reciprocal %302 {approx = true} : vector<8x1xf32> -> vector<8x1xf32>
    %304 = vector.broadcast %303 : vector<8x1xf32> to vector<8x16xf32>
    %305 = arith.mulf %300, %304 : vector<8x16xf32>
    %306 = vector.shape_cast %305 : vector<8x16xf32> to vector<8x16x1xf32>
    %307 = vector.broadcast %306 : vector<8x16x1xf32> to vector<8x16x8xf32>
    %308 = arith.mulf %307, %291 : vector<8x16x8xf32>
    %cst_118 = arith.constant dense<0.000000e+00> : vector<8x8xf32>
    %309 = vector.multi_reduction <add>, %308, %cst_118 [1] : vector<8x16x8xf32> to vector<8x8xf32>
    %310 = arith.truncf %309 : vector<8x8xf32> to vector<8x8xbf16>
    %311 = vector.extract_strided_slice %189 {offsets = [16, 0], sizes = [8, 32], strides = [1, 1]} : vector<32x32xbf16> to vector<8x32xbf16>
    %cst_119 = arith.constant dense<0.000000e+00> : vector<8x32xf32>
    %312 = tpu.matmul %310, %311, %cst_119 {dimension_numbers = #tpu.dot_dimension_numbers<[1], [0], [0], [1], [0, 0, 1, 1], [], []>} : vector<8x8xbf16>, vector<8x32xbf16>, vector<8x32xf32> -> vector<8x32xf32>
    %313 = arith.addf %287, %312 : vector<8x32xf32>
    %314 = vector.shape_cast %305 : vector<8x16xf32> to vector<8x1x16xf32>
    %315 = vector.extract_strided_slice %231 {offsets = [0, 24], sizes = [8, 8], strides = [1, 1]} : vector<8x32xf32> to vector<8x8xf32>
    %316 = vector.extract_strided_slice %235 {offsets = [0, 0, 24], sizes = [8, 16, 8], strides = [1, 1, 1]} : vector<8x16x64xf32> to vector<8x16x8xf32>
    %317 = vector.extract_strided_slice %235 {offsets = [0, 0, 56], sizes = [8, 16, 8], strides = [1, 1, 1]} : vector<8x16x64xf32> to vector<8x16x8xf32>
    %318 = vector.shape_cast %315 : vector<8x8xf32> to vector<8x1x8xf32>
    %319 = vector.broadcast %318 : vector<8x1x8xf32> to vector<8x16x8xf32>
    %320 = arith.mulf %319, %316 : vector<8x16x8xf32>
    %cst_120 = arith.constant dense<0.000000e+00> : vector<8x16xf32>
    %321 = vector.multi_reduction <add>, %320, %cst_120 [2] : vector<8x16x8xf32> to vector<8x16xf32>
    %cst_121 = arith.constant dense<0xFF800000> : vector<8xf32>
    %322 = vector.multi_reduction <maximumf>, %321, %cst_121 [1] : vector<8x16xf32> to vector<8xf32>
    %323 = vector.shape_cast %322 : vector<8xf32> to vector<8x1xf32>
    %324 = vector.broadcast %323 : vector<8x1xf32> to vector<8x16xf32>
    %325 = arith.subf %321, %324 : vector<8x16xf32>
    %326 = math.exp %325 : vector<8x16xf32>
    %cst_122 = arith.constant dense<0.000000e+00> : vector<8xf32>
    %327 = vector.multi_reduction <add>, %326, %cst_122 [1] : vector<8x16xf32> to vector<8xf32>
    %328 = vector.shape_cast %327 : vector<8xf32> to vector<8x1xf32>
    %329 = tpu.reciprocal %328 {approx = true} : vector<8x1xf32> -> vector<8x1xf32>
    %330 = vector.broadcast %329 : vector<8x1xf32> to vector<8x16xf32>
    %331 = arith.mulf %326, %330 : vector<8x16xf32>
    %332 = vector.shape_cast %331 : vector<8x16xf32> to vector<8x16x1xf32>
    %333 = vector.broadcast %332 : vector<8x16x1xf32> to vector<8x16x8xf32>
    %334 = arith.mulf %333, %317 : vector<8x16x8xf32>
    %cst_123 = arith.constant dense<0.000000e+00> : vector<8x8xf32>
    %335 = vector.multi_reduction <add>, %334, %cst_123 [1] : vector<8x16x8xf32> to vector<8x8xf32>
    %336 = arith.truncf %335 : vector<8x8xf32> to vector<8x8xbf16>
    %337 = vector.extract_strided_slice %189 {offsets = [24, 0], sizes = [8, 32], strides = [1, 1]} : vector<32x32xbf16> to vector<8x32xbf16>
    %cst_124 = arith.constant dense<0.000000e+00> : vector<8x32xf32>
    %338 = tpu.matmul %336, %337, %cst_124 {dimension_numbers = #tpu.dot_dimension_numbers<[1], [0], [0], [1], [0, 0, 1, 1], [], []>} : vector<8x8xbf16>, vector<8x32xbf16>, vector<8x32xf32> -> vector<8x32xf32>
    %339 = arith.addf %313, %338 : vector<8x32xf32>
    %340 = vector.shape_cast %331 : vector<8x16xf32> to vector<8x1x16xf32>
    %341 = tpu.concatenate %262, %288, %314, %340 in 1 : vector<8x1x16xf32>, vector<8x1x16xf32>, vector<8x1x16xf32>, vector<8x1x16xf32> -> vector<8x4x16xf32>
    %c0_125 = arith.constant 0 : index
    %c0_126 = arith.constant 0 : index
    %c0_127 = arith.constant 0 : index
    %342 = vector.load %arg32[%c0_125, %c0_126, %c0_127] : memref<8x4x16xf32, #tpu.memory_space<vmem>>, vector<8x4x16xf32>
    tpu.vector_store %arg32[%c0_125, %c0_126, %c0_127], %341 {strides = array<i32>} : memref<8x4x16xf32, #tpu.memory_space<vmem>>, vector<8x4x16xf32>,
    %343 = arith.addf %225, %339 : vector<8x32xf32>
    %cst_128 = arith.constant dense<0.000000e+00> : vector<8xf32>
    %344 = vector.multi_reduction <add>, %343, %cst_128 [1] : vector<8x32xf32> to vector<8xf32>
    %345 = vector.shape_cast %344 : vector<8xf32> to vector<8x1xf32>
    %cst_129 = arith.constant 3.200000e+01 : f32
    %346 = vector.broadcast %cst_129 : f32 to vector<8x1xf32>
    %347 = arith.divf %345, %346 : vector<8x1xf32>
    %348 = vector.broadcast %347 : vector<8x1xf32> to vector<8x32xf32>
    %349 = arith.subf %343, %348 : vector<8x32xf32>
    %350 = arith.mulf %349, %349 : vector<8x32xf32>
    %cst_130 = arith.constant dense<0.000000e+00> : vector<8xf32>
    %351 = vector.multi_reduction <add>, %350, %cst_130 [1] : vector<8x32xf32> to vector<8xf32>
    %352 = vector.shape_cast %351 : vector<8xf32> to vector<8x1xf32>
    %cst_131 = arith.constant 3.200000e+01 : f32
    %353 = vector.broadcast %cst_131 : f32 to vector<8x1xf32>
    %354 = arith.divf %352, %353 : vector<8x1xf32>
    %cst_132 = arith.constant 9.99999974E-6 : f32
    %355 = vector.broadcast %cst_132 : f32 to vector<8x1xf32>
    %356 = arith.addf %354, %355 : vector<8x1xf32>
    %357 = math.rsqrt %356 : vector<8x1xf32>
    %358 = vector.broadcast %357 : vector<8x1xf32> to vector<8x32xf32>
    %359 = arith.mulf %349, %358 : vector<8x32xf32>
    %360 = vector.broadcast %191 : vector<1x32xf32> to vector<8x32xf32>
    %361 = arith.mulf %359, %360 : vector<8x32xf32>
    %362 = vector.broadcast %192 : vector<1x32xf32> to vector<8x32xf32>
    %363 = arith.addf %361, %362 : vector<8x32xf32>
    %364 = arith.truncf %363 : vector<8x32xf32> to vector<8x32xbf16>
    %cst_133 = arith.constant dense<0.000000e+00> : vector<8x64xf32>
    %365 = tpu.matmul %364, %193, %cst_133 {dimension_numbers = #tpu.dot_dimension_numbers<[1], [0], [0], [1], [0, 0, 1, 1], [], []>} : vector<8x32xbf16>, vector<32x64xbf16>, vector<8x64xf32> -> vector<8x64xf32>
    %366 = vector.broadcast %194 : vector<1x64xf32> to vector<8x64xf32>
    %367 = arith.addf %365, %366 : vector<8x64xf32>
    %cst_134 = arith.constant 0.000000e+00 : f32
    %368 = vector.broadcast %cst_134 : f32 to vector<8x64xf32>
    %369 = arith.maximumf %367, %368 : vector<8x64xf32>
    %370 = arith.truncf %369 : vector<8x64xf32> to vector<8x64xbf16>
    %cst_135 = arith.constant dense<0.000000e+00> : vector<8x32xf32>
    %371 = tpu.matmul %370, %195, %cst_135 {dimension_numbers = #tpu.dot_dimension_numbers<[1], [0], [0], [1], [0, 0, 1, 1], [], []>} : vector<8x64xbf16>, vector<64x32xbf16>, vector<8x32xf32> -> vector<8x32xf32>
    %372 = vector.broadcast %196 : vector<1x32xf32> to vector<8x32xf32>
    %373 = arith.addf %371, %372 : vector<8x32xf32>
    %374 = arith.addf %363, %373 : vector<8x32xf32>
    %cst_136 = arith.constant dense<0.000000e+00> : vector<8xf32>
    %375 = vector.multi_reduction <add>, %374, %cst_136 [1] : vector<8x32xf32> to vector<8xf32>
    %376 = vector.shape_cast %375 : vector<8xf32> to vector<8x1xf32>
    %cst_137 = arith.constant 3.200000e+01 : f32
    %377 = vector.broadcast %cst_137 : f32 to vector<8x1xf32>
    %378 = arith.divf %376, %377 : vector<8x1xf32>
    %379 = vector.broadcast %378 : vector<8x1xf32> to vector<8x32xf32>
    %380 = arith.subf %374, %379 : vector<8x32xf32>
    %381 = arith.mulf %380, %380 : vector<8x32xf32>
    %cst_138 = arith.constant dense<0.000000e+00> : vector<8xf32>
    %382 = vector.multi_reduction <add>, %381, %cst_138 [1] : vector<8x32xf32> to vector<8xf32>
    %383 = vector.shape_cast %382 : vector<8xf32> to vector<8x1xf32>
    %cst_139 = arith.constant 3.200000e+01 : f32
    %384 = vector.broadcast %cst_139 : f32 to vector<8x1xf32>
    %385 = arith.divf %383, %384 : vector<8x1xf32>
    %cst_140 = arith.constant 9.99999974E-6 : f32
    %386 = vector.broadcast %cst_140 : f32 to vector<8x1xf32>
    %387 = arith.addf %385, %386 : vector<8x1xf32>
    %388 = math.rsqrt %387 : vector<8x1xf32>
    %389 = vector.broadcast %388 : vector<8x1xf32> to vector<8x32xf32>
    %390 = arith.mulf %380, %389 : vector<8x32xf32>
    %391 = vector.broadcast %191 : vector<1x32xf32> to vector<8x32xf32>
    %392 = arith.mulf %390, %391 : vector<8x32xf32>
    %393 = vector.broadcast %192 : vector<1x32xf32> to vector<8x32xf32>
    %394 = arith.addf %392, %393 : vector<8x32xf32>
    %c0_141 = arith.constant 0 : index
    %c0_142 = arith.constant 0 : index
    %395 = vector.load %arg31[%c0_141, %c0_142] : memref<8x32xf32, #tpu.memory_space<vmem>>, vector<8x32xf32>
    tpu.vector_store %arg31[%c0_141, %c0_142], %394 {strides = array<i32>} : memref<8x32xf32, #tpu.memory_space<vmem>>, vector<8x32xf32>,
    return
  }
  func.func @transform_0(%arg0: i32) -> (i32, i32, i32) {
    %c0_i32 = arith.constant 0 : i32
    %c0_i32_0 = arith.constant 0 : i32
    %c0_i32_1 = arith.constant 0 : i32
    return %arg0, %c0_i32, %c0_i32_0 : i32, i32, i32
  }
  func.func @transform_1(%arg0: i32) -> (i32, i32) {
    %c0_i32 = arith.constant 0 : i32
    %c0_i32_0 = arith.constant 0 : i32
    %c0_i32_1 = arith.constant 0 : i32
    return %c0_i32, %c0_i32_0 : i32, i32
  }
  func.func @transform_2(%arg0: i32) -> (i32, i32) {
    %c0_i32 = arith.constant 0 : i32
    %c0_i32_0 = arith.constant 0 : i32
    %c0_i32_1 = arith.constant 0 : i32
    return %c0_i32, %c0_i32_0 : i32, i32
  }
  func.func @transform_3(%arg0: i32) -> (i32, i32) {
    %c0_i32 = arith.constant 0 : i32
    %c0_i32_0 = arith.constant 0 : i32
    %c0_i32_1 = arith.constant 0 : i32
    return %c0_i32, %c0_i32_0 : i32, i32
  }
  func.func @transform_4(%arg0: i32) -> (i32, i32) {
    %c0_i32 = arith.constant 0 : i32
    %c0_i32_0 = arith.constant 0 : i32
    %c0_i32_1 = arith.constant 0 : i32
    return %c0_i32, %c0_i32_0 : i32, i32
  }
  func.func @transform_5(%arg0: i32) -> (i32, i32) {
    %c0_i32 = arith.constant 0 : i32
    %c0_i32_0 = arith.constant 0 : i32
    %c0_i32_1 = arith.constant 0 : i32
    return %c0_i32, %c0_i32_0 : i32, i32
  }
  func.func @transform_6(%arg0: i32) -> (i32, i32) {
    %c0_i32 = arith.constant 0 : i32
    %c0_i32_0 = arith.constant 0 : i32
    %c0_i32_1 = arith.constant 0 : i32
    return %c0_i32, %c0_i32_0 : i32, i32
  }
  func.func @transform_7(%arg0: i32) -> (i32, i32) {
    %c0_i32 = arith.constant 0 : i32
    %c0_i32_0 = arith.constant 0 : i32
    %c0_i32_1 = arith.constant 0 : i32
    return %c0_i32, %c0_i32_0 : i32, i32
  }
  func.func @transform_8(%arg0: i32) -> (i32, i32) {
    %c0_i32 = arith.constant 0 : i32
    %c0_i32_0 = arith.constant 0 : i32
    %c0_i32_1 = arith.constant 0 : i32
    return %c0_i32, %c0_i32_0 : i32, i32
  }
  func.func @transform_9(%arg0: i32) -> (i32, i32) {
    %c0_i32 = arith.constant 0 : i32
    %c0_i32_0 = arith.constant 0 : i32
    %c0_i32_1 = arith.constant 0 : i32
    return %c0_i32, %c0_i32_0 : i32, i32
  }
  func.func @transform_10(%arg0: i32) -> (i32, i32) {
    %c0_i32 = arith.constant 0 : i32
    %c0_i32_0 = arith.constant 0 : i32
    %c0_i32_1 = arith.constant 0 : i32
    return %c0_i32, %c0_i32_0 : i32, i32
  }
  func.func @transform_11(%arg0: i32) -> (i32, i32) {
    %c0_i32 = arith.constant 0 : i32
    %c0_i32_0 = arith.constant 0 : i32
    %c0_i32_1 = arith.constant 0 : i32
    return %c0_i32, %c0_i32_0 : i32, i32
  }
  func.func @transform_12(%arg0: i32) -> (i32, i32) {
    %c0_i32 = arith.constant 0 : i32
    %c0_i32_0 = arith.constant 0 : i32
    %c0_i32_1 = arith.constant 0 : i32
    return %c0_i32, %c0_i32_0 : i32, i32
  }
  func.func @transform_13(%arg0: i32) -> (i32, i32) {
    %c0_i32 = arith.constant 0 : i32
    %c0_i32_0 = arith.constant 0 : i32
    %c0_i32_1 = arith.constant 0 : i32
    return %c0_i32, %c0_i32_0 : i32, i32
  }
  func.func @transform_14(%arg0: i32) -> (i32, i32) {
    %c0_i32 = arith.constant 0 : i32
    %c0_i32_0 = arith.constant 0 : i32
    %c0_i32_1 = arith.constant 0 : i32
    return %c0_i32, %c0_i32_0 : i32, i32
  }
  func.func @transform_15(%arg0: i32) -> (i32, i32) {
    %c0_i32 = arith.constant 0 : i32
    %c0_i32_0 = arith.constant 0 : i32
    %c0_i32_1 = arith.constant 0 : i32
    return %c0_i32, %c0_i32_0 : i32, i32
  }
  func.func @transform_16(%arg0: i32) -> (i32, i32) {
    %c0_i32 = arith.constant 0 : i32
    %c0_i32_0 = arith.constant 0 : i32
    %c0_i32_1 = arith.constant 0 : i32
    return %c0_i32, %c0_i32_0 : i32, i32
  }
  func.func @transform_17(%arg0: i32) -> (i32, i32) {
    %c0_i32 = arith.constant 0 : i32
    %c0_i32_0 = arith.constant 0 : i32
    %c0_i32_1 = arith.constant 0 : i32
    return %c0_i32, %c0_i32_0 : i32, i32
  }
  func.func @transform_18(%arg0: i32) -> (i32, i32) {
    %c0_i32 = arith.constant 0 : i32
    %c0_i32_0 = arith.constant 0 : i32
    %c0_i32_1 = arith.constant 0 : i32
    return %c0_i32, %c0_i32_0 : i32, i32
  }
  func.func @transform_19(%arg0: i32) -> (i32, i32) {
    %c0_i32 = arith.constant 0 : i32
    %c0_i32_0 = arith.constant 0 : i32
    %c0_i32_1 = arith.constant 0 : i32
    return %c0_i32, %c0_i32_0 : i32, i32
  }
  func.func @transform_20(%arg0: i32) -> (i32, i32) {
    %c0_i32 = arith.constant 0 : i32
    %c0_i32_0 = arith.constant 0 : i32
    %c0_i32_1 = arith.constant 0 : i32
    return %c0_i32, %c0_i32_0 : i32, i32
  }
  func.func @transform_21(%arg0: i32) -> (i32, i32) {
    %c0_i32 = arith.constant 0 : i32
    %c0_i32_0 = arith.constant 0 : i32
    %c0_i32_1 = arith.constant 0 : i32
    return %c0_i32, %c0_i32_0 : i32, i32
  }
  func.func @transform_22(%arg0: i32) -> (i32, i32) {
    %c0_i32 = arith.constant 0 : i32
    %c0_i32_0 = arith.constant 0 : i32
    %c0_i32_1 = arith.constant 0 : i32
    return %c0_i32, %c0_i32_0 : i32, i32
  }
  func.func @transform_23(%arg0: i32) -> (i32, i32) {
    %c0_i32 = arith.constant 0 : i32
    %c0_i32_0 = arith.constant 0 : i32
    %c0_i32_1 = arith.constant 0 : i32
    return %c0_i32, %c0_i32_0 : i32, i32
  }
  func.func @transform_24(%arg0: i32) -> (i32, i32) {
    %c0_i32 = arith.constant 0 : i32
    %c0_i32_0 = arith.constant 0 : i32
    %c0_i32_1 = arith.constant 0 : i32
    return %c0_i32, %c0_i32_0 : i32, i32
  }
  func.func @transform_25(%arg0: i32) -> (i32, i32) {
    %c0_i32 = arith.constant 0 : i32
    %c0_i32_0 = arith.constant 0 : i32
    %c0_i32_1 = arith.constant 0 : i32
    return %c0_i32, %c0_i32_0 : i32, i32
  }
  func.func @transform_26(%arg0: i32) -> (i32, i32) {
    %c0_i32 = arith.constant 0 : i32
    %c0_i32_0 = arith.constant 0 : i32
    %c0_i32_1 = arith.constant 0 : i32
    return %c0_i32, %c0_i32_0 : i32, i32
  }
  func.func @transform_27(%arg0: i32) -> (i32, i32) {
    %c0_i32 = arith.constant 0 : i32
    %c0_i32_0 = arith.constant 0 : i32
    %c0_i32_1 = arith.constant 0 : i32
    return %c0_i32, %c0_i32_0 : i32, i32
  }
  func.func @transform_28(%arg0: i32) -> (i32, i32) {
    %c0_i32 = arith.constant 0 : i32
    %c0_i32_0 = arith.constant 0 : i32
    %c0_i32_1 = arith.constant 0 : i32
    return %c0_i32, %c0_i32_0 : i32, i32
  }
  func.func @transform_29(%arg0: i32) -> (i32, i32) {
    %c0_i32 = arith.constant 0 : i32
    %c0_i32_0 = arith.constant 0 : i32
    %c0_i32_1 = arith.constant 0 : i32
    return %c0_i32, %c0_i32_0 : i32, i32
  }
  func.func @transform_30(%arg0: i32) -> (i32, i32) {
    %c0_i32 = arith.constant 0 : i32
    %c0_i32_0 = arith.constant 0 : i32
    return %arg0, %c0_i32 : i32, i32
  }
  func.func @transform_31(%arg0: i32) -> (i32, i32, i32) {
    %c0_i32 = arith.constant 0 : i32
    %c0_i32_0 = arith.constant 0 : i32
    %c0_i32_1 = arith.constant 0 : i32
    return %arg0, %c0_i32, %c0_i32_0 : i32, i32, i32
  }
}

</mosaic_0001>

<llo_original>
// kernel: squeeze.6
$region0: #{squeeze.6}
  %s0 = inlined_call_operand.vmem [shape: f32[16], index: 0, kind: input, shape index: {}]
  %s1 = inlined_call_operand.hbm [shape: f32[2,8], index: 1, kind: output, shape index: {}]
  $region1: #{squeeze.6} parent=0
    #allocation0 [shape = 'u8[1024]{0}', space=vmem, size = 0x400, scoped, tag = 'operand span for operand 1']
    #allocation1 [shape = 's32[1]{0}', space=sflag, size = 0x4, scoped, tag = 'scoped memory for squeeze.6']
    #allocation2 [shape = 'u8[4096]{0}', space=vmem, size = 0x1000, scoped, tag = 'scoped mem for output reshape']
    #allocation3 [shape = 'u8[4096]{0}', space=vmem, size = 0x1000, scoped, tag = 'scoped mem for input reshape']
    %2 = vsyncpa [#allocation1], 0
    %s4 = ssub.s32 2, 1
    %v5 = vld [vmem:[%s0] sm:%s4]
    %6 = vst [vmem:[#allocation3] sm:%s4] %v5
    %v7 = vld [vmem:[#allocation3] sm:$0x1]
    %vm8 = vcmask 64512
    %9 = vst.msk [vmem:[#allocation2] sm:$0x1] %vm8, %v7
    %v10 = vld [vmem:[#allocation3] sm:$0x1]
    %11 = vrot.lane.b32.xlu0 %v10, 120
    %v12 = vpop.permute.xlu0 %11
    %vm13 = vcmask 64512
    %s14 = scalar_lea.vmem [#allocation2], 1
    %15 = vst.msk [vmem:[%s14] sm:$0x1] %vm13, %v12
    %s17 = ssub.s32 4, 1
    %v18 = vld [vmem:[#allocation2] sm:%s17]
    %s20 = ssub.s32 4, 1
    %21 = vst [vmem:[#allocation0] sm:%s20] %v18
    %23 = vsyncadd [#allocation1], 0
    %s25 = sshll.u32 [#allocation0], 4
    %s26 = int_to_ptr.vmem [resolvable:$true] %s25
    %s27 = sshll.u32 %s1, 4
    %s28 = int_to_ptr.hbm [resolvable:$true] %s27
    %30 = dma.vmem_to_hbm [thread:$0]  %s26, 32, %s28, [#allocation1]
    %32 = dma.done [#allocation1], 32
    %33 = vsyncpa [#allocation1], 1

// kernel: decoder_pedal_forward.3
$region0: #{decoder_pedal_forward.3}
  #allocation0 [shape = 'u32[]', space=smem, size = 0x4, offset = 0x4, fixed_abs, tag = 'smem constant byte address 0x4 - core index']
  #allocation1 [shape = 'u32[72,128]{1,0:T(1,128)}', space=vmem, size = 0x9000, scoped, tag = 'internal scratch']
  %s0 = inlined_call_operand.vmem [shape: f32[2,8,32], index: 0, kind: input, shape index: {}]
  %s1 = inlined_call_operand.vmem [shape: f32[8,32], index: 1, kind: input, shape index: {}]
  %s2 = inlined_call_operand.vmem [shape: bf16[32,96], index: 2, kind: input, shape index: {}]
  %s3 = inlined_call_operand.vmem [shape: f32[1,96], index: 3, kind: input, shape index: {}]
  %s4 = inlined_call_operand.vmem [shape: bf16[32,32], index: 4, kind: input, shape index: {}]
  %s5 = inlined_call_operand.vmem [shape: f32[1,32], index: 5, kind: input, shape index: {}]
  %s6 = inlined_call_operand.vmem [shape: f32[1,32], index: 6, kind: input, shape index: {}]
  %s7 = inlined_call_operand.vmem [shape: f32[1,32], index: 7, kind: input, shape index: {}]
  %s8 = inlined_call_operand.vmem [shape: bf16[32,64], index: 8, kind: input, shape index: {}]
  %s9 = inlined_call_operand.vmem [shape: f32[1,64], index: 9, kind: input, shape index: {}]
  %s10 = inlined_call_operand.vmem [shape: bf16[64,32], index: 10, kind: input, shape index: {}]
  %s11 = inlined_call_operand.vmem [shape: f32[1,32], index: 11, kind: input, shape index: {}]
  %s12 = inlined_call_operand.vmem [shape: bf16[32,96], index: 12, kind: input, shape index: {}]
  %s13 = inlined_call_operand.vmem [shape: f32[1,96], index: 13, kind: input, shape index: {}]
  %s14 = inlined_call_operand.vmem [shape: bf16[32,32], index: 14, kind: input, shape index: {}]
  %s15 = inlined_call_operand.vmem [shape: f32[1,32], index: 15, kind: input, shape index: {}]
  %s16 = inlined_call_operand.vmem [shape: f32[1,32], index: 16, kind: input, shape index: {}]
  %s17 = inlined_call_operand.vmem [shape: f32[1,32], index: 17, kind: input, shape index: {}]
  %s18 = inlined_call_operand.vmem [shape: bf16[32,64], index: 18, kind: input, shape index: {}]
  %s19 = inlined_call_operand.vmem [shape: f32[1,64], index: 19, kind: input, shape index: {}]
  %s20 = inlined_call_operand.vmem [shape: bf16[64,32], index: 20, kind: input, shape index: {}]
  %s21 = inlined_call_operand.vmem [shape: f32[1,32], index: 21, kind: input, shape index: {}]
  %s22 = inlined_call_operand.vmem [shape: f32[2,8,32], index: 22, kind: output, shape index: {}]
  %s23 = sld [smem:[#allocation0]]
  $region121: #{decoder_pedal_forward.3} parent=0
    _
  %s25 = ssub.s32 1, %s23
  %s26 = scalar_select 0, %s25, %s23
  loop: start=0, step=1, limit=4
  $region2: #{decoder_pedal_forward.3} parent=0 // loop_pre_header
    _
  $region3: #{decoder_pedal_forward.3} parent=0 // loop_header
    %s28 = sphi 0, %s32
    %p29 = scmp.ge.s32.totalorder %s28, 4
    %s38 = sphi 0, %s40
    %s41 = sphi 0, %s38
    %s42 = sphi 0, %s41
    %s58 = sphi 0, %s42
    %s62 = sphi 0, %s62
    %s64 = sphi 0, %s62
    %s65 = sphi 0, %s64
    %s79 = sphi 0, %s65
    %s83 = sphi 0, %s83
    %s85 = sphi 0, %s83
    %s86 = sphi 0, %s85
    %s100 = sphi 0, %s86
    %s104 = sphi 0, %s104
    %s106 = sphi 0, %s104
    %s107 = sphi 0, %s106
    %s121 = sphi 0, %s107
    %s125 = sphi 0, %s125
    %s127 = sphi 0, %s125
    %s128 = sphi 0, %s127
    %s142 = sphi 0, %s128
    %s146 = sphi 0, %s146
    %s148 = sphi 0, %s146
    %s149 = sphi 0, %s148
    %s163 = sphi 0, %s149
    %s167 = sphi 0, %s167
    %s169 = sphi 0, %s167
    %s170 = sphi 0, %s169
    %s184 = sphi 0, %s170
    %s188 = sphi 0, %s188
    %s190 = sphi 0, %s188
    %s191 = sphi 0, %s190
    %s205 = sphi 0, %s191
    %s209 = sphi 0, %s209
    %s211 = sphi 0, %s209
    %s212 = sphi 0, %s211
    %s226 = sphi 0, %s212
    %s230 = sphi 0, %s230
    %s232 = sphi 0, %s230
    %s233 = sphi 0, %s232
    %s247 = sphi 0, %s233
    %s251 = sphi 0, %s251
    %s253 = sphi 0, %s251
    %s254 = sphi 0, %s253
    %s268 = sphi 0, %s254
    %s272 = sphi 0, %s272
    %s274 = sphi 0, %s272
    %s275 = sphi 0, %s274
    %s289 = sphi 0, %s275
    %s293 = sphi 0, %s293
    %s295 = sphi 0, %s293
    %s296 = sphi 0, %s295
    %s310 = sphi 0, %s296
    %s314 = sphi 0, %s314
    %s316 = sphi 0, %s314
    %s317 = sphi 0, %s316
    %s331 = sphi 0, %s317
    %s335 = sphi 0, %s335
    %s337 = sphi 0, %s335
    %s338 = sphi 0, %s337
    %s352 = sphi 0, %s338
    %s356 = sphi 0, %s356
    %s358 = sphi 0, %s356
    %s359 = sphi 0, %s358
    %s373 = sphi 0, %s359
    %s377 = sphi 0, %s377
    %s379 = sphi 0, %s377
    %s380 = sphi 0, %s379
    %s394 = sphi 0, %s380
    %s398 = sphi 0, %s398
    %s400 = sphi 0, %s398
    %s401 = sphi 0, %s400
    %s415 = sphi 0, %s401
    %s419 = sphi 0, %s419
    %s421 = sphi 0, %s419
    %s422 = sphi 0, %s421
    %s436 = sphi 0, %s422
    %s440 = sphi 0, %s440
    %s442 = sphi 0, %s440
    %s443 = sphi 0, %s442
    %s457 = sphi 0, %s443
    %s461 = sphi 0, %s461
    %s463 = sphi 0, %s461
    %s464 = sphi 0, %s463
    %s478 = sphi 0, %s464
    %s482 = sphi 0, %s482
    %s484 = sphi 0, %s482
    %s485 = sphi 0, %s484
    %s499 = sphi 0, %s485
    %s505 = sphi 0, %s507
    %s508 = sphi 0, %s505
    %s509 = sphi 0, %s508
    %s525 = sphi 0, %s509
  $region4: #{decoder_pedal_forward.3} parent=0 // loop_header_branch
    %31 = sbr.rel (%p29) target = $region8
  $region5: #{decoder_pedal_forward.3} parent=0 // loop_body
    %s33 = ssub.s32 %s28, 1
    %s34 = ssub.s32 %s28, 2
    %s35 = sadd.s32 %s28, 1
    %s36 = ssub.s32 %s28, %s35
    %p37 = scmp.eq.s32.totalorder %s36, 0
    %s39 = sadd.s32 %s38, 1
    %s40 = scalar_select %p37, %s38, %s39
    %p43 = pneg %p37
    %p44 = scmp.eq.s32.totalorder %s28, 1
    %p45 = por %p43, %p44
    %p46 = scmp.ne.s32.totalorder %s38, %s41
    %p47 = scmp.eq.s32.totalorder %s28, 0
    %p48 = por %p46, %p47
    %p49 = scmp.ne.s32.totalorder %s38, %s41
    %p50 = scmp.eq.s32.totalorder %s33, 1
    %p51 = por %p49, %p50
    %p52 = scmp.ne.s32.totalorder %s41, %s42
    %p53 = scmp.eq.s32.totalorder %s33, 0
    %p54 = por %p52, %p53
    %p55 = scmp.ne.s32.totalorder %s41, %s42
    %p56 = scmp.eq.s32.totalorder %s34, 1
    %p57 = por %p55, %p56
    %p59 = scmp.ne.s32.totalorder %s42, %s58
    %p60 = scmp.eq.s32.totalorder %s34, 0
    %p61 = por %p59, %p60
    %s63 = sadd.s32 %s62, 1
    %p66 = scmp.eq.s32.totalorder %s28, 1
    %p67 = scmp.ne.s32.totalorder %s62, %s64
    %p68 = scmp.eq.s32.totalorder %s28, 0
    %p69 = por %p67, %p68
    %p70 = scmp.ne.s32.totalorder %s62, %s64
    %p71 = scmp.eq.s32.totalorder %s33, 1
    %p72 = por %p70, %p71
    %p73 = scmp.ne.s32.totalorder %s64, %s65
    %p74 = scmp.eq.s32.totalorder %s33, 0
    %p75 = por %p73, %p74
    %p76 = scmp.ne.s32.totalorder %s64, %s65
    %p77 = scmp.eq.s32.totalorder %s34, 1
    %p78 = por %p76, %p77
    %p80 = scmp.ne.s32.totalorder %s65, %s79
    %p81 = scmp.eq.s32.totalorder %s34, 0
    %p82 = por %p80, %p81
    %s84 = sadd.s32 %s83, 1
    %p87 = scmp.eq.s32.totalorder %s28, 1
    %p88 = scmp.ne.s32.totalorder %s83, %s85
    %p89 = scmp.eq.s32.totalorder %s28, 0
    %p90 = por %p88, %p89
    %p91 = scmp.ne.s32.totalorder %s83, %s85
    %p92 = scmp.eq.s32.totalorder %s33, 1
    %p93 = por %p91, %p92
    %p94 = scmp.ne.s32.totalorder %s85, %s86
    %p95 = scmp.eq.s32.totalorder %s33, 0
    %p96 = por %p94, %p95
    %p97 = scmp.ne.s32.totalorder %s85, %s86
    %p98 = scmp.eq.s32.totalorder %s34, 1
    %p99 = por %p97, %p98
    %p101 = scmp.ne.s32.totalorder %s86, %s100
    %p102 = scmp.eq.s32.totalorder %s34, 0
    %p103 = por %p101, %p102
    %s105 = sadd.s32 %s104, 1
    %p108 = scmp.eq.s32.totalorder %s28, 1
    %p109 = scmp.ne.s32.totalorder %s104, %s106
    %p110 = scmp.eq.s32.totalorder %s28, 0
    %p111 = por %p109, %p110
    %p112 = scmp.ne.s32.totalorder %s104, %s106
    %p113 = scmp.eq.s32.totalorder %s33, 1
    %p114 = por %p112, %p113
    %p115 = scmp.ne.s32.totalorder %s106, %s107
    %p116 = scmp.eq.s32.totalorder %s33, 0
    %p117 = por %p115, %p116
    %p118 = scmp.ne.s32.totalorder %s106, %s107
    %p119 = scmp.eq.s32.totalorder %s34, 1
    %p120 = por %p118, %p119
    %p122 = scmp.ne.s32.totalorder %s107, %s121
    %p123 = scmp.eq.s32.totalorder %s34, 0
    %p124 = por %p122, %p123
    %s126 = sadd.s32 %s125, 1
    %p129 = scmp.eq.s32.totalorder %s28, 1
    %p130 = scmp.ne.s32.totalorder %s125, %s127
    %p131 = scmp.eq.s32.totalorder %s28, 0
    %p132 = por %p130, %p131
    %p133 = scmp.ne.s32.totalorder %s125, %s127
    %p134 = scmp.eq.s32.totalorder %s33, 1
    %p135 = por %p133, %p134
    %p136 = scmp.ne.s32.totalorder %s127, %s128
    %p137 = scmp.eq.s32.totalorder %s33, 0
    %p138 = por %p136, %p137
    %p139 = scmp.ne.s32.totalorder %s127, %s128
    %p140 = scmp.eq.s32.totalorder %s34, 1
    %p141 = por %p139, %p140
    %p143 = scmp.ne.s32.totalorder %s128, %s142
    %p144 = scmp.eq.s32.totalorder %s34, 0
    %p145 = por %p143, %p144
    %s147 = sadd.s32 %s146, 1
    %p150 = scmp.eq.s32.totalorder %s28, 1
    %p151 = scmp.ne.s32.totalorder %s146, %s148
    %p152 = scmp.eq.s32.totalorder %s28, 0
    %p153 = por %p151, %p152
    %p154 = scmp.ne.s32.totalorder %s146, %s148
    %p155 = scmp.eq.s32.totalorder %s33, 1
    %p156 = por %p154, %p155
    %p157 = scmp.ne.s32.totalorder %s148, %s149
    %p158 = scmp.eq.s32.totalorder %s33, 0
    %p159 = por %p157, %p158
    %p160 = scmp.ne.s32.totalorder %s148, %s149
    %p161 = scmp.eq.s32.totalorder %s34, 1
    %p162 = por %p160, %p161
    %p164 = scmp.ne.s32.totalorder %s149, %s163
    %p165 = scmp.eq.s32.totalorder %s34, 0
    %p166 = por %p164, %p165
    %s168 = sadd.s32 %s167, 1
    %p171 = scmp.eq.s32.totalorder %s28, 1
    %p172 = scmp.ne.s32.totalorder %s167, %s169
    %p173 = scmp.eq.s32.totalorder %s28, 0
    %p174 = por %p172, %p173
    %p175 = scmp.ne.s32.totalorder %s167, %s169
    %p176 = scmp.eq.s32.totalorder %s33, 1
    %p177 = por %p175, %p176
    %p178 = scmp.ne.s32.totalorder %s169, %s170
    %p179 = scmp.eq.s32.totalorder %s33, 0
    %p180 = por %p178, %p179
    %p181 = scmp.ne.s32.totalorder %s169, %s170
    %p182 = scmp.eq.s32.totalorder %s34, 1
    %p183 = por %p181, %p182
    %p185 = scmp.ne.s32.totalorder %s170, %s184
    %p186 = scmp.eq.s32.totalorder %s34, 0
    %p187 = por %p185, %p186
    %s189 = sadd.s32 %s188, 1
    %p192 = scmp.eq.s32.totalorder %s28, 1
    %p193 = scmp.ne.s32.totalorder %s188, %s190
    %p194 = scmp.eq.s32.totalorder %s28, 0
    %p195 = por %p193, %p194
    %p196 = scmp.ne.s32.totalorder %s188, %s190
    %p197 = scmp.eq.s32.totalorder %s33, 1
    %p198 = por %p196, %p197
    %p199 = scmp.ne.s32.totalorder %s190, %s191
    %p200 = scmp.eq.s32.totalorder %s33, 0
    %p201 = por %p199, %p200
    %p202 = scmp.ne.s32.totalorder %s190, %s191
    %p203 = scmp.eq.s32.totalorder %s34, 1
    %p204 = por %p202, %p203
    %p206 = scmp.ne.s32.totalorder %s191, %s205
    %p207 = scmp.eq.s32.totalorder %s34, 0
    %p208 = por %p206, %p207
    %s210 = sadd.s32 %s209, 1
    %p213 = scmp.eq.s32.totalorder %s28, 1
    %p214 = scmp.ne.s32.totalorder %s209, %s211
    %p215 = scmp.eq.s32.totalorder %s28, 0
    %p216 = por %p214, %p215
    %p217 = scmp.ne.s32.totalorder %s209, %s211
    %p218 = scmp.eq.s32.totalorder %s33, 1
    %p219 = por %p217, %p218
    %p220 = scmp.ne.s32.totalorder %s211, %s212
    %p221 = scmp.eq.s32.totalorder %s33, 0
    %p222 = por %p220, %p221
    %p223 = scmp.ne.s32.totalorder %s211, %s212
    %p224 = scmp.eq.s32.totalorder %s34, 1
    %p225 = por %p223, %p224
    %p227 = scmp.ne.s32.totalorder %s212, %s226
    %p228 = scmp.eq.s32.totalorder %s34, 0
    %p229 = por %p227, %p228
    %s231 = sadd.s32 %s230, 1
    %p234 = scmp.eq.s32.totalorder %s28, 1
    %p235 = scmp.ne.s32.totalorder %s230, %s232
    %p236 = scmp.eq.s32.totalorder %s28, 0
    %p237 = por %p235, %p236
    %p238 = scmp.ne.s32.totalorder %s230, %s232
    %p239 = scmp.eq.s32.totalorder %s33, 1
    %p240 = por %p238, %p239
    %p241 = scmp.ne.s32.totalorder %s232, %s233
    %p242 = scmp.eq.s32.totalorder %s33, 0
    %p243 = por %p241, %p242
    %p244 = scmp.ne.s32.totalorder %s232, %s233
    %p245 = scmp.eq.s32.totalorder %s34, 1
    %p246 = por %p244, %p245
    %p248 = scmp.ne.s32.totalorder %s233, %s247
    %p249 = scmp.eq.s32.totalorder %s34, 0
    %p250 = por %p248, %p249
    %s252 = sadd.s32 %s251, 1
    %p255 = scmp.eq.s32.totalorder %s28, 1
    %p256 = scmp.ne.s32.totalorder %s251, %s253
    %p257 = scmp.eq.s32.totalorder %s28, 0
    %p258 = por %p256, %p257
    %p259 = scmp.ne.s32.totalorder %s251, %s253
    %p260 = scmp.eq.s32.totalorder %s33, 1
    %p261 = por %p259, %p260
    %p262 = scmp.ne.s32.totalorder %s253, %s254
    %p263 = scmp.eq.s32.totalorder %s33, 0
    %p264 = por %p262, %p263
    %p265 = scmp.ne.s32.totalorder %s253, %s254
    %p266 = scmp.eq.s32.totalorder %s34, 1
    %p267 = por %p265, %p266
    %p269 = scmp.ne.s32.totalorder %s254, %s268
    %p270 = scmp.eq.s32.totalorder %s34, 0
    %p271 = por %p269, %p270
    %s273 = sadd.s32 %s272, 1
    %p276 = scmp.eq.s32.totalorder %s28, 1
    %p277 = scmp.ne.s32.totalorder %s272, %s274
    %p278 = scmp.eq.s32.totalorder %s28, 0
    %p279 = por %p277, %p278
    %p280 = scmp.ne.s32.totalorder %s272, %s274
    %p281 = scmp.eq.s32.totalorder %s33, 1
    %p282 = por %p280, %p281
    %p283 = scmp.ne.s32.totalorder %s274, %s275
    %p284 = scmp.eq.s32.totalorder %s33, 0
    %p285 = por %p283, %p284
    %p286 = scmp.ne.s32.totalorder %s274, %s275
    %p287 = scmp.eq.s32.totalorder %s34, 1
    %p288 = por %p286, %p287
    %p290 = scmp.ne.s32.totalorder %s275, %s289
    %p291 = scmp.eq.s32.totalorder %s34, 0
    %p292 = por %p290, %p291
    %s294 = sadd.s32 %s293, 1
    %p297 = scmp.eq.s32.totalorder %s28, 1
    %p298 = scmp.ne.s32.totalorder %s293, %s295
    %p299 = scmp.eq.s32.totalorder %s28, 0
    %p300 = por %p298, %p299
    %p301 = scmp.ne.s32.totalorder %s293, %s295
    %p302 = scmp.eq.s32.totalorder %s33, 1
    %p303 = por %p301, %p302
    %p304 = scmp.ne.s32.totalorder %s295, %s296
    %p305 = scmp.eq.s32.totalorder %s33, 0
    %p306 = por %p304, %p305
    %p307 = scmp.ne.s32.totalorder %s295, %s296
    %p308 = scmp.eq.s32.totalorder %s34, 1
    %p309 = por %p307, %p308
    %p311 = scmp.ne.s32.totalorder %s296, %s310
    %p312 = scmp.eq.s32.totalorder %s34, 0
    %p313 = por %p311, %p312
    %s315 = sadd.s32 %s314, 1
    %p318 = scmp.eq.s32.totalorder %s28, 1
    %p319 = scmp.ne.s32.totalorder %s314, %s316
    %p320 = scmp.eq.s32.totalorder %s28, 0
    %p321 = por %p319, %p320
    %p322 = scmp.ne.s32.totalorder %s314, %s316
    %p323 = scmp.eq.s32.totalorder %s33, 1
    %p324 = por %p322, %p323
    %p325 = scmp.ne.s32.totalorder %s316, %s317
    %p326 = scmp.eq.s32.totalorder %s33, 0
    %p327 = por %p325, %p326
    %p328 = scmp.ne.s32.totalorder %s316, %s317
    %p329 = scmp.eq.s32.totalorder %s34, 1
    %p330 = por %p328, %p329
    %p332 = scmp.ne.s32.totalorder %s317, %s331
    %p333 = scmp.eq.s32.totalorder %s34, 0
    %p334 = por %p332, %p333
    %s336 = sadd.s32 %s335, 1
    %p339 = scmp.eq.s32.totalorder %s28, 1
    %p340 = scmp.ne.s32.totalorder %s335, %s337
    %p341 = scmp.eq.s32.totalorder %s28, 0
    %p342 = por %p340, %p341
    %p343 = scmp.ne.s32.totalorder %s335, %s337
    %p344 = scmp.eq.s32.totalorder %s33, 1
    %p345 = por %p343, %p344
    %p346 = scmp.ne.s32.totalorder %s337, %s338
    %p347 = scmp.eq.s32.totalorder %s33, 0
    %p348 = por %p346, %p347
    %p349 = scmp.ne.s32.totalorder %s337, %s338
    %p350 = scmp.eq.s32.totalorder %s34, 1
    %p351 = por %p349, %p350
    %p353 = scmp.ne.s32.totalorder %s338, %s352
    %p354 = scmp.eq.s32.totalorder %s34, 0
    %p355 = por %p353, %p354
    %s357 = sadd.s32 %s356, 1
    %p360 = scmp.eq.s32.totalorder %s28, 1
    %p361 = scmp.ne.s32.totalorder %s356, %s358
    %p362 = scmp.eq.s32.totalorder %s28, 0
    %p363 = por %p361, %p362
    %p364 = scmp.ne.s32.totalorder %s356, %s358
    %p365 = scmp.eq.s32.totalorder %s33, 1
    %p366 = por %p364, %p365
    %p367 = scmp.ne.s32.totalorder %s358, %s359
    %p368 = scmp.eq.s32.totalorder %s33, 0
    %p369 = por %p367, %p368
    %p370 = scmp.ne.s32.totalorder %s358, %s359
    %p371 = scmp.eq.s32.totalorder %s34, 1
    %p372 = por %p370, %p371
    %p374 = scmp.ne.s32.totalorder %s359, %s373
    %p375 = scmp.eq.s32.totalorder %s34, 0
    %p376 = por %p374, %p375
    %s378 = sadd.s32 %s377, 1
    %p381 = scmp.eq.s32.totalorder %s28, 1
    %p382 = scmp.ne.s32.totalorder %s377, %s379
    %p383 = scmp.eq.s32.totalorder %s28, 0
    %p384 = por %p382, %p383
    %p385 = scmp.ne.s32.totalorder %s377, %s379
    %p386 = scmp.eq.s32.totalorder %s33, 1
    %p387 = por %p385, %p386
    %p388 = scmp.ne.s32.totalorder %s379, %s380
    %p389 = scmp.eq.s32.totalorder %s33, 0
    %p390 = por %p388, %p389
    %p391 = scmp.ne.s32.totalorder %s379, %s380
    %p392 = scmp.eq.s32.totalorder %s34, 1
    %p393 = por %p391, %p392
    %p395 = scmp.ne.s32.totalorder %s380, %s394
    %p396 = scmp.eq.s32.totalorder %s34, 0
    %p397 = por %p395, %p396
    %s399 = sadd.s32 %s398, 1
    %p402 = scmp.eq.s32.totalorder %s28, 1
    %p403 = scmp.ne.s32.totalorder %s398, %s400
    %p404 = scmp.eq.s32.totalorder %s28, 0
    %p405 = por %p403, %p404
    %p406 = scmp.ne.s32.totalorder %s398, %s400
    %p407 = scmp.eq.s32.totalorder %s33, 1
    %p408 = por %p406, %p407
    %p409 = scmp.ne.s32.totalorder %s400, %s401
    %p410 = scmp.eq.s32.totalorder %s33, 0
    %p411 = por %p409, %p410
    %p412 = scmp.ne.s32.totalorder %s400, %s401
    %p413 = scmp.eq.s32.totalorder %s34, 1
    %p414 = por %p412, %p413
    %p416 = scmp.ne.s32.totalorder %s401, %s415
    %p417 = scmp.eq.s32.totalorder %s34, 0
    %p418 = por %p416, %p417
    %s420 = sadd.s32 %s419, 1
    %p423 = scmp.eq.s32.totalorder %s28, 1
    %p424 = scmp.ne.s32.totalorder %s419, %s421
    %p425 = scmp.eq.s32.totalorder %s28, 0
    %p426 = por %p424, %p425
    %p427 = scmp.ne.s32.totalorder %s419, %s421
    %p428 = scmp.eq.s32.totalorder %s33, 1
    %p429 = por %p427, %p428
    %p430 = scmp.ne.s32.totalorder %s421, %s422
    %p431 = scmp.eq.s32.totalorder %s33, 0
    %p432 = por %p430, %p431
    %p433 = scmp.ne.s32.totalorder %s421, %s422
    %p434 = scmp.eq.s32.totalorder %s34, 1
    %p435 = por %p433, %p434
    %p437 = scmp.ne.s32.totalorder %s422, %s436
    %p438 = scmp.eq.s32.totalorder %s34, 0
    %p439 = por %p437, %p438
    %s441 = sadd.s32 %s440, 1
    %p444 = scmp.eq.s32.totalorder %s28, 1
    %p445 = scmp.ne.s32.totalorder %s440, %s442
    %p446 = scmp.eq.s32.totalorder %s28, 0
    %p447 = por %p445, %p446
    %p448 = scmp.ne.s32.totalorder %s440, %s442
    %p449 = scmp.eq.s32.totalorder %s33, 1
    %p450 = por %p448, %p449
    %p451 = scmp.ne.s32.totalorder %s442, %s443
    %p452 = scmp.eq.s32.totalorder %s33, 0
    %p453 = por %p451, %p452
    %p454 = scmp.ne.s32.totalorder %s442, %s443
    %p455 = scmp.eq.s32.totalorder %s34, 1
    %p456 = por %p454, %p455
    %p458 = scmp.ne.s32.totalorder %s443, %s457
    %p459 = scmp.eq.s32.totalorder %s34, 0
    %p460 = por %p458, %p459
    %s462 = sadd.s32 %s461, 1
    %p465 = scmp.eq.s32.totalorder %s28, 1
    %p466 = scmp.ne.s32.totalorder %s461, %s463
    %p467 = scmp.eq.s32.totalorder %s28, 0
    %p468 = por %p466, %p467
    %p469 = scmp.ne.s32.totalorder %s461, %s463
    %p470 = scmp.eq.s32.totalorder %s33, 1
    %p471 = por %p469, %p470
    %p472 = scmp.ne.s32.totalorder %s463, %s464
    %p473 = scmp.eq.s32.totalorder %s33, 0
    %p474 = por %p472, %p473
    %p475 = scmp.ne.s32.totalorder %s463, %s464
    %p476 = scmp.eq.s32.totalorder %s34, 1
    %p477 = por %p475, %p476
    %p479 = scmp.ne.s32.totalorder %s464, %s478
    %p480 = scmp.eq.s32.totalorder %s34, 0
    %p481 = por %p479, %p480
    %s483 = sadd.s32 %s482, 1
    %p486 = scmp.eq.s32.totalorder %s28, 1
    %p487 = scmp.ne.s32.totalorder %s482, %s484
    %p488 = scmp.eq.s32.totalorder %s28, 0
    %p489 = por %p487, %p488
    %p490 = scmp.ne.s32.totalorder %s482, %s484
    %p491 = scmp.eq.s32.totalorder %s33, 1
    %p492 = por %p490, %p491
    %p493 = scmp.ne.s32.totalorder %s484, %s485
    %p494 = scmp.eq.s32.totalorder %s33, 0
    %p495 = por %p493, %p494
    %p496 = scmp.ne.s32.totalorder %s484, %s485
    %p497 = scmp.eq.s32.totalorder %s34, 1
    %p498 = por %p496, %p497
    %p500 = scmp.ne.s32.totalorder %s485, %s499
    %p501 = scmp.eq.s32.totalorder %s34, 0
    %p502 = por %p500, %p501
    %s503 = ssub.s32 %s28, %s35
    %p504 = scmp.eq.s32.totalorder %s503, 0
    %s506 = sadd.s32 %s505, 1
    %s507 = scalar_select %p504, %s505, %s506
    %p510 = pneg %p504
    %p511 = scmp.eq.s32.totalorder %s28, 1
    %p512 = por %p510, %p511
    %p513 = scmp.ne.s32.totalorder %s505, %s508
    %p514 = scmp.eq.s32.totalorder %s28, 0
    %p515 = por %p513, %p514
    %p516 = scmp.ne.s32.totalorder %s505, %s508
    %p517 = scmp.eq.s32.totalorder %s33, 1
    %p518 = por %p516, %p517
    %p519 = scmp.ne.s32.totalorder %s508, %s509
    %p520 = scmp.eq.s32.totalorder %s33, 0
    %p521 = por %p519, %p520
    %p522 = scmp.ne.s32.totalorder %s508, %s509
    %p523 = scmp.eq.s32.totalorder %s34, 1
    %p524 = por %p522, %p523
    %p526 = scmp.ne.s32.totalorder %s509, %s525
    %p527 = scmp.eq.s32.totalorder %s34, 0
    %p528 = por %p526, %p527
    %p529 = scmp.le.s32.totalorder 1, %s28
    %p530 = scmp.lt.s32.totalorder %s28, 3
    %p531 = pnand %p529, %p530
    %p532 = pneg %p531
    // Predicated region
    $region9: #{decoder_pedal_forward.3} parent=5 // pred_check
      _
    $region10: #{decoder_pedal_forward.3} parent=5 // pred_check_branch
      %534 = sbr.rel (%p531) target = $region12
    $region11: #{decoder_pedal_forward.3} parent=5 // pred_region
      %s535 = ssub.s32 %s28, 1
      // Predicated region
      $region13: #{decoder_pedal_forward.3} parent=11 // pred_check
        %p536 = pneg %p75
      $region14: #{decoder_pedal_forward.3} parent=11 // pred_check_branch
        %538 = sbr.rel (%p536) target = $region16
      $region15: #{decoder_pedal_forward.3} parent=11 // pred_region
        _
      $region16: #{decoder_pedal_forward.3} parent=11 // pred_fallthru
        _
      // Predicated region
      $region17: #{decoder_pedal_forward.3} parent=11 // pred_check
        %p539 = pneg %p96
      $region18: #{decoder_pedal_forward.3} parent=11 // pred_check_branch
        %541 = sbr.rel (%p539) target = $region20
      $region19: #{decoder_pedal_forward.3} parent=11 // pred_region
        _
      $region20: #{decoder_pedal_forward.3} parent=11 // pred_fallthru
        _
      // Predicated region
      $region21: #{decoder_pedal_forward.3} parent=11 // pred_check
        %p542 = pneg %p117
      $region22: #{decoder_pedal_forward.3} parent=11 // pred_check_branch
        %544 = sbr.rel (%p542) target = $region24
      $region23: #{decoder_pedal_forward.3} parent=11 // pred_region
        _
      $region24: #{decoder_pedal_forward.3} parent=11 // pred_fallthru
        _
      // Predicated region
      $region25: #{decoder_pedal_forward.3} parent=11 // pred_check
        %p545 = pneg %p138
      $region26: #{decoder_pedal_forward.3} parent=11 // pred_check_branch
        %547 = sbr.rel (%p545) target = $region28
      $region27: #{decoder_pedal_forward.3} parent=11 // pred_region
        _
      $region28: #{decoder_pedal_forward.3} parent=11 // pred_fallthru
        _
      // Predicated region
      $region29: #{decoder_pedal_forward.3} parent=11 // pred_check
        %p548 = pneg %p159
      $region30: #{decoder_pedal_forward.3} parent=11 // pred_check_branch
        %550 = sbr.rel (%p548) target = $region32
      $region31: #{decoder_pedal_forward.3} parent=11 // pred_region
        _
      $region32: #{decoder_pedal_forward.3} parent=11 // pred_fallthru
        _
      // Predicated region
      $region33: #{decoder_pedal_forward.3} parent=11 // pred_check
        %p551 = pneg %p180
      $region34: #{decoder_pedal_forward.3} parent=11 // pred_check_branch
        %553 = sbr.rel (%p551) target = $region36
      $region35: #{decoder_pedal_forward.3} parent=11 // pred_region
        _
      $region36: #{decoder_pedal_forward.3} parent=11 // pred_fallthru
        _
      // Predicated region
      $region37: #{decoder_pedal_forward.3} parent=11 // pred_check
        %p554 = pneg %p201
      $region38: #{decoder_pedal_forward.3} parent=11 // pred_check_branch
        %556 = sbr.rel (%p554) target = $region40
      $region39: #{decoder_pedal_forward.3} parent=11 // pred_region
        _
      $region40: #{decoder_pedal_forward.3} parent=11 // pred_fallthru
        _
      // Predicated region
      $region41: #{decoder_pedal_forward.3} parent=11 // pred_check
        %p557 = pneg %p222
      $region42: #{decoder_pedal_forward.3} parent=11 // pred_check_branch
        %559 = sbr.rel (%p557) target = $region44
      $region43: #{decoder_pedal_forward.3} parent=11 // pred_region
        _
      $region44: #{decoder_pedal_forward.3} parent=11 // pred_fallthru
        _
      // Predicated region
      $region45: #{decoder_pedal_forward.3} parent=11 // pred_check
        %p560 = pneg %p243
      $region46: #{decoder_pedal_forward.3} parent=11 // pred_check_branch
        %562 = sbr.rel (%p560) target = $region48
      $region47: #{decoder_pedal_forward.3} parent=11 // pred_region
        _
      $region48: #{decoder_pedal_forward.3} parent=11 // pred_fallthru
        _
      // Predicated region
      $region49: #{decoder_pedal_forward.3} parent=11 // pred_check
        %p563 = pneg %p264
      $region50: #{decoder_pedal_forward.3} parent=11 // pred_check_branch
        %565 = sbr.rel (%p563) target = $region52
      $region51: #{decoder_pedal_forward.3} parent=11 // pred_region
        _
      $region52: #{decoder_pedal_forward.3} parent=11 // pred_fallthru
        _
      // Predicated region
      $region53: #{decoder_pedal_forward.3} parent=11 // pred_check
        %p566 = pneg %p285
      $region54: #{decoder_pedal_forward.3} parent=11 // pred_check_branch
        %568 = sbr.rel (%p566) target = $region56
      $region55: #{decoder_pedal_forward.3} parent=11 // pred_region
        _
      $region56: #{decoder_pedal_forward.3} parent=11 // pred_fallthru
        _
      // Predicated region
      $region57: #{decoder_pedal_forward.3} parent=11 // pred_check
        %p569 = pneg %p306
      $region58: #{decoder_pedal_forward.3} parent=11 // pred_check_branch
        %571 = sbr.rel (%p569) target = $region60
      $region59: #{decoder_pedal_forward.3} parent=11 // pred_region
        _
      $region60: #{decoder_pedal_forward.3} parent=11 // pred_fallthru
        _
      // Predicated region
      $region61: #{decoder_pedal_forward.3} parent=11 // pred_check
        %p572 = pneg %p327
      $region62: #{decoder_pedal_forward.3} parent=11 // pred_check_branch
        %574 = sbr.rel (%p572) target = $region64
      $region63: #{decoder_pedal_forward.3} parent=11 // pred_region
        _
      $region64: #{decoder_pedal_forward.3} parent=11 // pred_fallthru
        _
      // Predicated region
      $region65: #{decoder_pedal_forward.3} parent=11 // pred_check
        %p575 = pneg %p348
      $region66: #{decoder_pedal_forward.3} parent=11 // pred_check_branch
        %577 = sbr.rel (%p575) target = $region68
      $region67: #{decoder_pedal_forward.3} parent=11 // pred_region
        _
      $region68: #{decoder_pedal_forward.3} parent=11 // pred_fallthru
        _
      // Predicated region
      $region69: #{decoder_pedal_forward.3} parent=11 // pred_check
        %p578 = pneg %p369
      $region70: #{decoder_pedal_forward.3} parent=11 // pred_check_branch
        %580 = sbr.rel (%p578) target = $region72
      $region71: #{decoder_pedal_forward.3} parent=11 // pred_region
        _
      $region72: #{decoder_pedal_forward.3} parent=11 // pred_fallthru
        _
      // Predicated region
      $region73: #{decoder_pedal_forward.3} parent=11 // pred_check
        %p581 = pneg %p390
      $region74: #{decoder_pedal_forward.3} parent=11 // pred_check_branch
        %583 = sbr.rel (%p581) target = $region76
      $region75: #{decoder_pedal_forward.3} parent=11 // pred_region
        _
      $region76: #{decoder_pedal_forward.3} parent=11 // pred_fallthru
        _
      // Predicated region
      $region77: #{decoder_pedal_forward.3} parent=11 // pred_check
        %p584 = pneg %p411
      $region78: #{decoder_pedal_forward.3} parent=11 // pred_check_branch
        %586 = sbr.rel (%p584) target = $region80
      $region79: #{decoder_pedal_forward.3} parent=11 // pred_region
        _
      $region80: #{decoder_pedal_forward.3} parent=11 // pred_fallthru
        _
      // Predicated region
      $region81: #{decoder_pedal_forward.3} parent=11 // pred_check
        %p587 = pneg %p432
      $region82: #{decoder_pedal_forward.3} parent=11 // pred_check_branch
        %589 = sbr.rel (%p587) target = $region84
      $region83: #{decoder_pedal_forward.3} parent=11 // pred_region
        _
      $region84: #{decoder_pedal_forward.3} parent=11 // pred_fallthru
        _
      // Predicated region
      $region85: #{decoder_pedal_forward.3} parent=11 // pred_check
        %p590 = pneg %p453
      $region86: #{decoder_pedal_forward.3} parent=11 // pred_check_branch
        %592 = sbr.rel (%p590) target = $region88
      $region87: #{decoder_pedal_forward.3} parent=11 // pred_region
        _
      $region88: #{decoder_pedal_forward.3} parent=11 // pred_fallthru
        _
      // Predicated region
      $region89: #{decoder_pedal_forward.3} parent=11 // pred_check
        %p593 = pneg %p474
      $region90: #{decoder_pedal_forward.3} parent=11 // pred_check_branch
        %595 = sbr.rel (%p593) target = $region92
      $region91: #{decoder_pedal_forward.3} parent=11 // pred_region
        _
      $region92: #{decoder_pedal_forward.3} parent=11 // pred_fallthru
        _
      // Predicated region
      $region93: #{decoder_pedal_forward.3} parent=11 // pred_check
        %p596 = pneg %p495
      $region94: #{decoder_pedal_forward.3} parent=11 // pred_check_branch
        %598 = sbr.rel (%p596) target = $region96
      $region95: #{decoder_pedal_forward.3} parent=11 // pred_region
        _
      $region96: #{decoder_pedal_forward.3} parent=11 // pred_fallthru
        _
    $region12: #{decoder_pedal_forward.3} parent=5 // pred_fallthru
      _
    %p599 = scmp.lt.s32.totalorder %s28, 2
    // Predicated region
    $region97: #{decoder_pedal_forward.3} parent=5 // pred_check
      %p600 = pneg %p599
    $region98: #{decoder_pedal_forward.3} parent=5 // pred_check_branch
      %602 = sbr.rel (%p600) target = $region100
    $region99: #{decoder_pedal_forward.3} parent=5 // pred_region
      // Predicated region
      $region101: #{decoder_pedal_forward.3} parent=99 // pred_check
        %p603 = pneg %p48
      $region102: #{decoder_pedal_forward.3} parent=99 // pred_check_branch
        %605 = sbr.rel (%p603) target = $region104
      $region103: #{decoder_pedal_forward.3} parent=99 // pred_region
        %p606 = scmp.lt.s32.totalorder %s28, 1
        %s607 = scalar_select %p606, %s28, 1
        %s608 = smul.addr %s607, 8
        %s609 = scalar_lea.vmem %s0, %s608
      $region104: #{decoder_pedal_forward.3} parent=99 // pred_fallthru
        _
    $region100: #{decoder_pedal_forward.3} parent=5 // pred_fallthru
      _
    %p610 = scmp.le.s32.totalorder 1, %s28
    %p611 = scmp.lt.s32.totalorder %s28, 3
    %p612 = pnand %p610, %p611
    %p613 = pneg %p612
    // Predicated region
    $region105: #{decoder_pedal_forward.3} parent=5 // pred_check
      _
    $region106: #{decoder_pedal_forward.3} parent=5 // pred_check_branch
      %615 = sbr.rel (%p612) target = $region108
    $region107: #{decoder_pedal_forward.3} parent=5 // pred_region
      %s616 = ssub.s32 %s28, 1
      %p617 = scmp.lt.s32.totalorder %s33, 1
      %s618 = scalar_select %p617, %s33, 1
      %s619 = smul.addr %s618, 8
      %s620 = scalar_lea.vmem %s0, %s619
      %p621 = pneg %p54
      %p622 = pneg %p51
      %p623 = pneg %p75
      %p624 = pneg %p72
      %p625 = pneg %p96
      %p626 = pneg %p93
      %p627 = pneg %p117
      %p628 = pneg %p114
      %p629 = pneg %p138
      %p630 = pneg %p135
      %p631 = pneg %p159
      %p632 = pneg %p156
      %p633 = pneg %p180
      %p634 = pneg %p177
      %p635 = pneg %p201
      %p636 = pneg %p198
      %p637 = pneg %p222
      %p638 = pneg %p219
      %p639 = pneg %p243
      %p640 = pneg %p240
      %p641 = pneg %p264
      %p642 = pneg %p261
      %p643 = pneg %p285
      %p644 = pneg %p282
      %p645 = pneg %p306
      %p646 = pneg %p303
      %p647 = pneg %p327
      %p648 = pneg %p324
      %p649 = pneg %p348
      %p650 = pneg %p345
      %p651 = pneg %p369
      %p652 = pneg %p366
      %p653 = pneg %p390
      %p654 = pneg %p387
      %p655 = pneg %p411
      %p656 = pneg %p408
      %p657 = pneg %p432
      %p658 = pneg %p429
      %p659 = pneg %p453
      %p660 = pneg %p450
      %p661 = pneg %p474
      %p662 = pneg %p471
      %p663 = pneg %p495
      %p664 = pneg %p492
      %p665 = pneg %p521
      %p666 = pneg %p518
      %p667 = scmp.lt.s32.totalorder %s33, 1
      %s668 = scalar_select %p667, %s33, 1
      %s669 = smul.addr %s668, 8
      %s670 = scalar_lea.vmem %s22, %s669
      %p671 = scmp.lt.s32.totalorder %s33, 1
      %s672 = scalar_select %p671, %s33, 1
      %s673 = smul.addr %s672, 8
      %s674 = scalar_lea.vmem %s0, %s673
      %p675 = scmp.lt.s32.totalorder %s33, 1
      %s676 = scalar_select %p675, %s33, 1
      %s677 = smul.addr %s676, 8
      %s678 = scalar_lea.vmem %s22, %s677
      %v680 = vld [vmem:[%s674] sm:$0xff]
      %v681 = vmul.f32 %v680, 5.656854
      %v682 = vld [vmem:[%s1] sm:$0xff]
      %v683 = vadd.f32 %v681, %v682
      %v684 = vld [vmem:[%s2] sm:$0xf]
      %v685 = vld [vmem:[%s2 + $0x4] sm:$0xf]
      %v686 = vld [vmem:[%s2 + $0x8] sm:$0xf]
      %v687 = vld [vmem:[%s2 + $0xc] sm:$0xf]
      %v688 = vld [vmem:[%s3] sm:$0x1]
      %v689 = vld [vmem:[%s4] sm:$0xf]
      %v690 = vld [vmem:[%s4 + $0x4] sm:$0xf]
      %v691 = vld [vmem:[%s4 + $0x8] sm:$0xf]
      %v692 = vld [vmem:[%s4 + $0xc] sm:$0xf]
      %v693 = vld [vmem:[%s5] sm:$0x1]
      %v694 = vld [vmem:[%s6] sm:$0x1]
      %v695 = vld [vmem:[%s7] sm:$0x1]
      %v696 = vld [vmem:[%s8] sm:$0xf]
      %v697 = vld [vmem:[%s8 + $0x4] sm:$0xf]
      %v698 = vld [vmem:[%s8 + $0x8] sm:$0xf]
      %v699 = vld [vmem:[%s8 + $0xc] sm:$0xf]
      %v700 = vld [vmem:[%s9] sm:$0x1]
      %v701 = vld [vmem:[%s10] sm:$0xf]
      %v702 = vld [vmem:[%s10 + $0x4] sm:$0xf]
      %v703 = vld [vmem:[%s10 + $0x8] sm:$0xf]
      %v704 = vld [vmem:[%s10 + $0xc] sm:$0xf]
      %v705 = vld [vmem:[%s10 + $0x10] sm:$0xf]
      %v706 = vld [vmem:[%s10 + $0x14] sm:$0xf]
      %v707 = vld [vmem:[%s10 + $0x18] sm:$0xf]
      %v708 = vld [vmem:[%s10 + $0x1c] sm:$0xf]
      %v709 = vld [vmem:[%s11] sm:$0x1]
      %v710 = vpack.c.bf16 %v683, %v683
      %v712 = vperm.slane %v688, 0
      %v718 = vunpack.c.l.b16 %v684
      %v719 = vunpack.c.l.b16 %v685
      %v720 = vunpack.c.l.b16 %v686
      %v721 = vunpack.c.l.b16 %v687
      %v722 = vpack.c.b16 %v719, %v718
      %v723 = vpack.c.b16 %v721, %v720
      %vm726 = vcmask 261120
      %v728 = vsel %vm726, %v710, 0
      %730 = vmatpush.bf16.msra.mxu0 0
      %731 = vmatpush.bf16.msra.mxu0 0
      %732 = vmatpush.bf16.msra.mxu0 0
      %733 = vmatpush.bf16.msra.mxu0 0
      %734 = vmatpush.bf16.msra.mxu0 0
      %735 = vmatpush.bf16.msra.mxu0 0
      %736 = vmatpush.bf16.msra.mxu0 %v723
      %737 = vmatpush.bf16.msra.mxu0 %v722
      %738 = vmatmul.bf16.gmra.mxu0 %v728
      %v739 = vpop.f32.mrf.mxu0
      %v740 = vadd.f32 %v712, %v739
      %v741 = vpop.f32.mrf.mxu0
      %742 = vdwg.mxu0
      %v743 = vmul.f32 %v740, 0.35355338
      %v744 = vpack.c.bf16 %v743, %v743
      %v745 = vpack.c.bf16 %v740, %v740
      %v747 = vunpack.c.l.b16 %v745
      %v748 = vpack.c.b16 %v747, %v747
      %749 = vrot.lane.b32.xlu0 %v748, 96
      %v750 = vpop.permute.xlu0 %749
      %vm751 = vcmask 64512
      %v753 = vsel %vm751, %v744, 0
      %v756 = vsel %vm751, %v750, 0
      %758 = vmatpush.bf16.xpose.msra.mxu0 0
      %759 = vmatpush.bf16.xpose.msra.mxu0 0
      %760 = vmatpush.bf16.xpose.msra.mxu0 0
      %761 = vmatpush.bf16.xpose.msra.mxu0 0
      %762 = vmatpush.bf16.xpose.msra.mxu0 0
      %763 = vmatpush.bf16.xpose.msra.mxu0 0
      %764 = vmatpush.bf16.xpose.msra.mxu0 0
      %765 = vmatpush.bf16.xpose.msra.mxu0 %v756
      %766 = vmatmul.bf16.gmra.mxu0 %v753
      %v767 = vpop.f32.mrf.mxu0
      %v768 = vadd.f32 0.0, %v767
      %v769 = vpop.f32.mrf.mxu0
      %770 = vdwg.mxu0
      %v771 = vsel %vm751, %v768, -inf
      %772 = vmax.xlane.f32.xlu0 %v771
      %v773 = vpop.xlane.xlu0 %772
      %v774 = vsub.f32 %v768, %v773
      %v775 = vmul.f32 %v774, 1.442695
      %v776 = vpow.pop %v775
      %v777 = vsel %vm751, %v776, 0.0
      %778 = vadd.xlane.f32.xlu0 %v777
      %v779 = vpop.xlane.xlu0 %778
      %v780 = vrcp.pop %v779
      %v781 = vmul.f32 %v776, %v780
      %v782 = vpack.c.bf16 %v781, %v781
      %783 = vrot.lane.b32.xlu0 %v748, 64
      %v784 = vpop.permute.xlu0 %783
      %v786 = vsel %vm751, %v782, 0
      %vm788 = vcmask 1043456
      %v790 = vsel %vm788, %v784, 0
      %792 = vmatpush.bf16.msra.mxu0 0
      %793 = vmatpush.bf16.msra.mxu0 0
      %794 = vmatpush.bf16.msra.mxu0 0
      %795 = vmatpush.bf16.msra.mxu0 0
      %796 = vmatpush.bf16.msra.mxu0 0
      %797 = vmatpush.bf16.msra.mxu0 0
      %798 = vmatpush.bf16.msra.mxu0 0
      %799 = vmatpush.bf16.msra.mxu0 %v790
      %800 = vmatmul.bf16.gmra.mxu0 %v786
      %v801 = vpop.f32.mrf.mxu0
      %v802 = vadd.f32 0.0, %v801
      %v803 = vpop.f32.mrf.mxu0
      %804 = vdwg.mxu0
      %v805 = vpack.c.bf16 %v802, %v802
      %v807 = vsel %vm751, %v805, 0
      %v810 = vsel %vm788, %v689, 0
      %812 = vmatpush.bf16.msra.mxu0 0
      %813 = vmatpush.bf16.msra.mxu0 0
      %814 = vmatpush.bf16.msra.mxu0 0
      %815 = vmatpush.bf16.msra.mxu0 0
      %816 = vmatpush.bf16.msra.mxu0 0
      %817 = vmatpush.bf16.msra.mxu0 0
      %818 = vmatpush.bf16.msra.mxu0 0
      %819 = vmatpush.bf16.msra.mxu0 %v810
      %820 = vmatmul.bf16.gmra.mxu0 %v807
      %v821 = vpop.f32.mrf.mxu0
      %v822 = vadd.f32 0.0, %v821
      %v823 = vpop.f32.mrf.mxu0
      %824 = vdwg.mxu0
      %v826 = vperm.slane %v693, 0
      %v828 = vadd.f32 %v826, %v822
      %v830 = vunpack.c.l.b16 %v744
      %v831 = vpack.c.b16 %v830, %v830
      %832 = vrot.lane.b32.xlu0 %v831, 120
      %v833 = vpop.permute.xlu0 %832
      %834 = vrot.lane.b32.xlu0 %v748, 88
      %v835 = vpop.permute.xlu0 %834
      %v837 = vsel %vm751, %v833, 0
      %v840 = vsel %vm751, %v835, 0
      %842 = vmatpush.bf16.xpose.msra.mxu0 0
      %843 = vmatpush.bf16.xpose.msra.mxu0 0
      %844 = vmatpush.bf16.xpose.msra.mxu0 0
      %845 = vmatpush.bf16.xpose.msra.mxu0 0
      %846 = vmatpush.bf16.xpose.msra.mxu0 0
      %847 = vmatpush.bf16.xpose.msra.mxu0 0
      %848 = vmatpush.bf16.xpose.msra.mxu0 0
      %849 = vmatpush.bf16.xpose.msra.mxu0 %v840
      %850 = vmatmul.bf16.gmra.mxu0 %v837
      %v851 = vpop.f32.mrf.mxu0
      %v852 = vadd.f32 0.0, %v851
      %v853 = vpop.f32.mrf.mxu0
      %854 = vdwg.mxu0
      %v855 = vsel %vm751, %v852, -inf
      %856 = vmax.xlane.f32.xlu0 %v855
      %v857 = vpop.xlane.xlu0 %856
      %v858 = vsub.f32 %v852, %v857
      %v859 = vmul.f32 %v858, 1.442695
      %v860 = vpow.pop %v859
      %v861 = vsel %vm751, %v860, 0.0
      %862 = vadd.xlane.f32.xlu0 %v861
      %v863 = vpop.xlane.xlu0 %862
      %v864 = vrcp.pop %v863
      %v865 = vmul.f32 %v860, %v864
      %v866 = vpack.c.bf16 %v865, %v865
      %867 = vrot.lane.b32.xlu0 %v748, 56
      %v868 = vpop.permute.xlu0 %867
      %v870 = vsel %vm751, %v866, 0
      %v873 = vsel %vm788, %v868, 0
      %875 = vmatpush.bf16.msra.mxu0 0
      %876 = vmatpush.bf16.msra.mxu0 0
      %877 = vmatpush.bf16.msra.mxu0 0
      %878 = vmatpush.bf16.msra.mxu0 0
      %879 = vmatpush.bf16.msra.mxu0 0
      %880 = vmatpush.bf16.msra.mxu0 0
      %881 = vmatpush.bf16.msra.mxu0 0
      %882 = vmatpush.bf16.msra.mxu0 %v873
      %883 = vmatmul.bf16.gmra.mxu0 %v870
      %v884 = vpop.f32.mrf.mxu0
      %v885 = vadd.f32 0.0, %v884
      %v886 = vpop.f32.mrf.mxu0
      %887 = vdwg.mxu0
      %v888 = vpack.c.bf16 %v885, %v885
      %v890 = vsel %vm751, %v888, 0
      %v893 = vsel %vm788, %v690, 0
      %895 = vmatpush.bf16.msra.mxu0 0
      %896 = vmatpush.bf16.msra.mxu0 0
      %897 = vmatpush.bf16.msra.mxu0 0
      %898 = vmatpush.bf16.msra.mxu0 0
      %899 = vmatpush.bf16.msra.mxu0 0
      %900 = vmatpush.bf16.msra.mxu0 0
      %901 = vmatpush.bf16.msra.mxu0 0
      %902 = vmatpush.bf16.msra.mxu0 %v893
      %903 = vmatmul.bf16.gmra.mxu0 %v890
      %v904 = vpop.f32.mrf.mxu0
      %v905 = vadd.f32 0.0, %v904
      %v906 = vpop.f32.mrf.mxu0
      %907 = vdwg.mxu0
      %v908 = vadd.f32 %v828, %v905
      %909 = vrot.lane.b32.xlu0 %v831, 112
      %v910 = vpop.permute.xlu0 %909
      %911 = vrot.lane.b32.xlu0 %v748, 80
      %v912 = vpop.permute.xlu0 %911
      %v914 = vsel %vm751, %v910, 0
      %v917 = vsel %vm751, %v912, 0
      %919 = vmatpush.bf16.xpose.msra.mxu0 0
      %920 = vmatpush.bf16.xpose.msra.mxu0 0
      %921 = vmatpush.bf16.xpose.msra.mxu0 0
      %922 = vmatpush.bf16.xpose.msra.mxu0 0
      %923 = vmatpush.bf16.xpose.msra.mxu0 0
      %924 = vmatpush.bf16.xpose.msra.mxu0 0
      %925 = vmatpush.bf16.xpose.msra.mxu0 0
      %926 = vmatpush.bf16.xpose.msra.mxu0 %v917
      %927 = vmatmul.bf16.gmra.mxu0 %v914
      %v928 = vpop.f32.mrf.mxu0
      %v929 = vadd.f32 0.0, %v928
      %v930 = vpop.f32.mrf.mxu0
      %931 = vdwg.mxu0
      %v932 = vsel %vm751, %v929, -inf
      %933 = vmax.xlane.f32.xlu0 %v932
      %v934 = vpop.xlane.xlu0 %933
      %v935 = vsub.f32 %v929, %v934
      %v936 = vmul.f32 %v935, 1.442695
      %v937 = vpow.pop %v936
      %v938 = vsel %vm751, %v937, 0.0
      %939 = vadd.xlane.f32.xlu0 %v938
      %v940 = vpop.xlane.xlu0 %939
      %v941 = vrcp.pop %v940
      %v942 = vmul.f32 %v937, %v941
      %v943 = vpack.c.bf16 %v942, %v942
      %944 = vrot.lane.b32.xlu0 %v748, 48
      %v945 = vpop.permute.xlu0 %944
      %v947 = vsel %vm751, %v943, 0
      %v950 = vsel %vm788, %v945, 0
      %952 = vmatpush.bf16.msra.mxu0 0
      %953 = vmatpush.bf16.msra.mxu0 0
      %954 = vmatpush.bf16.msra.mxu0 0
      %955 = vmatpush.bf16.msra.mxu0 0
      %956 = vmatpush.bf16.msra.mxu0 0
      %957 = vmatpush.bf16.msra.mxu0 0
      %958 = vmatpush.bf16.msra.mxu0 0
      %959 = vmatpush.bf16.msra.mxu0 %v950
      %960 = vmatmul.bf16.gmra.mxu0 %v947
      %v961 = vpop.f32.mrf.mxu0
      %v962 = vadd.f32 0.0, %v961
      %v963 = vpop.f32.mrf.mxu0
      %964 = vdwg.mxu0
      %v965 = vpack.c.bf16 %v962, %v962
      %v967 = vsel %vm751, %v965, 0
      %v970 = vsel %vm788, %v691, 0
      %972 = vmatpush.bf16.msra.mxu0 0
      %973 = vmatpush.bf16.msra.mxu0 0
      %974 = vmatpush.bf16.msra.mxu0 0
      %975 = vmatpush.bf16.msra.mxu0 0
      %976 = vmatpush.bf16.msra.mxu0 0
      %977 = vmatpush.bf16.msra.mxu0 0
      %978 = vmatpush.bf16.msra.mxu0 0
      %979 = vmatpush.bf16.msra.mxu0 %v970
      %980 = vmatmul.bf16.gmra.mxu0 %v967
      %v981 = vpop.f32.mrf.mxu0
      %v982 = vadd.f32 0.0, %v981
      %v983 = vpop.f32.mrf.mxu0
      %984 = vdwg.mxu0
      %v985 = vadd.f32 %v908, %v982
      %986 = vrot.lane.b32.xlu0 %v831, 104
      %v987 = vpop.permute.xlu0 %986
      %988 = vrot.lane.b32.xlu0 %v748, 72
      %v989 = vpop.permute.xlu0 %988
      %v991 = vsel %vm751, %v987, 0
      %v994 = vsel %vm751, %v989, 0
      %996 = vmatpush.bf16.xpose.msra.mxu0 0
      %997 = vmatpush.bf16.xpose.msra.mxu0 0
      %998 = vmatpush.bf16.xpose.msra.mxu0 0
      %999 = vmatpush.bf16.xpose.msra.mxu0 0
      %1000 = vmatpush.bf16.xpose.msra.mxu0 0
      %1001 = vmatpush.bf16.xpose.msra.mxu0 0
      %1002 = vmatpush.bf16.xpose.msra.mxu0 0
      %1003 = vmatpush.bf16.xpose.msra.mxu0 %v994
      %1004 = vmatmul.bf16.gmra.mxu0 %v991
      %v1005 = vpop.f32.mrf.mxu0
      %v1006 = vadd.f32 0.0, %v1005
      %v1007 = vpop.f32.mrf.mxu0
      %1008 = vdwg.mxu0
      %v1009 = vsel %vm751, %v1006, -inf
      %1010 = vmax.xlane.f32.xlu0 %v1009
      %v1011 = vpop.xlane.xlu0 %1010
      %v1012 = vsub.f32 %v1006, %v1011
      %v1013 = vmul.f32 %v1012, 1.442695
      %v1014 = vpow.pop %v1013
      %v1015 = vsel %vm751, %v1014, 0.0
      %1016 = vadd.xlane.f32.xlu0 %v1015
      %v1017 = vpop.xlane.xlu0 %1016
      %v1018 = vrcp.pop %v1017
      %v1019 = vmul.f32 %v1014, %v1018
      %v1020 = vpack.c.bf16 %v1019, %v1019
      %1021 = vrot.lane.b32.xlu0 %v748, 40
      %v1022 = vpop.permute.xlu0 %1021
      %v1024 = vsel %vm751, %v1020, 0
      %v1027 = vsel %vm788, %v1022, 0
      %1029 = vmatpush.bf16.msra.mxu0 0
      %1030 = vmatpush.bf16.msra.mxu0 0
      %1031 = vmatpush.bf16.msra.mxu0 0
      %1032 = vmatpush.bf16.msra.mxu0 0
      %1033 = vmatpush.bf16.msra.mxu0 0
      %1034 = vmatpush.bf16.msra.mxu0 0
      %1035 = vmatpush.bf16.msra.mxu0 0
      %1036 = vmatpush.bf16.msra.mxu0 %v1027
      %1037 = vmatmul.bf16.gmra.mxu0 %v1024
      %v1038 = vpop.f32.mrf.mxu0
      %v1039 = vadd.f32 0.0, %v1038
      %v1040 = vpop.f32.mrf.mxu0
      %1041 = vdwg.mxu0
      %v1042 = vpack.c.bf16 %v1039, %v1039
      %v1044 = vsel %vm751, %v1042, 0
      %v1047 = vsel %vm788, %v692, 0
      %1049 = vmatpush.bf16.msra.mxu0 0
      %1050 = vmatpush.bf16.msra.mxu0 0
      %1051 = vmatpush.bf16.msra.mxu0 0
      %1052 = vmatpush.bf16.msra.mxu0 0
      %1053 = vmatpush.bf16.msra.mxu0 0
      %1054 = vmatpush.bf16.msra.mxu0 0
      %1055 = vmatpush.bf16.msra.mxu0 0
      %1056 = vmatpush.bf16.msra.mxu0 %v1047
      %1057 = vmatmul.bf16.gmra.mxu0 %v1044
      %v1058 = vpop.f32.mrf.mxu0
      %v1059 = vadd.f32 0.0, %v1058
      %v1060 = vpop.f32.mrf.mxu0
      %1061 = vdwg.mxu0
      %v1062 = vadd.f32 %v985, %v1059
      %v1063 = vadd.f32 %v683, %v1062
      %v1064 = vsel %vm726, %v1063, 0.0
      %1065 = vadd.xlane.f32.xlu0 %v1064
      %v1066 = vpop.xlane.xlu0 %1065
      %v1067 = vrcp.pop 32.0
      %v1068 = vmul.f32 32.0, %v1067
      %v1069 = vsub.f32 1.0, %v1068
      %v1070 = vmul.f32 %v1067, %v1069
      %v1071 = vadd.f32 %v1067, %v1070
      %vm1072 = vweird.f32 %v1067
      %v1073 = vsel %vm1072, %v1067, %v1071
      %v1074 = vmul.f32 %v1066, %v1073
      %v1075 = vsub.f32 %v1063, %v1074
      %v1076 = vmul.f32 %v1075, %v1075
      %v1077 = vsel %vm726, %v1076, 0.0
      %1078 = vadd.xlane.f32.xlu0 %v1077
      %v1079 = vpop.xlane.xlu0 %1078
      %v1080 = vmul.f32 %v1079, %v1073
      %v1081 = vadd.f32 %v1080, 1e-05
      %v1082 = vrsqrt.pop %v1081
      %v1083 = vmul.f32 %v1082, %v1081
      %v1084 = vmul.f32 %v1083, %v1082
      %v1085 = vmul.f32 0.5, %v1084
      %v1086 = vsub.f32 1.5, %v1085
      %v1087 = vmul.f32 %v1082, %v1086
      %vm1088 = vweird.f32 %v1081
      %vm1089 = vweird.f32 %v1082
      %vm1090 = vmor %vm1088, %vm1089
      %v1091 = vsel %vm1090, %v1082, %v1087
      %v1092 = vmul.f32 %v1075, %v1091
      %v1094 = vperm.slane %v694, 0
      %v1096 = vmul.f32 %v1092, %v1094
      %v1098 = vperm.slane %v695, 0
      %v1100 = vadd.f32 %v1096, %v1098
      %v1101 = vpack.c.bf16 %v1100, %v1100
      %v1103 = vperm.slane %v700, 0
      %v1109 = vunpack.c.l.b16 %v696
      %v1110 = vunpack.c.l.b16 %v697
      %v1111 = vunpack.c.l.b16 %v698
      %v1112 = vunpack.c.l.b16 %v699
      %v1113 = vpack.c.b16 %v1110, %v1109
      %v1114 = vpack.c.b16 %v1112, %v1111
      %v1118 = vsel %vm726, %v1101, 0
      %1120 = vmatpush.bf16.msra.mxu0 0
      %1121 = vmatpush.bf16.msra.mxu0 0
      %1122 = vmatpush.bf16.msra.mxu0 0
      %1123 = vmatpush.bf16.msra.mxu0 0
      %1124 = vmatpush.bf16.msra.mxu0 0
      %1125 = vmatpush.bf16.msra.mxu0 0
      %1126 = vmatpush.bf16.msra.mxu0 %v1114
      %1127 = vmatpush.bf16.msra.mxu0 %v1113
      %1128 = vmatmul.bf16.gmra.mxu0 %v1118
      %v1129 = vpop.f32.mrf.mxu0
      %v1130 = vadd.f32 %v1103, %v1129
      %v1131 = vpop.f32.mrf.mxu0
      %1132 = vdwg.mxu0
      %v1133 = vmax.f32 %v1130, 0.0
      %v1134 = vpack.c.bf16 %v1133, %v1133
      %v1136 = vperm.slane %v709, 0
      %v1146 = vunpack.c.l.b16 %v701
      %v1147 = vunpack.c.l.b16 %v702
      %v1148 = vunpack.c.l.b16 %v703
      %v1149 = vunpack.c.l.b16 %v704
      %v1150 = vunpack.c.l.b16 %v705
      %v1151 = vunpack.c.l.b16 %v706
      %v1152 = vunpack.c.l.b16 %v707
      %v1153 = vunpack.c.l.b16 %v708
      %v1154 = vpack.c.b16 %v1147, %v1146
      %v1155 = vpack.c.b16 %v1149, %v1148
      %v1156 = vpack.c.b16 %v1151, %v1150
      %v1157 = vpack.c.b16 %v1153, %v1152
      %vm1162 = vcmask 523264
      %v1164 = vsel %vm1162, %v1134, 0
      %1166 = vmatpush.bf16.msra.mxu0 0
      %1167 = vmatpush.bf16.msra.mxu0 0
      %1168 = vmatpush.bf16.msra.mxu0 0
      %1169 = vmatpush.bf16.msra.mxu0 0
      %1170 = vmatpush.bf16.msra.mxu0 %v1157
      %1171 = vmatpush.bf16.msra.mxu0 %v1156
      %1172 = vmatpush.bf16.msra.mxu0 %v1155
      %1173 = vmatpush.bf16.msra.mxu0 %v1154
      %1174 = vmatmul.bf16.gmra.mxu0 %v1164
      %v1175 = vpop.f32.mrf.mxu0
      %v1176 = vadd.f32 %v1136, %v1175
      %v1177 = vpop.f32.mrf.mxu0
      %1178 = vdwg.mxu0
      %v1179 = vadd.f32 %v1100, %v1176
      %v1180 = vsel %vm726, %v1179, 0.0
      %1181 = vadd.xlane.f32.xlu0 %v1180
      %v1182 = vpop.xlane.xlu0 %1181
      %v1183 = vmul.f32 %v1182, %v1073
      %v1184 = vsub.f32 %v1179, %v1183
      %v1185 = vmul.f32 %v1184, %v1184
      %v1186 = vsel %vm726, %v1185, 0.0
      %1187 = vadd.xlane.f32.xlu0 %v1186
      %v1188 = vpop.xlane.xlu0 %1187
      %v1189 = vmul.f32 %v1188, %v1073
      %v1190 = vadd.f32 %v1189, 1e-05
      %v1191 = vrsqrt.pop %v1190
      %v1192 = vmul.f32 %v1191, %v1190
      %v1193 = vmul.f32 %v1192, %v1191
      %v1194 = vmul.f32 0.5, %v1193
      %v1195 = vsub.f32 1.5, %v1194
      %v1196 = vmul.f32 %v1191, %v1195
      %vm1197 = vweird.f32 %v1190
      %vm1198 = vweird.f32 %v1191
      %vm1199 = vmor %vm1197, %vm1198
      %v1200 = vsel %vm1199, %v1191, %v1196
      %v1201 = vmul.f32 %v1184, %v1200
      %v1202 = vmul.f32 %v1201, %v1094
      %v1203 = vadd.f32 %v1202, %v1098
      %v1204 = vld [vmem:[%s12] sm:$0xf]
      %v1205 = vld [vmem:[%s12 + $0x4] sm:$0xf]
      %v1206 = vld [vmem:[%s12 + $0x8] sm:$0xf]
      %v1207 = vld [vmem:[%s12 + $0xc] sm:$0xf]
      %v1208 = vld [vmem:[%s13] sm:$0x1]
      %v1209 = vld [vmem:[%s14] sm:$0xf]
      %v1210 = vld [vmem:[%s14 + $0x4] sm:$0xf]
      %v1211 = vld [vmem:[%s14 + $0x8] sm:$0xf]
      %v1212 = vld [vmem:[%s14 + $0xc] sm:$0xf]
      %v1213 = vld [vmem:[%s15] sm:$0x1]
      %v1214 = vld [vmem:[%s16] sm:$0x1]
      %v1215 = vld [vmem:[%s17] sm:$0x1]
      %v1216 = vld [vmem:[%s18] sm:$0xf]
      %v1217 = vld [vmem:[%s18 + $0x4] sm:$0xf]
      %v1218 = vld [vmem:[%s18 + $0x8] sm:$0xf]
      %v1219 = vld [vmem:[%s18 + $0xc] sm:$0xf]
      %v1220 = vld [vmem:[%s19] sm:$0x1]
      %v1221 = vld [vmem:[%s20] sm:$0xf]
      %v1222 = vld [vmem:[%s20 + $0x4] sm:$0xf]
      %v1223 = vld [vmem:[%s20 + $0x8] sm:$0xf]
      %v1224 = vld [vmem:[%s20 + $0xc] sm:$0xf]
      %v1225 = vld [vmem:[%s20 + $0x10] sm:$0xf]
      %v1226 = vld [vmem:[%s20 + $0x14] sm:$0xf]
      %v1227 = vld [vmem:[%s20 + $0x18] sm:$0xf]
      %v1228 = vld [vmem:[%s20 + $0x1c] sm:$0xf]
      %v1229 = vld [vmem:[%s21] sm:$0x1]
      %v1230 = vpack.c.bf16 %v1203, %v1203
      %v1232 = vperm.slane %v1208, 0
      %v1238 = vunpack.c.l.b16 %v1204
      %v1239 = vunpack.c.l.b16 %v1205
      %v1240 = vunpack.c.l.b16 %v1206
      %v1241 = vunpack.c.l.b16 %v1207
      %v1242 = vpack.c.b16 %v1239, %v1238
      %v1243 = vpack.c.b16 %v1241, %v1240
      %v1247 = vsel %vm726, %v1230, 0
      %1249 = vmatpush.bf16.msra.mxu0 0
      %1250 = vmatpush.bf16.msra.mxu0 0
      %1251 = vmatpush.bf16.msra.mxu0 0
      %1252 = vmatpush.bf16.msra.mxu0 0
      %1253 = vmatpush.bf16.msra.mxu0 0
      %1254 = vmatpush.bf16.msra.mxu0 0
      %1255 = vmatpush.bf16.msra.mxu0 %v1243
      %1256 = vmatpush.bf16.msra.mxu0 %v1242
      %1257 = vmatmul.bf16.gmra.mxu0 %v1247
      %v1258 = vpop.f32.mrf.mxu0
      %v1259 = vadd.f32 %v1232, %v1258
      %v1260 = vpop.f32.mrf.mxu0
      %1261 = vdwg.mxu0
      %v1262 = vmul.f32 %v1259, 0.35355338
      %v1263 = vpack.c.bf16 %v1262, %v1262
      %v1264 = vpack.c.bf16 %v1259, %v1259
      %v1266 = vunpack.c.l.b16 %v1264
      %v1267 = vpack.c.b16 %v1266, %v1266
      %1268 = vrot.lane.b32.xlu0 %v1267, 96
      %v1269 = vpop.permute.xlu0 %1268
      %v1271 = vsel %vm751, %v1263, 0
      %v1274 = vsel %vm751, %v1269, 0
      %1276 = vmatpush.bf16.xpose.msra.mxu0 0
      %1277 = vmatpush.bf16.xpose.msra.mxu0 0
      %1278 = vmatpush.bf16.xpose.msra.mxu0 0
      %1279 = vmatpush.bf16.xpose.msra.mxu0 0
      %1280 = vmatpush.bf16.xpose.msra.mxu0 0
      %1281 = vmatpush.bf16.xpose.msra.mxu0 0
      %1282 = vmatpush.bf16.xpose.msra.mxu0 0
      %1283 = vmatpush.bf16.xpose.msra.mxu0 %v1274
      %1284 = vmatmul.bf16.gmra.mxu0 %v1271
      %v1285 = vpop.f32.mrf.mxu0
      %v1286 = vadd.f32 0.0, %v1285
      %v1287 = vpop.f32.mrf.mxu0
      %1288 = vdwg.mxu0
      %v1289 = vsel %vm751, %v1286, -inf
      %1290 = vmax.xlane.f32.xlu0 %v1289
      %v1291 = vpop.xlane.xlu0 %1290
      %v1292 = vsub.f32 %v1286, %v1291
      %v1293 = vmul.f32 %v1292, 1.442695
      %v1294 = vpow.pop %v1293
      %v1295 = vsel %vm751, %v1294, 0.0
      %1296 = vadd.xlane.f32.xlu0 %v1295
      %v1297 = vpop.xlane.xlu0 %1296
      %v1298 = vrcp.pop %v1297
      %v1299 = vmul.f32 %v1294, %v1298
      %v1300 = vpack.c.bf16 %v1299, %v1299
      %1301 = vrot.lane.b32.xlu0 %v1267, 64
      %v1302 = vpop.permute.xlu0 %1301
      %v1304 = vsel %vm751, %v1300, 0
      %v1307 = vsel %vm788, %v1302, 0
      %1309 = vmatpush.bf16.msra.mxu0 0
      %1310 = vmatpush.bf16.msra.mxu0 0
      %1311 = vmatpush.bf16.msra.mxu0 0
      %1312 = vmatpush.bf16.msra.mxu0 0
      %1313 = vmatpush.bf16.msra.mxu0 0
      %1314 = vmatpush.bf16.msra.mxu0 0
      %1315 = vmatpush.bf16.msra.mxu0 0
      %1316 = vmatpush.bf16.msra.mxu0 %v1307
      %1317 = vmatmul.bf16.gmra.mxu0 %v1304
      %v1318 = vpop.f32.mrf.mxu0
      %v1319 = vadd.f32 0.0, %v1318
      %v1320 = vpop.f32.mrf.mxu0
      %1321 = vdwg.mxu0
      %v1322 = vpack.c.bf16 %v1319, %v1319
      %v1324 = vsel %vm751, %v1322, 0
      %v1327 = vsel %vm788, %v1209, 0
      %1329 = vmatpush.bf16.msra.mxu0 0
      %1330 = vmatpush.bf16.msra.mxu0 0
      %1331 = vmatpush.bf16.msra.mxu0 0
      %1332 = vmatpush.bf16.msra.mxu0 0
      %1333 = vmatpush.bf16.msra.mxu0 0
      %1334 = vmatpush.bf16.msra.mxu0 0
      %1335 = vmatpush.bf16.msra.mxu0 0
      %1336 = vmatpush.bf16.msra.mxu0 %v1327
      %1337 = vmatmul.bf16.gmra.mxu0 %v1324
      %v1338 = vpop.f32.mrf.mxu0
      %v1339 = vadd.f32 0.0, %v1338
      %v1340 = vpop.f32.mrf.mxu0
      %1341 = vdwg.mxu0
      %v1343 = vperm.slane %v1213, 0
      %v1345 = vadd.f32 %v1343, %v1339
      %v1347 = vunpack.c.l.b16 %v1263
      %v1348 = vpack.c.b16 %v1347, %v1347
      %1349 = vrot.lane.b32.xlu0 %v1348, 120
      %v1350 = vpop.permute.xlu0 %1349
      %1351 = vrot.lane.b32.xlu0 %v1267, 88
      %v1352 = vpop.permute.xlu0 %1351
      %v1354 = vsel %vm751, %v1350, 0
      %v1357 = vsel %vm751, %v1352, 0
      %1359 = vmatpush.bf16.xpose.msra.mxu0 0
      %1360 = vmatpush.bf16.xpose.msra.mxu0 0
      %1361 = vmatpush.bf16.xpose.msra.mxu0 0
      %1362 = vmatpush.bf16.xpose.msra.mxu0 0
      %1363 = vmatpush.bf16.xpose.msra.mxu0 0
      %1364 = vmatpush.bf16.xpose.msra.mxu0 0
      %1365 = vmatpush.bf16.xpose.msra.mxu0 0
      %1366 = vmatpush.bf16.xpose.msra.mxu0 %v1357
      %1367 = vmatmul.bf16.gmra.mxu0 %v1354
      %v1368 = vpop.f32.mrf.mxu0
      %v1369 = vadd.f32 0.0, %v1368
      %v1370 = vpop.f32.mrf.mxu0
      %1371 = vdwg.mxu0
      %v1372 = vsel %vm751, %v1369, -inf
      %1373 = vmax.xlane.f32.xlu0 %v1372
      %v1374 = vpop.xlane.xlu0 %1373
      %v1375 = vsub.f32 %v1369, %v1374
      %v1376 = vmul.f32 %v1375, 1.442695
      %v1377 = vpow.pop %v1376
      %v1378 = vsel %vm751, %v1377, 0.0
      %1379 = vadd.xlane.f32.xlu0 %v1378
      %v1380 = vpop.xlane.xlu0 %1379
      %v1381 = vrcp.pop %v1380
      %v1382 = vmul.f32 %v1377, %v1381
      %v1383 = vpack.c.bf16 %v1382, %v1382
      %1384 = vrot.lane.b32.xlu0 %v1267, 56
      %v1385 = vpop.permute.xlu0 %1384
      %v1387 = vsel %vm751, %v1383, 0
      %v1390 = vsel %vm788, %v1385, 0
      %1392 = vmatpush.bf16.msra.mxu0 0
      %1393 = vmatpush.bf16.msra.mxu0 0
      %1394 = vmatpush.bf16.msra.mxu0 0
      %1395 = vmatpush.bf16.msra.mxu0 0
      %1396 = vmatpush.bf16.msra.mxu0 0
      %1397 = vmatpush.bf16.msra.mxu0 0
      %1398 = vmatpush.bf16.msra.mxu0 0
      %1399 = vmatpush.bf16.msra.mxu0 %v1390
      %1400 = vmatmul.bf16.gmra.mxu0 %v1387
      %v1401 = vpop.f32.mrf.mxu0
      %v1402 = vadd.f32 0.0, %v1401
      %v1403 = vpop.f32.mrf.mxu0
      %1404 = vdwg.mxu0
      %v1405 = vpack.c.bf16 %v1402, %v1402
      %v1407 = vsel %vm751, %v1405, 0
      %v1410 = vsel %vm788, %v1210, 0
      %1412 = vmatpush.bf16.msra.mxu0 0
      %1413 = vmatpush.bf16.msra.mxu0 0
      %1414 = vmatpush.bf16.msra.mxu0 0
      %1415 = vmatpush.bf16.msra.mxu0 0
      %1416 = vmatpush.bf16.msra.mxu0 0
      %1417 = vmatpush.bf16.msra.mxu0 0
      %1418 = vmatpush.bf16.msra.mxu0 0
      %1419 = vmatpush.bf16.msra.mxu0 %v1410
      %1420 = vmatmul.bf16.gmra.mxu0 %v1407
      %v1421 = vpop.f32.mrf.mxu0
      %v1422 = vadd.f32 0.0, %v1421
      %v1423 = vpop.f32.mrf.mxu0
      %1424 = vdwg.mxu0
      %v1425 = vadd.f32 %v1345, %v1422
      %1426 = vrot.lane.b32.xlu0 %v1348, 112
      %v1427 = vpop.permute.xlu0 %1426
      %1428 = vrot.lane.b32.xlu0 %v1267, 80
      %v1429 = vpop.permute.xlu0 %1428
      %v1431 = vsel %vm751, %v1427, 0
      %v1434 = vsel %vm751, %v1429, 0
      %1436 = vmatpush.bf16.xpose.msra.mxu0 0
      %1437 = vmatpush.bf16.xpose.msra.mxu0 0
      %1438 = vmatpush.bf16.xpose.msra.mxu0 0
      %1439 = vmatpush.bf16.xpose.msra.mxu0 0
      %1440 = vmatpush.bf16.xpose.msra.mxu0 0
      %1441 = vmatpush.bf16.xpose.msra.mxu0 0
      %1442 = vmatpush.bf16.xpose.msra.mxu0 0
      %1443 = vmatpush.bf16.xpose.msra.mxu0 %v1434
      %1444 = vmatmul.bf16.gmra.mxu0 %v1431
      %v1445 = vpop.f32.mrf.mxu0
      %v1446 = vadd.f32 0.0, %v1445
      %v1447 = vpop.f32.mrf.mxu0
      %1448 = vdwg.mxu0
      %v1449 = vsel %vm751, %v1446, -inf
      %1450 = vmax.xlane.f32.xlu0 %v1449
      %v1451 = vpop.xlane.xlu0 %1450
      %v1452 = vsub.f32 %v1446, %v1451
      %v1453 = vmul.f32 %v1452, 1.442695
      %v1454 = vpow.pop %v1453
      %v1455 = vsel %vm751, %v1454, 0.0
      %1456 = vadd.xlane.f32.xlu0 %v1455
      %v1457 = vpop.xlane.xlu0 %1456
      %v1458 = vrcp.pop %v1457
      %v1459 = vmul.f32 %v1454, %v1458
      %v1460 = vpack.c.bf16 %v1459, %v1459
      %1461 = vrot.lane.b32.xlu0 %v1267, 48
      %v1462 = vpop.permute.xlu0 %1461
      %v1464 = vsel %vm751, %v1460, 0
      %v1467 = vsel %vm788, %v1462, 0
      %1469 = vmatpush.bf16.msra.mxu0 0
      %1470 = vmatpush.bf16.msra.mxu0 0
      %1471 = vmatpush.bf16.msra.mxu0 0
      %1472 = vmatpush.bf16.msra.mxu0 0
      %1473 = vmatpush.bf16.msra.mxu0 0
      %1474 = vmatpush.bf16.msra.mxu0 0
      %1475 = vmatpush.bf16.msra.mxu0 0
      %1476 = vmatpush.bf16.msra.mxu0 %v1467
      %1477 = vmatmul.bf16.gmra.mxu0 %v1464
      %v1478 = vpop.f32.mrf.mxu0
      %v1479 = vadd.f32 0.0, %v1478
      %v1480 = vpop.f32.mrf.mxu0
      %1481 = vdwg.mxu0
      %v1482 = vpack.c.bf16 %v1479, %v1479
      %v1484 = vsel %vm751, %v1482, 0
      %v1487 = vsel %vm788, %v1211, 0
      %1489 = vmatpush.bf16.msra.mxu0 0
      %1490 = vmatpush.bf16.msra.mxu0 0
      %1491 = vmatpush.bf16.msra.mxu0 0
      %1492 = vmatpush.bf16.msra.mxu0 0
      %1493 = vmatpush.bf16.msra.mxu0 0
      %1494 = vmatpush.bf16.msra.mxu0 0
      %1495 = vmatpush.bf16.msra.mxu0 0
      %1496 = vmatpush.bf16.msra.mxu0 %v1487
      %1497 = vmatmul.bf16.gmra.mxu0 %v1484
      %v1498 = vpop.f32.mrf.mxu0
      %v1499 = vadd.f32 0.0, %v1498
      %v1500 = vpop.f32.mrf.mxu0
      %1501 = vdwg.mxu0
      %v1502 = vadd.f32 %v1425, %v1499
      %1503 = vrot.lane.b32.xlu0 %v1348, 104
      %v1504 = vpop.permute.xlu0 %1503
      %1505 = vrot.lane.b32.xlu0 %v1267, 72
      %v1506 = vpop.permute.xlu0 %1505
      %v1508 = vsel %vm751, %v1504, 0
      %v1511 = vsel %vm751, %v1506, 0
      %1513 = vmatpush.bf16.xpose.msra.mxu0 0
      %1514 = vmatpush.bf16.xpose.msra.mxu0 0
      %1515 = vmatpush.bf16.xpose.msra.mxu0 0
      %1516 = vmatpush.bf16.xpose.msra.mxu0 0
      %1517 = vmatpush.bf16.xpose.msra.mxu0 0
      %1518 = vmatpush.bf16.xpose.msra.mxu0 0
      %1519 = vmatpush.bf16.xpose.msra.mxu0 0
      %1520 = vmatpush.bf16.xpose.msra.mxu0 %v1511
      %1521 = vmatmul.bf16.gmra.mxu0 %v1508
      %v1522 = vpop.f32.mrf.mxu0
      %v1523 = vadd.f32 0.0, %v1522
      %v1524 = vpop.f32.mrf.mxu0
      %1525 = vdwg.mxu0
      %v1526 = vsel %vm751, %v1523, -inf
      %1527 = vmax.xlane.f32.xlu0 %v1526
      %v1528 = vpop.xlane.xlu0 %1527
      %v1529 = vsub.f32 %v1523, %v1528
      %v1530 = vmul.f32 %v1529, 1.442695
      %v1531 = vpow.pop %v1530
      %v1532 = vsel %vm751, %v1531, 0.0
      %1533 = vadd.xlane.f32.xlu0 %v1532
      %v1534 = vpop.xlane.xlu0 %1533
      %v1535 = vrcp.pop %v1534
      %v1536 = vmul.f32 %v1531, %v1535
      %v1537 = vpack.c.bf16 %v1536, %v1536
      %1538 = vrot.lane.b32.xlu0 %v1267, 40
      %v1539 = vpop.permute.xlu0 %1538
      %v1541 = vsel %vm751, %v1537, 0
      %v1544 = vsel %vm788, %v1539, 0
      %1546 = vmatpush.bf16.msra.mxu0 0
      %1547 = vmatpush.bf16.msra.mxu0 0
      %1548 = vmatpush.bf16.msra.mxu0 0
      %1549 = vmatpush.bf16.msra.mxu0 0
      %1550 = vmatpush.bf16.msra.mxu0 0
      %1551 = vmatpush.bf16.msra.mxu0 0
      %1552 = vmatpush.bf16.msra.mxu0 0
      %1553 = vmatpush.bf16.msra.mxu0 %v1544
      %1554 = vmatmul.bf16.gmra.mxu0 %v1541
      %v1555 = vpop.f32.mrf.mxu0
      %v1556 = vadd.f32 0.0, %v1555
      %v1557 = vpop.f32.mrf.mxu0
      %1558 = vdwg.mxu0
      %v1559 = vpack.c.bf16 %v1556, %v1556
      %v1561 = vsel %vm751, %v1559, 0
      %v1564 = vsel %vm788, %v1212, 0
      %1566 = vmatpush.bf16.msra.mxu0 0
      %1567 = vmatpush.bf16.msra.mxu0 0
      %1568 = vmatpush.bf16.msra.mxu0 0
      %1569 = vmatpush.bf16.msra.mxu0 0
      %1570 = vmatpush.bf16.msra.mxu0 0
      %1571 = vmatpush.bf16.msra.mxu0 0
      %1572 = vmatpush.bf16.msra.mxu0 0
      %1573 = vmatpush.bf16.msra.mxu0 %v1564
      %1574 = vmatmul.bf16.gmra.mxu0 %v1561
      %v1575 = vpop.f32.mrf.mxu0
      %v1576 = vadd.f32 0.0, %v1575
      %v1577 = vpop.f32.mrf.mxu0
      %1578 = vdwg.mxu0
      %v1579 = vadd.f32 %v1502, %v1576
      %v1580 = vadd.f32 %v1203, %v1579
      %v1581 = vsel %vm726, %v1580, 0.0
      %1582 = vadd.xlane.f32.xlu0 %v1581
      %v1583 = vpop.xlane.xlu0 %1582
      %v1584 = vmul.f32 %v1583, %v1073
      %v1585 = vsub.f32 %v1580, %v1584
      %v1586 = vmul.f32 %v1585, %v1585
      %v1587 = vsel %vm726, %v1586, 0.0
      %1588 = vadd.xlane.f32.xlu0 %v1587
      %v1589 = vpop.xlane.xlu0 %1588
      %v1590 = vmul.f32 %v1589, %v1073
      %v1591 = vadd.f32 %v1590, 1e-05
      %v1592 = vrsqrt.pop %v1591
      %v1593 = vmul.f32 %v1592, %v1591
      %v1594 = vmul.f32 %v1593, %v1592
      %v1595 = vmul.f32 0.5, %v1594
      %v1596 = vsub.f32 1.5, %v1595
      %v1597 = vmul.f32 %v1592, %v1596
      %vm1598 = vweird.f32 %v1591
      %vm1599 = vweird.f32 %v1592
      %vm1600 = vmor %vm1598, %vm1599
      %v1601 = vsel %vm1600, %v1592, %v1597
      %v1602 = vmul.f32 %v1585, %v1601
      %v1604 = vperm.slane %v1214, 0
      %v1606 = vmul.f32 %v1602, %v1604
      %v1608 = vperm.slane %v1215, 0
      %v1610 = vadd.f32 %v1606, %v1608
      %v1611 = vpack.c.bf16 %v1610, %v1610
      %v1613 = vperm.slane %v1220, 0
      %v1619 = vunpack.c.l.b16 %v1216
      %v1620 = vunpack.c.l.b16 %v1217
      %v1621 = vunpack.c.l.b16 %v1218
      %v1622 = vunpack.c.l.b16 %v1219
      %v1623 = vpack.c.b16 %v1620, %v1619
      %v1624 = vpack.c.b16 %v1622, %v1621
      %v1628 = vsel %vm726, %v1611, 0
      %1630 = vmatpush.bf16.msra.mxu0 0
      %1631 = vmatpush.bf16.msra.mxu0 0
      %1632 = vmatpush.bf16.msra.mxu0 0
      %1633 = vmatpush.bf16.msra.mxu0 0
      %1634 = vmatpush.bf16.msra.mxu0 0
      %1635 = vmatpush.bf16.msra.mxu0 0
      %1636 = vmatpush.bf16.msra.mxu0 %v1624
      %1637 = vmatpush.bf16.msra.mxu0 %v1623
      %1638 = vmatmul.bf16.gmra.mxu0 %v1628
      %v1639 = vpop.f32.mrf.mxu0
      %v1640 = vadd.f32 %v1613, %v1639
      %v1641 = vpop.f32.mrf.mxu0
      %1642 = vdwg.mxu0
      %v1643 = vmax.f32 %v1640, 0.0
      %v1644 = vpack.c.bf16 %v1643, %v1643
      %v1646 = vperm.slane %v1229, 0
      %v1656 = vunpack.c.l.b16 %v1221
      %v1657 = vunpack.c.l.b16 %v1222
      %v1658 = vunpack.c.l.b16 %v1223
      %v1659 = vunpack.c.l.b16 %v1224
      %v1660 = vunpack.c.l.b16 %v1225
      %v1661 = vunpack.c.l.b16 %v1226
      %v1662 = vunpack.c.l.b16 %v1227
      %v1663 = vunpack.c.l.b16 %v1228
      %v1664 = vpack.c.b16 %v1657, %v1656
      %v1665 = vpack.c.b16 %v1659, %v1658
      %v1666 = vpack.c.b16 %v1661, %v1660
      %v1667 = vpack.c.b16 %v1663, %v1662
      %v1673 = vsel %vm1162, %v1644, 0
      %1675 = vmatpush.bf16.msra.mxu0 0
      %1676 = vmatpush.bf16.msra.mxu0 0
      %1677 = vmatpush.bf16.msra.mxu0 0
      %1678 = vmatpush.bf16.msra.mxu0 0
      %1679 = vmatpush.bf16.msra.mxu0 %v1667
      %1680 = vmatpush.bf16.msra.mxu0 %v1666
      %1681 = vmatpush.bf16.msra.mxu0 %v1665
      %1682 = vmatpush.bf16.msra.mxu0 %v1664
      %1683 = vmatmul.bf16.gmra.mxu0 %v1673
      %v1684 = vpop.f32.mrf.mxu0
      %v1685 = vadd.f32 %v1646, %v1684
      %v1686 = vpop.f32.mrf.mxu0
      %1687 = vdwg.mxu0
      %v1688 = vadd.f32 %v1610, %v1685
      %v1689 = vsel %vm726, %v1688, 0.0
      %1690 = vadd.xlane.f32.xlu0 %v1689
      %v1691 = vpop.xlane.xlu0 %1690
      %v1692 = vmul.f32 %v1691, %v1073
      %v1693 = vsub.f32 %v1688, %v1692
      %v1694 = vmul.f32 %v1693, %v1693
      %v1695 = vsel %vm726, %v1694, 0.0
      %1696 = vadd.xlane.f32.xlu0 %v1695
      %v1697 = vpop.xlane.xlu0 %1696
      %v1698 = vmul.f32 %v1697, %v1073
      %v1699 = vadd.f32 %v1698, 1e-05
      %v1700 = vrsqrt.pop %v1699
      %v1701 = vmul.f32 %v1700, %v1699
      %v1702 = vmul.f32 %v1701, %v1700
      %v1703 = vmul.f32 0.5, %v1702
      %v1704 = vsub.f32 1.5, %v1703
      %v1705 = vmul.f32 %v1700, %v1704
      %vm1706 = vweird.f32 %v1699
      %vm1707 = vweird.f32 %v1700
      %vm1708 = vmor %vm1706, %vm1707
      %v1709 = vsel %vm1708, %v1700, %v1705
      %v1710 = vmul.f32 %v1693, %v1709
      %v1711 = vmul.f32 %v1710, %v1604
      %v1712 = vadd.f32 %v1711, %v1608
      %1713 = vst.msk [vmem:[%s678] sm:$0xff] %vm726, %v1712
      %p1714 = scmp.lt.s32.totalorder %s33, 1
      %s1715 = scalar_select %p1714, %s33, 1
      %s1716 = smul.addr %s1715, 8
      %s1717 = scalar_lea.vmem %s22, %s1716
      // Predicated region
      $region109: #{decoder_pedal_forward.3} parent=107 // pred_check
        %p1718 = pneg %p518
      $region110: #{decoder_pedal_forward.3} parent=107 // pred_check_branch
        %1720 = sbr.rel (%p1718) target = $region112
      $region111: #{decoder_pedal_forward.3} parent=107 // pred_region
        _
      $region112: #{decoder_pedal_forward.3} parent=107 // pred_fallthru
        _
    $region108: #{decoder_pedal_forward.3} parent=5 // pred_fallthru
      _
    %p1721 = scmp.le.s32.totalorder 2, %s28
    // Predicated region
    $region113: #{decoder_pedal_forward.3} parent=5 // pred_check
      %p1722 = pneg %p1721
    $region114: #{decoder_pedal_forward.3} parent=5 // pred_check_branch
      %1724 = sbr.rel (%p1722) target = $region116
    $region115: #{decoder_pedal_forward.3} parent=5 // pred_region
      %s1725 = ssub.s32 %s28, 2
      // Predicated region
      $region117: #{decoder_pedal_forward.3} parent=115 // pred_check
        %p1726 = pneg %p524
      $region118: #{decoder_pedal_forward.3} parent=115 // pred_check_branch
        %1728 = sbr.rel (%p1726) target = $region120
      $region119: #{decoder_pedal_forward.3} parent=115 // pred_region
        %p1729 = scmp.lt.s32.totalorder %s34, 1
        %s1730 = scalar_select %p1729, %s34, 1
        %s1731 = smul.addr %s1730, 8
        %s1732 = scalar_lea.vmem %s22, %s1731
      $region120: #{decoder_pedal_forward.3} parent=115 // pred_fallthru
        _
    $region116: #{decoder_pedal_forward.3} parent=5 // pred_fallthru
      _
  $region6: #{decoder_pedal_forward.3} parent=0 // loop_footer
    %s32 = sadd.s32 1, %s28
  $region7: #{decoder_pedal_forward.3} parent=0 // loop_footer_branch
    %27 = sbr.rel target = $region3
  $region8: #{decoder_pedal_forward.3} parent=0 // loop_exit
    _

// kernel: decoder_pedal_forward.2
$region0: #{decoder_pedal_forward.2}
  #allocation0 [shape = 'u32[]', space=smem, size = 0x4, offset = 0x4, fixed_abs, tag = 'smem constant byte address 0x4 - core index']
  #allocation1 [shape = 'u32[72,128]{1,0:T(1,128)}', space=vmem, size = 0x9000, scoped, tag = 'internal scratch']
  %s0 = inlined_call_operand.smem [shape: u32[32], index: -1, kind: input, shape index: {}]
  %s1 = sld [smem:[%s0]]
  %s2 = scalar_lea.smem %s0, 1
  %s3 = sld [smem:[%s2]]
  %s4 = scalar_lea.smem %s0, 2
  %s5 = sld [smem:[%s4]]
  %s6 = scalar_lea.smem %s0, 3
  %s7 = sld [smem:[%s6]]
  %s8 = scalar_lea.smem %s0, 4
  %s9 = sld [smem:[%s8]]
  %s10 = scalar_lea.smem %s0, 5
  %s11 = sld [smem:[%s10]]
  %s12 = scalar_lea.smem %s0, 6
  %s13 = sld [smem:[%s12]]
  %s14 = scalar_lea.smem %s0, 7
  %s15 = sld [smem:[%s14]]
  %s16 = scalar_lea.smem %s0, 8
  %s17 = sld [smem:[%s16]]
  %s18 = scalar_lea.smem %s0, 9
  %s19 = sld [smem:[%s18]]
  %s20 = scalar_lea.smem %s0, 10
  %s21 = sld [smem:[%s20]]
  %s22 = scalar_lea.smem %s0, 11
  %s23 = sld [smem:[%s22]]
  %s24 = scalar_lea.smem %s0, 12
  %s25 = sld [smem:[%s24]]
  %s26 = scalar_lea.smem %s0, 13
  %s27 = sld [smem:[%s26]]
  %s28 = scalar_lea.smem %s0, 14
  %s29 = sld [smem:[%s28]]
  %s30 = scalar_lea.smem %s0, 15
  %s31 = sld [smem:[%s30]]
  %s32 = scalar_lea.smem %s0, 16
  %s33 = sld [smem:[%s32]]
  %s34 = scalar_lea.smem %s0, 17
  %s35 = sld [smem:[%s34]]
  %s36 = scalar_lea.smem %s0, 18
  %s37 = sld [smem:[%s36]]
  %s38 = scalar_lea.smem %s0, 19
  %s39 = sld [smem:[%s38]]
  %s40 = scalar_lea.smem %s0, 20
  %s41 = sld [smem:[%s40]]
  %s42 = scalar_lea.smem %s0, 21
  %s43 = sld [smem:[%s42]]
  %s44 = scalar_lea.smem %s0, 22
  %s45 = sld [smem:[%s44]]
  %s46 = scalar_lea.smem %s0, 23
  %s47 = sld [smem:[%s46]]
  %s48 = scalar_lea.smem %s0, 24
  %s49 = sld [smem:[%s48]]
  %s50 = scalar_lea.smem %s0, 25
  %s51 = sld [smem:[%s50]]
  %s52 = scalar_lea.smem %s0, 26
  %s53 = sld [smem:[%s52]]
  %s54 = scalar_lea.smem %s0, 27
  %s55 = sld [smem:[%s54]]
  %s56 = scalar_lea.smem %s0, 28
  %s57 = sld [smem:[%s56]]
  %s58 = scalar_lea.smem %s0, 29
  %s59 = sld [smem:[%s58]]
  %s60 = scalar_lea.smem %s0, 30
  %s61 = sld [smem:[%s60]]
  %s62 = scalar_lea.smem %s0, 31
  %s63 = sld [smem:[%s62]]
  %64 = xla_tuple %s61, %s63
  %s65 = sld [smem:[#allocation0]]
  $region161: #{decoder_pedal_forward.2} parent=0
    _
  %s67 = ssub.s32 1, %s65
  %s68 = scalar_select 0, %s67, %s65
  $region1: #{decoder_pedal_forward.2} parent=0
    #allocation2 [shape = 'u8[32768]{0}', space=vmem, size = 0x8000, scoped, tag = 'output window, operand 1']
    #allocation3 [shape = 's32[2]{0}', space=sflag, size = 0x8, scoped, tag = 'scoped memory for decoder_pedal_forward.2']
    %69 = vsyncpa [#allocation3], 0
    %s70 = scalar_lea.sflag [#allocation3], 1
    %71 = vsyncpa %s70, 0
    loop: start=0, step=1, limit=4
    $region2: #{decoder_pedal_forward.2} parent=1 // loop_pre_header
      _
    $region3: #{decoder_pedal_forward.2} parent=1 // loop_header
      %s73 = sphi 0, %s77
      %p74 = scmp.ge.s32.totalorder %s73, 4
      %s83 = sphi 0, %s85
      %s86 = sphi 0, %s83
      %s87 = sphi 0, %s86
      %s103 = sphi 0, %s87
      %s107 = sphi 0, %s107
      %s109 = sphi 0, %s107
      %s110 = sphi 0, %s109
      %s124 = sphi 0, %s110
      %s128 = sphi 0, %s128
      %s130 = sphi 0, %s128
      %s131 = sphi 0, %s130
      %s145 = sphi 0, %s131
      %s149 = sphi 0, %s149
      %s151 = sphi 0, %s149
      %s152 = sphi 0, %s151
      %s166 = sphi 0, %s152
      %s170 = sphi 0, %s170
      %s172 = sphi 0, %s170
      %s173 = sphi 0, %s172
      %s187 = sphi 0, %s173
      %s191 = sphi 0, %s191
      %s193 = sphi 0, %s191
      %s194 = sphi 0, %s193
      %s208 = sphi 0, %s194
      %s212 = sphi 0, %s212
      %s214 = sphi 0, %s212
      %s215 = sphi 0, %s214
      %s229 = sphi 0, %s215
      %s233 = sphi 0, %s233
      %s235 = sphi 0, %s233
      %s236 = sphi 0, %s235
      %s250 = sphi 0, %s236
      %s254 = sphi 0, %s254
      %s256 = sphi 0, %s254
      %s257 = sphi 0, %s256
      %s271 = sphi 0, %s257
      %s275 = sphi 0, %s275
      %s277 = sphi 0, %s275
      %s278 = sphi 0, %s277
      %s292 = sphi 0, %s278
      %s296 = sphi 0, %s296
      %s298 = sphi 0, %s296
      %s299 = sphi 0, %s298
      %s313 = sphi 0, %s299
      %s317 = sphi 0, %s317
      %s319 = sphi 0, %s317
      %s320 = sphi 0, %s319
      %s334 = sphi 0, %s320
      %s338 = sphi 0, %s338
      %s340 = sphi 0, %s338
      %s341 = sphi 0, %s340
      %s355 = sphi 0, %s341
      %s359 = sphi 0, %s359
      %s361 = sphi 0, %s359
      %s362 = sphi 0, %s361
      %s376 = sphi 0, %s362
      %s380 = sphi 0, %s380
      %s382 = sphi 0, %s380
      %s383 = sphi 0, %s382
      %s397 = sphi 0, %s383
      %s401 = sphi 0, %s401
      %s403 = sphi 0, %s401
      %s404 = sphi 0, %s403
      %s418 = sphi 0, %s404
      %s422 = sphi 0, %s422
      %s424 = sphi 0, %s422
      %s425 = sphi 0, %s424
      %s439 = sphi 0, %s425
      %s443 = sphi 0, %s443
      %s445 = sphi 0, %s443
      %s446 = sphi 0, %s445
      %s460 = sphi 0, %s446
      %s464 = sphi 0, %s464
      %s466 = sphi 0, %s464
      %s467 = sphi 0, %s466
      %s481 = sphi 0, %s467
      %s485 = sphi 0, %s485
      %s487 = sphi 0, %s485
      %s488 = sphi 0, %s487
      %s502 = sphi 0, %s488
      %s506 = sphi 0, %s506
      %s508 = sphi 0, %s506
      %s509 = sphi 0, %s508
      %s523 = sphi 0, %s509
      %s527 = sphi 0, %s527
      %s529 = sphi 0, %s527
      %s530 = sphi 0, %s529
      %s544 = sphi 0, %s530
      %s548 = sphi 0, %s548
      %s550 = sphi 0, %s548
      %s551 = sphi 0, %s550
      %s565 = sphi 0, %s551
      %s569 = sphi 0, %s569
      %s571 = sphi 0, %s569
      %s572 = sphi 0, %s571
      %s586 = sphi 0, %s572
      %s590 = sphi 0, %s590
      %s592 = sphi 0, %s590
      %s593 = sphi 0, %s592
      %s607 = sphi 0, %s593
      %s611 = sphi 0, %s611
      %s613 = sphi 0, %s611
      %s614 = sphi 0, %s613
      %s628 = sphi 0, %s614
      %s632 = sphi 0, %s632
      %s634 = sphi 0, %s632
      %s635 = sphi 0, %s634
      %s649 = sphi 0, %s635
      %s653 = sphi 0, %s653
      %s655 = sphi 0, %s653
      %s656 = sphi 0, %s655
      %s670 = sphi 0, %s656
      %s674 = sphi 0, %s674
      %s676 = sphi 0, %s674
      %s677 = sphi 0, %s676
      %s691 = sphi 0, %s677
      %s695 = sphi 0, %s695
      %s697 = sphi 0, %s695
      %s698 = sphi 0, %s697
      %s712 = sphi 0, %s698
      %s718 = sphi 0, %s720
      %s721 = sphi 0, %s718
      %s722 = sphi 0, %s721
      %s738 = sphi 0, %s722
      %s744 = sphi 0, %s746
      %s747 = sphi 0, %s744
      %s748 = sphi 0, %s747
      %s764 = sphi 0, %s748
    $region4: #{decoder_pedal_forward.2} parent=1 // loop_header_branch
      %76 = sbr.rel (%p74) target = $region8
    $region5: #{decoder_pedal_forward.2} parent=1 // loop_body
      %s78 = ssub.s32 %s73, 1
      %s79 = ssub.s32 %s73, 2
      %s80 = sadd.s32 %s73, 1
      %s81 = ssub.s32 %s73, %s80
      %p82 = scmp.eq.s32.totalorder %s81, 0
      %s84 = sadd.s32 %s83, 1
      %s85 = scalar_select %p82, %s83, %s84
      %p88 = pneg %p82
      %p89 = scmp.eq.s32.totalorder %s73, 1
      %p90 = por %p88, %p89
      %p91 = scmp.ne.s32.totalorder %s83, %s86
      %p92 = scmp.eq.s32.totalorder %s73, 0
      %p93 = por %p91, %p92
      %p94 = scmp.ne.s32.totalorder %s83, %s86
      %p95 = scmp.eq.s32.totalorder %s78, 1
      %p96 = por %p94, %p95
      %p97 = scmp.ne.s32.totalorder %s86, %s87
      %p98 = scmp.eq.s32.totalorder %s78, 0
      %p99 = por %p97, %p98
      %p100 = scmp.ne.s32.totalorder %s86, %s87
      %p101 = scmp.eq.s32.totalorder %s79, 1
      %p102 = por %p100, %p101
      %p104 = scmp.ne.s32.totalorder %s87, %s103
      %p105 = scmp.eq.s32.totalorder %s79, 0
      %p106 = por %p104, %p105
      %s108 = sadd.s32 %s107, 1
      %p111 = scmp.eq.s32.totalorder %s73, 1
      %p112 = scmp.ne.s32.totalorder %s107, %s109
      %p113 = scmp.eq.s32.totalorder %s73, 0
      %p114 = por %p112, %p113
      %p115 = scmp.ne.s32.totalorder %s107, %s109
      %p116 = scmp.eq.s32.totalorder %s78, 1
      %p117 = por %p115, %p116
      %p118 = scmp.ne.s32.totalorder %s109, %s110
      %p119 = scmp.eq.s32.totalorder %s78, 0
      %p120 = por %p118, %p119
      %p121 = scmp.ne.s32.totalorder %s109, %s110
      %p122 = scmp.eq.s32.totalorder %s79, 1
      %p123 = por %p121, %p122
      %p125 = scmp.ne.s32.totalorder %s110, %s124
      %p126 = scmp.eq.s32.totalorder %s79, 0
      %p127 = por %p125, %p126
      %s129 = sadd.s32 %s128, 1
      %p132 = scmp.eq.s32.totalorder %s73, 1
      %p133 = scmp.ne.s32.totalorder %s128, %s130
      %p134 = scmp.eq.s32.totalorder %s73, 0
      %p135 = por %p133, %p134
      %p136 = scmp.ne.s32.totalorder %s128, %s130
      %p137 = scmp.eq.s32.totalorder %s78, 1
      %p138 = por %p136, %p137
      %p139 = scmp.ne.s32.totalorder %s130, %s131
      %p140 = scmp.eq.s32.totalorder %s78, 0
      %p141 = por %p139, %p140
      %p142 = scmp.ne.s32.totalorder %s130, %s131
      %p143 = scmp.eq.s32.totalorder %s79, 1
      %p144 = por %p142, %p143
      %p146 = scmp.ne.s32.totalorder %s131, %s145
      %p147 = scmp.eq.s32.totalorder %s79, 0
      %p148 = por %p146, %p147
      %s150 = sadd.s32 %s149, 1
      %p153 = scmp.eq.s32.totalorder %s73, 1
      %p154 = scmp.ne.s32.totalorder %s149, %s151
      %p155 = scmp.eq.s32.totalorder %s73, 0
      %p156 = por %p154, %p155
      %p157 = scmp.ne.s32.totalorder %s149, %s151
      %p158 = scmp.eq.s32.totalorder %s78, 1
      %p159 = por %p157, %p158
      %p160 = scmp.ne.s32.totalorder %s151, %s152
      %p161 = scmp.eq.s32.totalorder %s78, 0
      %p162 = por %p160, %p161
      %p163 = scmp.ne.s32.totalorder %s151, %s152
      %p164 = scmp.eq.s32.totalorder %s79, 1
      %p165 = por %p163, %p164
      %p167 = scmp.ne.s32.totalorder %s152, %s166
      %p168 = scmp.eq.s32.totalorder %s79, 0
      %p169 = por %p167, %p168
      %s171 = sadd.s32 %s170, 1
      %p174 = scmp.eq.s32.totalorder %s73, 1
      %p175 = scmp.ne.s32.totalorder %s170, %s172
      %p176 = scmp.eq.s32.totalorder %s73, 0
      %p177 = por %p175, %p176
      %p178 = scmp.ne.s32.totalorder %s170, %s172
      %p179 = scmp.eq.s32.totalorder %s78, 1
      %p180 = por %p178, %p179
      %p181 = scmp.ne.s32.totalorder %s172, %s173
      %p182 = scmp.eq.s32.totalorder %s78, 0
      %p183 = por %p181, %p182
      %p184 = scmp.ne.s32.totalorder %s172, %s173
      %p185 = scmp.eq.s32.totalorder %s79, 1
      %p186 = por %p184, %p185
      %p188 = scmp.ne.s32.totalorder %s173, %s187
      %p189 = scmp.eq.s32.totalorder %s79, 0
      %p190 = por %p188, %p189
      %s192 = sadd.s32 %s191, 1
      %p195 = scmp.eq.s32.totalorder %s73, 1
      %p196 = scmp.ne.s32.totalorder %s191, %s193
      %p197 = scmp.eq.s32.totalorder %s73, 0
      %p198 = por %p196, %p197
      %p199 = scmp.ne.s32.totalorder %s191, %s193
      %p200 = scmp.eq.s32.totalorder %s78, 1
      %p201 = por %p199, %p200
      %p202 = scmp.ne.s32.totalorder %s193, %s194
      %p203 = scmp.eq.s32.totalorder %s78, 0
      %p204 = por %p202, %p203
      %p205 = scmp.ne.s32.totalorder %s193, %s194
      %p206 = scmp.eq.s32.totalorder %s79, 1
      %p207 = por %p205, %p206
      %p209 = scmp.ne.s32.totalorder %s194, %s208
      %p210 = scmp.eq.s32.totalorder %s79, 0
      %p211 = por %p209, %p210
      %s213 = sadd.s32 %s212, 1
      %p216 = scmp.eq.s32.totalorder %s73, 1
      %p217 = scmp.ne.s32.totalorder %s212, %s214
      %p218 = scmp.eq.s32.totalorder %s73, 0
      %p219 = por %p217, %p218
      %p220 = scmp.ne.s32.totalorder %s212, %s214
      %p221 = scmp.eq.s32.totalorder %s78, 1
      %p222 = por %p220, %p221
      %p223 = scmp.ne.s32.totalorder %s214, %s215
      %p224 = scmp.eq.s32.totalorder %s78, 0
      %p225 = por %p223, %p224
      %p226 = scmp.ne.s32.totalorder %s214, %s215
      %p227 = scmp.eq.s32.totalorder %s79, 1
      %p228 = por %p226, %p227
      %p230 = scmp.ne.s32.totalorder %s215, %s229
      %p231 = scmp.eq.s32.totalorder %s79, 0
      %p232 = por %p230, %p231
      %s234 = sadd.s32 %s233, 1
      %p237 = scmp.eq.s32.totalorder %s73, 1
      %p238 = scmp.ne.s32.totalorder %s233, %s235
      %p239 = scmp.eq.s32.totalorder %s73, 0
      %p240 = por %p238, %p239
      %p241 = scmp.ne.s32.totalorder %s233, %s235
      %p242 = scmp.eq.s32.totalorder %s78, 1
      %p243 = por %p241, %p242
      %p244 = scmp.ne.s32.totalorder %s235, %s236
      %p245 = scmp.eq.s32.totalorder %s78, 0
      %p246 = por %p244, %p245
      %p247 = scmp.ne.s32.totalorder %s235, %s236
      %p248 = scmp.eq.s32.totalorder %s79, 1
      %p249 = por %p247, %p248
      %p251 = scmp.ne.s32.totalorder %s236, %s250
      %p252 = scmp.eq.s32.totalorder %s79, 0
      %p253 = por %p251, %p252
      %s255 = sadd.s32 %s254, 1
      %p258 = scmp.eq.s32.totalorder %s73, 1
      %p259 = scmp.ne.s32.totalorder %s254, %s256
      %p260 = scmp.eq.s32.totalorder %s73, 0
      %p261 = por %p259, %p260
      %p262 = scmp.ne.s32.totalorder %s254, %s256
      %p263 = scmp.eq.s32.totalorder %s78, 1
      %p264 = por %p262, %p263
      %p265 = scmp.ne.s32.totalorder %s256, %s257
      %p266 = scmp.eq.s32.totalorder %s78, 0
      %p267 = por %p265, %p266
      %p268 = scmp.ne.s32.totalorder %s256, %s257
      %p269 = scmp.eq.s32.totalorder %s79, 1
      %p270 = por %p268, %p269
      %p272 = scmp.ne.s32.totalorder %s257, %s271
      %p273 = scmp.eq.s32.totalorder %s79, 0
      %p274 = por %p272, %p273
      %s276 = sadd.s32 %s275, 1
      %p279 = scmp.eq.s32.totalorder %s73, 1
      %p280 = scmp.ne.s32.totalorder %s275, %s277
      %p281 = scmp.eq.s32.totalorder %s73, 0
      %p282 = por %p280, %p281
      %p283 = scmp.ne.s32.totalorder %s275, %s277
      %p284 = scmp.eq.s32.totalorder %s78, 1
      %p285 = por %p283, %p284
      %p286 = scmp.ne.s32.totalorder %s277, %s278
      %p287 = scmp.eq.s32.totalorder %s78, 0
      %p288 = por %p286, %p287
      %p289 = scmp.ne.s32.totalorder %s277, %s278
      %p290 = scmp.eq.s32.totalorder %s79, 1
      %p291 = por %p289, %p290
      %p293 = scmp.ne.s32.totalorder %s278, %s292
      %p294 = scmp.eq.s32.totalorder %s79, 0
      %p295 = por %p293, %p294
      %s297 = sadd.s32 %s296, 1
      %p300 = scmp.eq.s32.totalorder %s73, 1
      %p301 = scmp.ne.s32.totalorder %s296, %s298
      %p302 = scmp.eq.s32.totalorder %s73, 0
      %p303 = por %p301, %p302
      %p304 = scmp.ne.s32.totalorder %s296, %s298
      %p305 = scmp.eq.s32.totalorder %s78, 1
      %p306 = por %p304, %p305
      %p307 = scmp.ne.s32.totalorder %s298, %s299
      %p308 = scmp.eq.s32.totalorder %s78, 0
      %p309 = por %p307, %p308
      %p310 = scmp.ne.s32.totalorder %s298, %s299
      %p311 = scmp.eq.s32.totalorder %s79, 1
      %p312 = por %p310, %p311
      %p314 = scmp.ne.s32.totalorder %s299, %s313
      %p315 = scmp.eq.s32.totalorder %s79, 0
      %p316 = por %p314, %p315
      %s318 = sadd.s32 %s317, 1
      %p321 = scmp.eq.s32.totalorder %s73, 1
      %p322 = scmp.ne.s32.totalorder %s317, %s319
      %p323 = scmp.eq.s32.totalorder %s73, 0
      %p324 = por %p322, %p323
      %p325 = scmp.ne.s32.totalorder %s317, %s319
      %p326 = scmp.eq.s32.totalorder %s78, 1
      %p327 = por %p325, %p326
      %p328 = scmp.ne.s32.totalorder %s319, %s320
      %p329 = scmp.eq.s32.totalorder %s78, 0
      %p330 = por %p328, %p329
      %p331 = scmp.ne.s32.totalorder %s319, %s320
      %p332 = scmp.eq.s32.totalorder %s79, 1
      %p333 = por %p331, %p332
      %p335 = scmp.ne.s32.totalorder %s320, %s334
      %p336 = scmp.eq.s32.totalorder %s79, 0
      %p337 = por %p335, %p336
      %s339 = sadd.s32 %s338, 1
      %p342 = scmp.eq.s32.totalorder %s73, 1
      %p343 = scmp.ne.s32.totalorder %s338, %s340
      %p344 = scmp.eq.s32.totalorder %s73, 0
      %p345 = por %p343, %p344
      %p346 = scmp.ne.s32.totalorder %s338, %s340
      %p347 = scmp.eq.s32.totalorder %s78, 1
      %p348 = por %p346, %p347
      %p349 = scmp.ne.s32.totalorder %s340, %s341
      %p350 = scmp.eq.s32.totalorder %s78, 0
      %p351 = por %p349, %p350
      %p352 = scmp.ne.s32.totalorder %s340, %s341
      %p353 = scmp.eq.s32.totalorder %s79, 1
      %p354 = por %p352, %p353
      %p356 = scmp.ne.s32.totalorder %s341, %s355
      %p357 = scmp.eq.s32.totalorder %s79, 0
      %p358 = por %p356, %p357
      %s360 = sadd.s32 %s359, 1
      %p363 = scmp.eq.s32.totalorder %s73, 1
      %p364 = scmp.ne.s32.totalorder %s359, %s361
      %p365 = scmp.eq.s32.totalorder %s73, 0
      %p366 = por %p364, %p365
      %p367 = scmp.ne.s32.totalorder %s359, %s361
      %p368 = scmp.eq.s32.totalorder %s78, 1
      %p369 = por %p367, %p368
      %p370 = scmp.ne.s32.totalorder %s361, %s362
      %p371 = scmp.eq.s32.totalorder %s78, 0
      %p372 = por %p370, %p371
      %p373 = scmp.ne.s32.totalorder %s361, %s362
      %p374 = scmp.eq.s32.totalorder %s79, 1
      %p375 = por %p373, %p374
      %p377 = scmp.ne.s32.totalorder %s362, %s376
      %p378 = scmp.eq.s32.totalorder %s79, 0
      %p379 = por %p377, %p378
      %s381 = sadd.s32 %s380, 1
      %p384 = scmp.eq.s32.totalorder %s73, 1
      %p385 = scmp.ne.s32.totalorder %s380, %s382
      %p386 = scmp.eq.s32.totalorder %s73, 0
      %p387 = por %p385, %p386
      %p388 = scmp.ne.s32.totalorder %s380, %s382
      %p389 = scmp.eq.s32.totalorder %s78, 1
      %p390 = por %p388, %p389
      %p391 = scmp.ne.s32.totalorder %s382, %s383
      %p392 = scmp.eq.s32.totalorder %s78, 0
      %p393 = por %p391, %p392
      %p394 = scmp.ne.s32.totalorder %s382, %s383
      %p395 = scmp.eq.s32.totalorder %s79, 1
      %p396 = por %p394, %p395
      %p398 = scmp.ne.s32.totalorder %s383, %s397
      %p399 = scmp.eq.s32.totalorder %s79, 0
      %p400 = por %p398, %p399
      %s402 = sadd.s32 %s401, 1
      %p405 = scmp.eq.s32.totalorder %s73, 1
      %p406 = scmp.ne.s32.totalorder %s401, %s403
      %p407 = scmp.eq.s32.totalorder %s73, 0
      %p408 = por %p406, %p407
      %p409 = scmp.ne.s32.totalorder %s401, %s403
      %p410 = scmp.eq.s32.totalorder %s78, 1
      %p411 = por %p409, %p410
      %p412 = scmp.ne.s32.totalorder %s403, %s404
      %p413 = scmp.eq.s32.totalorder %s78, 0
      %p414 = por %p412, %p413
      %p415 = scmp.ne.s32.totalorder %s403, %s404
      %p416 = scmp.eq.s32.totalorder %s79, 1
      %p417 = por %p415, %p416
      %p419 = scmp.ne.s32.totalorder %s404, %s418
      %p420 = scmp.eq.s32.totalorder %s79, 0
      %p421 = por %p419, %p420
      %s423 = sadd.s32 %s422, 1
      %p426 = scmp.eq.s32.totalorder %s73, 1
      %p427 = scmp.ne.s32.totalorder %s422, %s424
      %p428 = scmp.eq.s32.totalorder %s73, 0
      %p429 = por %p427, %p428
      %p430 = scmp.ne.s32.totalorder %s422, %s424
      %p431 = scmp.eq.s32.totalorder %s78, 1
      %p432 = por %p430, %p431
      %p433 = scmp.ne.s32.totalorder %s424, %s425
      %p434 = scmp.eq.s32.totalorder %s78, 0
      %p435 = por %p433, %p434
      %p436 = scmp.ne.s32.totalorder %s424, %s425
      %p437 = scmp.eq.s32.totalorder %s79, 1
      %p438 = por %p436, %p437
      %p440 = scmp.ne.s32.totalorder %s425, %s439
      %p441 = scmp.eq.s32.totalorder %s79, 0
      %p442 = por %p440, %p441
      %s444 = sadd.s32 %s443, 1
      %p447 = scmp.eq.s32.totalorder %s73, 1
      %p448 = scmp.ne.s32.totalorder %s443, %s445
      %p449 = scmp.eq.s32.totalorder %s73, 0
      %p450 = por %p448, %p449
      %p451 = scmp.ne.s32.totalorder %s443, %s445
      %p452 = scmp.eq.s32.totalorder %s78, 1
      %p453 = por %p451, %p452
      %p454 = scmp.ne.s32.totalorder %s445, %s446
      %p455 = scmp.eq.s32.totalorder %s78, 0
      %p456 = por %p454, %p455
      %p457 = scmp.ne.s32.totalorder %s445, %s446
      %p458 = scmp.eq.s32.totalorder %s79, 1
      %p459 = por %p457, %p458
      %p461 = scmp.ne.s32.totalorder %s446, %s460
      %p462 = scmp.eq.s32.totalorder %s79, 0
      %p463 = por %p461, %p462
      %s465 = sadd.s32 %s464, 1
      %p468 = scmp.eq.s32.totalorder %s73, 1
      %p469 = scmp.ne.s32.totalorder %s464, %s466
      %p470 = scmp.eq.s32.totalorder %s73, 0
      %p471 = por %p469, %p470
      %p472 = scmp.ne.s32.totalorder %s464, %s466
      %p473 = scmp.eq.s32.totalorder %s78, 1
      %p474 = por %p472, %p473
      %p475 = scmp.ne.s32.totalorder %s466, %s467
      %p476 = scmp.eq.s32.totalorder %s78, 0
      %p477 = por %p475, %p476
      %p478 = scmp.ne.s32.totalorder %s466, %s467
      %p479 = scmp.eq.s32.totalorder %s79, 1
      %p480 = por %p478, %p479
      %p482 = scmp.ne.s32.totalorder %s467, %s481
      %p483 = scmp.eq.s32.totalorder %s79, 0
      %p484 = por %p482, %p483
      %s486 = sadd.s32 %s485, 1
      %p489 = scmp.eq.s32.totalorder %s73, 1
      %p490 = scmp.ne.s32.totalorder %s485, %s487
      %p491 = scmp.eq.s32.totalorder %s73, 0
      %p492 = por %p490, %p491
      %p493 = scmp.ne.s32.totalorder %s485, %s487
      %p494 = scmp.eq.s32.totalorder %s78, 1
      %p495 = por %p493, %p494
      %p496 = scmp.ne.s32.totalorder %s487, %s488
      %p497 = scmp.eq.s32.totalorder %s78, 0
      %p498 = por %p496, %p497
      %p499 = scmp.ne.s32.totalorder %s487, %s488
      %p500 = scmp.eq.s32.totalorder %s79, 1
      %p501 = por %p499, %p500
      %p503 = scmp.ne.s32.totalorder %s488, %s502
      %p504 = scmp.eq.s32.totalorder %s79, 0
      %p505 = por %p503, %p504
      %s507 = sadd.s32 %s506, 1
      %p510 = scmp.eq.s32.totalorder %s73, 1
      %p511 = scmp.ne.s32.totalorder %s506, %s508
      %p512 = scmp.eq.s32.totalorder %s73, 0
      %p513 = por %p511, %p512
      %p514 = scmp.ne.s32.totalorder %s506, %s508
      %p515 = scmp.eq.s32.totalorder %s78, 1
      %p516 = por %p514, %p515
      %p517 = scmp.ne.s32.totalorder %s508, %s509
      %p518 = scmp.eq.s32.totalorder %s78, 0
      %p519 = por %p517, %p518
      %p520 = scmp.ne.s32.totalorder %s508, %s509
      %p521 = scmp.eq.s32.totalorder %s79, 1
      %p522 = por %p520, %p521
      %p524 = scmp.ne.s32.totalorder %s509, %s523
      %p525 = scmp.eq.s32.totalorder %s79, 0
      %p526 = por %p524, %p525
      %s528 = sadd.s32 %s527, 1
      %p531 = scmp.eq.s32.totalorder %s73, 1
      %p532 = scmp.ne.s32.totalorder %s527, %s529
      %p533 = scmp.eq.s32.totalorder %s73, 0
      %p534 = por %p532, %p533
      %p535 = scmp.ne.s32.totalorder %s527, %s529
      %p536 = scmp.eq.s32.totalorder %s78, 1
      %p537 = por %p535, %p536
      %p538 = scmp.ne.s32.totalorder %s529, %s530
      %p539 = scmp.eq.s32.totalorder %s78, 0
      %p540 = por %p538, %p539
      %p541 = scmp.ne.s32.totalorder %s529, %s530
      %p542 = scmp.eq.s32.totalorder %s79, 1
      %p543 = por %p541, %p542
      %p545 = scmp.ne.s32.totalorder %s530, %s544
      %p546 = scmp.eq.s32.totalorder %s79, 0
      %p547 = por %p545, %p546
      %s549 = sadd.s32 %s548, 1
      %p552 = scmp.eq.s32.totalorder %s73, 1
      %p553 = scmp.ne.s32.totalorder %s548, %s550
      %p554 = scmp.eq.s32.totalorder %s73, 0
      %p555 = por %p553, %p554
      %p556 = scmp.ne.s32.totalorder %s548, %s550
      %p557 = scmp.eq.s32.totalorder %s78, 1
      %p558 = por %p556, %p557
      %p559 = scmp.ne.s32.totalorder %s550, %s551
      %p560 = scmp.eq.s32.totalorder %s78, 0
      %p561 = por %p559, %p560
      %p562 = scmp.ne.s32.totalorder %s550, %s551
      %p563 = scmp.eq.s32.totalorder %s79, 1
      %p564 = por %p562, %p563
      %p566 = scmp.ne.s32.totalorder %s551, %s565
      %p567 = scmp.eq.s32.totalorder %s79, 0
      %p568 = por %p566, %p567
      %s570 = sadd.s32 %s569, 1
      %p573 = scmp.eq.s32.totalorder %s73, 1
      %p574 = scmp.ne.s32.totalorder %s569, %s571
      %p575 = scmp.eq.s32.totalorder %s73, 0
      %p576 = por %p574, %p575
      %p577 = scmp.ne.s32.totalorder %s569, %s571
      %p578 = scmp.eq.s32.totalorder %s78, 1
      %p579 = por %p577, %p578
      %p580 = scmp.ne.s32.totalorder %s571, %s572
      %p581 = scmp.eq.s32.totalorder %s78, 0
      %p582 = por %p580, %p581
      %p583 = scmp.ne.s32.totalorder %s571, %s572
      %p584 = scmp.eq.s32.totalorder %s79, 1
      %p585 = por %p583, %p584
      %p587 = scmp.ne.s32.totalorder %s572, %s586
      %p588 = scmp.eq.s32.totalorder %s79, 0
      %p589 = por %p587, %p588
      %s591 = sadd.s32 %s590, 1
      %p594 = scmp.eq.s32.totalorder %s73, 1
      %p595 = scmp.ne.s32.totalorder %s590, %s592
      %p596 = scmp.eq.s32.totalorder %s73, 0
      %p597 = por %p595, %p596
      %p598 = scmp.ne.s32.totalorder %s590, %s592
      %p599 = scmp.eq.s32.totalorder %s78, 1
      %p600 = por %p598, %p599
      %p601 = scmp.ne.s32.totalorder %s592, %s593
      %p602 = scmp.eq.s32.totalorder %s78, 0
      %p603 = por %p601, %p602
      %p604 = scmp.ne.s32.totalorder %s592, %s593
      %p605 = scmp.eq.s32.totalorder %s79, 1
      %p606 = por %p604, %p605
      %p608 = scmp.ne.s32.totalorder %s593, %s607
      %p609 = scmp.eq.s32.totalorder %s79, 0
      %p610 = por %p608, %p609
      %s612 = sadd.s32 %s611, 1
      %p615 = scmp.eq.s32.totalorder %s73, 1
      %p616 = scmp.ne.s32.totalorder %s611, %s613
      %p617 = scmp.eq.s32.totalorder %s73, 0
      %p618 = por %p616, %p617
      %p619 = scmp.ne.s32.totalorder %s611, %s613
      %p620 = scmp.eq.s32.totalorder %s78, 1
      %p621 = por %p619, %p620
      %p622 = scmp.ne.s32.totalorder %s613, %s614
      %p623 = scmp.eq.s32.totalorder %s78, 0
      %p624 = por %p622, %p623
      %p625 = scmp.ne.s32.totalorder %s613, %s614
      %p626 = scmp.eq.s32.totalorder %s79, 1
      %p627 = por %p625, %p626
      %p629 = scmp.ne.s32.totalorder %s614, %s628
      %p630 = scmp.eq.s32.totalorder %s79, 0
      %p631 = por %p629, %p630
      %s633 = sadd.s32 %s632, 1
      %p636 = scmp.eq.s32.totalorder %s73, 1
      %p637 = scmp.ne.s32.totalorder %s632, %s634
      %p638 = scmp.eq.s32.totalorder %s73, 0
      %p639 = por %p637, %p638
      %p640 = scmp.ne.s32.totalorder %s632, %s634
      %p641 = scmp.eq.s32.totalorder %s78, 1
      %p642 = por %p640, %p641
      %p643 = scmp.ne.s32.totalorder %s634, %s635
      %p644 = scmp.eq.s32.totalorder %s78, 0
      %p645 = por %p643, %p644
      %p646 = scmp.ne.s32.totalorder %s634, %s635
      %p647 = scmp.eq.s32.totalorder %s79, 1
      %p648 = por %p646, %p647
      %p650 = scmp.ne.s32.totalorder %s635, %s649
      %p651 = scmp.eq.s32.totalorder %s79, 0
      %p652 = por %p650, %p651
      %s654 = sadd.s32 %s653, 1
      %p657 = scmp.eq.s32.totalorder %s73, 1
      %p658 = scmp.ne.s32.totalorder %s653, %s655
      %p659 = scmp.eq.s32.totalorder %s73, 0
      %p660 = por %p658, %p659
      %p661 = scmp.ne.s32.totalorder %s653, %s655
      %p662 = scmp.eq.s32.totalorder %s78, 1
      %p663 = por %p661, %p662
      %p664 = scmp.ne.s32.totalorder %s655, %s656
      %p665 = scmp.eq.s32.totalorder %s78, 0
      %p666 = por %p664, %p665
      %p667 = scmp.ne.s32.totalorder %s655, %s656
      %p668 = scmp.eq.s32.totalorder %s79, 1
      %p669 = por %p667, %p668
      %p671 = scmp.ne.s32.totalorder %s656, %s670
      %p672 = scmp.eq.s32.totalorder %s79, 0
      %p673 = por %p671, %p672
      %s675 = sadd.s32 %s674, 1
      %p678 = scmp.eq.s32.totalorder %s73, 1
      %p679 = scmp.ne.s32.totalorder %s674, %s676
      %p680 = scmp.eq.s32.totalorder %s73, 0
      %p681 = por %p679, %p680
      %p682 = scmp.ne.s32.totalorder %s674, %s676
      %p683 = scmp.eq.s32.totalorder %s78, 1
      %p684 = por %p682, %p683
      %p685 = scmp.ne.s32.totalorder %s676, %s677
      %p686 = scmp.eq.s32.totalorder %s78, 0
      %p687 = por %p685, %p686
      %p688 = scmp.ne.s32.totalorder %s676, %s677
      %p689 = scmp.eq.s32.totalorder %s79, 1
      %p690 = por %p688, %p689
      %p692 = scmp.ne.s32.totalorder %s677, %s691
      %p693 = scmp.eq.s32.totalorder %s79, 0
      %p694 = por %p692, %p693
      %s696 = sadd.s32 %s695, 1
      %p699 = scmp.eq.s32.totalorder %s73, 1
      %p700 = scmp.ne.s32.totalorder %s695, %s697
      %p701 = scmp.eq.s32.totalorder %s73, 0
      %p702 = por %p700, %p701
      %p703 = scmp.ne.s32.totalorder %s695, %s697
      %p704 = scmp.eq.s32.totalorder %s78, 1
      %p705 = por %p703, %p704
      %p706 = scmp.ne.s32.totalorder %s697, %s698
      %p707 = scmp.eq.s32.totalorder %s78, 0
      %p708 = por %p706, %p707
      %p709 = scmp.ne.s32.totalorder %s697, %s698
      %p710 = scmp.eq.s32.totalorder %s79, 1
      %p711 = por %p709, %p710
      %p713 = scmp.ne.s32.totalorder %s698, %s712
      %p714 = scmp.eq.s32.totalorder %s79, 0
      %p715 = por %p713, %p714
      %s716 = ssub.s32 %s73, %s80
      %p717 = scmp.eq.s32.totalorder %s716, 0
      %s719 = sadd.s32 %s718, 1
      %s720 = scalar_select %p717, %s718, %s719
      %p723 = pneg %p717
      %p724 = scmp.eq.s32.totalorder %s73, 1
      %p725 = por %p723, %p724
      %p726 = scmp.ne.s32.totalorder %s718, %s721
      %p727 = scmp.eq.s32.totalorder %s73, 0
      %p728 = por %p726, %p727
      %p729 = scmp.ne.s32.totalorder %s718, %s721
      %p730 = scmp.eq.s32.totalorder %s78, 1
      %p731 = por %p729, %p730
      %p732 = scmp.ne.s32.totalorder %s721, %s722
      %p733 = scmp.eq.s32.totalorder %s78, 0
      %p734 = por %p732, %p733
      %p735 = scmp.ne.s32.totalorder %s721, %s722
      %p736 = scmp.eq.s32.totalorder %s79, 1
      %p737 = por %p735, %p736
      %p739 = scmp.ne.s32.totalorder %s722, %s738
      %p740 = scmp.eq.s32.totalorder %s79, 0
      %p741 = por %p739, %p740
      %s742 = ssub.s32 %s73, %s80
      %p743 = scmp.eq.s32.totalorder %s742, 0
      %s745 = sadd.s32 %s744, 1
      %s746 = scalar_select %p743, %s744, %s745
      %p749 = pneg %p743
      %p750 = scmp.eq.s32.totalorder %s73, 1
      %p751 = por %p749, %p750
      %p752 = scmp.ne.s32.totalorder %s744, %s747
      %p753 = scmp.eq.s32.totalorder %s73, 0
      %p754 = por %p752, %p753
      %p755 = scmp.ne.s32.totalorder %s744, %s747
      %p756 = scmp.eq.s32.totalorder %s78, 1
      %p757 = por %p755, %p756
      %p758 = scmp.ne.s32.totalorder %s747, %s748
      %p759 = scmp.eq.s32.totalorder %s78, 0
      %p760 = por %p758, %p759
      %p761 = scmp.ne.s32.totalorder %s747, %s748
      %p762 = scmp.eq.s32.totalorder %s79, 1
      %p763 = por %p761, %p762
      %p765 = scmp.ne.s32.totalorder %s748, %s764
      %p766 = scmp.eq.s32.totalorder %s79, 0
      %p767 = por %p765, %p766
      %p768 = scmp.le.s32.totalorder 1, %s73
      %p769 = scmp.lt.s32.totalorder %s73, 3
      %p770 = pnand %p768, %p769
      %p771 = pneg %p770
      // Predicated region
      $region9: #{decoder_pedal_forward.2} parent=5 // pred_check
        _
      $region10: #{decoder_pedal_forward.2} parent=5 // pred_check_branch
        %773 = sbr.rel (%p770) target = $region12
      $region11: #{decoder_pedal_forward.2} parent=5 // pred_region
        %s774 = ssub.s32 %s73, 1
        // Predicated region
        $region13: #{decoder_pedal_forward.2} parent=11 // pred_check
          %p775 = pneg %p120
        $region14: #{decoder_pedal_forward.2} parent=11 // pred_check_branch
          %777 = sbr.rel (%p775) target = $region16
        $region15: #{decoder_pedal_forward.2} parent=11 // pred_region
          _
        $region16: #{decoder_pedal_forward.2} parent=11 // pred_fallthru
          _
        // Predicated region
        $region17: #{decoder_pedal_forward.2} parent=11 // pred_check
          %p778 = pneg %p141
        $region18: #{decoder_pedal_forward.2} parent=11 // pred_check_branch
          %780 = sbr.rel (%p778) target = $region20
        $region19: #{decoder_pedal_forward.2} parent=11 // pred_region
          _
        $region20: #{decoder_pedal_forward.2} parent=11 // pred_fallthru
          _
        // Predicated region
        $region21: #{decoder_pedal_forward.2} parent=11 // pred_check
          %p781 = pneg %p162
        $region22: #{decoder_pedal_forward.2} parent=11 // pred_check_branch
          %783 = sbr.rel (%p781) target = $region24
        $region23: #{decoder_pedal_forward.2} parent=11 // pred_region
          _
        $region24: #{decoder_pedal_forward.2} parent=11 // pred_fallthru
          _
        // Predicated region
        $region25: #{decoder_pedal_forward.2} parent=11 // pred_check
          %p784 = pneg %p183
        $region26: #{decoder_pedal_forward.2} parent=11 // pred_check_branch
          %786 = sbr.rel (%p784) target = $region28
        $region27: #{decoder_pedal_forward.2} parent=11 // pred_region
          _
        $region28: #{decoder_pedal_forward.2} parent=11 // pred_fallthru
          _
        // Predicated region
        $region29: #{decoder_pedal_forward.2} parent=11 // pred_check
          %p787 = pneg %p204
        $region30: #{decoder_pedal_forward.2} parent=11 // pred_check_branch
          %789 = sbr.rel (%p787) target = $region32
        $region31: #{decoder_pedal_forward.2} parent=11 // pred_region
          _
        $region32: #{decoder_pedal_forward.2} parent=11 // pred_fallthru
          _
        // Predicated region
        $region33: #{decoder_pedal_forward.2} parent=11 // pred_check
          %p790 = pneg %p225
        $region34: #{decoder_pedal_forward.2} parent=11 // pred_check_branch
          %792 = sbr.rel (%p790) target = $region36
        $region35: #{decoder_pedal_forward.2} parent=11 // pred_region
          _
        $region36: #{decoder_pedal_forward.2} parent=11 // pred_fallthru
          _
        // Predicated region
        $region37: #{decoder_pedal_forward.2} parent=11 // pred_check
          %p793 = pneg %p246
        $region38: #{decoder_pedal_forward.2} parent=11 // pred_check_branch
          %795 = sbr.rel (%p793) target = $region40
        $region39: #{decoder_pedal_forward.2} parent=11 // pred_region
          _
        $region40: #{decoder_pedal_forward.2} parent=11 // pred_fallthru
          _
        // Predicated region
        $region41: #{decoder_pedal_forward.2} parent=11 // pred_check
          %p796 = pneg %p267
        $region42: #{decoder_pedal_forward.2} parent=11 // pred_check_branch
          %798 = sbr.rel (%p796) target = $region44
        $region43: #{decoder_pedal_forward.2} parent=11 // pred_region
          _
        $region44: #{decoder_pedal_forward.2} parent=11 // pred_fallthru
          _
        // Predicated region
        $region45: #{decoder_pedal_forward.2} parent=11 // pred_check
          %p799 = pneg %p288
        $region46: #{decoder_pedal_forward.2} parent=11 // pred_check_branch
          %801 = sbr.rel (%p799) target = $region48
        $region47: #{decoder_pedal_forward.2} parent=11 // pred_region
          _
        $region48: #{decoder_pedal_forward.2} parent=11 // pred_fallthru
          _
        // Predicated region
        $region49: #{decoder_pedal_forward.2} parent=11 // pred_check
          %p802 = pneg %p309
        $region50: #{decoder_pedal_forward.2} parent=11 // pred_check_branch
          %804 = sbr.rel (%p802) target = $region52
        $region51: #{decoder_pedal_forward.2} parent=11 // pred_region
          _
        $region52: #{decoder_pedal_forward.2} parent=11 // pred_fallthru
          _
        // Predicated region
        $region53: #{decoder_pedal_forward.2} parent=11 // pred_check
          %p805 = pneg %p330
        $region54: #{decoder_pedal_forward.2} parent=11 // pred_check_branch
          %807 = sbr.rel (%p805) target = $region56
        $region55: #{decoder_pedal_forward.2} parent=11 // pred_region
          _
        $region56: #{decoder_pedal_forward.2} parent=11 // pred_fallthru
          _
        // Predicated region
        $region57: #{decoder_pedal_forward.2} parent=11 // pred_check
          %p808 = pneg %p351
        $region58: #{decoder_pedal_forward.2} parent=11 // pred_check_branch
          %810 = sbr.rel (%p808) target = $region60
        $region59: #{decoder_pedal_forward.2} parent=11 // pred_region
          _
        $region60: #{decoder_pedal_forward.2} parent=11 // pred_fallthru
          _
        // Predicated region
        $region61: #{decoder_pedal_forward.2} parent=11 // pred_check
          %p811 = pneg %p372
        $region62: #{decoder_pedal_forward.2} parent=11 // pred_check_branch
          %813 = sbr.rel (%p811) target = $region64
        $region63: #{decoder_pedal_forward.2} parent=11 // pred_region
          _
        $region64: #{decoder_pedal_forward.2} parent=11 // pred_fallthru
          _
        // Predicated region
        $region65: #{decoder_pedal_forward.2} parent=11 // pred_check
          %p814 = pneg %p393
        $region66: #{decoder_pedal_forward.2} parent=11 // pred_check_branch
          %816 = sbr.rel (%p814) target = $region68
        $region67: #{decoder_pedal_forward.2} parent=11 // pred_region
          _
        $region68: #{decoder_pedal_forward.2} parent=11 // pred_fallthru
          _
        // Predicated region
        $region69: #{decoder_pedal_forward.2} parent=11 // pred_check
          %p817 = pneg %p414
        $region70: #{decoder_pedal_forward.2} parent=11 // pred_check_branch
          %819 = sbr.rel (%p817) target = $region72
        $region71: #{decoder_pedal_forward.2} parent=11 // pred_region
          _
        $region72: #{decoder_pedal_forward.2} parent=11 // pred_fallthru
          _
        // Predicated region
        $region73: #{decoder_pedal_forward.2} parent=11 // pred_check
          %p820 = pneg %p435
        $region74: #{decoder_pedal_forward.2} parent=11 // pred_check_branch
          %822 = sbr.rel (%p820) target = $region76
        $region75: #{decoder_pedal_forward.2} parent=11 // pred_region
          _
        $region76: #{decoder_pedal_forward.2} parent=11 // pred_fallthru
          _
        // Predicated region
        $region77: #{decoder_pedal_forward.2} parent=11 // pred_check
          %p823 = pneg %p456
        $region78: #{decoder_pedal_forward.2} parent=11 // pred_check_branch
          %825 = sbr.rel (%p823) target = $region80
        $region79: #{decoder_pedal_forward.2} parent=11 // pred_region
          _
        $region80: #{decoder_pedal_forward.2} parent=11 // pred_fallthru
          _
        // Predicated region
        $region81: #{decoder_pedal_forward.2} parent=11 // pred_check
          %p826 = pneg %p477
        $region82: #{decoder_pedal_forward.2} parent=11 // pred_check_branch
          %828 = sbr.rel (%p826) target = $region84
        $region83: #{decoder_pedal_forward.2} parent=11 // pred_region
          _
        $region84: #{decoder_pedal_forward.2} parent=11 // pred_fallthru
          _
        // Predicated region
        $region85: #{decoder_pedal_forward.2} parent=11 // pred_check
          %p829 = pneg %p498
        $region86: #{decoder_pedal_forward.2} parent=11 // pred_check_branch
          %831 = sbr.rel (%p829) target = $region88
        $region87: #{decoder_pedal_forward.2} parent=11 // pred_region
          _
        $region88: #{decoder_pedal_forward.2} parent=11 // pred_fallthru
          _
        // Predicated region
        $region89: #{decoder_pedal_forward.2} parent=11 // pred_check
          %p832 = pneg %p519
        $region90: #{decoder_pedal_forward.2} parent=11 // pred_check_branch
          %834 = sbr.rel (%p832) target = $region92
        $region91: #{decoder_pedal_forward.2} parent=11 // pred_region
          _
        $region92: #{decoder_pedal_forward.2} parent=11 // pred_fallthru
          _
        // Predicated region
        $region93: #{decoder_pedal_forward.2} parent=11 // pred_check
          %p835 = pneg %p540
        $region94: #{decoder_pedal_forward.2} parent=11 // pred_check_branch
          %837 = sbr.rel (%p835) target = $region96
        $region95: #{decoder_pedal_forward.2} parent=11 // pred_region
          _
        $region96: #{decoder_pedal_forward.2} parent=11 // pred_fallthru
          _
        // Predicated region
        $region97: #{decoder_pedal_forward.2} parent=11 // pred_check
          %p838 = pneg %p561
        $region98: #{decoder_pedal_forward.2} parent=11 // pred_check_branch
          %840 = sbr.rel (%p838) target = $region100
        $region99: #{decoder_pedal_forward.2} parent=11 // pred_region
          _
        $region100: #{decoder_pedal_forward.2} parent=11 // pred_fallthru
          _
        // Predicated region
        $region101: #{decoder_pedal_forward.2} parent=11 // pred_check
          %p841 = pneg %p582
        $region102: #{decoder_pedal_forward.2} parent=11 // pred_check_branch
          %843 = sbr.rel (%p841) target = $region104
        $region103: #{decoder_pedal_forward.2} parent=11 // pred_region
          _
        $region104: #{decoder_pedal_forward.2} parent=11 // pred_fallthru
          _
        // Predicated region
        $region105: #{decoder_pedal_forward.2} parent=11 // pred_check
          %p844 = pneg %p603
        $region106: #{decoder_pedal_forward.2} parent=11 // pred_check_branch
          %846 = sbr.rel (%p844) target = $region108
        $region107: #{decoder_pedal_forward.2} parent=11 // pred_region
          _
        $region108: #{decoder_pedal_forward.2} parent=11 // pred_fallthru
          _
        // Predicated region
        $region109: #{decoder_pedal_forward.2} parent=11 // pred_check
          %p847 = pneg %p624
        $region110: #{decoder_pedal_forward.2} parent=11 // pred_check_branch
          %849 = sbr.rel (%p847) target = $region112
        $region111: #{decoder_pedal_forward.2} parent=11 // pred_region
          _
        $region112: #{decoder_pedal_forward.2} parent=11 // pred_fallthru
          _
        // Predicated region
        $region113: #{decoder_pedal_forward.2} parent=11 // pred_check
          %p850 = pneg %p645
        $region114: #{decoder_pedal_forward.2} parent=11 // pred_check_branch
          %852 = sbr.rel (%p850) target = $region116
        $region115: #{decoder_pedal_forward.2} parent=11 // pred_region
          _
        $region116: #{decoder_pedal_forward.2} parent=11 // pred_fallthru
          _
        // Predicated region
        $region117: #{decoder_pedal_forward.2} parent=11 // pred_check
          %p853 = pneg %p666
        $region118: #{decoder_pedal_forward.2} parent=11 // pred_check_branch
          %855 = sbr.rel (%p853) target = $region120
        $region119: #{decoder_pedal_forward.2} parent=11 // pred_region
          _
        $region120: #{decoder_pedal_forward.2} parent=11 // pred_fallthru
          _
        // Predicated region
        $region121: #{decoder_pedal_forward.2} parent=11 // pred_check
          %p856 = pneg %p687
        $region122: #{decoder_pedal_forward.2} parent=11 // pred_check_branch
          %858 = sbr.rel (%p856) target = $region124
        $region123: #{decoder_pedal_forward.2} parent=11 // pred_region
          _
        $region124: #{decoder_pedal_forward.2} parent=11 // pred_fallthru
          _
        // Predicated region
        $region125: #{decoder_pedal_forward.2} parent=11 // pred_check
          %p859 = pneg %p708
        $region126: #{decoder_pedal_forward.2} parent=11 // pred_check_branch
          %861 = sbr.rel (%p859) target = $region128
        $region127: #{decoder_pedal_forward.2} parent=11 // pred_region
          _
        $region128: #{decoder_pedal_forward.2} parent=11 // pred_fallthru
          _
      $region12: #{decoder_pedal_forward.2} parent=5 // pred_fallthru
        _
      %p862 = scmp.lt.s32.totalorder %s73, 2
      // Predicated region
      $region129: #{decoder_pedal_forward.2} parent=5 // pred_check
        %p863 = pneg %p862
      $region130: #{decoder_pedal_forward.2} parent=5 // pred_check_branch
        %865 = sbr.rel (%p863) target = $region132
      $region131: #{decoder_pedal_forward.2} parent=5 // pred_region
        // Predicated region
        $region133: #{decoder_pedal_forward.2} parent=131 // pred_check
          %p866 = pneg %p93
        $region134: #{decoder_pedal_forward.2} parent=131 // pred_check_branch
          %868 = sbr.rel (%p866) target = $region136
        $region135: #{decoder_pedal_forward.2} parent=131 // pred_region
          %s869 = smul.u32 8, %s73
          %p870 = scmp.lt.s32.totalorder %s869, 15
          %s871 = scalar_select %p870, %s869, 15
          %s872 = smul.addr %s871, 2
          %s873 = smul.addr %s872, 8
          %s874 = scalar_lea.vmem %s1, %s873
          %s875 = smul.u32 8, %s73
        $region136: #{decoder_pedal_forward.2} parent=131 // pred_fallthru
          _
      $region132: #{decoder_pedal_forward.2} parent=5 // pred_fallthru
        _
      %p876 = scmp.le.s32.totalorder 1, %s73
      %p877 = scmp.lt.s32.totalorder %s73, 3
      %p878 = pnand %p876, %p877
      %p879 = pneg %p878
      // Predicated region
      $region137: #{decoder_pedal_forward.2} parent=5 // pred_check
        _
      $region138: #{decoder_pedal_forward.2} parent=5 // pred_check_branch
        %881 = sbr.rel (%p878) target = $region140
      $region139: #{decoder_pedal_forward.2} parent=5 // pred_region
        %s882 = ssub.s32 %s73, 1
        %s883 = smul.u32 8, %s78
        %p884 = scmp.lt.s32.totalorder %s883, 15
        %s885 = scalar_select %p884, %s883, 15
        %s886 = smul.addr %s885, 2
        %s887 = smul.addr %s886, 8
        %s888 = scalar_lea.vmem %s1, %s887
        %p889 = pneg %p99
        %p890 = pneg %p96
        %p891 = pneg %p120
        %p892 = pneg %p117
        %p893 = pneg %p141
        %p894 = pneg %p138
        %p895 = pneg %p162
        %p896 = pneg %p159
        %p897 = pneg %p183
        %p898 = pneg %p180
        %p899 = pneg %p204
        %p900 = pneg %p201
        %p901 = pneg %p225
        %p902 = pneg %p222
        %p903 = pneg %p246
        %p904 = pneg %p243
        %p905 = pneg %p267
        %p906 = pneg %p264
        %p907 = pneg %p288
        %p908 = pneg %p285
        %p909 = pneg %p309
        %p910 = pneg %p306
        %p911 = pneg %p330
        %p912 = pneg %p327
        %p913 = pneg %p351
        %p914 = pneg %p348
        %p915 = pneg %p372
        %p916 = pneg %p369
        %p917 = pneg %p393
        %p918 = pneg %p390
        %p919 = pneg %p414
        %p920 = pneg %p411
        %p921 = pneg %p435
        %p922 = pneg %p432
        %p923 = pneg %p456
        %p924 = pneg %p453
        %p925 = pneg %p477
        %p926 = pneg %p474
        %p927 = pneg %p498
        %p928 = pneg %p495
        %p929 = pneg %p519
        %p930 = pneg %p516
        %p931 = pneg %p540
        %p932 = pneg %p537
        %p933 = pneg %p561
        %p934 = pneg %p558
        %p935 = pneg %p582
        %p936 = pneg %p579
        %p937 = pneg %p603
        %p938 = pneg %p600
        %p939 = pneg %p624
        %p940 = pneg %p621
        %p941 = pneg %p645
        %p942 = pneg %p642
        %p943 = pneg %p666
        %p944 = pneg %p663
        %p945 = pneg %p687
        %p946 = pneg %p684
        %p947 = pneg %p708
        %p948 = pneg %p705
        %p949 = pneg %p734
        %p950 = pneg %p731
        %p951 = scmp.lt.s32.totalorder %s78, 1
        %s952 = scalar_select %p951, %s78, 1
        %s953 = smul.addr %s952, 8
        %s954 = scalar_lea.vmem %s61, %s953
        %p955 = pneg %p760
        %p956 = pneg %p757
        %s957 = sand.u32 %s747, 1
        %s958 = scalar_lea.sflag [#allocation3], %s957
        %s959 = sand.u32 %s747, 1
        %s960 = smul.addr %s959, 32
        %s961 = scalar_lea.vmem [#allocation2], %s960
        %s962 = smul.u32 8, %s78
        %p963 = scmp.lt.s32.totalorder %s962, 15
        %s964 = scalar_select %p963, %s962, 15
        %s965 = smul.addr %s964, 2
        %s966 = smul.addr %s965, 8
        %s967 = scalar_lea.vmem %s1, %s966
        %s968 = smul.u32 8, %s78
        %p969 = scmp.lt.s32.totalorder %s78, 1
        %s970 = scalar_select %p969, %s78, 1
        %s971 = smul.addr %s970, 8
        %s972 = scalar_lea.vmem %s61, %s971
        %s973 = smul.u32 8, %s78
        %v975 = vld [vmem:[%s967] sm:$0xff]
        %v976 = vld [vmem:[%s967 + $0x8] sm:$0xff]
        %v977 = vld [vmem:[%s967 + $0x10] sm:$0xff]
        %v978 = vld [vmem:[%s967 + $0x18] sm:$0xff]
        %v979 = vld [vmem:[%s967 + $0x20] sm:$0xff]
        %v980 = vld [vmem:[%s967 + $0x28] sm:$0xff]
        %v981 = vld [vmem:[%s967 + $0x30] sm:$0xff]
        %v982 = vld [vmem:[%s967 + $0x38] sm:$0xff]
        %v983 = vld [vmem:[%s967 + $0x40] sm:$0xff]
        %v984 = vld [vmem:[%s967 + $0x48] sm:$0xff]
        %v985 = vld [vmem:[%s967 + $0x50] sm:$0xff]
        %v986 = vld [vmem:[%s967 + $0x58] sm:$0xff]
        %v987 = vld [vmem:[%s967 + $0x60] sm:$0xff]
        %v988 = vld [vmem:[%s967 + $0x68] sm:$0xff]
        %v989 = vld [vmem:[%s967 + $0x70] sm:$0xff]
        %v990 = vld [vmem:[%s967 + $0x78] sm:$0xff]
        %v991 = vpack.c.bf16 %v975, %v975
        %v992 = vpack.c.bf16 %v976, %v976
        %v993 = vpack.c.bf16 %v977, %v977
        %v994 = vpack.c.bf16 %v978, %v978
        %v995 = vpack.c.bf16 %v979, %v979
        %v996 = vpack.c.bf16 %v980, %v980
        %v997 = vpack.c.bf16 %v981, %v981
        %v998 = vpack.c.bf16 %v982, %v982
        %v999 = vpack.c.bf16 %v983, %v983
        %v1000 = vpack.c.bf16 %v984, %v984
        %v1001 = vpack.c.bf16 %v985, %v985
        %v1002 = vpack.c.bf16 %v986, %v986
        %v1003 = vpack.c.bf16 %v987, %v987
        %v1004 = vpack.c.bf16 %v988, %v988
        %v1005 = vpack.c.bf16 %v989, %v989
        %v1006 = vpack.c.bf16 %v990, %v990
        %v1007 = vld [vmem:[%s3] sm:$0x1]
        %v1009 = vperm.slane %v1007, 0
        %v1011 = vld [vmem:[%s5] sm:$0xf]
        %v1012 = vld [vmem:[%s5 + $0x4] sm:$0xf]
        %v1013 = vld [vmem:[%s5 + $0x8] sm:$0xf]
        %v1014 = vld [vmem:[%s5 + $0xc] sm:$0xf]
        %v1015 = vld [vmem:[%s7] sm:$0x1]
        %v1016 = vld [vmem:[%s9] sm:$0xf]
        %v1017 = vld [vmem:[%s9 + $0x4] sm:$0xf]
        %v1018 = vld [vmem:[%s9 + $0x8] sm:$0xf]
        %v1019 = vld [vmem:[%s9 + $0xc] sm:$0xf]
        %v1020 = vld [vmem:[%s11] sm:$0x1]
        %v1021 = vld [vmem:[%s13] sm:$0xf]
        %v1022 = vld [vmem:[%s13 + $0x4] sm:$0xf]
        %v1023 = vld [vmem:[%s13 + $0x8] sm:$0xf]
        %v1024 = vld [vmem:[%s13 + $0xc] sm:$0xf]
        %v1025 = vld [vmem:[%s15] sm:$0x1]
        %v1026 = vld [vmem:[%s17] sm:$0x1]
        %v1027 = vld [vmem:[%s19] sm:$0x1]
        %v1028 = vld [vmem:[%s21] sm:$0xf]
        %v1029 = vld [vmem:[%s21 + $0x4] sm:$0xf]
        %v1030 = vld [vmem:[%s21 + $0x8] sm:$0xf]
        %v1031 = vld [vmem:[%s21 + $0xc] sm:$0xf]
        %v1032 = vld [vmem:[%s23] sm:$0x1]
        %v1033 = vld [vmem:[%s25] sm:$0xf]
        %v1034 = vld [vmem:[%s25 + $0x4] sm:$0xf]
        %v1035 = vld [vmem:[%s25 + $0x8] sm:$0xf]
        %v1036 = vld [vmem:[%s25 + $0xc] sm:$0xf]
        %v1037 = vld [vmem:[%s25 + $0x10] sm:$0xf]
        %v1038 = vld [vmem:[%s25 + $0x14] sm:$0xf]
        %v1039 = vld [vmem:[%s25 + $0x18] sm:$0xf]
        %v1040 = vld [vmem:[%s25 + $0x1c] sm:$0xf]
        %v1041 = vld [vmem:[%s27] sm:$0x1]
        %v1042 = vpack.c.bf16 %v1009, %v1009
        %v1044 = vperm.slane %v1015, 0
        %v1050 = vunpack.c.l.b16 %v1011
        %v1051 = vunpack.c.l.b16 %v1012
        %v1052 = vunpack.c.l.b16 %v1013
        %v1053 = vunpack.c.l.b16 %v1014
        %v1054 = vpack.c.b16 %v1051, %v1050
        %v1055 = vpack.c.b16 %v1053, %v1052
        %vm1058 = vcmask 261120
        %v1060 = vsel %vm1058, %v1042, 0
        %1062 = vmatpush.bf16.msra.mxu0 0
        %1063 = vmatpush.bf16.msra.mxu0 0
        %1064 = vmatpush.bf16.msra.mxu0 0
        %1065 = vmatpush.bf16.msra.mxu0 0
        %1066 = vmatpush.bf16.msra.mxu0 0
        %1067 = vmatpush.bf16.msra.mxu0 0
        %1068 = vmatpush.bf16.msra.mxu0 %v1055
        %1069 = vmatpush.bf16.msra.mxu0 %v1054
        %1070 = vmatmul.bf16.gmra.mxu0 %v1060
        %v1071 = vpop.f32.mrf.mxu0
        %v1072 = vadd.f32 %v1044, %v1071
        %v1073 = vpop.f32.mrf.mxu0
        %1074 = vdwg.mxu0
        %v1075 = vmul.f32 %v1072, 0.35355338
        %v1077 = vperm.slane %v1020, 0
        %v1095 = vunpack.c.l.b16 %v991
        %v1096 = vunpack.c.l.b16 %v992
        %v1097 = vunpack.c.l.b16 %v993
        %v1098 = vunpack.c.l.b16 %v994
        %v1099 = vunpack.c.l.b16 %v995
        %v1100 = vunpack.c.l.b16 %v996
        %v1101 = vunpack.c.l.b16 %v997
        %v1102 = vunpack.c.l.b16 %v998
        %v1103 = vunpack.c.l.b16 %v999
        %v1104 = vunpack.c.l.b16 %v1000
        %v1105 = vunpack.c.l.b16 %v1001
        %v1106 = vunpack.c.l.b16 %v1002
        %v1107 = vunpack.c.l.b16 %v1003
        %v1108 = vunpack.c.l.b16 %v1004
        %v1109 = vunpack.c.l.b16 %v1005
        %v1110 = vunpack.c.l.b16 %v1006
        %v1111 = vpack.c.b16 %v1096, %v1095
        %v1112 = vpack.c.b16 %v1098, %v1097
        %v1113 = vpack.c.b16 %v1100, %v1099
        %v1114 = vpack.c.b16 %v1102, %v1101
        %v1115 = vpack.c.b16 %v1104, %v1103
        %v1116 = vpack.c.b16 %v1106, %v1105
        %v1117 = vpack.c.b16 %v1108, %v1107
        %v1118 = vpack.c.b16 %v1110, %v1109
        %v1123 = vunpack.c.l.b16 %v1016
        %v1124 = vunpack.c.l.b16 %v1017
        %v1125 = vunpack.c.l.b16 %v1018
        %v1126 = vunpack.c.l.b16 %v1019
        %v1127 = vpack.c.b16 %v1124, %v1123
        %v1128 = vpack.c.b16 %v1126, %v1125
        %v1132 = vsel %vm1058, %v1111, 0
        %v1135 = vsel %vm1058, %v1112, 0
        %v1138 = vsel %vm1058, %v1113, 0
        %v1141 = vsel %vm1058, %v1114, 0
        %v1144 = vsel %vm1058, %v1115, 0
        %v1147 = vsel %vm1058, %v1116, 0
        %v1150 = vsel %vm1058, %v1117, 0
        %v1153 = vsel %vm1058, %v1118, 0
        %1155 = vmatpush.bf16.msra.mxu0 0
        %1156 = vmatpush.bf16.msra.mxu0 0
        %1157 = vmatpush.bf16.msra.mxu0 0
        %1158 = vmatpush.bf16.msra.mxu0 0
        %1159 = vmatpush.bf16.msra.mxu0 0
        %1160 = vmatpush.bf16.msra.mxu0 0
        %1161 = vmatpush.bf16.msra.mxu0 %v1128
        %1162 = vmatpush.bf16.msra.mxu0 %v1127
        %1163 = vmatmul.bf16.gmra.mxu0 %v1132
        %v1164 = vpop.f32.mrf.mxu0
        %v1165 = vadd.f32 %v1077, %v1164
        %v1166 = vpop.f32.mrf.mxu0
        %v1167 = vadd.f32 %v1077, %v1166
        %1168 = vmatmul.bf16.gmra.mxu0 %v1135
        %v1169 = vpop.f32.mrf.mxu0
        %v1170 = vadd.f32 %v1077, %v1169
        %v1171 = vpop.f32.mrf.mxu0
        %v1172 = vadd.f32 %v1077, %v1171
        %1173 = vmatmul.bf16.gmra.mxu0 %v1138
        %v1174 = vpop.f32.mrf.mxu0
        %v1175 = vadd.f32 %v1077, %v1174
        %v1176 = vpop.f32.mrf.mxu0
        %v1177 = vadd.f32 %v1077, %v1176
        %1178 = vmatmul.bf16.gmra.mxu0 %v1141
        %v1179 = vpop.f32.mrf.mxu0
        %v1180 = vadd.f32 %v1077, %v1179
        %v1181 = vpop.f32.mrf.mxu0
        %v1182 = vadd.f32 %v1077, %v1181
        %1183 = vmatmul.bf16.gmra.mxu0 %v1144
        %v1184 = vpop.f32.mrf.mxu0
        %v1185 = vadd.f32 %v1077, %v1184
        %v1186 = vpop.f32.mrf.mxu0
        %v1187 = vadd.f32 %v1077, %v1186
        %1188 = vmatmul.bf16.gmra.mxu0 %v1147
        %v1189 = vpop.f32.mrf.mxu0
        %v1190 = vadd.f32 %v1077, %v1189
        %v1191 = vpop.f32.mrf.mxu0
        %v1192 = vadd.f32 %v1077, %v1191
        %1193 = vmatmul.bf16.gmra.mxu0 %v1150
        %v1194 = vpop.f32.mrf.mxu0
        %v1195 = vadd.f32 %v1077, %v1194
        %v1196 = vpop.f32.mrf.mxu0
        %v1197 = vadd.f32 %v1077, %v1196
        %1198 = vmatmul.bf16.gmra.mxu0 %v1153
        %v1199 = vpop.f32.mrf.mxu0
        %v1200 = vadd.f32 %v1077, %v1199
        %v1201 = vpop.f32.mrf.mxu0
        %v1202 = vadd.f32 %v1077, %v1201
        %1203 = vdwg.mxu0
        %v1205 = vrot.slane %v1075, 1
        %v1206 = vrot.slane %v1075, 2
        %v1207 = vrot.slane %v1075, 3
        %v1208 = vrot.slane %v1075, 4
        %v1209 = vrot.slane %v1075, 5
        %v1210 = vrot.slane %v1075, 6
        %v1211 = vrot.slane %v1075, 7
        %v1212 = vperm.slane %v1075, 0
        %v1213 = vperm.slane %v1205, 0
        %v1214 = vperm.slane %v1206, 0
        %v1215 = vperm.slane %v1207, 0
        %v1216 = vperm.slane %v1208, 0
        %v1217 = vperm.slane %v1209, 0
        %v1218 = vperm.slane %v1210, 0
        %v1219 = vperm.slane %v1211, 0
        %v1228 = vmul.f32 %v1212, %v1165
        %v1229 = vmul.f32 %v1212, %v1167
        %v1230 = vmul.f32 %v1213, %v1170
        %v1231 = vmul.f32 %v1213, %v1172
        %v1232 = vmul.f32 %v1214, %v1175
        %v1233 = vmul.f32 %v1214, %v1177
        %v1234 = vmul.f32 %v1215, %v1180
        %v1235 = vmul.f32 %v1215, %v1182
        %v1236 = vmul.f32 %v1216, %v1185
        %v1237 = vmul.f32 %v1216, %v1187
        %v1238 = vmul.f32 %v1217, %v1190
        %v1239 = vmul.f32 %v1217, %v1192
        %v1240 = vmul.f32 %v1218, %v1195
        %v1241 = vmul.f32 %v1218, %v1197
        %v1242 = vmul.f32 %v1219, %v1200
        %v1243 = vmul.f32 %v1219, %v1202
        %vm1244 = vcmask 64512
        %v1245 = vsel %vm1244, %v1228, 0.0
        %1246 = vadd.xlane.f32.xlu0 %v1245
        %v1247 = vpop.xlane.xlu0 %1246
        %v1248 = vsel %vm1244, %v1229, 0.0
        %1249 = vadd.xlane.f32.xlu0 %v1248
        %v1250 = vpop.xlane.xlu0 %1249
        %v1251 = vsel %vm1244, %v1230, 0.0
        %1252 = vadd.xlane.f32.xlu0 %v1251
        %v1253 = vpop.xlane.xlu0 %1252
        %v1254 = vsel %vm1244, %v1231, 0.0
        %1255 = vadd.xlane.f32.xlu0 %v1254
        %v1256 = vpop.xlane.xlu0 %1255
        %v1257 = vsel %vm1244, %v1232, 0.0
        %1258 = vadd.xlane.f32.xlu0 %v1257
        %v1259 = vpop.xlane.xlu0 %1258
        %v1260 = vsel %vm1244, %v1233, 0.0
        %1261 = vadd.xlane.f32.xlu0 %v1260
        %v1262 = vpop.xlane.xlu0 %1261
        %v1263 = vsel %vm1244, %v1234, 0.0
        %1264 = vadd.xlane.f32.xlu0 %v1263
        %v1265 = vpop.xlane.xlu0 %1264
        %v1266 = vsel %vm1244, %v1235, 0.0
        %1267 = vadd.xlane.f32.xlu0 %v1266
        %v1268 = vpop.xlane.xlu0 %1267
        %v1269 = vsel %vm1244, %v1236, 0.0
        %1270 = vadd.xlane.f32.xlu0 %v1269
        %v1271 = vpop.xlane.xlu0 %1270
        %v1272 = vsel %vm1244, %v1237, 0.0
        %1273 = vadd.xlane.f32.xlu0 %v1272
        %v1274 = vpop.xlane.xlu0 %1273
        %v1275 = vsel %vm1244, %v1238, 0.0
        %1276 = vadd.xlane.f32.xlu0 %v1275
        %v1277 = vpop.xlane.xlu0 %1276
        %v1278 = vsel %vm1244, %v1239, 0.0
        %1279 = vadd.xlane.f32.xlu0 %v1278
        %v1280 = vpop.xlane.xlu0 %1279
        %v1281 = vsel %vm1244, %v1240, 0.0
        %1282 = vadd.xlane.f32.xlu0 %v1281
        %v1283 = vpop.xlane.xlu0 %1282
        %v1284 = vsel %vm1244, %v1241, 0.0
        %1285 = vadd.xlane.f32.xlu0 %v1284
        %v1286 = vpop.xlane.xlu0 %1285
        %v1287 = vsel %vm1244, %v1242, 0.0
        %1288 = vadd.xlane.f32.xlu0 %v1287
        %v1289 = vpop.xlane.xlu0 %1288
        %v1290 = vsel %vm1244, %v1243, 0.0
        %1291 = vadd.xlane.f32.xlu0 %v1290
        %v1292 = vpop.xlane.xlu0 %1291
        %v1309 = vlaneseq
        %v1310 = vand.u32 %v1309, 127
        %v1311 = vperm.slane %v1247, %v1310
        %v1312 = vadd.s32 %v1310, 4294967288
        %v1313 = vperm.slane %v1250, %v1312
        %vm1314 = vcmask 130112
        %v1315 = vsel %vm1314, %v1313, %v1311
        %v1316 = vperm.slane %v1253, %v1310
        %v1317 = vperm.slane %v1256, %v1312
        %v1318 = vsel %vm1314, %v1317, %v1316
        %v1319 = vperm.slane %v1259, %v1310
        %v1320 = vperm.slane %v1262, %v1312
        %v1321 = vsel %vm1314, %v1320, %v1319
        %v1322 = vperm.slane %v1265, %v1310
        %v1323 = vperm.slane %v1268, %v1312
        %v1324 = vsel %vm1314, %v1323, %v1322
        %v1325 = vperm.slane %v1271, %v1310
        %v1326 = vperm.slane %v1274, %v1312
        %v1327 = vsel %vm1314, %v1326, %v1325
        %v1328 = vperm.slane %v1277, %v1310
        %v1329 = vperm.slane %v1280, %v1312
        %v1330 = vsel %vm1314, %v1329, %v1328
        %v1331 = vperm.slane %v1283, %v1310
        %v1332 = vperm.slane %v1286, %v1312
        %v1333 = vsel %vm1314, %v1332, %v1331
        %v1334 = vperm.slane %v1289, %v1310
        %v1335 = vperm.slane %v1292, %v1312
        %v1336 = vsel %vm1314, %v1335, %v1334
        %vm1337 = vcmask 1041409
        %v1338 = vsel %vm1337, %v1318, %v1315
        %vm1339 = vcmask 1042434
        %v1340 = vsel %vm1339, %v1321, %v1338
        %vm1341 = vcmask 1043459
        %v1342 = vsel %vm1341, %v1324, %v1340
        %vm1343 = vcmask 1044484
        %v1344 = vsel %vm1343, %v1327, %v1342
        %vm1345 = vcmask 1045509
        %v1346 = vsel %vm1345, %v1330, %v1344
        %vm1347 = vcmask 1046534
        %v1348 = vsel %vm1347, %v1333, %v1346
        %vm1349 = vcmask 1047559
        %v1350 = vsel %vm1349, %v1336, %v1348
        %vm1352 = vcmask 130048
        %v1353 = vsel %vm1352, %v1350, -inf
        %1354 = vmax.xlane.f32.xlu0 %v1353
        %v1355 = vpop.xlane.xlu0 %1354
        %v1357 = vperm.slane %v1355, 0
        %v1358 = vperm.slane %v1355, 1
        %v1359 = vperm.slane %v1355, 2
        %v1360 = vperm.slane %v1355, 3
        %v1361 = vperm.slane %v1355, 4
        %v1362 = vperm.slane %v1355, 5
        %v1363 = vperm.slane %v1355, 6
        %v1364 = vperm.slane %v1355, 7
        %v1373 = vsub.f32 %v1247, %v1357
        %v1374 = vsub.f32 %v1250, %v1357
        %v1375 = vsub.f32 %v1253, %v1358
        %v1376 = vsub.f32 %v1256, %v1358
        %v1377 = vsub.f32 %v1259, %v1359
        %v1378 = vsub.f32 %v1262, %v1359
        %v1379 = vsub.f32 %v1265, %v1360
        %v1380 = vsub.f32 %v1268, %v1360
        %v1381 = vsub.f32 %v1271, %v1361
        %v1382 = vsub.f32 %v1274, %v1361
        %v1383 = vsub.f32 %v1277, %v1362
        %v1384 = vsub.f32 %v1280, %v1362
        %v1385 = vsub.f32 %v1283, %v1363
        %v1386 = vsub.f32 %v1286, %v1363
        %v1387 = vsub.f32 %v1289, %v1364
        %v1388 = vsub.f32 %v1292, %v1364
        %v1389 = vmul.f32 %v1373, 1.442695
        %v1390 = vpow.pop %v1389
        %v1391 = vmul.f32 %v1374, 1.442695
        %v1392 = vpow.pop %v1391
        %v1393 = vmul.f32 %v1375, 1.442695
        %v1394 = vpow.pop %v1393
        %v1395 = vmul.f32 %v1376, 1.442695
        %v1396 = vpow.pop %v1395
        %v1397 = vmul.f32 %v1377, 1.442695
        %v1398 = vpow.pop %v1397
        %v1399 = vmul.f32 %v1378, 1.442695
        %v1400 = vpow.pop %v1399
        %v1401 = vmul.f32 %v1379, 1.442695
        %v1402 = vpow.pop %v1401
        %v1403 = vmul.f32 %v1380, 1.442695
        %v1404 = vpow.pop %v1403
        %v1405 = vmul.f32 %v1381, 1.442695
        %v1406 = vpow.pop %v1405
        %v1407 = vmul.f32 %v1382, 1.442695
        %v1408 = vpow.pop %v1407
        %v1409 = vmul.f32 %v1383, 1.442695
        %v1410 = vpow.pop %v1409
        %v1411 = vmul.f32 %v1384, 1.442695
        %v1412 = vpow.pop %v1411
        %v1413 = vmul.f32 %v1385, 1.442695
        %v1414 = vpow.pop %v1413
        %v1415 = vmul.f32 %v1386, 1.442695
        %v1416 = vpow.pop %v1415
        %v1417 = vmul.f32 %v1387, 1.442695
        %v1418 = vpow.pop %v1417
        %v1419 = vmul.f32 %v1388, 1.442695
        %v1420 = vpow.pop %v1419
        %1437 = vset.pattern.permute.xlu0 0
        %1438 = vperm.xlu0 %1437, %v1390
        %v1439 = vpop.permute.xlu0 %1438
        %1440 = vset.pattern.permute.xlu0 0
        %1441 = vperm.xlu0 %1440, %v1392
        %v1442 = vpop.permute.xlu0 %1441
        %1443 = vset.pattern.permute.xlu0 0
        %1444 = vperm.xlu0 %1443, %v1394
        %v1445 = vpop.permute.xlu0 %1444
        %1446 = vset.pattern.permute.xlu0 0
        %1447 = vperm.xlu0 %1446, %v1396
        %v1448 = vpop.permute.xlu0 %1447
        %1449 = vset.pattern.permute.xlu0 0
        %1450 = vperm.xlu0 %1449, %v1398
        %v1451 = vpop.permute.xlu0 %1450
        %1452 = vset.pattern.permute.xlu0 0
        %1453 = vperm.xlu0 %1452, %v1400
        %v1454 = vpop.permute.xlu0 %1453
        %1455 = vset.pattern.permute.xlu0 0
        %1456 = vperm.xlu0 %1455, %v1402
        %v1457 = vpop.permute.xlu0 %1456
        %1458 = vset.pattern.permute.xlu0 0
        %1459 = vperm.xlu0 %1458, %v1404
        %v1460 = vpop.permute.xlu0 %1459
        %1461 = vset.pattern.permute.xlu0 0
        %1462 = vperm.xlu0 %1461, %v1406
        %v1463 = vpop.permute.xlu0 %1462
        %1464 = vset.pattern.permute.xlu0 0
        %1465 = vperm.xlu0 %1464, %v1408
        %v1466 = vpop.permute.xlu0 %1465
        %1467 = vset.pattern.permute.xlu0 0
        %1468 = vperm.xlu0 %1467, %v1410
        %v1469 = vpop.permute.xlu0 %1468
        %1470 = vset.pattern.permute.xlu0 0
        %1471 = vperm.xlu0 %1470, %v1412
        %v1472 = vpop.permute.xlu0 %1471
        %1473 = vset.pattern.permute.xlu0 0
        %1474 = vperm.xlu0 %1473, %v1414
        %v1475 = vpop.permute.xlu0 %1474
        %1476 = vset.pattern.permute.xlu0 0
        %1477 = vperm.xlu0 %1476, %v1416
        %v1478 = vpop.permute.xlu0 %1477
        %1479 = vset.pattern.permute.xlu0 0
        %1480 = vperm.xlu0 %1479, %v1418
        %v1481 = vpop.permute.xlu0 %1480
        %1482 = vset.pattern.permute.xlu0 0
        %1483 = vperm.xlu0 %1482, %v1420
        %v1484 = vpop.permute.xlu0 %1483
        %v1485 = vperm.slane %v1439, %v1310
        %v1486 = vperm.slane %v1442, %v1312
        %v1487 = vsel %vm1314, %v1486, %v1485
        %v1488 = vperm.slane %v1445, %v1310
        %v1489 = vperm.slane %v1448, %v1312
        %v1490 = vsel %vm1314, %v1489, %v1488
        %v1491 = vperm.slane %v1451, %v1310
        %v1492 = vperm.slane %v1454, %v1312
        %v1493 = vsel %vm1314, %v1492, %v1491
        %v1494 = vperm.slane %v1457, %v1310
        %v1495 = vperm.slane %v1460, %v1312
        %v1496 = vsel %vm1314, %v1495, %v1494
        %v1497 = vperm.slane %v1463, %v1310
        %v1498 = vperm.slane %v1466, %v1312
        %v1499 = vsel %vm1314, %v1498, %v1497
        %v1500 = vperm.slane %v1469, %v1310
        %v1501 = vperm.slane %v1472, %v1312
        %v1502 = vsel %vm1314, %v1501, %v1500
        %v1503 = vperm.slane %v1475, %v1310
        %v1504 = vperm.slane %v1478, %v1312
        %v1505 = vsel %vm1314, %v1504, %v1503
        %v1506 = vperm.slane %v1481, %v1310
        %v1507 = vperm.slane %v1484, %v1312
        %v1508 = vsel %vm1314, %v1507, %v1506
        %v1509 = vsel %vm1337, %v1490, %v1487
        %v1510 = vsel %vm1339, %v1493, %v1509
        %v1511 = vsel %vm1341, %v1496, %v1510
        %v1512 = vsel %vm1343, %v1499, %v1511
        %v1513 = vsel %vm1345, %v1502, %v1512
        %v1514 = vsel %vm1347, %v1505, %v1513
        %v1515 = vsel %vm1349, %v1508, %v1514
        %v1517 = vsel %vm1352, %v1515, 0.0
        %1518 = vadd.xlane.f32.xlu0 %v1517
        %v1519 = vpop.xlane.xlu0 %1518
        %v1520 = vrcp.pop %v1519
        %v1522 = vperm.slane %v1520, 0
        %v1523 = vperm.slane %v1520, 1
        %v1524 = vperm.slane %v1520, 2
        %v1525 = vperm.slane %v1520, 3
        %v1526 = vperm.slane %v1520, 4
        %v1527 = vperm.slane %v1520, 5
        %v1528 = vperm.slane %v1520, 6
        %v1529 = vperm.slane %v1520, 7
        %v1538 = vmul.f32 %v1390, %v1522
        %v1539 = vmul.f32 %v1392, %v1522
        %v1540 = vmul.f32 %v1394, %v1523
        %v1541 = vmul.f32 %v1396, %v1523
        %v1542 = vmul.f32 %v1398, %v1524
        %v1543 = vmul.f32 %v1400, %v1524
        %v1544 = vmul.f32 %v1402, %v1525
        %v1545 = vmul.f32 %v1404, %v1525
        %v1546 = vmul.f32 %v1406, %v1526
        %v1547 = vmul.f32 %v1408, %v1526
        %v1548 = vmul.f32 %v1410, %v1527
        %v1549 = vmul.f32 %v1412, %v1527
        %v1550 = vmul.f32 %v1414, %v1528
        %v1551 = vmul.f32 %v1416, %v1528
        %v1552 = vmul.f32 %v1418, %v1529
        %v1553 = vmul.f32 %v1420, %v1529
        %1555 = vset.pattern.permute.xlu0 0
        %1556 = vperm.xlu0 %1555, %v1538
        %v1557 = vpop.permute.xlu0 %1556
        %1560 = vset.pattern.permute.xlu0 0
        %1561 = vperm.xlu0 %1560, %v1539
        %v1562 = vpop.permute.xlu0 %1561
        %1565 = vset.pattern.permute.xlu0 0
        %1566 = vperm.xlu0 %1565, %v1540
        %v1567 = vpop.permute.xlu0 %1566
        %1570 = vset.pattern.permute.xlu0 0
        %1571 = vperm.xlu0 %1570, %v1541
        %v1572 = vpop.permute.xlu0 %1571
        %1575 = vset.pattern.permute.xlu0 0
        %1576 = vperm.xlu0 %1575, %v1542
        %v1577 = vpop.permute.xlu0 %1576
        %1580 = vset.pattern.permute.xlu0 0
        %1581 = vperm.xlu0 %1580, %v1543
        %v1582 = vpop.permute.xlu0 %1581
        %1585 = vset.pattern.permute.xlu0 0
        %1586 = vperm.xlu0 %1585, %v1544
        %v1587 = vpop.permute.xlu0 %1586
        %1590 = vset.pattern.permute.xlu0 0
        %1591 = vperm.xlu0 %1590, %v1545
        %v1592 = vpop.permute.xlu0 %1591
        %1595 = vset.pattern.permute.xlu0 0
        %1596 = vperm.xlu0 %1595, %v1546
        %v1597 = vpop.permute.xlu0 %1596
        %1600 = vset.pattern.permute.xlu0 0
        %1601 = vperm.xlu0 %1600, %v1547
        %v1602 = vpop.permute.xlu0 %1601
        %1605 = vset.pattern.permute.xlu0 0
        %1606 = vperm.xlu0 %1605, %v1548
        %v1607 = vpop.permute.xlu0 %1606
        %1610 = vset.pattern.permute.xlu0 0
        %1611 = vperm.xlu0 %1610, %v1549
        %v1612 = vpop.permute.xlu0 %1611
        %1615 = vset.pattern.permute.xlu0 0
        %1616 = vperm.xlu0 %1615, %v1550
        %v1617 = vpop.permute.xlu0 %1616
        %1620 = vset.pattern.permute.xlu0 0
        %1621 = vperm.xlu0 %1620, %v1551
        %v1622 = vpop.permute.xlu0 %1621
        %1625 = vset.pattern.permute.xlu0 0
        %1626 = vperm.xlu0 %1625, %v1552
        %v1627 = vpop.permute.xlu0 %1626
        %1630 = vset.pattern.permute.xlu0 0
        %1631 = vperm.xlu0 %1630, %v1553
        %v1632 = vpop.permute.xlu0 %1631
        %v1634 = vmul.f32 %v1557, %v1165
        %v1635 = vmul.f32 %v1562, %v1167
        %v1636 = vmul.f32 %v1567, %v1170
        %v1637 = vmul.f32 %v1572, %v1172
        %v1638 = vmul.f32 %v1577, %v1175
        %v1639 = vmul.f32 %v1582, %v1177
        %v1640 = vmul.f32 %v1587, %v1180
        %v1641 = vmul.f32 %v1592, %v1182
        %v1642 = vmul.f32 %v1597, %v1185
        %v1643 = vmul.f32 %v1602, %v1187
        %v1644 = vmul.f32 %v1607, %v1190
        %v1645 = vmul.f32 %v1612, %v1192
        %v1646 = vmul.f32 %v1617, %v1195
        %v1647 = vmul.f32 %v1622, %v1197
        %v1648 = vmul.f32 %v1627, %v1200
        %v1649 = vmul.f32 %v1632, %v1202
        %vm1650 = vcmask 326912
        %v1651 = vsel %vm1650, %v1634, 0.0
        %v1652 = vsel %vm1650, %v1635, 0.0
        %v1653 = vadd.f32 %v1651, %v1652
        %v1654 = vrot.slane %v1653, 4
        %v1655 = vadd.f32 %v1653, %v1654
        %v1656 = vrot.slane %v1655, 2
        %v1657 = vadd.f32 %v1655, %v1656
        %v1658 = vrot.slane %v1657, 1
        %v1659 = vadd.f32 %v1657, %v1658
        %v1660 = vsel %vm1650, %v1636, 0.0
        %v1661 = vsel %vm1650, %v1637, 0.0
        %v1662 = vadd.f32 %v1660, %v1661
        %v1663 = vrot.slane %v1662, 4
        %v1664 = vadd.f32 %v1662, %v1663
        %v1665 = vrot.slane %v1664, 2
        %v1666 = vadd.f32 %v1664, %v1665
        %v1667 = vrot.slane %v1666, 1
        %v1668 = vadd.f32 %v1666, %v1667
        %v1669 = vsel %vm1650, %v1638, 0.0
        %v1670 = vsel %vm1650, %v1639, 0.0
        %v1671 = vadd.f32 %v1669, %v1670
        %v1672 = vrot.slane %v1671, 4
        %v1673 = vadd.f32 %v1671, %v1672
        %v1674 = vrot.slane %v1673, 2
        %v1675 = vadd.f32 %v1673, %v1674
        %v1676 = vrot.slane %v1675, 1
        %v1677 = vadd.f32 %v1675, %v1676
        %v1678 = vsel %vm1650, %v1640, 0.0
        %v1679 = vsel %vm1650, %v1641, 0.0
        %v1680 = vadd.f32 %v1678, %v1679
        %v1681 = vrot.slane %v1680, 4
        %v1682 = vadd.f32 %v1680, %v1681
        %v1683 = vrot.slane %v1682, 2
        %v1684 = vadd.f32 %v1682, %v1683
        %v1685 = vrot.slane %v1684, 1
        %v1686 = vadd.f32 %v1684, %v1685
        %v1687 = vsel %vm1650, %v1642, 0.0
        %v1688 = vsel %vm1650, %v1643, 0.0
        %v1689 = vadd.f32 %v1687, %v1688
        %v1690 = vrot.slane %v1689, 4
        %v1691 = vadd.f32 %v1689, %v1690
        %v1692 = vrot.slane %v1691, 2
        %v1693 = vadd.f32 %v1691, %v1692
        %v1694 = vrot.slane %v1693, 1
        %v1695 = vadd.f32 %v1693, %v1694
        %v1696 = vsel %vm1650, %v1644, 0.0
        %v1697 = vsel %vm1650, %v1645, 0.0
        %v1698 = vadd.f32 %v1696, %v1697
        %v1699 = vrot.slane %v1698, 4
        %v1700 = vadd.f32 %v1698, %v1699
        %v1701 = vrot.slane %v1700, 2
        %v1702 = vadd.f32 %v1700, %v1701
        %v1703 = vrot.slane %v1702, 1
        %v1704 = vadd.f32 %v1702, %v1703
        %v1705 = vsel %vm1650, %v1646, 0.0
        %v1706 = vsel %vm1650, %v1647, 0.0
        %v1707 = vadd.f32 %v1705, %v1706
        %v1708 = vrot.slane %v1707, 4
        %v1709 = vadd.f32 %v1707, %v1708
        %v1710 = vrot.slane %v1709, 2
        %v1711 = vadd.f32 %v1709, %v1710
        %v1712 = vrot.slane %v1711, 1
        %v1713 = vadd.f32 %v1711, %v1712
        %v1714 = vsel %vm1650, %v1648, 0.0
        %v1715 = vsel %vm1650, %v1649, 0.0
        %v1716 = vadd.f32 %v1714, %v1715
        %v1717 = vrot.slane %v1716, 4
        %v1718 = vadd.f32 %v1716, %v1717
        %v1719 = vrot.slane %v1718, 2
        %v1720 = vadd.f32 %v1718, %v1719
        %v1721 = vrot.slane %v1720, 1
        %v1722 = vadd.f32 %v1720, %v1721
        %v1723 = vpack.c.bf16 %v1659, %v1659
        %v1724 = vpack.c.bf16 %v1668, %v1668
        %v1725 = vpack.c.bf16 %v1677, %v1677
        %v1726 = vpack.c.bf16 %v1686, %v1686
        %v1727 = vpack.c.bf16 %v1695, %v1695
        %v1728 = vpack.c.bf16 %v1704, %v1704
        %v1729 = vpack.c.bf16 %v1713, %v1713
        %v1730 = vpack.c.bf16 %v1722, %v1722
        %v1739 = vunpack.c.l.b16 %v1723
        %v1740 = vunpack.c.l.b16 %v1724
        %v1741 = vunpack.c.l.b16 %v1725
        %v1742 = vunpack.c.l.b16 %v1726
        %v1743 = vunpack.c.l.b16 %v1727
        %v1744 = vunpack.c.l.b16 %v1728
        %v1745 = vunpack.c.l.b16 %v1729
        %v1746 = vunpack.c.l.b16 %v1730
        %v1747 = vsel %vm1337, %v1740, %v1739
        %v1748 = vsel %vm1339, %v1741, %v1747
        %v1749 = vsel %vm1341, %v1742, %v1748
        %v1750 = vsel %vm1343, %v1743, %v1749
        %v1751 = vsel %vm1345, %v1744, %v1750
        %v1752 = vsel %vm1347, %v1745, %v1751
        %v1753 = vsel %vm1349, %v1746, %v1752
        %v1754 = vpack.c.b16 %v1753, %v1753
        %1755 = vrot.lane.b32.xlu0 %v1754, 96
        %v1756 = vpop.permute.xlu0 %1755
        %v1758 = vsel %vm1244, %v1756, 0
        %vm1760 = vcmask 1043456
        %v1762 = vsel %vm1760, %v1021, 0
        %1764 = vmatpush.bf16.msra.mxu0 0
        %1765 = vmatpush.bf16.msra.mxu0 0
        %1766 = vmatpush.bf16.msra.mxu0 0
        %1767 = vmatpush.bf16.msra.mxu0 0
        %1768 = vmatpush.bf16.msra.mxu0 0
        %1769 = vmatpush.bf16.msra.mxu0 0
        %1770 = vmatpush.bf16.msra.mxu0 0
        %1771 = vmatpush.bf16.msra.mxu0 %v1762
        %1772 = vmatmul.bf16.gmra.mxu0 %v1758
        %v1773 = vpop.f32.mrf.mxu0
        %v1774 = vadd.f32 0.0, %v1773
        %v1775 = vpop.f32.mrf.mxu0
        %1776 = vdwg.mxu0
        %v1778 = vperm.slane %v1025, 0
        %v1780 = vadd.f32 %v1778, %v1774
        %1797 = vrot.lane.b32.xlu0 %v1228, 120
        %v1798 = vpop.permute.xlu0 %1797
        %1799 = vrot.lane.b32.xlu0 %v1229, 120
        %v1800 = vpop.permute.xlu0 %1799
        %1801 = vrot.lane.b32.xlu0 %v1230, 120
        %v1802 = vpop.permute.xlu0 %1801
        %1803 = vrot.lane.b32.xlu0 %v1231, 120
        %v1804 = vpop.permute.xlu0 %1803
        %1805 = vrot.lane.b32.xlu0 %v1232, 120
        %v1806 = vpop.permute.xlu0 %1805
        %1807 = vrot.lane.b32.xlu0 %v1233, 120
        %v1808 = vpop.permute.xlu0 %1807
        %1809 = vrot.lane.b32.xlu0 %v1234, 120
        %v1810 = vpop.permute.xlu0 %1809
        %1811 = vrot.lane.b32.xlu0 %v1235, 120
        %v1812 = vpop.permute.xlu0 %1811
        %1813 = vrot.lane.b32.xlu0 %v1236, 120
        %v1814 = vpop.permute.xlu0 %1813
        %1815 = vrot.lane.b32.xlu0 %v1237, 120
        %v1816 = vpop.permute.xlu0 %1815
        %1817 = vrot.lane.b32.xlu0 %v1238, 120
        %v1818 = vpop.permute.xlu0 %1817
        %1819 = vrot.lane.b32.xlu0 %v1239, 120
        %v1820 = vpop.permute.xlu0 %1819
        %1821 = vrot.lane.b32.xlu0 %v1240, 120
        %v1822 = vpop.permute.xlu0 %1821
        %1823 = vrot.lane.b32.xlu0 %v1241, 120
        %v1824 = vpop.permute.xlu0 %1823
        %1825 = vrot.lane.b32.xlu0 %v1242, 120
        %v1826 = vpop.permute.xlu0 %1825
        %1827 = vrot.lane.b32.xlu0 %v1243, 120
        %v1828 = vpop.permute.xlu0 %1827
        %v1845 = vsel %vm1244, %v1798, 0.0
        %1846 = vadd.xlane.f32.xlu0 %v1845
        %v1847 = vpop.xlane.xlu0 %1846
        %v1848 = vsel %vm1244, %v1800, 0.0
        %1849 = vadd.xlane.f32.xlu0 %v1848
        %v1850 = vpop.xlane.xlu0 %1849
        %v1851 = vsel %vm1244, %v1802, 0.0
        %1852 = vadd.xlane.f32.xlu0 %v1851
        %v1853 = vpop.xlane.xlu0 %1852
        %v1854 = vsel %vm1244, %v1804, 0.0
        %1855 = vadd.xlane.f32.xlu0 %v1854
        %v1856 = vpop.xlane.xlu0 %1855
        %v1857 = vsel %vm1244, %v1806, 0.0
        %1858 = vadd.xlane.f32.xlu0 %v1857
        %v1859 = vpop.xlane.xlu0 %1858
        %v1860 = vsel %vm1244, %v1808, 0.0
        %1861 = vadd.xlane.f32.xlu0 %v1860
        %v1862 = vpop.xlane.xlu0 %1861
        %v1863 = vsel %vm1244, %v1810, 0.0
        %1864 = vadd.xlane.f32.xlu0 %v1863
        %v1865 = vpop.xlane.xlu0 %1864
        %v1866 = vsel %vm1244, %v1812, 0.0
        %1867 = vadd.xlane.f32.xlu0 %v1866
        %v1868 = vpop.xlane.xlu0 %1867
        %v1869 = vsel %vm1244, %v1814, 0.0
        %1870 = vadd.xlane.f32.xlu0 %v1869
        %v1871 = vpop.xlane.xlu0 %1870
        %v1872 = vsel %vm1244, %v1816, 0.0
        %1873 = vadd.xlane.f32.xlu0 %v1872
        %v1874 = vpop.xlane.xlu0 %1873
        %v1875 = vsel %vm1244, %v1818, 0.0
        %1876 = vadd.xlane.f32.xlu0 %v1875
        %v1877 = vpop.xlane.xlu0 %1876
        %v1878 = vsel %vm1244, %v1820, 0.0
        %1879 = vadd.xlane.f32.xlu0 %v1878
        %v1880 = vpop.xlane.xlu0 %1879
        %v1881 = vsel %vm1244, %v1822, 0.0
        %1882 = vadd.xlane.f32.xlu0 %v1881
        %v1883 = vpop.xlane.xlu0 %1882
        %v1884 = vsel %vm1244, %v1824, 0.0
        %1885 = vadd.xlane.f32.xlu0 %v1884
        %v1886 = vpop.xlane.xlu0 %1885
        %v1887 = vsel %vm1244, %v1826, 0.0
        %1888 = vadd.xlane.f32.xlu0 %v1887
        %v1889 = vpop.xlane.xlu0 %1888
        %v1890 = vsel %vm1244, %v1828, 0.0
        %1891 = vadd.xlane.f32.xlu0 %v1890
        %v1892 = vpop.xlane.xlu0 %1891
        %v1909 = vperm.slane %v1847, %v1310
        %v1910 = vperm.slane %v1850, %v1312
        %v1911 = vsel %vm1314, %v1910, %v1909
        %v1912 = vperm.slane %v1853, %v1310
        %v1913 = vperm.slane %v1856, %v1312
        %v1914 = vsel %vm1314, %v1913, %v1912
        %v1915 = vperm.slane %v1859, %v1310
        %v1916 = vperm.slane %v1862, %v1312
        %v1917 = vsel %vm1314, %v1916, %v1915
        %v1918 = vperm.slane %v1865, %v1310
        %v1919 = vperm.slane %v1868, %v1312
        %v1920 = vsel %vm1314, %v1919, %v1918
        %v1921 = vperm.slane %v1871, %v1310
        %v1922 = vperm.slane %v1874, %v1312
        %v1923 = vsel %vm1314, %v1922, %v1921
        %v1924 = vperm.slane %v1877, %v1310
        %v1925 = vperm.slane %v1880, %v1312
        %v1926 = vsel %vm1314, %v1925, %v1924
        %v1927 = vperm.slane %v1883, %v1310
        %v1928 = vperm.slane %v1886, %v1312
        %v1929 = vsel %vm1314, %v1928, %v1927
        %v1930 = vperm.slane %v1889, %v1310
        %v1931 = vperm.slane %v1892, %v1312
        %v1932 = vsel %vm1314, %v1931, %v1930
        %v1933 = vsel %vm1337, %v1914, %v1911
        %v1934 = vsel %vm1339, %v1917, %v1933
        %v1935 = vsel %vm1341, %v1920, %v1934
        %v1936 = vsel %vm1343, %v1923, %v1935
        %v1937 = vsel %vm1345, %v1926, %v1936
        %v1938 = vsel %vm1347, %v1929, %v1937
        %v1939 = vsel %vm1349, %v1932, %v1938
        %v1941 = vsel %vm1352, %v1939, -inf
        %1942 = vmax.xlane.f32.xlu0 %v1941
        %v1943 = vpop.xlane.xlu0 %1942
        %v1945 = vperm.slane %v1943, 0
        %v1946 = vperm.slane %v1943, 1
        %v1947 = vperm.slane %v1943, 2
        %v1948 = vperm.slane %v1943, 3
        %v1949 = vperm.slane %v1943, 4
        %v1950 = vperm.slane %v1943, 5
        %v1951 = vperm.slane %v1943, 6
        %v1952 = vperm.slane %v1943, 7
        %v1961 = vsub.f32 %v1847, %v1945
        %v1962 = vsub.f32 %v1850, %v1945
        %v1963 = vsub.f32 %v1853, %v1946
        %v1964 = vsub.f32 %v1856, %v1946
        %v1965 = vsub.f32 %v1859, %v1947
        %v1966 = vsub.f32 %v1862, %v1947
        %v1967 = vsub.f32 %v1865, %v1948
        %v1968 = vsub.f32 %v1868, %v1948
        %v1969 = vsub.f32 %v1871, %v1949
        %v1970 = vsub.f32 %v1874, %v1949
        %v1971 = vsub.f32 %v1877, %v1950
        %v1972 = vsub.f32 %v1880, %v1950
        %v1973 = vsub.f32 %v1883, %v1951
        %v1974 = vsub.f32 %v1886, %v1951
        %v1975 = vsub.f32 %v1889, %v1952
        %v1976 = vsub.f32 %v1892, %v1952
        %v1977 = vmul.f32 %v1961, 1.442695
        %v1978 = vpow.pop %v1977
        %v1979 = vmul.f32 %v1962, 1.442695
        %v1980 = vpow.pop %v1979
        %v1981 = vmul.f32 %v1963, 1.442695
        %v1982 = vpow.pop %v1981
        %v1983 = vmul.f32 %v1964, 1.442695
        %v1984 = vpow.pop %v1983
        %v1985 = vmul.f32 %v1965, 1.442695
        %v1986 = vpow.pop %v1985
        %v1987 = vmul.f32 %v1966, 1.442695
        %v1988 = vpow.pop %v1987
        %v1989 = vmul.f32 %v1967, 1.442695
        %v1990 = vpow.pop %v1989
        %v1991 = vmul.f32 %v1968, 1.442695
        %v1992 = vpow.pop %v1991
        %v1993 = vmul.f32 %v1969, 1.442695
        %v1994 = vpow.pop %v1993
        %v1995 = vmul.f32 %v1970, 1.442695
        %v1996 = vpow.pop %v1995
        %v1997 = vmul.f32 %v1971, 1.442695
        %v1998 = vpow.pop %v1997
        %v1999 = vmul.f32 %v1972, 1.442695
        %v2000 = vpow.pop %v1999
        %v2001 = vmul.f32 %v1973, 1.442695
        %v2002 = vpow.pop %v2001
        %v2003 = vmul.f32 %v1974, 1.442695
        %v2004 = vpow.pop %v2003
        %v2005 = vmul.f32 %v1975, 1.442695
        %v2006 = vpow.pop %v2005
        %v2007 = vmul.f32 %v1976, 1.442695
        %v2008 = vpow.pop %v2007
        %2025 = vset.pattern.permute.xlu0 0
        %2026 = vperm.xlu0 %2025, %v1978
        %v2027 = vpop.permute.xlu0 %2026
        %2028 = vset.pattern.permute.xlu0 0
        %2029 = vperm.xlu0 %2028, %v1980
        %v2030 = vpop.permute.xlu0 %2029
        %2031 = vset.pattern.permute.xlu0 0
        %2032 = vperm.xlu0 %2031, %v1982
        %v2033 = vpop.permute.xlu0 %2032
        %2034 = vset.pattern.permute.xlu0 0
        %2035 = vperm.xlu0 %2034, %v1984
        %v2036 = vpop.permute.xlu0 %2035
        %2037 = vset.pattern.permute.xlu0 0
        %2038 = vperm.xlu0 %2037, %v1986
        %v2039 = vpop.permute.xlu0 %2038
        %2040 = vset.pattern.permute.xlu0 0
        %2041 = vperm.xlu0 %2040, %v1988
        %v2042 = vpop.permute.xlu0 %2041
        %2043 = vset.pattern.permute.xlu0 0
        %2044 = vperm.xlu0 %2043, %v1990
        %v2045 = vpop.permute.xlu0 %2044
        %2046 = vset.pattern.permute.xlu0 0
        %2047 = vperm.xlu0 %2046, %v1992
        %v2048 = vpop.permute.xlu0 %2047
        %2049 = vset.pattern.permute.xlu0 0
        %2050 = vperm.xlu0 %2049, %v1994
        %v2051 = vpop.permute.xlu0 %2050
        %2052 = vset.pattern.permute.xlu0 0
        %2053 = vperm.xlu0 %2052, %v1996
        %v2054 = vpop.permute.xlu0 %2053
        %2055 = vset.pattern.permute.xlu0 0
        %2056 = vperm.xlu0 %2055, %v1998
        %v2057 = vpop.permute.xlu0 %2056
        %2058 = vset.pattern.permute.xlu0 0
        %2059 = vperm.xlu0 %2058, %v2000
        %v2060 = vpop.permute.xlu0 %2059
        %2061 = vset.pattern.permute.xlu0 0
        %2062 = vperm.xlu0 %2061, %v2002
        %v2063 = vpop.permute.xlu0 %2062
        %2064 = vset.pattern.permute.xlu0 0
        %2065 = vperm.xlu0 %2064, %v2004
        %v2066 = vpop.permute.xlu0 %2065
        %2067 = vset.pattern.permute.xlu0 0
        %2068 = vperm.xlu0 %2067, %v2006
        %v2069 = vpop.permute.xlu0 %2068
        %2070 = vset.pattern.permute.xlu0 0
        %2071 = vperm.xlu0 %2070, %v2008
        %v2072 = vpop.permute.xlu0 %2071
        %v2073 = vperm.slane %v2027, %v1310
        %v2074 = vperm.slane %v2030, %v1312
        %v2075 = vsel %vm1314, %v2074, %v2073
        %v2076 = vperm.slane %v2033, %v1310
        %v2077 = vperm.slane %v2036, %v1312
        %v2078 = vsel %vm1314, %v2077, %v2076
        %v2079 = vperm.slane %v2039, %v1310
        %v2080 = vperm.slane %v2042, %v1312
        %v2081 = vsel %vm1314, %v2080, %v2079
        %v2082 = vperm.slane %v2045, %v1310
        %v2083 = vperm.slane %v2048, %v1312
        %v2084 = vsel %vm1314, %v2083, %v2082
        %v2085 = vperm.slane %v2051, %v1310
        %v2086 = vperm.slane %v2054, %v1312
        %v2087 = vsel %vm1314, %v2086, %v2085
        %v2088 = vperm.slane %v2057, %v1310
        %v2089 = vperm.slane %v2060, %v1312
        %v2090 = vsel %vm1314, %v2089, %v2088
        %v2091 = vperm.slane %v2063, %v1310
        %v2092 = vperm.slane %v2066, %v1312
        %v2093 = vsel %vm1314, %v2092, %v2091
        %v2094 = vperm.slane %v2069, %v1310
        %v2095 = vperm.slane %v2072, %v1312
        %v2096 = vsel %vm1314, %v2095, %v2094
        %v2097 = vsel %vm1337, %v2078, %v2075
        %v2098 = vsel %vm1339, %v2081, %v2097
        %v2099 = vsel %vm1341, %v2084, %v2098
        %v2100 = vsel %vm1343, %v2087, %v2099
        %v2101 = vsel %vm1345, %v2090, %v2100
        %v2102 = vsel %vm1347, %v2093, %v2101
        %v2103 = vsel %vm1349, %v2096, %v2102
        %v2105 = vsel %vm1352, %v2103, 0.0
        %2106 = vadd.xlane.f32.xlu0 %v2105
        %v2107 = vpop.xlane.xlu0 %2106
        %v2108 = vrcp.pop %v2107
        %v2110 = vperm.slane %v2108, 0
        %v2111 = vperm.slane %v2108, 1
        %v2112 = vperm.slane %v2108, 2
        %v2113 = vperm.slane %v2108, 3
        %v2114 = vperm.slane %v2108, 4
        %v2115 = vperm.slane %v2108, 5
        %v2116 = vperm.slane %v2108, 6
        %v2117 = vperm.slane %v2108, 7
        %v2126 = vmul.f32 %v1978, %v2110
        %v2127 = vmul.f32 %v1980, %v2110
        %v2128 = vmul.f32 %v1982, %v2111
        %v2129 = vmul.f32 %v1984, %v2111
        %v2130 = vmul.f32 %v1986, %v2112
        %v2131 = vmul.f32 %v1988, %v2112
        %v2132 = vmul.f32 %v1990, %v2113
        %v2133 = vmul.f32 %v1992, %v2113
        %v2134 = vmul.f32 %v1994, %v2114
        %v2135 = vmul.f32 %v1996, %v2114
        %v2136 = vmul.f32 %v1998, %v2115
        %v2137 = vmul.f32 %v2000, %v2115
        %v2138 = vmul.f32 %v2002, %v2116
        %v2139 = vmul.f32 %v2004, %v2116
        %v2140 = vmul.f32 %v2006, %v2117
        %v2141 = vmul.f32 %v2008, %v2117
        %2143 = vset.pattern.permute.xlu0 0
        %2144 = vperm.xlu0 %2143, %v2126
        %v2145 = vpop.permute.xlu0 %2144
        %2148 = vset.pattern.permute.xlu0 0
        %2149 = vperm.xlu0 %2148, %v2127
        %v2150 = vpop.permute.xlu0 %2149
        %2153 = vset.pattern.permute.xlu0 0
        %2154 = vperm.xlu0 %2153, %v2128
        %v2155 = vpop.permute.xlu0 %2154
        %2158 = vset.pattern.permute.xlu0 0
        %2159 = vperm.xlu0 %2158, %v2129
        %v2160 = vpop.permute.xlu0 %2159
        %2163 = vset.pattern.permute.xlu0 0
        %2164 = vperm.xlu0 %2163, %v2130
        %v2165 = vpop.permute.xlu0 %2164
        %2168 = vset.pattern.permute.xlu0 0
        %2169 = vperm.xlu0 %2168, %v2131
        %v2170 = vpop.permute.xlu0 %2169
        %2173 = vset.pattern.permute.xlu0 0
        %2174 = vperm.xlu0 %2173, %v2132
        %v2175 = vpop.permute.xlu0 %2174
        %2178 = vset.pattern.permute.xlu0 0
        %2179 = vperm.xlu0 %2178, %v2133
        %v2180 = vpop.permute.xlu0 %2179
        %2183 = vset.pattern.permute.xlu0 0
        %2184 = vperm.xlu0 %2183, %v2134
        %v2185 = vpop.permute.xlu0 %2184
        %2188 = vset.pattern.permute.xlu0 0
        %2189 = vperm.xlu0 %2188, %v2135
        %v2190 = vpop.permute.xlu0 %2189
        %2193 = vset.pattern.permute.xlu0 0
        %2194 = vperm.xlu0 %2193, %v2136
        %v2195 = vpop.permute.xlu0 %2194
        %2198 = vset.pattern.permute.xlu0 0
        %2199 = vperm.xlu0 %2198, %v2137
        %v2200 = vpop.permute.xlu0 %2199
        %2203 = vset.pattern.permute.xlu0 0
        %2204 = vperm.xlu0 %2203, %v2138
        %v2205 = vpop.permute.xlu0 %2204
        %2208 = vset.pattern.permute.xlu0 0
        %2209 = vperm.xlu0 %2208, %v2139
        %v2210 = vpop.permute.xlu0 %2209
        %2213 = vset.pattern.permute.xlu0 0
        %2214 = vperm.xlu0 %2213, %v2140
        %v2215 = vpop.permute.xlu0 %2214
        %2218 = vset.pattern.permute.xlu0 0
        %2219 = vperm.xlu0 %2218, %v2141
        %v2220 = vpop.permute.xlu0 %2219
        %v2222 = vmul.f32 %v2145, %v1165
        %v2223 = vmul.f32 %v2150, %v1167
        %v2224 = vmul.f32 %v2155, %v1170
        %v2225 = vmul.f32 %v2160, %v1172
        %v2226 = vmul.f32 %v2165, %v1175
        %v2227 = vmul.f32 %v2170, %v1177
        %v2228 = vmul.f32 %v2175, %v1180
        %v2229 = vmul.f32 %v2180, %v1182
        %v2230 = vmul.f32 %v2185, %v1185
        %v2231 = vmul.f32 %v2190, %v1187
        %v2232 = vmul.f32 %v2195, %v1190
        %v2233 = vmul.f32 %v2200, %v1192
        %v2234 = vmul.f32 %v2205, %v1195
        %v2235 = vmul.f32 %v2210, %v1197
        %v2236 = vmul.f32 %v2215, %v1200
        %v2237 = vmul.f32 %v2220, %v1202
        %vm2238 = vcmask 392512
        %v2239 = vsel %vm2238, %v2222, 0.0
        %v2240 = vsel %vm2238, %v2223, 0.0
        %v2241 = vadd.f32 %v2239, %v2240
        %v2242 = vrot.slane %v2241, 4
        %v2243 = vadd.f32 %v2241, %v2242
        %v2244 = vrot.slane %v2243, 2
        %v2245 = vadd.f32 %v2243, %v2244
        %v2246 = vrot.slane %v2245, 1
        %v2247 = vadd.f32 %v2245, %v2246
        %v2248 = vsel %vm2238, %v2224, 0.0
        %v2249 = vsel %vm2238, %v2225, 0.0
        %v2250 = vadd.f32 %v2248, %v2249
        %v2251 = vrot.slane %v2250, 4
        %v2252 = vadd.f32 %v2250, %v2251
        %v2253 = vrot.slane %v2252, 2
        %v2254 = vadd.f32 %v2252, %v2253
        %v2255 = vrot.slane %v2254, 1
        %v2256 = vadd.f32 %v2254, %v2255
        %v2257 = vsel %vm2238, %v2226, 0.0
        %v2258 = vsel %vm2238, %v2227, 0.0
        %v2259 = vadd.f32 %v2257, %v2258
        %v2260 = vrot.slane %v2259, 4
        %v2261 = vadd.f32 %v2259, %v2260
        %v2262 = vrot.slane %v2261, 2
        %v2263 = vadd.f32 %v2261, %v2262
        %v2264 = vrot.slane %v2263, 1
        %v2265 = vadd.f32 %v2263, %v2264
        %v2266 = vsel %vm2238, %v2228, 0.0
        %v2267 = vsel %vm2238, %v2229, 0.0
        %v2268 = vadd.f32 %v2266, %v2267
        %v2269 = vrot.slane %v2268, 4
        %v2270 = vadd.f32 %v2268, %v2269
        %v2271 = vrot.slane %v2270, 2
        %v2272 = vadd.f32 %v2270, %v2271
        %v2273 = vrot.slane %v2272, 1
        %v2274 = vadd.f32 %v2272, %v2273
        %v2275 = vsel %vm2238, %v2230, 0.0
        %v2276 = vsel %vm2238, %v2231, 0.0
        %v2277 = vadd.f32 %v2275, %v2276
        %v2278 = vrot.slane %v2277, 4
        %v2279 = vadd.f32 %v2277, %v2278
        %v2280 = vrot.slane %v2279, 2
        %v2281 = vadd.f32 %v2279, %v2280
        %v2282 = vrot.slane %v2281, 1
        %v2283 = vadd.f32 %v2281, %v2282
        %v2284 = vsel %vm2238, %v2232, 0.0
        %v2285 = vsel %vm2238, %v2233, 0.0
        %v2286 = vadd.f32 %v2284, %v2285
        %v2287 = vrot.slane %v2286, 4
        %v2288 = vadd.f32 %v2286, %v2287
        %v2289 = vrot.slane %v2288, 2
        %v2290 = vadd.f32 %v2288, %v2289
        %v2291 = vrot.slane %v2290, 1
        %v2292 = vadd.f32 %v2290, %v2291
        %v2293 = vsel %vm2238, %v2234, 0.0
        %v2294 = vsel %vm2238, %v2235, 0.0
        %v2295 = vadd.f32 %v2293, %v2294
        %v2296 = vrot.slane %v2295, 4
        %v2297 = vadd.f32 %v2295, %v2296
        %v2298 = vrot.slane %v2297, 2
        %v2299 = vadd.f32 %v2297, %v2298
        %v2300 = vrot.slane %v2299, 1
        %v2301 = vadd.f32 %v2299, %v2300
        %v2302 = vsel %vm2238, %v2236, 0.0
        %v2303 = vsel %vm2238, %v2237, 0.0
        %v2304 = vadd.f32 %v2302, %v2303
        %v2305 = vrot.slane %v2304, 4
        %v2306 = vadd.f32 %v2304, %v2305
        %v2307 = vrot.slane %v2306, 2
        %v2308 = vadd.f32 %v2306, %v2307
        %v2309 = vrot.slane %v2308, 1
        %v2310 = vadd.f32 %v2308, %v2309
        %v2311 = vpack.c.bf16 %v2247, %v2247
        %v2312 = vpack.c.bf16 %v2256, %v2256
        %v2313 = vpack.c.bf16 %v2265, %v2265
        %v2314 = vpack.c.bf16 %v2274, %v2274
        %v2315 = vpack.c.bf16 %v2283, %v2283
        %v2316 = vpack.c.bf16 %v2292, %v2292
        %v2317 = vpack.c.bf16 %v2301, %v2301
        %v2318 = vpack.c.bf16 %v2310, %v2310
        %v2327 = vunpack.c.l.b16 %v2311
        %v2328 = vunpack.c.l.b16 %v2312
        %v2329 = vunpack.c.l.b16 %v2313
        %v2330 = vunpack.c.l.b16 %v2314
        %v2331 = vunpack.c.l.b16 %v2315
        %v2332 = vunpack.c.l.b16 %v2316
        %v2333 = vunpack.c.l.b16 %v2317
        %v2334 = vunpack.c.l.b16 %v2318
        %v2335 = vsel %vm1337, %v2328, %v2327
        %v2336 = vsel %vm1339, %v2329, %v2335
        %v2337 = vsel %vm1341, %v2330, %v2336
        %v2338 = vsel %vm1343, %v2331, %v2337
        %v2339 = vsel %vm1345, %v2332, %v2338
        %v2340 = vsel %vm1347, %v2333, %v2339
        %v2341 = vsel %vm1349, %v2334, %v2340
        %v2342 = vpack.c.b16 %v2341, %v2341
        %2343 = vrot.lane.b32.xlu0 %v2342, 88
        %v2344 = vpop.permute.xlu0 %2343
        %v2346 = vsel %vm1244, %v2344, 0
        %v2349 = vsel %vm1760, %v1022, 0
        %2351 = vmatpush.bf16.msra.mxu0 0
        %2352 = vmatpush.bf16.msra.mxu0 0
        %2353 = vmatpush.bf16.msra.mxu0 0
        %2354 = vmatpush.bf16.msra.mxu0 0
        %2355 = vmatpush.bf16.msra.mxu0 0
        %2356 = vmatpush.bf16.msra.mxu0 0
        %2357 = vmatpush.bf16.msra.mxu0 0
        %2358 = vmatpush.bf16.msra.mxu0 %v2349
        %2359 = vmatmul.bf16.gmra.mxu0 %v2346
        %v2360 = vpop.f32.mrf.mxu0
        %v2361 = vadd.f32 0.0, %v2360
        %v2362 = vpop.f32.mrf.mxu0
        %2363 = vdwg.mxu0
        %v2364 = vadd.f32 %v1780, %v2361
        %2365 = vrot.lane.b32.xlu0 %v1228, 112
        %v2366 = vpop.permute.xlu0 %2365
        %2367 = vrot.lane.b32.xlu0 %v1229, 112
        %v2368 = vpop.permute.xlu0 %2367
        %2369 = vrot.lane.b32.xlu0 %v1230, 112
        %v2370 = vpop.permute.xlu0 %2369
        %2371 = vrot.lane.b32.xlu0 %v1231, 112
        %v2372 = vpop.permute.xlu0 %2371
        %2373 = vrot.lane.b32.xlu0 %v1232, 112
        %v2374 = vpop.permute.xlu0 %2373
        %2375 = vrot.lane.b32.xlu0 %v1233, 112
        %v2376 = vpop.permute.xlu0 %2375
        %2377 = vrot.lane.b32.xlu0 %v1234, 112
        %v2378 = vpop.permute.xlu0 %2377
        %2379 = vrot.lane.b32.xlu0 %v1235, 112
        %v2380 = vpop.permute.xlu0 %2379
        %2381 = vrot.lane.b32.xlu0 %v1236, 112
        %v2382 = vpop.permute.xlu0 %2381
        %2383 = vrot.lane.b32.xlu0 %v1237, 112
        %v2384 = vpop.permute.xlu0 %2383
        %2385 = vrot.lane.b32.xlu0 %v1238, 112
        %v2386 = vpop.permute.xlu0 %2385
        %2387 = vrot.lane.b32.xlu0 %v1239, 112
        %v2388 = vpop.permute.xlu0 %2387
        %2389 = vrot.lane.b32.xlu0 %v1240, 112
        %v2390 = vpop.permute.xlu0 %2389
        %2391 = vrot.lane.b32.xlu0 %v1241, 112
        %v2392 = vpop.permute.xlu0 %2391
        %2393 = vrot.lane.b32.xlu0 %v1242, 112
        %v2394 = vpop.permute.xlu0 %2393
        %2395 = vrot.lane.b32.xlu0 %v1243, 112
        %v2396 = vpop.permute.xlu0 %2395
        %v2413 = vsel %vm1244, %v2366, 0.0
        %2414 = vadd.xlane.f32.xlu0 %v2413
        %v2415 = vpop.xlane.xlu0 %2414
        %v2416 = vsel %vm1244, %v2368, 0.0
        %2417 = vadd.xlane.f32.xlu0 %v2416
        %v2418 = vpop.xlane.xlu0 %2417
        %v2419 = vsel %vm1244, %v2370, 0.0
        %2420 = vadd.xlane.f32.xlu0 %v2419
        %v2421 = vpop.xlane.xlu0 %2420
        %v2422 = vsel %vm1244, %v2372, 0.0
        %2423 = vadd.xlane.f32.xlu0 %v2422
        %v2424 = vpop.xlane.xlu0 %2423
        %v2425 = vsel %vm1244, %v2374, 0.0
        %2426 = vadd.xlane.f32.xlu0 %v2425
        %v2427 = vpop.xlane.xlu0 %2426
        %v2428 = vsel %vm1244, %v2376, 0.0
        %2429 = vadd.xlane.f32.xlu0 %v2428
        %v2430 = vpop.xlane.xlu0 %2429
        %v2431 = vsel %vm1244, %v2378, 0.0
        %2432 = vadd.xlane.f32.xlu0 %v2431
        %v2433 = vpop.xlane.xlu0 %2432
        %v2434 = vsel %vm1244, %v2380, 0.0
        %2435 = vadd.xlane.f32.xlu0 %v2434
        %v2436 = vpop.xlane.xlu0 %2435
        %v2437 = vsel %vm1244, %v2382, 0.0
        %2438 = vadd.xlane.f32.xlu0 %v2437
        %v2439 = vpop.xlane.xlu0 %2438
        %v2440 = vsel %vm1244, %v2384, 0.0
        %2441 = vadd.xlane.f32.xlu0 %v2440
        %v2442 = vpop.xlane.xlu0 %2441
        %v2443 = vsel %vm1244, %v2386, 0.0
        %2444 = vadd.xlane.f32.xlu0 %v2443
        %v2445 = vpop.xlane.xlu0 %2444
        %v2446 = vsel %vm1244, %v2388, 0.0
        %2447 = vadd.xlane.f32.xlu0 %v2446
        %v2448 = vpop.xlane.xlu0 %2447
        %v2449 = vsel %vm1244, %v2390, 0.0
        %2450 = vadd.xlane.f32.xlu0 %v2449
        %v2451 = vpop.xlane.xlu0 %2450
        %v2452 = vsel %vm1244, %v2392, 0.0
        %2453 = vadd.xlane.f32.xlu0 %v2452
        %v2454 = vpop.xlane.xlu0 %2453
        %v2455 = vsel %vm1244, %v2394, 0.0
        %2456 = vadd.xlane.f32.xlu0 %v2455
        %v2457 = vpop.xlane.xlu0 %2456
        %v2458 = vsel %vm1244, %v2396, 0.0
        %2459 = vadd.xlane.f32.xlu0 %v2458
        %v2460 = vpop.xlane.xlu0 %2459
        %v2477 = vperm.slane %v2415, %v1310
        %v2478 = vperm.slane %v2418, %v1312
        %v2479 = vsel %vm1314, %v2478, %v2477
        %v2480 = vperm.slane %v2421, %v1310
        %v2481 = vperm.slane %v2424, %v1312
        %v2482 = vsel %vm1314, %v2481, %v2480
        %v2483 = vperm.slane %v2427, %v1310
        %v2484 = vperm.slane %v2430, %v1312
        %v2485 = vsel %vm1314, %v2484, %v2483
        %v2486 = vperm.slane %v2433, %v1310
        %v2487 = vperm.slane %v2436, %v1312
        %v2488 = vsel %vm1314, %v2487, %v2486
        %v2489 = vperm.slane %v2439, %v1310
        %v2490 = vperm.slane %v2442, %v1312
        %v2491 = vsel %vm1314, %v2490, %v2489
        %v2492 = vperm.slane %v2445, %v1310
        %v2493 = vperm.slane %v2448, %v1312
        %v2494 = vsel %vm1314, %v2493, %v2492
        %v2495 = vperm.slane %v2451, %v1310
        %v2496 = vperm.slane %v2454, %v1312
        %v2497 = vsel %vm1314, %v2496, %v2495
        %v2498 = vperm.slane %v2457, %v1310
        %v2499 = vperm.slane %v2460, %v1312
        %v2500 = vsel %vm1314, %v2499, %v2498
        %v2501 = vsel %vm1337, %v2482, %v2479
        %v2502 = vsel %vm1339, %v2485, %v2501
        %v2503 = vsel %vm1341, %v2488, %v2502
        %v2504 = vsel %vm1343, %v2491, %v2503
        %v2505 = vsel %vm1345, %v2494, %v2504
        %v2506 = vsel %vm1347, %v2497, %v2505
        %v2507 = vsel %vm1349, %v2500, %v2506
        %v2509 = vsel %vm1352, %v2507, -inf
        %2510 = vmax.xlane.f32.xlu0 %v2509
        %v2511 = vpop.xlane.xlu0 %2510
        %v2513 = vperm.slane %v2511, 0
        %v2514 = vperm.slane %v2511, 1
        %v2515 = vperm.slane %v2511, 2
        %v2516 = vperm.slane %v2511, 3
        %v2517 = vperm.slane %v2511, 4
        %v2518 = vperm.slane %v2511, 5
        %v2519 = vperm.slane %v2511, 6
        %v2520 = vperm.slane %v2511, 7
        %v2529 = vsub.f32 %v2415, %v2513
        %v2530 = vsub.f32 %v2418, %v2513
        %v2531 = vsub.f32 %v2421, %v2514
        %v2532 = vsub.f32 %v2424, %v2514
        %v2533 = vsub.f32 %v2427, %v2515
        %v2534 = vsub.f32 %v2430, %v2515
        %v2535 = vsub.f32 %v2433, %v2516
        %v2536 = vsub.f32 %v2436, %v2516
        %v2537 = vsub.f32 %v2439, %v2517
        %v2538 = vsub.f32 %v2442, %v2517
        %v2539 = vsub.f32 %v2445, %v2518
        %v2540 = vsub.f32 %v2448, %v2518
        %v2541 = vsub.f32 %v2451, %v2519
        %v2542 = vsub.f32 %v2454, %v2519
        %v2543 = vsub.f32 %v2457, %v2520
        %v2544 = vsub.f32 %v2460, %v2520
        %v2545 = vmul.f32 %v2529, 1.442695
        %v2546 = vpow.pop %v2545
        %v2547 = vmul.f32 %v2530, 1.442695
        %v2548 = vpow.pop %v2547
        %v2549 = vmul.f32 %v2531, 1.442695
        %v2550 = vpow.pop %v2549
        %v2551 = vmul.f32 %v2532, 1.442695
        %v2552 = vpow.pop %v2551
        %v2553 = vmul.f32 %v2533, 1.442695
        %v2554 = vpow.pop %v2553
        %v2555 = vmul.f32 %v2534, 1.442695
        %v2556 = vpow.pop %v2555
        %v2557 = vmul.f32 %v2535, 1.442695
        %v2558 = vpow.pop %v2557
        %v2559 = vmul.f32 %v2536, 1.442695
        %v2560 = vpow.pop %v2559
        %v2561 = vmul.f32 %v2537, 1.442695
        %v2562 = vpow.pop %v2561
        %v2563 = vmul.f32 %v2538, 1.442695
        %v2564 = vpow.pop %v2563
        %v2565 = vmul.f32 %v2539, 1.442695
        %v2566 = vpow.pop %v2565
        %v2567 = vmul.f32 %v2540, 1.442695
        %v2568 = vpow.pop %v2567
        %v2569 = vmul.f32 %v2541, 1.442695
        %v2570 = vpow.pop %v2569
        %v2571 = vmul.f32 %v2542, 1.442695
        %v2572 = vpow.pop %v2571
        %v2573 = vmul.f32 %v2543, 1.442695
        %v2574 = vpow.pop %v2573
        %v2575 = vmul.f32 %v2544, 1.442695
        %v2576 = vpow.pop %v2575
        %2593 = vset.pattern.permute.xlu0 0
        %2594 = vperm.xlu0 %2593, %v2546
        %v2595 = vpop.permute.xlu0 %2594
        %2596 = vset.pattern.permute.xlu0 0
        %2597 = vperm.xlu0 %2596, %v2548
        %v2598 = vpop.permute.xlu0 %2597
        %2599 = vset.pattern.permute.xlu0 0
        %2600 = vperm.xlu0 %2599, %v2550
        %v2601 = vpop.permute.xlu0 %2600
        %2602 = vset.pattern.permute.xlu0 0
        %2603 = vperm.xlu0 %2602, %v2552
        %v2604 = vpop.permute.xlu0 %2603
        %2605 = vset.pattern.permute.xlu0 0
        %2606 = vperm.xlu0 %2605, %v2554
        %v2607 = vpop.permute.xlu0 %2606
        %2608 = vset.pattern.permute.xlu0 0
        %2609 = vperm.xlu0 %2608, %v2556
        %v2610 = vpop.permute.xlu0 %2609
        %2611 = vset.pattern.permute.xlu0 0
        %2612 = vperm.xlu0 %2611, %v2558
        %v2613 = vpop.permute.xlu0 %2612
        %2614 = vset.pattern.permute.xlu0 0
        %2615 = vperm.xlu0 %2614, %v2560
        %v2616 = vpop.permute.xlu0 %2615
        %2617 = vset.pattern.permute.xlu0 0
        %2618 = vperm.xlu0 %2617, %v2562
        %v2619 = vpop.permute.xlu0 %2618
        %2620 = vset.pattern.permute.xlu0 0
        %2621 = vperm.xlu0 %2620, %v2564
        %v2622 = vpop.permute.xlu0 %2621
        %2623 = vset.pattern.permute.xlu0 0
        %2624 = vperm.xlu0 %2623, %v2566
        %v2625 = vpop.permute.xlu0 %2624
        %2626 = vset.pattern.permute.xlu0 0
        %2627 = vperm.xlu0 %2626, %v2568
        %v2628 = vpop.permute.xlu0 %2627
        %2629 = vset.pattern.permute.xlu0 0
        %2630 = vperm.xlu0 %2629, %v2570
        %v2631 = vpop.permute.xlu0 %2630
        %2632 = vset.pattern.permute.xlu0 0
        %2633 = vperm.xlu0 %2632, %v2572
        %v2634 = vpop.permute.xlu0 %2633
        %2635 = vset.pattern.permute.xlu0 0
        %2636 = vperm.xlu0 %2635, %v2574
        %v2637 = vpop.permute.xlu0 %2636
        %2638 = vset.pattern.permute.xlu0 0
        %2639 = vperm.xlu0 %2638, %v2576
        %v2640 = vpop.permute.xlu0 %2639
        %v2641 = vperm.slane %v2595, %v1310
        %v2642 = vperm.slane %v2598, %v1312
        %v2643 = vsel %vm1314, %v2642, %v2641
        %v2644 = vperm.slane %v2601, %v1310
        %v2645 = vperm.slane %v2604, %v1312
        %v2646 = vsel %vm1314, %v2645, %v2644
        %v2647 = vperm.slane %v2607, %v1310
        %v2648 = vperm.slane %v2610, %v1312
        %v2649 = vsel %vm1314, %v2648, %v2647
        %v2650 = vperm.slane %v2613, %v1310
        %v2651 = vperm.slane %v2616, %v1312
        %v2652 = vsel %vm1314, %v2651, %v2650
        %v2653 = vperm.slane %v2619, %v1310
        %v2654 = vperm.slane %v2622, %v1312
        %v2655 = vsel %vm1314, %v2654, %v2653
        %v2656 = vperm.slane %v2625, %v1310
        %v2657 = vperm.slane %v2628, %v1312
        %v2658 = vsel %vm1314, %v2657, %v2656
        %v2659 = vperm.slane %v2631, %v1310
        %v2660 = vperm.slane %v2634, %v1312
        %v2661 = vsel %vm1314, %v2660, %v2659
        %v2662 = vperm.slane %v2637, %v1310
        %v2663 = vperm.slane %v2640, %v1312
        %v2664 = vsel %vm1314, %v2663, %v2662
        %v2665 = vsel %vm1337, %v2646, %v2643
        %v2666 = vsel %vm1339, %v2649, %v2665
        %v2667 = vsel %vm1341, %v2652, %v2666
        %v2668 = vsel %vm1343, %v2655, %v2667
        %v2669 = vsel %vm1345, %v2658, %v2668
        %v2670 = vsel %vm1347, %v2661, %v2669
        %v2671 = vsel %vm1349, %v2664, %v2670
        %v2673 = vsel %vm1352, %v2671, 0.0
        %2674 = vadd.xlane.f32.xlu0 %v2673
        %v2675 = vpop.xlane.xlu0 %2674
        %v2676 = vrcp.pop %v2675
        %v2678 = vperm.slane %v2676, 0
        %v2679 = vperm.slane %v2676, 1
        %v2680 = vperm.slane %v2676, 2
        %v2681 = vperm.slane %v2676, 3
        %v2682 = vperm.slane %v2676, 4
        %v2683 = vperm.slane %v2676, 5
        %v2684 = vperm.slane %v2676, 6
        %v2685 = vperm.slane %v2676, 7
        %v2694 = vmul.f32 %v2546, %v2678
        %v2695 = vmul.f32 %v2548, %v2678
        %v2696 = vmul.f32 %v2550, %v2679
        %v2697 = vmul.f32 %v2552, %v2679
        %v2698 = vmul.f32 %v2554, %v2680
        %v2699 = vmul.f32 %v2556, %v2680
        %v2700 = vmul.f32 %v2558, %v2681
        %v2701 = vmul.f32 %v2560, %v2681
        %v2702 = vmul.f32 %v2562, %v2682
        %v2703 = vmul.f32 %v2564, %v2682
        %v2704 = vmul.f32 %v2566, %v2683
        %v2705 = vmul.f32 %v2568, %v2683
        %v2706 = vmul.f32 %v2570, %v2684
        %v2707 = vmul.f32 %v2572, %v2684
        %v2708 = vmul.f32 %v2574, %v2685
        %v2709 = vmul.f32 %v2576, %v2685
        %2711 = vset.pattern.permute.xlu0 0
        %2712 = vperm.xlu0 %2711, %v2694
        %v2713 = vpop.permute.xlu0 %2712
        %2716 = vset.pattern.permute.xlu0 0
        %2717 = vperm.xlu0 %2716, %v2695
        %v2718 = vpop.permute.xlu0 %2717
        %2721 = vset.pattern.permute.xlu0 0
        %2722 = vperm.xlu0 %2721, %v2696
        %v2723 = vpop.permute.xlu0 %2722
        %2726 = vset.pattern.permute.xlu0 0
        %2727 = vperm.xlu0 %2726, %v2697
        %v2728 = vpop.permute.xlu0 %2727
        %2731 = vset.pattern.permute.xlu0 0
        %2732 = vperm.xlu0 %2731, %v2698
        %v2733 = vpop.permute.xlu0 %2732
        %2736 = vset.pattern.permute.xlu0 0
        %2737 = vperm.xlu0 %2736, %v2699
        %v2738 = vpop.permute.xlu0 %2737
        %2741 = vset.pattern.permute.xlu0 0
        %2742 = vperm.xlu0 %2741, %v2700
        %v2743 = vpop.permute.xlu0 %2742
        %2746 = vset.pattern.permute.xlu0 0
        %2747 = vperm.xlu0 %2746, %v2701
        %v2748 = vpop.permute.xlu0 %2747
        %2751 = vset.pattern.permute.xlu0 0
        %2752 = vperm.xlu0 %2751, %v2702
        %v2753 = vpop.permute.xlu0 %2752
        %2756 = vset.pattern.permute.xlu0 0
        %2757 = vperm.xlu0 %2756, %v2703
        %v2758 = vpop.permute.xlu0 %2757
        %2761 = vset.pattern.permute.xlu0 0
        %2762 = vperm.xlu0 %2761, %v2704
        %v2763 = vpop.permute.xlu0 %2762
        %2766 = vset.pattern.permute.xlu0 0
        %2767 = vperm.xlu0 %2766, %v2705
        %v2768 = vpop.permute.xlu0 %2767
        %2771 = vset.pattern.permute.xlu0 0
        %2772 = vperm.xlu0 %2771, %v2706
        %v2773 = vpop.permute.xlu0 %2772
        %2776 = vset.pattern.permute.xlu0 0
        %2777 = vperm.xlu0 %2776, %v2707
        %v2778 = vpop.permute.xlu0 %2777
        %2781 = vset.pattern.permute.xlu0 0
        %2782 = vperm.xlu0 %2781, %v2708
        %v2783 = vpop.permute.xlu0 %2782
        %2786 = vset.pattern.permute.xlu0 0
        %2787 = vperm.xlu0 %2786, %v2709
        %v2788 = vpop.permute.xlu0 %2787
        %v2790 = vmul.f32 %v2713, %v1165
        %v2791 = vmul.f32 %v2718, %v1167
        %v2792 = vmul.f32 %v2723, %v1170
        %v2793 = vmul.f32 %v2728, %v1172
        %v2794 = vmul.f32 %v2733, %v1175
        %v2795 = vmul.f32 %v2738, %v1177
        %v2796 = vmul.f32 %v2743, %v1180
        %v2797 = vmul.f32 %v2748, %v1182
        %v2798 = vmul.f32 %v2753, %v1185
        %v2799 = vmul.f32 %v2758, %v1187
        %v2800 = vmul.f32 %v2763, %v1190
        %v2801 = vmul.f32 %v2768, %v1192
        %v2802 = vmul.f32 %v2773, %v1195
        %v2803 = vmul.f32 %v2778, %v1197
        %v2804 = vmul.f32 %v2783, %v1200
        %v2805 = vmul.f32 %v2788, %v1202
        %vm2806 = vcmask 458112
        %v2807 = vsel %vm2806, %v2790, 0.0
        %v2808 = vsel %vm2806, %v2791, 0.0
        %v2809 = vadd.f32 %v2807, %v2808
        %v2810 = vrot.slane %v2809, 4
        %v2811 = vadd.f32 %v2809, %v2810
        %v2812 = vrot.slane %v2811, 2
        %v2813 = vadd.f32 %v2811, %v2812
        %v2814 = vrot.slane %v2813, 1
        %v2815 = vadd.f32 %v2813, %v2814
        %v2816 = vsel %vm2806, %v2792, 0.0
        %v2817 = vsel %vm2806, %v2793, 0.0
        %v2818 = vadd.f32 %v2816, %v2817
        %v2819 = vrot.slane %v2818, 4
        %v2820 = vadd.f32 %v2818, %v2819
        %v2821 = vrot.slane %v2820, 2
        %v2822 = vadd.f32 %v2820, %v2821
        %v2823 = vrot.slane %v2822, 1
        %v2824 = vadd.f32 %v2822, %v2823
        %v2825 = vsel %vm2806, %v2794, 0.0
        %v2826 = vsel %vm2806, %v2795, 0.0
        %v2827 = vadd.f32 %v2825, %v2826
        %v2828 = vrot.slane %v2827, 4
        %v2829 = vadd.f32 %v2827, %v2828
        %v2830 = vrot.slane %v2829, 2
        %v2831 = vadd.f32 %v2829, %v2830
        %v2832 = vrot.slane %v2831, 1
        %v2833 = vadd.f32 %v2831, %v2832
        %v2834 = vsel %vm2806, %v2796, 0.0
        %v2835 = vsel %vm2806, %v2797, 0.0
        %v2836 = vadd.f32 %v2834, %v2835
        %v2837 = vrot.slane %v2836, 4
        %v2838 = vadd.f32 %v2836, %v2837
        %v2839 = vrot.slane %v2838, 2
        %v2840 = vadd.f32 %v2838, %v2839
        %v2841 = vrot.slane %v2840, 1
        %v2842 = vadd.f32 %v2840, %v2841
        %v2843 = vsel %vm2806, %v2798, 0.0
        %v2844 = vsel %vm2806, %v2799, 0.0
        %v2845 = vadd.f32 %v2843, %v2844
        %v2846 = vrot.slane %v2845, 4
        %v2847 = vadd.f32 %v2845, %v2846
        %v2848 = vrot.slane %v2847, 2
        %v2849 = vadd.f32 %v2847, %v2848
        %v2850 = vrot.slane %v2849, 1
        %v2851 = vadd.f32 %v2849, %v2850
        %v2852 = vsel %vm2806, %v2800, 0.0
        %v2853 = vsel %vm2806, %v2801, 0.0
        %v2854 = vadd.f32 %v2852, %v2853
        %v2855 = vrot.slane %v2854, 4
        %v2856 = vadd.f32 %v2854, %v2855
        %v2857 = vrot.slane %v2856, 2
        %v2858 = vadd.f32 %v2856, %v2857
        %v2859 = vrot.slane %v2858, 1
        %v2860 = vadd.f32 %v2858, %v2859
        %v2861 = vsel %vm2806, %v2802, 0.0
        %v2862 = vsel %vm2806, %v2803, 0.0
        %v2863 = vadd.f32 %v2861, %v2862
        %v2864 = vrot.slane %v2863, 4
        %v2865 = vadd.f32 %v2863, %v2864
        %v2866 = vrot.slane %v2865, 2
        %v2867 = vadd.f32 %v2865, %v2866
        %v2868 = vrot.slane %v2867, 1
        %v2869 = vadd.f32 %v2867, %v2868
        %v2870 = vsel %vm2806, %v2804, 0.0
        %v2871 = vsel %vm2806, %v2805, 0.0
        %v2872 = vadd.f32 %v2870, %v2871
        %v2873 = vrot.slane %v2872, 4
        %v2874 = vadd.f32 %v2872, %v2873
        %v2875 = vrot.slane %v2874, 2
        %v2876 = vadd.f32 %v2874, %v2875
        %v2877 = vrot.slane %v2876, 1
        %v2878 = vadd.f32 %v2876, %v2877
        %v2879 = vpack.c.bf16 %v2815, %v2815
        %v2880 = vpack.c.bf16 %v2824, %v2824
        %v2881 = vpack.c.bf16 %v2833, %v2833
        %v2882 = vpack.c.bf16 %v2842, %v2842
        %v2883 = vpack.c.bf16 %v2851, %v2851
        %v2884 = vpack.c.bf16 %v2860, %v2860
        %v2885 = vpack.c.bf16 %v2869, %v2869
        %v2886 = vpack.c.bf16 %v2878, %v2878
        %v2895 = vunpack.c.l.b16 %v2879
        %v2896 = vunpack.c.l.b16 %v2880
        %v2897 = vunpack.c.l.b16 %v2881
        %v2898 = vunpack.c.l.b16 %v2882
        %v2899 = vunpack.c.l.b16 %v2883
        %v2900 = vunpack.c.l.b16 %v2884
        %v2901 = vunpack.c.l.b16 %v2885
        %v2902 = vunpack.c.l.b16 %v2886
        %v2903 = vsel %vm1337, %v2896, %v2895
        %v2904 = vsel %vm1339, %v2897, %v2903
        %v2905 = vsel %vm1341, %v2898, %v2904
        %v2906 = vsel %vm1343, %v2899, %v2905
        %v2907 = vsel %vm1345, %v2900, %v2906
        %v2908 = vsel %vm1347, %v2901, %v2907
        %v2909 = vsel %vm1349, %v2902, %v2908
        %v2910 = vpack.c.b16 %v2909, %v2909
        %2911 = vrot.lane.b32.xlu0 %v2910, 80
        %v2912 = vpop.permute.xlu0 %2911
        %v2914 = vsel %vm1244, %v2912, 0
        %v2917 = vsel %vm1760, %v1023, 0
        %2919 = vmatpush.bf16.msra.mxu0 0
        %2920 = vmatpush.bf16.msra.mxu0 0
        %2921 = vmatpush.bf16.msra.mxu0 0
        %2922 = vmatpush.bf16.msra.mxu0 0
        %2923 = vmatpush.bf16.msra.mxu0 0
        %2924 = vmatpush.bf16.msra.mxu0 0
        %2925 = vmatpush.bf16.msra.mxu0 0
        %2926 = vmatpush.bf16.msra.mxu0 %v2917
        %2927 = vmatmul.bf16.gmra.mxu0 %v2914
        %v2928 = vpop.f32.mrf.mxu0
        %v2929 = vadd.f32 0.0, %v2928
        %v2930 = vpop.f32.mrf.mxu0
        %2931 = vdwg.mxu0
        %v2932 = vadd.f32 %v2364, %v2929
        %2933 = vrot.lane.b32.xlu0 %v1228, 104
        %v2934 = vpop.permute.xlu0 %2933
        %2935 = vrot.lane.b32.xlu0 %v1229, 104
        %v2936 = vpop.permute.xlu0 %2935
        %2937 = vrot.lane.b32.xlu0 %v1230, 104
        %v2938 = vpop.permute.xlu0 %2937
        %2939 = vrot.lane.b32.xlu0 %v1231, 104
        %v2940 = vpop.permute.xlu0 %2939
        %2941 = vrot.lane.b32.xlu0 %v1232, 104
        %v2942 = vpop.permute.xlu0 %2941
        %2943 = vrot.lane.b32.xlu0 %v1233, 104
        %v2944 = vpop.permute.xlu0 %2943
        %2945 = vrot.lane.b32.xlu0 %v1234, 104
        %v2946 = vpop.permute.xlu0 %2945
        %2947 = vrot.lane.b32.xlu0 %v1235, 104
        %v2948 = vpop.permute.xlu0 %2947
        %2949 = vrot.lane.b32.xlu0 %v1236, 104
        %v2950 = vpop.permute.xlu0 %2949
        %2951 = vrot.lane.b32.xlu0 %v1237, 104
        %v2952 = vpop.permute.xlu0 %2951
        %2953 = vrot.lane.b32.xlu0 %v1238, 104
        %v2954 = vpop.permute.xlu0 %2953
        %2955 = vrot.lane.b32.xlu0 %v1239, 104
        %v2956 = vpop.permute.xlu0 %2955
        %2957 = vrot.lane.b32.xlu0 %v1240, 104
        %v2958 = vpop.permute.xlu0 %2957
        %2959 = vrot.lane.b32.xlu0 %v1241, 104
        %v2960 = vpop.permute.xlu0 %2959
        %2961 = vrot.lane.b32.xlu0 %v1242, 104
        %v2962 = vpop.permute.xlu0 %2961
        %2963 = vrot.lane.b32.xlu0 %v1243, 104
        %v2964 = vpop.permute.xlu0 %2963
        %v2981 = vsel %vm1244, %v2934, 0.0
        %2982 = vadd.xlane.f32.xlu0 %v2981
        %v2983 = vpop.xlane.xlu0 %2982
        %v2984 = vsel %vm1244, %v2936, 0.0
        %2985 = vadd.xlane.f32.xlu0 %v2984
        %v2986 = vpop.xlane.xlu0 %2985
        %v2987 = vsel %vm1244, %v2938, 0.0
        %2988 = vadd.xlane.f32.xlu0 %v2987
        %v2989 = vpop.xlane.xlu0 %2988
        %v2990 = vsel %vm1244, %v2940, 0.0
        %2991 = vadd.xlane.f32.xlu0 %v2990
        %v2992 = vpop.xlane.xlu0 %2991
        %v2993 = vsel %vm1244, %v2942, 0.0
        %2994 = vadd.xlane.f32.xlu0 %v2993
        %v2995 = vpop.xlane.xlu0 %2994
        %v2996 = vsel %vm1244, %v2944, 0.0
        %2997 = vadd.xlane.f32.xlu0 %v2996
        %v2998 = vpop.xlane.xlu0 %2997
        %v2999 = vsel %vm1244, %v2946, 0.0
        %3000 = vadd.xlane.f32.xlu0 %v2999
        %v3001 = vpop.xlane.xlu0 %3000
        %v3002 = vsel %vm1244, %v2948, 0.0
        %3003 = vadd.xlane.f32.xlu0 %v3002
        %v3004 = vpop.xlane.xlu0 %3003
        %v3005 = vsel %vm1244, %v2950, 0.0
        %3006 = vadd.xlane.f32.xlu0 %v3005
        %v3007 = vpop.xlane.xlu0 %3006
        %v3008 = vsel %vm1244, %v2952, 0.0
        %3009 = vadd.xlane.f32.xlu0 %v3008
        %v3010 = vpop.xlane.xlu0 %3009
        %v3011 = vsel %vm1244, %v2954, 0.0
        %3012 = vadd.xlane.f32.xlu0 %v3011
        %v3013 = vpop.xlane.xlu0 %3012
        %v3014 = vsel %vm1244, %v2956, 0.0
        %3015 = vadd.xlane.f32.xlu0 %v3014
        %v3016 = vpop.xlane.xlu0 %3015
        %v3017 = vsel %vm1244, %v2958, 0.0
        %3018 = vadd.xlane.f32.xlu0 %v3017
        %v3019 = vpop.xlane.xlu0 %3018
        %v3020 = vsel %vm1244, %v2960, 0.0
        %3021 = vadd.xlane.f32.xlu0 %v3020
        %v3022 = vpop.xlane.xlu0 %3021
        %v3023 = vsel %vm1244, %v2962, 0.0
        %3024 = vadd.xlane.f32.xlu0 %v3023
        %v3025 = vpop.xlane.xlu0 %3024
        %v3026 = vsel %vm1244, %v2964, 0.0
        %3027 = vadd.xlane.f32.xlu0 %v3026
        %v3028 = vpop.xlane.xlu0 %3027
        %v3045 = vperm.slane %v2983, %v1310
        %v3046 = vperm.slane %v2986, %v1312
        %v3047 = vsel %vm1314, %v3046, %v3045
        %v3048 = vperm.slane %v2989, %v1310
        %v3049 = vperm.slane %v2992, %v1312
        %v3050 = vsel %vm1314, %v3049, %v3048
        %v3051 = vperm.slane %v2995, %v1310
        %v3052 = vperm.slane %v2998, %v1312
        %v3053 = vsel %vm1314, %v3052, %v3051
        %v3054 = vperm.slane %v3001, %v1310
        %v3055 = vperm.slane %v3004, %v1312
        %v3056 = vsel %vm1314, %v3055, %v3054
        %v3057 = vperm.slane %v3007, %v1310
        %v3058 = vperm.slane %v3010, %v1312
        %v3059 = vsel %vm1314, %v3058, %v3057
        %v3060 = vperm.slane %v3013, %v1310
        %v3061 = vperm.slane %v3016, %v1312
        %v3062 = vsel %vm1314, %v3061, %v3060
        %v3063 = vperm.slane %v3019, %v1310
        %v3064 = vperm.slane %v3022, %v1312
        %v3065 = vsel %vm1314, %v3064, %v3063
        %v3066 = vperm.slane %v3025, %v1310
        %v3067 = vperm.slane %v3028, %v1312
        %v3068 = vsel %vm1314, %v3067, %v3066
        %v3069 = vsel %vm1337, %v3050, %v3047
        %v3070 = vsel %vm1339, %v3053, %v3069
        %v3071 = vsel %vm1341, %v3056, %v3070
        %v3072 = vsel %vm1343, %v3059, %v3071
        %v3073 = vsel %vm1345, %v3062, %v3072
        %v3074 = vsel %vm1347, %v3065, %v3073
        %v3075 = vsel %vm1349, %v3068, %v3074
        %v3077 = vsel %vm1352, %v3075, -inf
        %3078 = vmax.xlane.f32.xlu0 %v3077
        %v3079 = vpop.xlane.xlu0 %3078
        %v3081 = vperm.slane %v3079, 0
        %v3082 = vperm.slane %v3079, 1
        %v3083 = vperm.slane %v3079, 2
        %v3084 = vperm.slane %v3079, 3
        %v3085 = vperm.slane %v3079, 4
        %v3086 = vperm.slane %v3079, 5
        %v3087 = vperm.slane %v3079, 6
        %v3088 = vperm.slane %v3079, 7
        %v3097 = vsub.f32 %v2983, %v3081
        %v3098 = vsub.f32 %v2986, %v3081
        %v3099 = vsub.f32 %v2989, %v3082
        %v3100 = vsub.f32 %v2992, %v3082
        %v3101 = vsub.f32 %v2995, %v3083
        %v3102 = vsub.f32 %v2998, %v3083
        %v3103 = vsub.f32 %v3001, %v3084
        %v3104 = vsub.f32 %v3004, %v3084
        %v3105 = vsub.f32 %v3007, %v3085
        %v3106 = vsub.f32 %v3010, %v3085
        %v3107 = vsub.f32 %v3013, %v3086
        %v3108 = vsub.f32 %v3016, %v3086
        %v3109 = vsub.f32 %v3019, %v3087
        %v3110 = vsub.f32 %v3022, %v3087
        %v3111 = vsub.f32 %v3025, %v3088
        %v3112 = vsub.f32 %v3028, %v3088
        %v3113 = vmul.f32 %v3097, 1.442695
        %v3114 = vpow.pop %v3113
        %v3115 = vmul.f32 %v3098, 1.442695
        %v3116 = vpow.pop %v3115
        %v3117 = vmul.f32 %v3099, 1.442695
        %v3118 = vpow.pop %v3117
        %v3119 = vmul.f32 %v3100, 1.442695
        %v3120 = vpow.pop %v3119
        %v3121 = vmul.f32 %v3101, 1.442695
        %v3122 = vpow.pop %v3121
        %v3123 = vmul.f32 %v3102, 1.442695
        %v3124 = vpow.pop %v3123
        %v3125 = vmul.f32 %v3103, 1.442695
        %v3126 = vpow.pop %v3125
        %v3127 = vmul.f32 %v3104, 1.442695
        %v3128 = vpow.pop %v3127
        %v3129 = vmul.f32 %v3105, 1.442695
        %v3130 = vpow.pop %v3129
        %v3131 = vmul.f32 %v3106, 1.442695
        %v3132 = vpow.pop %v3131
        %v3133 = vmul.f32 %v3107, 1.442695
        %v3134 = vpow.pop %v3133
        %v3135 = vmul.f32 %v3108, 1.442695
        %v3136 = vpow.pop %v3135
        %v3137 = vmul.f32 %v3109, 1.442695
        %v3138 = vpow.pop %v3137
        %v3139 = vmul.f32 %v3110, 1.442695
        %v3140 = vpow.pop %v3139
        %v3141 = vmul.f32 %v3111, 1.442695
        %v3142 = vpow.pop %v3141
        %v3143 = vmul.f32 %v3112, 1.442695
        %v3144 = vpow.pop %v3143
        %3161 = vset.pattern.permute.xlu0 0
        %3162 = vperm.xlu0 %3161, %v3114
        %v3163 = vpop.permute.xlu0 %3162
        %3164 = vset.pattern.permute.xlu0 0
        %3165 = vperm.xlu0 %3164, %v3116
        %v3166 = vpop.permute.xlu0 %3165
        %3167 = vset.pattern.permute.xlu0 0
        %3168 = vperm.xlu0 %3167, %v3118
        %v3169 = vpop.permute.xlu0 %3168
        %3170 = vset.pattern.permute.xlu0 0
        %3171 = vperm.xlu0 %3170, %v3120
        %v3172 = vpop.permute.xlu0 %3171
        %3173 = vset.pattern.permute.xlu0 0
        %3174 = vperm.xlu0 %3173, %v3122
        %v3175 = vpop.permute.xlu0 %3174
        %3176 = vset.pattern.permute.xlu0 0
        %3177 = vperm.xlu0 %3176, %v3124
        %v3178 = vpop.permute.xlu0 %3177
        %3179 = vset.pattern.permute.xlu0 0
        %3180 = vperm.xlu0 %3179, %v3126
        %v3181 = vpop.permute.xlu0 %3180
        %3182 = vset.pattern.permute.xlu0 0
        %3183 = vperm.xlu0 %3182, %v3128
        %v3184 = vpop.permute.xlu0 %3183
        %3185 = vset.pattern.permute.xlu0 0
        %3186 = vperm.xlu0 %3185, %v3130
        %v3187 = vpop.permute.xlu0 %3186
        %3188 = vset.pattern.permute.xlu0 0
        %3189 = vperm.xlu0 %3188, %v3132
        %v3190 = vpop.permute.xlu0 %3189
        %3191 = vset.pattern.permute.xlu0 0
        %3192 = vperm.xlu0 %3191, %v3134
        %v3193 = vpop.permute.xlu0 %3192
        %3194 = vset.pattern.permute.xlu0 0
        %3195 = vperm.xlu0 %3194, %v3136
        %v3196 = vpop.permute.xlu0 %3195
        %3197 = vset.pattern.permute.xlu0 0
        %3198 = vperm.xlu0 %3197, %v3138
        %v3199 = vpop.permute.xlu0 %3198
        %3200 = vset.pattern.permute.xlu0 0
        %3201 = vperm.xlu0 %3200, %v3140
        %v3202 = vpop.permute.xlu0 %3201
        %3203 = vset.pattern.permute.xlu0 0
        %3204 = vperm.xlu0 %3203, %v3142
        %v3205 = vpop.permute.xlu0 %3204
        %3206 = vset.pattern.permute.xlu0 0
        %3207 = vperm.xlu0 %3206, %v3144
        %v3208 = vpop.permute.xlu0 %3207
        %v3209 = vperm.slane %v3163, %v1310
        %v3210 = vperm.slane %v3166, %v1312
        %v3211 = vsel %vm1314, %v3210, %v3209
        %v3212 = vperm.slane %v3169, %v1310
        %v3213 = vperm.slane %v3172, %v1312
        %v3214 = vsel %vm1314, %v3213, %v3212
        %v3215 = vperm.slane %v3175, %v1310
        %v3216 = vperm.slane %v3178, %v1312
        %v3217 = vsel %vm1314, %v3216, %v3215
        %v3218 = vperm.slane %v3181, %v1310
        %v3219 = vperm.slane %v3184, %v1312
        %v3220 = vsel %vm1314, %v3219, %v3218
        %v3221 = vperm.slane %v3187, %v1310
        %v3222 = vperm.slane %v3190, %v1312
        %v3223 = vsel %vm1314, %v3222, %v3221
        %v3224 = vperm.slane %v3193, %v1310
        %v3225 = vperm.slane %v3196, %v1312
        %v3226 = vsel %vm1314, %v3225, %v3224
        %v3227 = vperm.slane %v3199, %v1310
        %v3228 = vperm.slane %v3202, %v1312
        %v3229 = vsel %vm1314, %v3228, %v3227
        %v3230 = vperm.slane %v3205, %v1310
        %v3231 = vperm.slane %v3208, %v1312
        %v3232 = vsel %vm1314, %v3231, %v3230
        %v3233 = vsel %vm1337, %v3214, %v3211
        %v3234 = vsel %vm1339, %v3217, %v3233
        %v3235 = vsel %vm1341, %v3220, %v3234
        %v3236 = vsel %vm1343, %v3223, %v3235
        %v3237 = vsel %vm1345, %v3226, %v3236
        %v3238 = vsel %vm1347, %v3229, %v3237
        %v3239 = vsel %vm1349, %v3232, %v3238
        %v3241 = vsel %vm1352, %v3239, 0.0
        %3242 = vadd.xlane.f32.xlu0 %v3241
        %v3243 = vpop.xlane.xlu0 %3242
        %v3244 = vrcp.pop %v3243
        %v3246 = vperm.slane %v3244, 0
        %v3247 = vperm.slane %v3244, 1
        %v3248 = vperm.slane %v3244, 2
        %v3249 = vperm.slane %v3244, 3
        %v3250 = vperm.slane %v3244, 4
        %v3251 = vperm.slane %v3244, 5
        %v3252 = vperm.slane %v3244, 6
        %v3253 = vperm.slane %v3244, 7
        %v3262 = vmul.f32 %v3114, %v3246
        %v3263 = vmul.f32 %v3116, %v3246
        %v3264 = vmul.f32 %v3118, %v3247
        %v3265 = vmul.f32 %v3120, %v3247
        %v3266 = vmul.f32 %v3122, %v3248
        %v3267 = vmul.f32 %v3124, %v3248
        %v3268 = vmul.f32 %v3126, %v3249
        %v3269 = vmul.f32 %v3128, %v3249
        %v3270 = vmul.f32 %v3130, %v3250
        %v3271 = vmul.f32 %v3132, %v3250
        %v3272 = vmul.f32 %v3134, %v3251
        %v3273 = vmul.f32 %v3136, %v3251
        %v3274 = vmul.f32 %v3138, %v3252
        %v3275 = vmul.f32 %v3140, %v3252
        %v3276 = vmul.f32 %v3142, %v3253
        %v3277 = vmul.f32 %v3144, %v3253
        %3279 = vset.pattern.permute.xlu0 0
        %3280 = vperm.xlu0 %3279, %v3262
        %v3281 = vpop.permute.xlu0 %3280
        %3284 = vset.pattern.permute.xlu0 0
        %3285 = vperm.xlu0 %3284, %v3263
        %v3286 = vpop.permute.xlu0 %3285
        %3289 = vset.pattern.permute.xlu0 0
        %3290 = vperm.xlu0 %3289, %v3264
        %v3291 = vpop.permute.xlu0 %3290
        %3294 = vset.pattern.permute.xlu0 0
        %3295 = vperm.xlu0 %3294, %v3265
        %v3296 = vpop.permute.xlu0 %3295
        %3299 = vset.pattern.permute.xlu0 0
        %3300 = vperm.xlu0 %3299, %v3266
        %v3301 = vpop.permute.xlu0 %3300
        %3304 = vset.pattern.permute.xlu0 0
        %3305 = vperm.xlu0 %3304, %v3267
        %v3306 = vpop.permute.xlu0 %3305
        %3309 = vset.pattern.permute.xlu0 0
        %3310 = vperm.xlu0 %3309, %v3268
        %v3311 = vpop.permute.xlu0 %3310
        %3314 = vset.pattern.permute.xlu0 0
        %3315 = vperm.xlu0 %3314, %v3269
        %v3316 = vpop.permute.xlu0 %3315
        %3319 = vset.pattern.permute.xlu0 0
        %3320 = vperm.xlu0 %3319, %v3270
        %v3321 = vpop.permute.xlu0 %3320
        %3324 = vset.pattern.permute.xlu0 0
        %3325 = vperm.xlu0 %3324, %v3271
        %v3326 = vpop.permute.xlu0 %3325
        %3329 = vset.pattern.permute.xlu0 0
        %3330 = vperm.xlu0 %3329, %v3272
        %v3331 = vpop.permute.xlu0 %3330
        %3334 = vset.pattern.permute.xlu0 0
        %3335 = vperm.xlu0 %3334, %v3273
        %v3336 = vpop.permute.xlu0 %3335
        %3339 = vset.pattern.permute.xlu0 0
        %3340 = vperm.xlu0 %3339, %v3274
        %v3341 = vpop.permute.xlu0 %3340
        %3344 = vset.pattern.permute.xlu0 0
        %3345 = vperm.xlu0 %3344, %v3275
        %v3346 = vpop.permute.xlu0 %3345
        %3349 = vset.pattern.permute.xlu0 0
        %3350 = vperm.xlu0 %3349, %v3276
        %v3351 = vpop.permute.xlu0 %3350
        %3354 = vset.pattern.permute.xlu0 0
        %3355 = vperm.xlu0 %3354, %v3277
        %v3356 = vpop.permute.xlu0 %3355
        %v3358 = vmul.f32 %v3281, %v1165
        %v3359 = vmul.f32 %v3286, %v1167
        %v3360 = vmul.f32 %v3291, %v1170
        %v3361 = vmul.f32 %v3296, %v1172
        %v3362 = vmul.f32 %v3301, %v1175
        %v3363 = vmul.f32 %v3306, %v1177
        %v3364 = vmul.f32 %v3311, %v1180
        %v3365 = vmul.f32 %v3316, %v1182
        %v3366 = vmul.f32 %v3321, %v1185
        %v3367 = vmul.f32 %v3326, %v1187
        %v3368 = vmul.f32 %v3331, %v1190
        %v3369 = vmul.f32 %v3336, %v1192
        %v3370 = vmul.f32 %v3341, %v1195
        %v3371 = vmul.f32 %v3346, %v1197
        %v3372 = vmul.f32 %v3351, %v1200
        %v3373 = vmul.f32 %v3356, %v1202
        %vm3374 = vcmask 523712
        %v3375 = vsel %vm3374, %v3358, 0.0
        %v3376 = vsel %vm3374, %v3359, 0.0
        %v3377 = vadd.f32 %v3375, %v3376
        %v3378 = vrot.slane %v3377, 4
        %v3379 = vadd.f32 %v3377, %v3378
        %v3380 = vrot.slane %v3379, 2
        %v3381 = vadd.f32 %v3379, %v3380
        %v3382 = vrot.slane %v3381, 1
        %v3383 = vadd.f32 %v3381, %v3382
        %v3384 = vsel %vm3374, %v3360, 0.0
        %v3385 = vsel %vm3374, %v3361, 0.0
        %v3386 = vadd.f32 %v3384, %v3385
        %v3387 = vrot.slane %v3386, 4
        %v3388 = vadd.f32 %v3386, %v3387
        %v3389 = vrot.slane %v3388, 2
        %v3390 = vadd.f32 %v3388, %v3389
        %v3391 = vrot.slane %v3390, 1
        %v3392 = vadd.f32 %v3390, %v3391
        %v3393 = vsel %vm3374, %v3362, 0.0
        %v3394 = vsel %vm3374, %v3363, 0.0
        %v3395 = vadd.f32 %v3393, %v3394
        %v3396 = vrot.slane %v3395, 4
        %v3397 = vadd.f32 %v3395, %v3396
        %v3398 = vrot.slane %v3397, 2
        %v3399 = vadd.f32 %v3397, %v3398
        %v3400 = vrot.slane %v3399, 1
        %v3401 = vadd.f32 %v3399, %v3400
        %v3402 = vsel %vm3374, %v3364, 0.0
        %v3403 = vsel %vm3374, %v3365, 0.0
        %v3404 = vadd.f32 %v3402, %v3403
        %v3405 = vrot.slane %v3404, 4
        %v3406 = vadd.f32 %v3404, %v3405
        %v3407 = vrot.slane %v3406, 2
        %v3408 = vadd.f32 %v3406, %v3407
        %v3409 = vrot.slane %v3408, 1
        %v3410 = vadd.f32 %v3408, %v3409
        %v3411 = vsel %vm3374, %v3366, 0.0
        %v3412 = vsel %vm3374, %v3367, 0.0
        %v3413 = vadd.f32 %v3411, %v3412
        %v3414 = vrot.slane %v3413, 4
        %v3415 = vadd.f32 %v3413, %v3414
        %v3416 = vrot.slane %v3415, 2
        %v3417 = vadd.f32 %v3415, %v3416
        %v3418 = vrot.slane %v3417, 1
        %v3419 = vadd.f32 %v3417, %v3418
        %v3420 = vsel %vm3374, %v3368, 0.0
        %v3421 = vsel %vm3374, %v3369, 0.0
        %v3422 = vadd.f32 %v3420, %v3421
        %v3423 = vrot.slane %v3422, 4
        %v3424 = vadd.f32 %v3422, %v3423
        %v3425 = vrot.slane %v3424, 2
        %v3426 = vadd.f32 %v3424, %v3425
        %v3427 = vrot.slane %v3426, 1
        %v3428 = vadd.f32 %v3426, %v3427
        %v3429 = vsel %vm3374, %v3370, 0.0
        %v3430 = vsel %vm3374, %v3371, 0.0
        %v3431 = vadd.f32 %v3429, %v3430
        %v3432 = vrot.slane %v3431, 4
        %v3433 = vadd.f32 %v3431, %v3432
        %v3434 = vrot.slane %v3433, 2
        %v3435 = vadd.f32 %v3433, %v3434
        %v3436 = vrot.slane %v3435, 1
        %v3437 = vadd.f32 %v3435, %v3436
        %v3438 = vsel %vm3374, %v3372, 0.0
        %v3439 = vsel %vm3374, %v3373, 0.0
        %v3440 = vadd.f32 %v3438, %v3439
        %v3441 = vrot.slane %v3440, 4
        %v3442 = vadd.f32 %v3440, %v3441
        %v3443 = vrot.slane %v3442, 2
        %v3444 = vadd.f32 %v3442, %v3443
        %v3445 = vrot.slane %v3444, 1
        %v3446 = vadd.f32 %v3444, %v3445
        %v3447 = vpack.c.bf16 %v3383, %v3383
        %v3448 = vpack.c.bf16 %v3392, %v3392
        %v3449 = vpack.c.bf16 %v3401, %v3401
        %v3450 = vpack.c.bf16 %v3410, %v3410
        %v3451 = vpack.c.bf16 %v3419, %v3419
        %v3452 = vpack.c.bf16 %v3428, %v3428
        %v3453 = vpack.c.bf16 %v3437, %v3437
        %v3454 = vpack.c.bf16 %v3446, %v3446
        %v3463 = vunpack.c.l.b16 %v3447
        %v3464 = vunpack.c.l.b16 %v3448
        %v3465 = vunpack.c.l.b16 %v3449
        %v3466 = vunpack.c.l.b16 %v3450
        %v3467 = vunpack.c.l.b16 %v3451
        %v3468 = vunpack.c.l.b16 %v3452
        %v3469 = vunpack.c.l.b16 %v3453
        %v3470 = vunpack.c.l.b16 %v3454
        %v3471 = vsel %vm1337, %v3464, %v3463
        %v3472 = vsel %vm1339, %v3465, %v3471
        %v3473 = vsel %vm1341, %v3466, %v3472
        %v3474 = vsel %vm1343, %v3467, %v3473
        %v3475 = vsel %vm1345, %v3468, %v3474
        %v3476 = vsel %vm1347, %v3469, %v3475
        %v3477 = vsel %vm1349, %v3470, %v3476
        %v3478 = vpack.c.b16 %v3477, %v3477
        %3479 = vrot.lane.b32.xlu0 %v3478, 72
        %v3480 = vpop.permute.xlu0 %3479
        %v3482 = vsel %vm1244, %v3480, 0
        %v3485 = vsel %vm1760, %v1024, 0
        %3487 = vmatpush.bf16.msra.mxu0 0
        %3488 = vmatpush.bf16.msra.mxu0 0
        %3489 = vmatpush.bf16.msra.mxu0 0
        %3490 = vmatpush.bf16.msra.mxu0 0
        %3491 = vmatpush.bf16.msra.mxu0 0
        %3492 = vmatpush.bf16.msra.mxu0 0
        %3493 = vmatpush.bf16.msra.mxu0 0
        %3494 = vmatpush.bf16.msra.mxu0 %v3485
        %3495 = vmatmul.bf16.gmra.mxu0 %v3482
        %v3496 = vpop.f32.mrf.mxu0
        %v3497 = vadd.f32 0.0, %v3496
        %v3498 = vpop.f32.mrf.mxu0
        %3499 = vdwg.mxu0
        %v3500 = vadd.f32 %v2932, %v3497
        %v3501 = vadd.f32 %v1009, %v3500
        %v3502 = vsel %vm1058, %v3501, 0.0
        %3503 = vadd.xlane.f32.xlu0 %v3502
        %v3504 = vpop.xlane.xlu0 %3503
        %v3505 = vrcp.pop 32.0
        %v3506 = vmul.f32 32.0, %v3505
        %v3507 = vsub.f32 1.0, %v3506
        %v3508 = vmul.f32 %v3505, %v3507
        %v3509 = vadd.f32 %v3505, %v3508
        %vm3510 = vweird.f32 %v3505
        %v3511 = vsel %vm3510, %v3505, %v3509
        %v3512 = vmul.f32 %v3504, %v3511
        %v3513 = vsub.f32 %v3501, %v3512
        %v3514 = vmul.f32 %v3513, %v3513
        %v3515 = vsel %vm1058, %v3514, 0.0
        %3516 = vadd.xlane.f32.xlu0 %v3515
        %v3517 = vpop.xlane.xlu0 %3516
        %v3518 = vmul.f32 %v3517, %v3511
        %v3519 = vadd.f32 %v3518, 1e-05
        %v3520 = vrsqrt.pop %v3519
        %v3521 = vmul.f32 %v3520, %v3519
        %v3522 = vmul.f32 %v3521, %v3520
        %v3523 = vmul.f32 0.5, %v3522
        %v3524 = vsub.f32 1.5, %v3523
        %v3525 = vmul.f32 %v3520, %v3524
        %vm3526 = vweird.f32 %v3519
        %vm3527 = vweird.f32 %v3520
        %vm3528 = vmor %vm3526, %vm3527
        %v3529 = vsel %vm3528, %v3520, %v3525
        %v3530 = vmul.f32 %v3513, %v3529
        %v3532 = vperm.slane %v1026, 0
        %v3534 = vmul.f32 %v3530, %v3532
        %v3536 = vperm.slane %v1027, 0
        %v3538 = vadd.f32 %v3534, %v3536
        %v3539 = vpack.c.bf16 %v3538, %v3538
        %v3541 = vperm.slane %v1032, 0
        %v3547 = vunpack.c.l.b16 %v1028
        %v3548 = vunpack.c.l.b16 %v1029
        %v3549 = vunpack.c.l.b16 %v1030
        %v3550 = vunpack.c.l.b16 %v1031
        %v3551 = vpack.c.b16 %v3548, %v3547
        %v3552 = vpack.c.b16 %v3550, %v3549
        %v3556 = vsel %vm1058, %v3539, 0
        %3558 = vmatpush.bf16.msra.mxu0 0
        %3559 = vmatpush.bf16.msra.mxu0 0
        %3560 = vmatpush.bf16.msra.mxu0 0
        %3561 = vmatpush.bf16.msra.mxu0 0
        %3562 = vmatpush.bf16.msra.mxu0 0
        %3563 = vmatpush.bf16.msra.mxu0 0
        %3564 = vmatpush.bf16.msra.mxu0 %v3552
        %3565 = vmatpush.bf16.msra.mxu0 %v3551
        %3566 = vmatmul.bf16.gmra.mxu0 %v3556
        %v3567 = vpop.f32.mrf.mxu0
        %v3568 = vadd.f32 %v3541, %v3567
        %v3569 = vpop.f32.mrf.mxu0
        %3570 = vdwg.mxu0
        %v3571 = vmax.f32 %v3568, 0.0
        %v3572 = vpack.c.bf16 %v3571, %v3571
        %v3574 = vperm.slane %v1041, 0
        %v3584 = vunpack.c.l.b16 %v1033
        %v3585 = vunpack.c.l.b16 %v1034
        %v3586 = vunpack.c.l.b16 %v1035
        %v3587 = vunpack.c.l.b16 %v1036
        %v3588 = vunpack.c.l.b16 %v1037
        %v3589 = vunpack.c.l.b16 %v1038
        %v3590 = vunpack.c.l.b16 %v1039
        %v3591 = vunpack.c.l.b16 %v1040
        %v3592 = vpack.c.b16 %v3585, %v3584
        %v3593 = vpack.c.b16 %v3587, %v3586
        %v3594 = vpack.c.b16 %v3589, %v3588
        %v3595 = vpack.c.b16 %v3591, %v3590
        %vm3600 = vcmask 523264
        %v3602 = vsel %vm3600, %v3572, 0
        %3604 = vmatpush.bf16.msra.mxu0 0
        %3605 = vmatpush.bf16.msra.mxu0 0
        %3606 = vmatpush.bf16.msra.mxu0 0
        %3607 = vmatpush.bf16.msra.mxu0 0
        %3608 = vmatpush.bf16.msra.mxu0 %v3595
        %3609 = vmatpush.bf16.msra.mxu0 %v3594
        %3610 = vmatpush.bf16.msra.mxu0 %v3593
        %3611 = vmatpush.bf16.msra.mxu0 %v3592
        %3612 = vmatmul.bf16.gmra.mxu0 %v3602
        %v3613 = vpop.f32.mrf.mxu0
        %v3614 = vadd.f32 %v3574, %v3613
        %v3615 = vpop.f32.mrf.mxu0
        %3616 = vdwg.mxu0
        %v3617 = vadd.f32 %v3538, %v3614
        %v3618 = vsel %vm1058, %v3617, 0.0
        %3619 = vadd.xlane.f32.xlu0 %v3618
        %v3620 = vpop.xlane.xlu0 %3619
        %v3621 = vmul.f32 %v3620, %v3511
        %v3622 = vsub.f32 %v3617, %v3621
        %v3623 = vmul.f32 %v3622, %v3622
        %v3624 = vsel %vm1058, %v3623, 0.0
        %3625 = vadd.xlane.f32.xlu0 %v3624
        %v3626 = vpop.xlane.xlu0 %3625
        %v3627 = vmul.f32 %v3626, %v3511
        %v3628 = vadd.f32 %v3627, 1e-05
        %v3629 = vrsqrt.pop %v3628
        %v3630 = vmul.f32 %v3629, %v3628
        %v3631 = vmul.f32 %v3630, %v3629
        %v3632 = vmul.f32 0.5, %v3631
        %v3633 = vsub.f32 1.5, %v3632
        %v3634 = vmul.f32 %v3629, %v3633
        %vm3635 = vweird.f32 %v3628
        %vm3636 = vweird.f32 %v3629
        %vm3637 = vmor %vm3635, %vm3636
        %v3638 = vsel %vm3637, %v3629, %v3634
        %v3639 = vmul.f32 %v3622, %v3638
        %v3640 = vmul.f32 %v3639, %v3532
        %v3641 = vadd.f32 %v3640, %v3536
        %v3642 = vld [vmem:[%s29] sm:$0xf]
        %v3643 = vld [vmem:[%s29 + $0x4] sm:$0xf]
        %v3644 = vld [vmem:[%s29 + $0x8] sm:$0xf]
        %v3645 = vld [vmem:[%s29 + $0xc] sm:$0xf]
        %v3646 = vld [vmem:[%s31] sm:$0x1]
        %v3647 = vld [vmem:[%s33] sm:$0xf]
        %v3648 = vld [vmem:[%s33 + $0x4] sm:$0xf]
        %v3649 = vld [vmem:[%s33 + $0x8] sm:$0xf]
        %v3650 = vld [vmem:[%s33 + $0xc] sm:$0xf]
        %v3651 = vld [vmem:[%s35] sm:$0x1]
        %v3652 = vld [vmem:[%s37] sm:$0xf]
        %v3653 = vld [vmem:[%s37 + $0x4] sm:$0xf]
        %v3654 = vld [vmem:[%s37 + $0x8] sm:$0xf]
        %v3655 = vld [vmem:[%s37 + $0xc] sm:$0xf]
        %v3656 = vld [vmem:[%s39] sm:$0x1]
        %v3657 = vld [vmem:[%s41] sm:$0xf]
        %v3658 = vld [vmem:[%s41 + $0x4] sm:$0xf]
        %v3659 = vld [vmem:[%s41 + $0x8] sm:$0xf]
        %v3660 = vld [vmem:[%s41 + $0xc] sm:$0xf]
        %v3661 = vld [vmem:[%s43] sm:$0x1]
        %v3662 = vld [vmem:[%s45] sm:$0xf]
        %v3663 = vld [vmem:[%s45 + $0x4] sm:$0xf]
        %v3664 = vld [vmem:[%s45 + $0x8] sm:$0xf]
        %v3665 = vld [vmem:[%s45 + $0xc] sm:$0xf]
        %v3666 = vld [vmem:[%s47] sm:$0x1]
        %v3667 = vld [vmem:[%s49] sm:$0x1]
        %v3668 = vld [vmem:[%s51] sm:$0x1]
        %v3669 = vld [vmem:[%s53] sm:$0xf]
        %v3670 = vld [vmem:[%s53 + $0x4] sm:$0xf]
        %v3671 = vld [vmem:[%s53 + $0x8] sm:$0xf]
        %v3672 = vld [vmem:[%s53 + $0xc] sm:$0xf]
        %v3673 = vld [vmem:[%s55] sm:$0x1]
        %v3674 = vld [vmem:[%s57] sm:$0xf]
        %v3675 = vld [vmem:[%s57 + $0x4] sm:$0xf]
        %v3676 = vld [vmem:[%s57 + $0x8] sm:$0xf]
        %v3677 = vld [vmem:[%s57 + $0xc] sm:$0xf]
        %v3678 = vld [vmem:[%s57 + $0x10] sm:$0xf]
        %v3679 = vld [vmem:[%s57 + $0x14] sm:$0xf]
        %v3680 = vld [vmem:[%s57 + $0x18] sm:$0xf]
        %v3681 = vld [vmem:[%s57 + $0x1c] sm:$0xf]
        %v3682 = vld [vmem:[%s59] sm:$0x1]
        %v3683 = vpack.c.bf16 %v3641, %v3641
        %v3685 = vperm.slane %v3646, 0
        %v3691 = vunpack.c.l.b16 %v3642
        %v3692 = vunpack.c.l.b16 %v3643
        %v3693 = vunpack.c.l.b16 %v3644
        %v3694 = vunpack.c.l.b16 %v3645
        %v3695 = vpack.c.b16 %v3692, %v3691
        %v3696 = vpack.c.b16 %v3694, %v3693
        %v3700 = vsel %vm1058, %v3683, 0
        %3702 = vmatpush.bf16.msra.mxu0 0
        %3703 = vmatpush.bf16.msra.mxu0 0
        %3704 = vmatpush.bf16.msra.mxu0 0
        %3705 = vmatpush.bf16.msra.mxu0 0
        %3706 = vmatpush.bf16.msra.mxu0 0
        %3707 = vmatpush.bf16.msra.mxu0 0
        %3708 = vmatpush.bf16.msra.mxu0 %v3696
        %3709 = vmatpush.bf16.msra.mxu0 %v3695
        %3710 = vmatmul.bf16.gmra.mxu0 %v3700
        %v3711 = vpop.f32.mrf.mxu0
        %v3712 = vadd.f32 %v3685, %v3711
        %v3713 = vpop.f32.mrf.mxu0
        %3714 = vdwg.mxu0
        %v3715 = vpack.c.bf16 %v3712, %v3712
        %v3717 = vperm.slane %v3651, 0
        %v3723 = vunpack.c.l.b16 %v3647
        %v3724 = vunpack.c.l.b16 %v3648
        %v3725 = vunpack.c.l.b16 %v3649
        %v3726 = vunpack.c.l.b16 %v3650
        %v3727 = vpack.c.b16 %v3724, %v3723
        %v3728 = vpack.c.b16 %v3726, %v3725
        %v3732 = vsel %vm1058, %v3715, 0
        %3734 = vmatpush.bf16.msra.mxu0 0
        %3735 = vmatpush.bf16.msra.mxu0 0
        %3736 = vmatpush.bf16.msra.mxu0 0
        %3737 = vmatpush.bf16.msra.mxu0 0
        %3738 = vmatpush.bf16.msra.mxu0 0
        %3739 = vmatpush.bf16.msra.mxu0 0
        %3740 = vmatpush.bf16.msra.mxu0 %v3728
        %3741 = vmatpush.bf16.msra.mxu0 %v3727
        %3742 = vmatmul.bf16.gmra.mxu0 %v3732
        %v3743 = vpop.f32.mrf.mxu0
        %v3744 = vadd.f32 %v3717, %v3743
        %v3745 = vpop.f32.mrf.mxu0
        %3746 = vdwg.mxu0
        %v3747 = vadd.f32 %v3641, %v3744
        %v3748 = vsel %vm1058, %v3747, 0.0
        %3749 = vadd.xlane.f32.xlu0 %v3748
        %v3750 = vpop.xlane.xlu0 %3749
        %v3751 = vmul.f32 %v3750, %v3511
        %v3752 = vsub.f32 %v3747, %v3751
        %v3753 = vmul.f32 %v3752, %v3752
        %v3754 = vsel %vm1058, %v3753, 0.0
        %3755 = vadd.xlane.f32.xlu0 %v3754
        %v3756 = vpop.xlane.xlu0 %3755
        %v3757 = vmul.f32 %v3756, %v3511
        %v3758 = vadd.f32 %v3757, 1e-05
        %v3759 = vrsqrt.pop %v3758
        %v3760 = vmul.f32 %v3759, %v3758
        %v3761 = vmul.f32 %v3760, %v3759
        %v3762 = vmul.f32 0.5, %v3761
        %v3763 = vsub.f32 1.5, %v3762
        %v3764 = vmul.f32 %v3759, %v3763
        %vm3765 = vweird.f32 %v3758
        %vm3766 = vweird.f32 %v3759
        %vm3767 = vmor %vm3765, %vm3766
        %v3768 = vsel %vm3767, %v3759, %v3764
        %v3769 = vmul.f32 %v3752, %v3768
        %v3771 = vperm.slane %v3667, 0
        %v3773 = vmul.f32 %v3769, %v3771
        %v3775 = vperm.slane %v3668, 0
        %v3777 = vadd.f32 %v3773, %v3775
        %v3778 = vpack.c.bf16 %v3777, %v3777
        %v3780 = vperm.slane %v3656, 0
        %v3786 = vunpack.c.l.b16 %v3652
        %v3787 = vunpack.c.l.b16 %v3653
        %v3788 = vunpack.c.l.b16 %v3654
        %v3789 = vunpack.c.l.b16 %v3655
        %v3790 = vpack.c.b16 %v3787, %v3786
        %v3791 = vpack.c.b16 %v3789, %v3788
        %v3795 = vsel %vm1058, %v3778, 0
        %3797 = vmatpush.bf16.msra.mxu0 0
        %3798 = vmatpush.bf16.msra.mxu0 0
        %3799 = vmatpush.bf16.msra.mxu0 0
        %3800 = vmatpush.bf16.msra.mxu0 0
        %3801 = vmatpush.bf16.msra.mxu0 0
        %3802 = vmatpush.bf16.msra.mxu0 0
        %3803 = vmatpush.bf16.msra.mxu0 %v3791
        %3804 = vmatpush.bf16.msra.mxu0 %v3790
        %3805 = vmatmul.bf16.gmra.mxu0 %v3795
        %v3806 = vpop.f32.mrf.mxu0
        %v3807 = vadd.f32 %v3780, %v3806
        %v3808 = vpop.f32.mrf.mxu0
        %3809 = vdwg.mxu0
        %v3810 = vmul.f32 %v3807, 0.35355338
        %v3812 = vperm.slane %v3661, 0
        %v3818 = vunpack.c.l.b16 %v3657
        %v3819 = vunpack.c.l.b16 %v3658
        %v3820 = vunpack.c.l.b16 %v3659
        %v3821 = vunpack.c.l.b16 %v3660
        %v3822 = vpack.c.b16 %v3819, %v3818
        %v3823 = vpack.c.b16 %v3821, %v3820
        %3826 = vmatpush.bf16.msra.mxu0 0
        %3827 = vmatpush.bf16.msra.mxu0 0
        %3828 = vmatpush.bf16.msra.mxu0 0
        %3829 = vmatpush.bf16.msra.mxu0 0
        %3830 = vmatpush.bf16.msra.mxu0 0
        %3831 = vmatpush.bf16.msra.mxu0 0
        %3832 = vmatpush.bf16.msra.mxu0 %v3823
        %3833 = vmatpush.bf16.msra.mxu0 %v3822
        %3834 = vmatmul.bf16.gmra.mxu0 %v1132
        %v3835 = vpop.f32.mrf.mxu0
        %v3836 = vadd.f32 %v3812, %v3835
        %v3837 = vpop.f32.mrf.mxu0
        %v3838 = vadd.f32 %v3812, %v3837
        %3839 = vmatmul.bf16.gmra.mxu0 %v1135
        %v3840 = vpop.f32.mrf.mxu0
        %v3841 = vadd.f32 %v3812, %v3840
        %v3842 = vpop.f32.mrf.mxu0
        %v3843 = vadd.f32 %v3812, %v3842
        %3844 = vmatmul.bf16.gmra.mxu0 %v1138
        %v3845 = vpop.f32.mrf.mxu0
        %v3846 = vadd.f32 %v3812, %v3845
        %v3847 = vpop.f32.mrf.mxu0
        %v3848 = vadd.f32 %v3812, %v3847
        %3849 = vmatmul.bf16.gmra.mxu0 %v1141
        %v3850 = vpop.f32.mrf.mxu0
        %v3851 = vadd.f32 %v3812, %v3850
        %v3852 = vpop.f32.mrf.mxu0
        %v3853 = vadd.f32 %v3812, %v3852
        %3854 = vmatmul.bf16.gmra.mxu0 %v1144
        %v3855 = vpop.f32.mrf.mxu0
        %v3856 = vadd.f32 %v3812, %v3855
        %v3857 = vpop.f32.mrf.mxu0
        %v3858 = vadd.f32 %v3812, %v3857
        %3859 = vmatmul.bf16.gmra.mxu0 %v1147
        %v3860 = vpop.f32.mrf.mxu0
        %v3861 = vadd.f32 %v3812, %v3860
        %v3862 = vpop.f32.mrf.mxu0
        %v3863 = vadd.f32 %v3812, %v3862
        %3864 = vmatmul.bf16.gmra.mxu0 %v1150
        %v3865 = vpop.f32.mrf.mxu0
        %v3866 = vadd.f32 %v3812, %v3865
        %v3867 = vpop.f32.mrf.mxu0
        %v3868 = vadd.f32 %v3812, %v3867
        %3869 = vmatmul.bf16.gmra.mxu0 %v1153
        %v3870 = vpop.f32.mrf.mxu0
        %v3871 = vadd.f32 %v3812, %v3870
        %v3872 = vpop.f32.mrf.mxu0
        %v3873 = vadd.f32 %v3812, %v3872
        %3874 = vdwg.mxu0
        %v3876 = vrot.slane %v3810, 1
        %v3877 = vrot.slane %v3810, 2
        %v3878 = vrot.slane %v3810, 3
        %v3879 = vrot.slane %v3810, 4
        %v3880 = vrot.slane %v3810, 5
        %v3881 = vrot.slane %v3810, 6
        %v3882 = vrot.slane %v3810, 7
        %v3883 = vperm.slane %v3810, 0
        %v3884 = vperm.slane %v3876, 0
        %v3885 = vperm.slane %v3877, 0
        %v3886 = vperm.slane %v3878, 0
        %v3887 = vperm.slane %v3879, 0
        %v3888 = vperm.slane %v3880, 0
        %v3889 = vperm.slane %v3881, 0
        %v3890 = vperm.slane %v3882, 0
        %v3899 = vmul.f32 %v3883, %v3836
        %v3900 = vmul.f32 %v3883, %v3838
        %v3901 = vmul.f32 %v3884, %v3841
        %v3902 = vmul.f32 %v3884, %v3843
        %v3903 = vmul.f32 %v3885, %v3846
        %v3904 = vmul.f32 %v3885, %v3848
        %v3905 = vmul.f32 %v3886, %v3851
        %v3906 = vmul.f32 %v3886, %v3853
        %v3907 = vmul.f32 %v3887, %v3856
        %v3908 = vmul.f32 %v3887, %v3858
        %v3909 = vmul.f32 %v3888, %v3861
        %v3910 = vmul.f32 %v3888, %v3863
        %v3911 = vmul.f32 %v3889, %v3866
        %v3912 = vmul.f32 %v3889, %v3868
        %v3913 = vmul.f32 %v3890, %v3871
        %v3914 = vmul.f32 %v3890, %v3873
        %v3915 = vsel %vm1244, %v3899, 0.0
        %3916 = vadd.xlane.f32.xlu0 %v3915
        %v3917 = vpop.xlane.xlu0 %3916
        %v3918 = vsel %vm1244, %v3900, 0.0
        %3919 = vadd.xlane.f32.xlu0 %v3918
        %v3920 = vpop.xlane.xlu0 %3919
        %v3921 = vsel %vm1244, %v3901, 0.0
        %3922 = vadd.xlane.f32.xlu0 %v3921
        %v3923 = vpop.xlane.xlu0 %3922
        %v3924 = vsel %vm1244, %v3902, 0.0
        %3925 = vadd.xlane.f32.xlu0 %v3924
        %v3926 = vpop.xlane.xlu0 %3925
        %v3927 = vsel %vm1244, %v3903, 0.0
        %3928 = vadd.xlane.f32.xlu0 %v3927
        %v3929 = vpop.xlane.xlu0 %3928
        %v3930 = vsel %vm1244, %v3904, 0.0
        %3931 = vadd.xlane.f32.xlu0 %v3930
        %v3932 = vpop.xlane.xlu0 %3931
        %v3933 = vsel %vm1244, %v3905, 0.0
        %3934 = vadd.xlane.f32.xlu0 %v3933
        %v3935 = vpop.xlane.xlu0 %3934
        %v3936 = vsel %vm1244, %v3906, 0.0
        %3937 = vadd.xlane.f32.xlu0 %v3936
        %v3938 = vpop.xlane.xlu0 %3937
        %v3939 = vsel %vm1244, %v3907, 0.0
        %3940 = vadd.xlane.f32.xlu0 %v3939
        %v3941 = vpop.xlane.xlu0 %3940
        %v3942 = vsel %vm1244, %v3908, 0.0
        %3943 = vadd.xlane.f32.xlu0 %v3942
        %v3944 = vpop.xlane.xlu0 %3943
        %v3945 = vsel %vm1244, %v3909, 0.0
        %3946 = vadd.xlane.f32.xlu0 %v3945
        %v3947 = vpop.xlane.xlu0 %3946
        %v3948 = vsel %vm1244, %v3910, 0.0
        %3949 = vadd.xlane.f32.xlu0 %v3948
        %v3950 = vpop.xlane.xlu0 %3949
        %v3951 = vsel %vm1244, %v3911, 0.0
        %3952 = vadd.xlane.f32.xlu0 %v3951
        %v3953 = vpop.xlane.xlu0 %3952
        %v3954 = vsel %vm1244, %v3912, 0.0
        %3955 = vadd.xlane.f32.xlu0 %v3954
        %v3956 = vpop.xlane.xlu0 %3955
        %v3957 = vsel %vm1244, %v3913, 0.0
        %3958 = vadd.xlane.f32.xlu0 %v3957
        %v3959 = vpop.xlane.xlu0 %3958
        %v3960 = vsel %vm1244, %v3914, 0.0
        %3961 = vadd.xlane.f32.xlu0 %v3960
        %v3962 = vpop.xlane.xlu0 %3961
        %v3979 = vperm.slane %v3917, %v1310
        %v3980 = vperm.slane %v3920, %v1312
        %v3981 = vsel %vm1314, %v3980, %v3979
        %v3982 = vperm.slane %v3923, %v1310
        %v3983 = vperm.slane %v3926, %v1312
        %v3984 = vsel %vm1314, %v3983, %v3982
        %v3985 = vperm.slane %v3929, %v1310
        %v3986 = vperm.slane %v3932, %v1312
        %v3987 = vsel %vm1314, %v3986, %v3985
        %v3988 = vperm.slane %v3935, %v1310
        %v3989 = vperm.slane %v3938, %v1312
        %v3990 = vsel %vm1314, %v3989, %v3988
        %v3991 = vperm.slane %v3941, %v1310
        %v3992 = vperm.slane %v3944, %v1312
        %v3993 = vsel %vm1314, %v3992, %v3991
        %v3994 = vperm.slane %v3947, %v1310
        %v3995 = vperm.slane %v3950, %v1312
        %v3996 = vsel %vm1314, %v3995, %v3994
        %v3997 = vperm.slane %v3953, %v1310
        %v3998 = vperm.slane %v3956, %v1312
        %v3999 = vsel %vm1314, %v3998, %v3997
        %v4000 = vperm.slane %v3959, %v1310
        %v4001 = vperm.slane %v3962, %v1312
        %v4002 = vsel %vm1314, %v4001, %v4000
        %v4003 = vsel %vm1337, %v3984, %v3981
        %v4004 = vsel %vm1339, %v3987, %v4003
        %v4005 = vsel %vm1341, %v3990, %v4004
        %v4006 = vsel %vm1343, %v3993, %v4005
        %v4007 = vsel %vm1345, %v3996, %v4006
        %v4008 = vsel %vm1347, %v3999, %v4007
        %v4009 = vsel %vm1349, %v4002, %v4008
        %v4011 = vsel %vm1352, %v4009, -inf
        %4012 = vmax.xlane.f32.xlu0 %v4011
        %v4013 = vpop.xlane.xlu0 %4012
        %v4015 = vperm.slane %v4013, 0
        %v4016 = vperm.slane %v4013, 1
        %v4017 = vperm.slane %v4013, 2
        %v4018 = vperm.slane %v4013, 3
        %v4019 = vperm.slane %v4013, 4
        %v4020 = vperm.slane %v4013, 5
        %v4021 = vperm.slane %v4013, 6
        %v4022 = vperm.slane %v4013, 7
        %v4031 = vsub.f32 %v3917, %v4015
        %v4032 = vsub.f32 %v3920, %v4015
        %v4033 = vsub.f32 %v3923, %v4016
        %v4034 = vsub.f32 %v3926, %v4016
        %v4035 = vsub.f32 %v3929, %v4017
        %v4036 = vsub.f32 %v3932, %v4017
        %v4037 = vsub.f32 %v3935, %v4018
        %v4038 = vsub.f32 %v3938, %v4018
        %v4039 = vsub.f32 %v3941, %v4019
        %v4040 = vsub.f32 %v3944, %v4019
        %v4041 = vsub.f32 %v3947, %v4020
        %v4042 = vsub.f32 %v3950, %v4020
        %v4043 = vsub.f32 %v3953, %v4021
        %v4044 = vsub.f32 %v3956, %v4021
        %v4045 = vsub.f32 %v3959, %v4022
        %v4046 = vsub.f32 %v3962, %v4022
        %v4047 = vmul.f32 %v4031, 1.442695
        %v4048 = vpow.pop %v4047
        %v4049 = vmul.f32 %v4032, 1.442695
        %v4050 = vpow.pop %v4049
        %v4051 = vmul.f32 %v4033, 1.442695
        %v4052 = vpow.pop %v4051
        %v4053 = vmul.f32 %v4034, 1.442695
        %v4054 = vpow.pop %v4053
        %v4055 = vmul.f32 %v4035, 1.442695
        %v4056 = vpow.pop %v4055
        %v4057 = vmul.f32 %v4036, 1.442695
        %v4058 = vpow.pop %v4057
        %v4059 = vmul.f32 %v4037, 1.442695
        %v4060 = vpow.pop %v4059
        %v4061 = vmul.f32 %v4038, 1.442695
        %v4062 = vpow.pop %v4061
        %v4063 = vmul.f32 %v4039, 1.442695
        %v4064 = vpow.pop %v4063
        %v4065 = vmul.f32 %v4040, 1.442695
        %v4066 = vpow.pop %v4065
        %v4067 = vmul.f32 %v4041, 1.442695
        %v4068 = vpow.pop %v4067
        %v4069 = vmul.f32 %v4042, 1.442695
        %v4070 = vpow.pop %v4069
        %v4071 = vmul.f32 %v4043, 1.442695
        %v4072 = vpow.pop %v4071
        %v4073 = vmul.f32 %v4044, 1.442695
        %v4074 = vpow.pop %v4073
        %v4075 = vmul.f32 %v4045, 1.442695
        %v4076 = vpow.pop %v4075
        %v4077 = vmul.f32 %v4046, 1.442695
        %v4078 = vpow.pop %v4077
        %4095 = vset.pattern.permute.xlu0 0
        %4096 = vperm.xlu0 %4095, %v4048
        %v4097 = vpop.permute.xlu0 %4096
        %4098 = vset.pattern.permute.xlu0 0
        %4099 = vperm.xlu0 %4098, %v4050
        %v4100 = vpop.permute.xlu0 %4099
        %4101 = vset.pattern.permute.xlu0 0
        %4102 = vperm.xlu0 %4101, %v4052
        %v4103 = vpop.permute.xlu0 %4102
        %4104 = vset.pattern.permute.xlu0 0
        %4105 = vperm.xlu0 %4104, %v4054
        %v4106 = vpop.permute.xlu0 %4105
        %4107 = vset.pattern.permute.xlu0 0
        %4108 = vperm.xlu0 %4107, %v4056
        %v4109 = vpop.permute.xlu0 %4108
        %4110 = vset.pattern.permute.xlu0 0
        %4111 = vperm.xlu0 %4110, %v4058
        %v4112 = vpop.permute.xlu0 %4111
        %4113 = vset.pattern.permute.xlu0 0
        %4114 = vperm.xlu0 %4113, %v4060
        %v4115 = vpop.permute.xlu0 %4114
        %4116 = vset.pattern.permute.xlu0 0
        %4117 = vperm.xlu0 %4116, %v4062
        %v4118 = vpop.permute.xlu0 %4117
        %4119 = vset.pattern.permute.xlu0 0
        %4120 = vperm.xlu0 %4119, %v4064
        %v4121 = vpop.permute.xlu0 %4120
        %4122 = vset.pattern.permute.xlu0 0
        %4123 = vperm.xlu0 %4122, %v4066
        %v4124 = vpop.permute.xlu0 %4123
        %4125 = vset.pattern.permute.xlu0 0
        %4126 = vperm.xlu0 %4125, %v4068
        %v4127 = vpop.permute.xlu0 %4126
        %4128 = vset.pattern.permute.xlu0 0
        %4129 = vperm.xlu0 %4128, %v4070
        %v4130 = vpop.permute.xlu0 %4129
        %4131 = vset.pattern.permute.xlu0 0
        %4132 = vperm.xlu0 %4131, %v4072
        %v4133 = vpop.permute.xlu0 %4132
        %4134 = vset.pattern.permute.xlu0 0
        %4135 = vperm.xlu0 %4134, %v4074
        %v4136 = vpop.permute.xlu0 %4135
        %4137 = vset.pattern.permute.xlu0 0
        %4138 = vperm.xlu0 %4137, %v4076
        %v4139 = vpop.permute.xlu0 %4138
        %4140 = vset.pattern.permute.xlu0 0
        %4141 = vperm.xlu0 %4140, %v4078
        %v4142 = vpop.permute.xlu0 %4141
        %v4143 = vperm.slane %v4097, %v1310
        %v4144 = vperm.slane %v4100, %v1312
        %v4145 = vsel %vm1314, %v4144, %v4143
        %v4146 = vperm.slane %v4103, %v1310
        %v4147 = vperm.slane %v4106, %v1312
        %v4148 = vsel %vm1314, %v4147, %v4146
        %v4149 = vperm.slane %v4109, %v1310
        %v4150 = vperm.slane %v4112, %v1312
        %v4151 = vsel %vm1314, %v4150, %v4149
        %v4152 = vperm.slane %v4115, %v1310
        %v4153 = vperm.slane %v4118, %v1312
        %v4154 = vsel %vm1314, %v4153, %v4152
        %v4155 = vperm.slane %v4121, %v1310
        %v4156 = vperm.slane %v4124, %v1312
        %v4157 = vsel %vm1314, %v4156, %v4155
        %v4158 = vperm.slane %v4127, %v1310
        %v4159 = vperm.slane %v4130, %v1312
        %v4160 = vsel %vm1314, %v4159, %v4158
        %v4161 = vperm.slane %v4133, %v1310
        %v4162 = vperm.slane %v4136, %v1312
        %v4163 = vsel %vm1314, %v4162, %v4161
        %v4164 = vperm.slane %v4139, %v1310
        %v4165 = vperm.slane %v4142, %v1312
        %v4166 = vsel %vm1314, %v4165, %v4164
        %v4167 = vsel %vm1337, %v4148, %v4145
        %v4168 = vsel %vm1339, %v4151, %v4167
        %v4169 = vsel %vm1341, %v4154, %v4168
        %v4170 = vsel %vm1343, %v4157, %v4169
        %v4171 = vsel %vm1345, %v4160, %v4170
        %v4172 = vsel %vm1347, %v4163, %v4171
        %v4173 = vsel %vm1349, %v4166, %v4172
        %v4175 = vsel %vm1352, %v4173, 0.0
        %4176 = vadd.xlane.f32.xlu0 %v4175
        %v4177 = vpop.xlane.xlu0 %4176
        %v4178 = vrcp.pop %v4177
        %v4180 = vperm.slane %v4178, 0
        %v4181 = vperm.slane %v4178, 1
        %v4182 = vperm.slane %v4178, 2
        %v4183 = vperm.slane %v4178, 3
        %v4184 = vperm.slane %v4178, 4
        %v4185 = vperm.slane %v4178, 5
        %v4186 = vperm.slane %v4178, 6
        %v4187 = vperm.slane %v4178, 7
        %v4196 = vmul.f32 %v4048, %v4180
        %v4197 = vmul.f32 %v4050, %v4180
        %v4198 = vmul.f32 %v4052, %v4181
        %v4199 = vmul.f32 %v4054, %v4181
        %v4200 = vmul.f32 %v4056, %v4182
        %v4201 = vmul.f32 %v4058, %v4182
        %v4202 = vmul.f32 %v4060, %v4183
        %v4203 = vmul.f32 %v4062, %v4183
        %v4204 = vmul.f32 %v4064, %v4184
        %v4205 = vmul.f32 %v4066, %v4184
        %v4206 = vmul.f32 %v4068, %v4185
        %v4207 = vmul.f32 %v4070, %v4185
        %v4208 = vmul.f32 %v4072, %v4186
        %v4209 = vmul.f32 %v4074, %v4186
        %v4210 = vmul.f32 %v4076, %v4187
        %v4211 = vmul.f32 %v4078, %v4187
        %4213 = vset.pattern.permute.xlu0 0
        %4214 = vperm.xlu0 %4213, %v4196
        %v4215 = vpop.permute.xlu0 %4214
        %4218 = vset.pattern.permute.xlu0 0
        %4219 = vperm.xlu0 %4218, %v4197
        %v4220 = vpop.permute.xlu0 %4219
        %4223 = vset.pattern.permute.xlu0 0
        %4224 = vperm.xlu0 %4223, %v4198
        %v4225 = vpop.permute.xlu0 %4224
        %4228 = vset.pattern.permute.xlu0 0
        %4229 = vperm.xlu0 %4228, %v4199
        %v4230 = vpop.permute.xlu0 %4229
        %4233 = vset.pattern.permute.xlu0 0
        %4234 = vperm.xlu0 %4233, %v4200
        %v4235 = vpop.permute.xlu0 %4234
        %4238 = vset.pattern.permute.xlu0 0
        %4239 = vperm.xlu0 %4238, %v4201
        %v4240 = vpop.permute.xlu0 %4239
        %4243 = vset.pattern.permute.xlu0 0
        %4244 = vperm.xlu0 %4243, %v4202
        %v4245 = vpop.permute.xlu0 %4244
        %4248 = vset.pattern.permute.xlu0 0
        %4249 = vperm.xlu0 %4248, %v4203
        %v4250 = vpop.permute.xlu0 %4249
        %4253 = vset.pattern.permute.xlu0 0
        %4254 = vperm.xlu0 %4253, %v4204
        %v4255 = vpop.permute.xlu0 %4254
        %4258 = vset.pattern.permute.xlu0 0
        %4259 = vperm.xlu0 %4258, %v4205
        %v4260 = vpop.permute.xlu0 %4259
        %4263 = vset.pattern.permute.xlu0 0
        %4264 = vperm.xlu0 %4263, %v4206
        %v4265 = vpop.permute.xlu0 %4264
        %4268 = vset.pattern.permute.xlu0 0
        %4269 = vperm.xlu0 %4268, %v4207
        %v4270 = vpop.permute.xlu0 %4269
        %4273 = vset.pattern.permute.xlu0 0
        %4274 = vperm.xlu0 %4273, %v4208
        %v4275 = vpop.permute.xlu0 %4274
        %4278 = vset.pattern.permute.xlu0 0
        %4279 = vperm.xlu0 %4278, %v4209
        %v4280 = vpop.permute.xlu0 %4279
        %4283 = vset.pattern.permute.xlu0 0
        %4284 = vperm.xlu0 %4283, %v4210
        %v4285 = vpop.permute.xlu0 %4284
        %4288 = vset.pattern.permute.xlu0 0
        %4289 = vperm.xlu0 %4288, %v4211
        %v4290 = vpop.permute.xlu0 %4289
        %v4292 = vmul.f32 %v4215, %v3836
        %v4293 = vmul.f32 %v4220, %v3838
        %v4294 = vmul.f32 %v4225, %v3841
        %v4295 = vmul.f32 %v4230, %v3843
        %v4296 = vmul.f32 %v4235, %v3846
        %v4297 = vmul.f32 %v4240, %v3848
        %v4298 = vmul.f32 %v4245, %v3851
        %v4299 = vmul.f32 %v4250, %v3853
        %v4300 = vmul.f32 %v4255, %v3856
        %v4301 = vmul.f32 %v4260, %v3858
        %v4302 = vmul.f32 %v4265, %v3861
        %v4303 = vmul.f32 %v4270, %v3863
        %v4304 = vmul.f32 %v4275, %v3866
        %v4305 = vmul.f32 %v4280, %v3868
        %v4306 = vmul.f32 %v4285, %v3871
        %v4307 = vmul.f32 %v4290, %v3873
        %v4308 = vsel %vm1650, %v4292, 0.0
        %v4309 = vsel %vm1650, %v4293, 0.0
        %v4310 = vadd.f32 %v4308, %v4309
        %v4311 = vrot.slane %v4310, 4
        %v4312 = vadd.f32 %v4310, %v4311
        %v4313 = vrot.slane %v4312, 2
        %v4314 = vadd.f32 %v4312, %v4313
        %v4315 = vrot.slane %v4314, 1
        %v4316 = vadd.f32 %v4314, %v4315
        %v4317 = vsel %vm1650, %v4294, 0.0
        %v4318 = vsel %vm1650, %v4295, 0.0
        %v4319 = vadd.f32 %v4317, %v4318
        %v4320 = vrot.slane %v4319, 4
        %v4321 = vadd.f32 %v4319, %v4320
        %v4322 = vrot.slane %v4321, 2
        %v4323 = vadd.f32 %v4321, %v4322
        %v4324 = vrot.slane %v4323, 1
        %v4325 = vadd.f32 %v4323, %v4324
        %v4326 = vsel %vm1650, %v4296, 0.0
        %v4327 = vsel %vm1650, %v4297, 0.0
        %v4328 = vadd.f32 %v4326, %v4327
        %v4329 = vrot.slane %v4328, 4
        %v4330 = vadd.f32 %v4328, %v4329
        %v4331 = vrot.slane %v4330, 2
        %v4332 = vadd.f32 %v4330, %v4331
        %v4333 = vrot.slane %v4332, 1
        %v4334 = vadd.f32 %v4332, %v4333
        %v4335 = vsel %vm1650, %v4298, 0.0
        %v4336 = vsel %vm1650, %v4299, 0.0
        %v4337 = vadd.f32 %v4335, %v4336
        %v4338 = vrot.slane %v4337, 4
        %v4339 = vadd.f32 %v4337, %v4338
        %v4340 = vrot.slane %v4339, 2
        %v4341 = vadd.f32 %v4339, %v4340
        %v4342 = vrot.slane %v4341, 1
        %v4343 = vadd.f32 %v4341, %v4342
        %v4344 = vsel %vm1650, %v4300, 0.0
        %v4345 = vsel %vm1650, %v4301, 0.0
        %v4346 = vadd.f32 %v4344, %v4345
        %v4347 = vrot.slane %v4346, 4
        %v4348 = vadd.f32 %v4346, %v4347
        %v4349 = vrot.slane %v4348, 2
        %v4350 = vadd.f32 %v4348, %v4349
        %v4351 = vrot.slane %v4350, 1
        %v4352 = vadd.f32 %v4350, %v4351
        %v4353 = vsel %vm1650, %v4302, 0.0
        %v4354 = vsel %vm1650, %v4303, 0.0
        %v4355 = vadd.f32 %v4353, %v4354
        %v4356 = vrot.slane %v4355, 4
        %v4357 = vadd.f32 %v4355, %v4356
        %v4358 = vrot.slane %v4357, 2
        %v4359 = vadd.f32 %v4357, %v4358
        %v4360 = vrot.slane %v4359, 1
        %v4361 = vadd.f32 %v4359, %v4360
        %v4362 = vsel %vm1650, %v4304, 0.0
        %v4363 = vsel %vm1650, %v4305, 0.0
        %v4364 = vadd.f32 %v4362, %v4363
        %v4365 = vrot.slane %v4364, 4
        %v4366 = vadd.f32 %v4364, %v4365
        %v4367 = vrot.slane %v4366, 2
        %v4368 = vadd.f32 %v4366, %v4367
        %v4369 = vrot.slane %v4368, 1
        %v4370 = vadd.f32 %v4368, %v4369
        %v4371 = vsel %vm1650, %v4306, 0.0
        %v4372 = vsel %vm1650, %v4307, 0.0
        %v4373 = vadd.f32 %v4371, %v4372
        %v4374 = vrot.slane %v4373, 4
        %v4375 = vadd.f32 %v4373, %v4374
        %v4376 = vrot.slane %v4375, 2
        %v4377 = vadd.f32 %v4375, %v4376
        %v4378 = vrot.slane %v4377, 1
        %v4379 = vadd.f32 %v4377, %v4378
        %v4380 = vpack.c.bf16 %v4316, %v4316
        %v4381 = vpack.c.bf16 %v4325, %v4325
        %v4382 = vpack.c.bf16 %v4334, %v4334
        %v4383 = vpack.c.bf16 %v4343, %v4343
        %v4384 = vpack.c.bf16 %v4352, %v4352
        %v4385 = vpack.c.bf16 %v4361, %v4361
        %v4386 = vpack.c.bf16 %v4370, %v4370
        %v4387 = vpack.c.bf16 %v4379, %v4379
        %v4396 = vunpack.c.l.b16 %v4380
        %v4397 = vunpack.c.l.b16 %v4381
        %v4398 = vunpack.c.l.b16 %v4382
        %v4399 = vunpack.c.l.b16 %v4383
        %v4400 = vunpack.c.l.b16 %v4384
        %v4401 = vunpack.c.l.b16 %v4385
        %v4402 = vunpack.c.l.b16 %v4386
        %v4403 = vunpack.c.l.b16 %v4387
        %v4404 = vsel %vm1337, %v4397, %v4396
        %v4405 = vsel %vm1339, %v4398, %v4404
        %v4406 = vsel %vm1341, %v4399, %v4405
        %v4407 = vsel %vm1343, %v4400, %v4406
        %v4408 = vsel %vm1345, %v4401, %v4407
        %v4409 = vsel %vm1347, %v4402, %v4408
        %v4410 = vsel %vm1349, %v4403, %v4409
        %v4411 = vpack.c.b16 %v4410, %v4410
        %4412 = vrot.lane.b32.xlu0 %v4411, 96
        %v4413 = vpop.permute.xlu0 %4412
        %v4415 = vsel %vm1244, %v4413, 0
        %v4418 = vsel %vm1760, %v3662, 0
        %4420 = vmatpush.bf16.msra.mxu0 0
        %4421 = vmatpush.bf16.msra.mxu0 0
        %4422 = vmatpush.bf16.msra.mxu0 0
        %4423 = vmatpush.bf16.msra.mxu0 0
        %4424 = vmatpush.bf16.msra.mxu0 0
        %4425 = vmatpush.bf16.msra.mxu0 0
        %4426 = vmatpush.bf16.msra.mxu0 0
        %4427 = vmatpush.bf16.msra.mxu0 %v4418
        %4428 = vmatmul.bf16.gmra.mxu0 %v4415
        %v4429 = vpop.f32.mrf.mxu0
        %v4430 = vadd.f32 0.0, %v4429
        %v4431 = vpop.f32.mrf.mxu0
        %4432 = vdwg.mxu0
        %v4434 = vperm.slane %v3666, 0
        %v4436 = vadd.f32 %v4434, %v4430
        %4453 = vrot.lane.b32.xlu0 %v3899, 120
        %v4454 = vpop.permute.xlu0 %4453
        %4455 = vrot.lane.b32.xlu0 %v3900, 120
        %v4456 = vpop.permute.xlu0 %4455
        %4457 = vrot.lane.b32.xlu0 %v3901, 120
        %v4458 = vpop.permute.xlu0 %4457
        %4459 = vrot.lane.b32.xlu0 %v3902, 120
        %v4460 = vpop.permute.xlu0 %4459
        %4461 = vrot.lane.b32.xlu0 %v3903, 120
        %v4462 = vpop.permute.xlu0 %4461
        %4463 = vrot.lane.b32.xlu0 %v3904, 120
        %v4464 = vpop.permute.xlu0 %4463
        %4465 = vrot.lane.b32.xlu0 %v3905, 120
        %v4466 = vpop.permute.xlu0 %4465
        %4467 = vrot.lane.b32.xlu0 %v3906, 120
        %v4468 = vpop.permute.xlu0 %4467
        %4469 = vrot.lane.b32.xlu0 %v3907, 120
        %v4470 = vpop.permute.xlu0 %4469
        %4471 = vrot.lane.b32.xlu0 %v3908, 120
        %v4472 = vpop.permute.xlu0 %4471
        %4473 = vrot.lane.b32.xlu0 %v3909, 120
        %v4474 = vpop.permute.xlu0 %4473
        %4475 = vrot.lane.b32.xlu0 %v3910, 120
        %v4476 = vpop.permute.xlu0 %4475
        %4477 = vrot.lane.b32.xlu0 %v3911, 120
        %v4478 = vpop.permute.xlu0 %4477
        %4479 = vrot.lane.b32.xlu0 %v3912, 120
        %v4480 = vpop.permute.xlu0 %4479
        %4481 = vrot.lane.b32.xlu0 %v3913, 120
        %v4482 = vpop.permute.xlu0 %4481
        %4483 = vrot.lane.b32.xlu0 %v3914, 120
        %v4484 = vpop.permute.xlu0 %4483
        %v4501 = vsel %vm1244, %v4454, 0.0
        %4502 = vadd.xlane.f32.xlu0 %v4501
        %v4503 = vpop.xlane.xlu0 %4502
        %v4504 = vsel %vm1244, %v4456, 0.0
        %4505 = vadd.xlane.f32.xlu0 %v4504
        %v4506 = vpop.xlane.xlu0 %4505
        %v4507 = vsel %vm1244, %v4458, 0.0
        %4508 = vadd.xlane.f32.xlu0 %v4507
        %v4509 = vpop.xlane.xlu0 %4508
        %v4510 = vsel %vm1244, %v4460, 0.0
        %4511 = vadd.xlane.f32.xlu0 %v4510
        %v4512 = vpop.xlane.xlu0 %4511
        %v4513 = vsel %vm1244, %v4462, 0.0
        %4514 = vadd.xlane.f32.xlu0 %v4513
        %v4515 = vpop.xlane.xlu0 %4514
        %v4516 = vsel %vm1244, %v4464, 0.0
        %4517 = vadd.xlane.f32.xlu0 %v4516
        %v4518 = vpop.xlane.xlu0 %4517
        %v4519 = vsel %vm1244, %v4466, 0.0
        %4520 = vadd.xlane.f32.xlu0 %v4519
        %v4521 = vpop.xlane.xlu0 %4520
        %v4522 = vsel %vm1244, %v4468, 0.0
        %4523 = vadd.xlane.f32.xlu0 %v4522
        %v4524 = vpop.xlane.xlu0 %4523
        %v4525 = vsel %vm1244, %v4470, 0.0
        %4526 = vadd.xlane.f32.xlu0 %v4525
        %v4527 = vpop.xlane.xlu0 %4526
        %v4528 = vsel %vm1244, %v4472, 0.0
        %4529 = vadd.xlane.f32.xlu0 %v4528
        %v4530 = vpop.xlane.xlu0 %4529
        %v4531 = vsel %vm1244, %v4474, 0.0
        %4532 = vadd.xlane.f32.xlu0 %v4531
        %v4533 = vpop.xlane.xlu0 %4532
        %v4534 = vsel %vm1244, %v4476, 0.0
        %4535 = vadd.xlane.f32.xlu0 %v4534
        %v4536 = vpop.xlane.xlu0 %4535
        %v4537 = vsel %vm1244, %v4478, 0.0
        %4538 = vadd.xlane.f32.xlu0 %v4537
        %v4539 = vpop.xlane.xlu0 %4538
        %v4540 = vsel %vm1244, %v4480, 0.0
        %4541 = vadd.xlane.f32.xlu0 %v4540
        %v4542 = vpop.xlane.xlu0 %4541
        %v4543 = vsel %vm1244, %v4482, 0.0
        %4544 = vadd.xlane.f32.xlu0 %v4543
        %v4545 = vpop.xlane.xlu0 %4544
        %v4546 = vsel %vm1244, %v4484, 0.0
        %4547 = vadd.xlane.f32.xlu0 %v4546
        %v4548 = vpop.xlane.xlu0 %4547
        %v4565 = vperm.slane %v4503, %v1310
        %v4566 = vperm.slane %v4506, %v1312
        %v4567 = vsel %vm1314, %v4566, %v4565
        %v4568 = vperm.slane %v4509, %v1310
        %v4569 = vperm.slane %v4512, %v1312
        %v4570 = vsel %vm1314, %v4569, %v4568
        %v4571 = vperm.slane %v4515, %v1310
        %v4572 = vperm.slane %v4518, %v1312
        %v4573 = vsel %vm1314, %v4572, %v4571
        %v4574 = vperm.slane %v4521, %v1310
        %v4575 = vperm.slane %v4524, %v1312
        %v4576 = vsel %vm1314, %v4575, %v4574
        %v4577 = vperm.slane %v4527, %v1310
        %v4578 = vperm.slane %v4530, %v1312
        %v4579 = vsel %vm1314, %v4578, %v4577
        %v4580 = vperm.slane %v4533, %v1310
        %v4581 = vperm.slane %v4536, %v1312
        %v4582 = vsel %vm1314, %v4581, %v4580
        %v4583 = vperm.slane %v4539, %v1310
        %v4584 = vperm.slane %v4542, %v1312
        %v4585 = vsel %vm1314, %v4584, %v4583
        %v4586 = vperm.slane %v4545, %v1310
        %v4587 = vperm.slane %v4548, %v1312
        %v4588 = vsel %vm1314, %v4587, %v4586
        %v4589 = vsel %vm1337, %v4570, %v4567
        %v4590 = vsel %vm1339, %v4573, %v4589
        %v4591 = vsel %vm1341, %v4576, %v4590
        %v4592 = vsel %vm1343, %v4579, %v4591
        %v4593 = vsel %vm1345, %v4582, %v4592
        %v4594 = vsel %vm1347, %v4585, %v4593
        %v4595 = vsel %vm1349, %v4588, %v4594
        %v4597 = vsel %vm1352, %v4595, -inf
        %4598 = vmax.xlane.f32.xlu0 %v4597
        %v4599 = vpop.xlane.xlu0 %4598
        %v4601 = vperm.slane %v4599, 0
        %v4602 = vperm.slane %v4599, 1
        %v4603 = vperm.slane %v4599, 2
        %v4604 = vperm.slane %v4599, 3
        %v4605 = vperm.slane %v4599, 4
        %v4606 = vperm.slane %v4599, 5
        %v4607 = vperm.slane %v4599, 6
        %v4608 = vperm.slane %v4599, 7
        %v4617 = vsub.f32 %v4503, %v4601
        %v4618 = vsub.f32 %v4506, %v4601
        %v4619 = vsub.f32 %v4509, %v4602
        %v4620 = vsub.f32 %v4512, %v4602
        %v4621 = vsub.f32 %v4515, %v4603
        %v4622 = vsub.f32 %v4518, %v4603
        %v4623 = vsub.f32 %v4521, %v4604
        %v4624 = vsub.f32 %v4524, %v4604
        %v4625 = vsub.f32 %v4527, %v4605
        %v4626 = vsub.f32 %v4530, %v4605
        %v4627 = vsub.f32 %v4533, %v4606
        %v4628 = vsub.f32 %v4536, %v4606
        %v4629 = vsub.f32 %v4539, %v4607
        %v4630 = vsub.f32 %v4542, %v4607
        %v4631 = vsub.f32 %v4545, %v4608
        %v4632 = vsub.f32 %v4548, %v4608
        %v4633 = vmul.f32 %v4617, 1.442695
        %v4634 = vpow.pop %v4633
        %v4635 = vmul.f32 %v4618, 1.442695
        %v4636 = vpow.pop %v4635
        %v4637 = vmul.f32 %v4619, 1.442695
        %v4638 = vpow.pop %v4637
        %v4639 = vmul.f32 %v4620, 1.442695
        %v4640 = vpow.pop %v4639
        %v4641 = vmul.f32 %v4621, 1.442695
        %v4642 = vpow.pop %v4641
        %v4643 = vmul.f32 %v4622, 1.442695
        %v4644 = vpow.pop %v4643
        %v4645 = vmul.f32 %v4623, 1.442695
        %v4646 = vpow.pop %v4645
        %v4647 = vmul.f32 %v4624, 1.442695
        %v4648 = vpow.pop %v4647
        %v4649 = vmul.f32 %v4625, 1.442695
        %v4650 = vpow.pop %v4649
        %v4651 = vmul.f32 %v4626, 1.442695
        %v4652 = vpow.pop %v4651
        %v4653 = vmul.f32 %v4627, 1.442695
        %v4654 = vpow.pop %v4653
        %v4655 = vmul.f32 %v4628, 1.442695
        %v4656 = vpow.pop %v4655
        %v4657 = vmul.f32 %v4629, 1.442695
        %v4658 = vpow.pop %v4657
        %v4659 = vmul.f32 %v4630, 1.442695
        %v4660 = vpow.pop %v4659
        %v4661 = vmul.f32 %v4631, 1.442695
        %v4662 = vpow.pop %v4661
        %v4663 = vmul.f32 %v4632, 1.442695
        %v4664 = vpow.pop %v4663
        %4681 = vset.pattern.permute.xlu0 0
        %4682 = vperm.xlu0 %4681, %v4634
        %v4683 = vpop.permute.xlu0 %4682
        %4684 = vset.pattern.permute.xlu0 0
        %4685 = vperm.xlu0 %4684, %v4636
        %v4686 = vpop.permute.xlu0 %4685
        %4687 = vset.pattern.permute.xlu0 0
        %4688 = vperm.xlu0 %4687, %v4638
        %v4689 = vpop.permute.xlu0 %4688
        %4690 = vset.pattern.permute.xlu0 0
        %4691 = vperm.xlu0 %4690, %v4640
        %v4692 = vpop.permute.xlu0 %4691
        %4693 = vset.pattern.permute.xlu0 0
        %4694 = vperm.xlu0 %4693, %v4642
        %v4695 = vpop.permute.xlu0 %4694
        %4696 = vset.pattern.permute.xlu0 0
        %4697 = vperm.xlu0 %4696, %v4644
        %v4698 = vpop.permute.xlu0 %4697
        %4699 = vset.pattern.permute.xlu0 0
        %4700 = vperm.xlu0 %4699, %v4646
        %v4701 = vpop.permute.xlu0 %4700
        %4702 = vset.pattern.permute.xlu0 0
        %4703 = vperm.xlu0 %4702, %v4648
        %v4704 = vpop.permute.xlu0 %4703
        %4705 = vset.pattern.permute.xlu0 0
        %4706 = vperm.xlu0 %4705, %v4650
        %v4707 = vpop.permute.xlu0 %4706
        %4708 = vset.pattern.permute.xlu0 0
        %4709 = vperm.xlu0 %4708, %v4652
        %v4710 = vpop.permute.xlu0 %4709
        %4711 = vset.pattern.permute.xlu0 0
        %4712 = vperm.xlu0 %4711, %v4654
        %v4713 = vpop.permute.xlu0 %4712
        %4714 = vset.pattern.permute.xlu0 0
        %4715 = vperm.xlu0 %4714, %v4656
        %v4716 = vpop.permute.xlu0 %4715
        %4717 = vset.pattern.permute.xlu0 0
        %4718 = vperm.xlu0 %4717, %v4658
        %v4719 = vpop.permute.xlu0 %4718
        %4720 = vset.pattern.permute.xlu0 0
        %4721 = vperm.xlu0 %4720, %v4660
        %v4722 = vpop.permute.xlu0 %4721
        %4723 = vset.pattern.permute.xlu0 0
        %4724 = vperm.xlu0 %4723, %v4662
        %v4725 = vpop.permute.xlu0 %4724
        %4726 = vset.pattern.permute.xlu0 0
        %4727 = vperm.xlu0 %4726, %v4664
        %v4728 = vpop.permute.xlu0 %4727
        %v4729 = vperm.slane %v4683, %v1310
        %v4730 = vperm.slane %v4686, %v1312
        %v4731 = vsel %vm1314, %v4730, %v4729
        %v4732 = vperm.slane %v4689, %v1310
        %v4733 = vperm.slane %v4692, %v1312
        %v4734 = vsel %vm1314, %v4733, %v4732
        %v4735 = vperm.slane %v4695, %v1310
        %v4736 = vperm.slane %v4698, %v1312
        %v4737 = vsel %vm1314, %v4736, %v4735
        %v4738 = vperm.slane %v4701, %v1310
        %v4739 = vperm.slane %v4704, %v1312
        %v4740 = vsel %vm1314, %v4739, %v4738
        %v4741 = vperm.slane %v4707, %v1310
        %v4742 = vperm.slane %v4710, %v1312
        %v4743 = vsel %vm1314, %v4742, %v4741
        %v4744 = vperm.slane %v4713, %v1310
        %v4745 = vperm.slane %v4716, %v1312
        %v4746 = vsel %vm1314, %v4745, %v4744
        %v4747 = vperm.slane %v4719, %v1310
        %v4748 = vperm.slane %v4722, %v1312
        %v4749 = vsel %vm1314, %v4748, %v4747
        %v4750 = vperm.slane %v4725, %v1310
        %v4751 = vperm.slane %v4728, %v1312
        %v4752 = vsel %vm1314, %v4751, %v4750
        %v4753 = vsel %vm1337, %v4734, %v4731
        %v4754 = vsel %vm1339, %v4737, %v4753
        %v4755 = vsel %vm1341, %v4740, %v4754
        %v4756 = vsel %vm1343, %v4743, %v4755
        %v4757 = vsel %vm1345, %v4746, %v4756
        %v4758 = vsel %vm1347, %v4749, %v4757
        %v4759 = vsel %vm1349, %v4752, %v4758
        %v4761 = vsel %vm1352, %v4759, 0.0
        %4762 = vadd.xlane.f32.xlu0 %v4761
        %v4763 = vpop.xlane.xlu0 %4762
        %v4764 = vrcp.pop %v4763
        %v4766 = vperm.slane %v4764, 0
        %v4767 = vperm.slane %v4764, 1
        %v4768 = vperm.slane %v4764, 2
        %v4769 = vperm.slane %v4764, 3
        %v4770 = vperm.slane %v4764, 4
        %v4771 = vperm.slane %v4764, 5
        %v4772 = vperm.slane %v4764, 6
        %v4773 = vperm.slane %v4764, 7
        %v4782 = vmul.f32 %v4634, %v4766
        %v4783 = vmul.f32 %v4636, %v4766
        %v4784 = vmul.f32 %v4638, %v4767
        %v4785 = vmul.f32 %v4640, %v4767
        %v4786 = vmul.f32 %v4642, %v4768
        %v4787 = vmul.f32 %v4644, %v4768
        %v4788 = vmul.f32 %v4646, %v4769
        %v4789 = vmul.f32 %v4648, %v4769
        %v4790 = vmul.f32 %v4650, %v4770
        %v4791 = vmul.f32 %v4652, %v4770
        %v4792 = vmul.f32 %v4654, %v4771
        %v4793 = vmul.f32 %v4656, %v4771
        %v4794 = vmul.f32 %v4658, %v4772
        %v4795 = vmul.f32 %v4660, %v4772
        %v4796 = vmul.f32 %v4662, %v4773
        %v4797 = vmul.f32 %v4664, %v4773
        %4799 = vset.pattern.permute.xlu0 0
        %4800 = vperm.xlu0 %4799, %v4782
        %v4801 = vpop.permute.xlu0 %4800
        %4804 = vset.pattern.permute.xlu0 0
        %4805 = vperm.xlu0 %4804, %v4783
        %v4806 = vpop.permute.xlu0 %4805
        %4809 = vset.pattern.permute.xlu0 0
        %4810 = vperm.xlu0 %4809, %v4784
        %v4811 = vpop.permute.xlu0 %4810
        %4814 = vset.pattern.permute.xlu0 0
        %4815 = vperm.xlu0 %4814, %v4785
        %v4816 = vpop.permute.xlu0 %4815
        %4819 = vset.pattern.permute.xlu0 0
        %4820 = vperm.xlu0 %4819, %v4786
        %v4821 = vpop.permute.xlu0 %4820
        %4824 = vset.pattern.permute.xlu0 0
        %4825 = vperm.xlu0 %4824, %v4787
        %v4826 = vpop.permute.xlu0 %4825
        %4829 = vset.pattern.permute.xlu0 0
        %4830 = vperm.xlu0 %4829, %v4788
        %v4831 = vpop.permute.xlu0 %4830
        %4834 = vset.pattern.permute.xlu0 0
        %4835 = vperm.xlu0 %4834, %v4789
        %v4836 = vpop.permute.xlu0 %4835
        %4839 = vset.pattern.permute.xlu0 0
        %4840 = vperm.xlu0 %4839, %v4790
        %v4841 = vpop.permute.xlu0 %4840
        %4844 = vset.pattern.permute.xlu0 0
        %4845 = vperm.xlu0 %4844, %v4791
        %v4846 = vpop.permute.xlu0 %4845
        %4849 = vset.pattern.permute.xlu0 0
        %4850 = vperm.xlu0 %4849, %v4792
        %v4851 = vpop.permute.xlu0 %4850
        %4854 = vset.pattern.permute.xlu0 0
        %4855 = vperm.xlu0 %4854, %v4793
        %v4856 = vpop.permute.xlu0 %4855
        %4859 = vset.pattern.permute.xlu0 0
        %4860 = vperm.xlu0 %4859, %v4794
        %v4861 = vpop.permute.xlu0 %4860
        %4864 = vset.pattern.permute.xlu0 0
        %4865 = vperm.xlu0 %4864, %v4795
        %v4866 = vpop.permute.xlu0 %4865
        %4869 = vset.pattern.permute.xlu0 0
        %4870 = vperm.xlu0 %4869, %v4796
        %v4871 = vpop.permute.xlu0 %4870
        %4874 = vset.pattern.permute.xlu0 0
        %4875 = vperm.xlu0 %4874, %v4797
        %v4876 = vpop.permute.xlu0 %4875
        %v4878 = vmul.f32 %v4801, %v3836
        %v4879 = vmul.f32 %v4806, %v3838
        %v4880 = vmul.f32 %v4811, %v3841
        %v4881 = vmul.f32 %v4816, %v3843
        %v4882 = vmul.f32 %v4821, %v3846
        %v4883 = vmul.f32 %v4826, %v3848
        %v4884 = vmul.f32 %v4831, %v3851
        %v4885 = vmul.f32 %v4836, %v3853
        %v4886 = vmul.f32 %v4841, %v3856
        %v4887 = vmul.f32 %v4846, %v3858
        %v4888 = vmul.f32 %v4851, %v3861
        %v4889 = vmul.f32 %v4856, %v3863
        %v4890 = vmul.f32 %v4861, %v3866
        %v4891 = vmul.f32 %v4866, %v3868
        %v4892 = vmul.f32 %v4871, %v3871
        %v4893 = vmul.f32 %v4876, %v3873
        %v4894 = vsel %vm2238, %v4878, 0.0
        %v4895 = vsel %vm2238, %v4879, 0.0
        %v4896 = vadd.f32 %v4894, %v4895
        %v4897 = vrot.slane %v4896, 4
        %v4898 = vadd.f32 %v4896, %v4897
        %v4899 = vrot.slane %v4898, 2
        %v4900 = vadd.f32 %v4898, %v4899
        %v4901 = vrot.slane %v4900, 1
        %v4902 = vadd.f32 %v4900, %v4901
        %v4903 = vsel %vm2238, %v4880, 0.0
        %v4904 = vsel %vm2238, %v4881, 0.0
        %v4905 = vadd.f32 %v4903, %v4904
        %v4906 = vrot.slane %v4905, 4
        %v4907 = vadd.f32 %v4905, %v4906
        %v4908 = vrot.slane %v4907, 2
        %v4909 = vadd.f32 %v4907, %v4908
        %v4910 = vrot.slane %v4909, 1
        %v4911 = vadd.f32 %v4909, %v4910
        %v4912 = vsel %vm2238, %v4882, 0.0
        %v4913 = vsel %vm2238, %v4883, 0.0
        %v4914 = vadd.f32 %v4912, %v4913
        %v4915 = vrot.slane %v4914, 4
        %v4916 = vadd.f32 %v4914, %v4915
        %v4917 = vrot.slane %v4916, 2
        %v4918 = vadd.f32 %v4916, %v4917
        %v4919 = vrot.slane %v4918, 1
        %v4920 = vadd.f32 %v4918, %v4919
        %v4921 = vsel %vm2238, %v4884, 0.0
        %v4922 = vsel %vm2238, %v4885, 0.0
        %v4923 = vadd.f32 %v4921, %v4922
        %v4924 = vrot.slane %v4923, 4
        %v4925 = vadd.f32 %v4923, %v4924
        %v4926 = vrot.slane %v4925, 2
        %v4927 = vadd.f32 %v4925, %v4926
        %v4928 = vrot.slane %v4927, 1
        %v4929 = vadd.f32 %v4927, %v4928
        %v4930 = vsel %vm2238, %v4886, 0.0
        %v4931 = vsel %vm2238, %v4887, 0.0
        %v4932 = vadd.f32 %v4930, %v4931
        %v4933 = vrot.slane %v4932, 4
        %v4934 = vadd.f32 %v4932, %v4933
        %v4935 = vrot.slane %v4934, 2
        %v4936 = vadd.f32 %v4934, %v4935
        %v4937 = vrot.slane %v4936, 1
        %v4938 = vadd.f32 %v4936, %v4937
        %v4939 = vsel %vm2238, %v4888, 0.0
        %v4940 = vsel %vm2238, %v4889, 0.0
        %v4941 = vadd.f32 %v4939, %v4940
        %v4942 = vrot.slane %v4941, 4
        %v4943 = vadd.f32 %v4941, %v4942
        %v4944 = vrot.slane %v4943, 2
        %v4945 = vadd.f32 %v4943, %v4944
        %v4946 = vrot.slane %v4945, 1
        %v4947 = vadd.f32 %v4945, %v4946
        %v4948 = vsel %vm2238, %v4890, 0.0
        %v4949 = vsel %vm2238, %v4891, 0.0
        %v4950 = vadd.f32 %v4948, %v4949
        %v4951 = vrot.slane %v4950, 4
        %v4952 = vadd.f32 %v4950, %v4951
        %v4953 = vrot.slane %v4952, 2
        %v4954 = vadd.f32 %v4952, %v4953
        %v4955 = vrot.slane %v4954, 1
        %v4956 = vadd.f32 %v4954, %v4955
        %v4957 = vsel %vm2238, %v4892, 0.0
        %v4958 = vsel %vm2238, %v4893, 0.0
        %v4959 = vadd.f32 %v4957, %v4958
        %v4960 = vrot.slane %v4959, 4
        %v4961 = vadd.f32 %v4959, %v4960
        %v4962 = vrot.slane %v4961, 2
        %v4963 = vadd.f32 %v4961, %v4962
        %v4964 = vrot.slane %v4963, 1
        %v4965 = vadd.f32 %v4963, %v4964
        %v4966 = vpack.c.bf16 %v4902, %v4902
        %v4967 = vpack.c.bf16 %v4911, %v4911
        %v4968 = vpack.c.bf16 %v4920, %v4920
        %v4969 = vpack.c.bf16 %v4929, %v4929
        %v4970 = vpack.c.bf16 %v4938, %v4938
        %v4971 = vpack.c.bf16 %v4947, %v4947
        %v4972 = vpack.c.bf16 %v4956, %v4956
        %v4973 = vpack.c.bf16 %v4965, %v4965
        %v4982 = vunpack.c.l.b16 %v4966
        %v4983 = vunpack.c.l.b16 %v4967
        %v4984 = vunpack.c.l.b16 %v4968
        %v4985 = vunpack.c.l.b16 %v4969
        %v4986 = vunpack.c.l.b16 %v4970
        %v4987 = vunpack.c.l.b16 %v4971
        %v4988 = vunpack.c.l.b16 %v4972
        %v4989 = vunpack.c.l.b16 %v4973
        %v4990 = vsel %vm1337, %v4983, %v4982
        %v4991 = vsel %vm1339, %v4984, %v4990
        %v4992 = vsel %vm1341, %v4985, %v4991
        %v4993 = vsel %vm1343, %v4986, %v4992
        %v4994 = vsel %vm1345, %v4987, %v4993
        %v4995 = vsel %vm1347, %v4988, %v4994
        %v4996 = vsel %vm1349, %v4989, %v4995
        %v4997 = vpack.c.b16 %v4996, %v4996
        %4998 = vrot.lane.b32.xlu0 %v4997, 88
        %v4999 = vpop.permute.xlu0 %4998
        %v5001 = vsel %vm1244, %v4999, 0
        %v5004 = vsel %vm1760, %v3663, 0
        %5006 = vmatpush.bf16.msra.mxu0 0
        %5007 = vmatpush.bf16.msra.mxu0 0
        %5008 = vmatpush.bf16.msra.mxu0 0
        %5009 = vmatpush.bf16.msra.mxu0 0
        %5010 = vmatpush.bf16.msra.mxu0 0
        %5011 = vmatpush.bf16.msra.mxu0 0
        %5012 = vmatpush.bf16.msra.mxu0 0
        %5013 = vmatpush.bf16.msra.mxu0 %v5004
        %5014 = vmatmul.bf16.gmra.mxu0 %v5001
        %v5015 = vpop.f32.mrf.mxu0
        %v5016 = vadd.f32 0.0, %v5015
        %v5017 = vpop.f32.mrf.mxu0
        %5018 = vdwg.mxu0
        %v5019 = vadd.f32 %v4436, %v5016
        %5020 = vrot.lane.b32.xlu0 %v3899, 112
        %v5021 = vpop.permute.xlu0 %5020
        %5022 = vrot.lane.b32.xlu0 %v3900, 112
        %v5023 = vpop.permute.xlu0 %5022
        %5024 = vrot.lane.b32.xlu0 %v3901, 112
        %v5025 = vpop.permute.xlu0 %5024
        %5026 = vrot.lane.b32.xlu0 %v3902, 112
        %v5027 = vpop.permute.xlu0 %5026
        %5028 = vrot.lane.b32.xlu0 %v3903, 112
        %v5029 = vpop.permute.xlu0 %5028
        %5030 = vrot.lane.b32.xlu0 %v3904, 112
        %v5031 = vpop.permute.xlu0 %5030
        %5032 = vrot.lane.b32.xlu0 %v3905, 112
        %v5033 = vpop.permute.xlu0 %5032
        %5034 = vrot.lane.b32.xlu0 %v3906, 112
        %v5035 = vpop.permute.xlu0 %5034
        %5036 = vrot.lane.b32.xlu0 %v3907, 112
        %v5037 = vpop.permute.xlu0 %5036
        %5038 = vrot.lane.b32.xlu0 %v3908, 112
        %v5039 = vpop.permute.xlu0 %5038
        %5040 = vrot.lane.b32.xlu0 %v3909, 112
        %v5041 = vpop.permute.xlu0 %5040
        %5042 = vrot.lane.b32.xlu0 %v3910, 112
        %v5043 = vpop.permute.xlu0 %5042
        %5044 = vrot.lane.b32.xlu0 %v3911, 112
        %v5045 = vpop.permute.xlu0 %5044
        %5046 = vrot.lane.b32.xlu0 %v3912, 112
        %v5047 = vpop.permute.xlu0 %5046
        %5048 = vrot.lane.b32.xlu0 %v3913, 112
        %v5049 = vpop.permute.xlu0 %5048
        %5050 = vrot.lane.b32.xlu0 %v3914, 112
        %v5051 = vpop.permute.xlu0 %5050
        %v5068 = vsel %vm1244, %v5021, 0.0
        %5069 = vadd.xlane.f32.xlu0 %v5068
        %v5070 = vpop.xlane.xlu0 %5069
        %v5071 = vsel %vm1244, %v5023, 0.0
        %5072 = vadd.xlane.f32.xlu0 %v5071
        %v5073 = vpop.xlane.xlu0 %5072
        %v5074 = vsel %vm1244, %v5025, 0.0
        %5075 = vadd.xlane.f32.xlu0 %v5074
        %v5076 = vpop.xlane.xlu0 %5075
        %v5077 = vsel %vm1244, %v5027, 0.0
        %5078 = vadd.xlane.f32.xlu0 %v5077
        %v5079 = vpop.xlane.xlu0 %5078
        %v5080 = vsel %vm1244, %v5029, 0.0
        %5081 = vadd.xlane.f32.xlu0 %v5080
        %v5082 = vpop.xlane.xlu0 %5081
        %v5083 = vsel %vm1244, %v5031, 0.0
        %5084 = vadd.xlane.f32.xlu0 %v5083
        %v5085 = vpop.xlane.xlu0 %5084
        %v5086 = vsel %vm1244, %v5033, 0.0
        %5087 = vadd.xlane.f32.xlu0 %v5086
        %v5088 = vpop.xlane.xlu0 %5087
        %v5089 = vsel %vm1244, %v5035, 0.0
        %5090 = vadd.xlane.f32.xlu0 %v5089
        %v5091 = vpop.xlane.xlu0 %5090
        %v5092 = vsel %vm1244, %v5037, 0.0
        %5093 = vadd.xlane.f32.xlu0 %v5092
        %v5094 = vpop.xlane.xlu0 %5093
        %v5095 = vsel %vm1244, %v5039, 0.0
        %5096 = vadd.xlane.f32.xlu0 %v5095
        %v5097 = vpop.xlane.xlu0 %5096
        %v5098 = vsel %vm1244, %v5041, 0.0
        %5099 = vadd.xlane.f32.xlu0 %v5098
        %v5100 = vpop.xlane.xlu0 %5099
        %v5101 = vsel %vm1244, %v5043, 0.0
        %5102 = vadd.xlane.f32.xlu0 %v5101
        %v5103 = vpop.xlane.xlu0 %5102
        %v5104 = vsel %vm1244, %v5045, 0.0
        %5105 = vadd.xlane.f32.xlu0 %v5104
        %v5106 = vpop.xlane.xlu0 %5105
        %v5107 = vsel %vm1244, %v5047, 0.0
        %5108 = vadd.xlane.f32.xlu0 %v5107
        %v5109 = vpop.xlane.xlu0 %5108
        %v5110 = vsel %vm1244, %v5049, 0.0
        %5111 = vadd.xlane.f32.xlu0 %v5110
        %v5112 = vpop.xlane.xlu0 %5111
        %v5113 = vsel %vm1244, %v5051, 0.0
        %5114 = vadd.xlane.f32.xlu0 %v5113
        %v5115 = vpop.xlane.xlu0 %5114
        %v5132 = vperm.slane %v5070, %v1310
        %v5133 = vperm.slane %v5073, %v1312
        %v5134 = vsel %vm1314, %v5133, %v5132
        %v5135 = vperm.slane %v5076, %v1310
        %v5136 = vperm.slane %v5079, %v1312
        %v5137 = vsel %vm1314, %v5136, %v5135
        %v5138 = vperm.slane %v5082, %v1310
        %v5139 = vperm.slane %v5085, %v1312
        %v5140 = vsel %vm1314, %v5139, %v5138
        %v5141 = vperm.slane %v5088, %v1310
        %v5142 = vperm.slane %v5091, %v1312
        %v5143 = vsel %vm1314, %v5142, %v5141
        %v5144 = vperm.slane %v5094, %v1310
        %v5145 = vperm.slane %v5097, %v1312
        %v5146 = vsel %vm1314, %v5145, %v5144
        %v5147 = vperm.slane %v5100, %v1310
        %v5148 = vperm.slane %v5103, %v1312
        %v5149 = vsel %vm1314, %v5148, %v5147
        %v5150 = vperm.slane %v5106, %v1310
        %v5151 = vperm.slane %v5109, %v1312
        %v5152 = vsel %vm1314, %v5151, %v5150
        %v5153 = vperm.slane %v5112, %v1310
        %v5154 = vperm.slane %v5115, %v1312
        %v5155 = vsel %vm1314, %v5154, %v5153
        %v5156 = vsel %vm1337, %v5137, %v5134
        %v5157 = vsel %vm1339, %v5140, %v5156
        %v5158 = vsel %vm1341, %v5143, %v5157
        %v5159 = vsel %vm1343, %v5146, %v5158
        %v5160 = vsel %vm1345, %v5149, %v5159
        %v5161 = vsel %vm1347, %v5152, %v5160
        %v5162 = vsel %vm1349, %v5155, %v5161
        %v5164 = vsel %vm1352, %v5162, -inf
        %5165 = vmax.xlane.f32.xlu0 %v5164
        %v5166 = vpop.xlane.xlu0 %5165
        %v5168 = vperm.slane %v5166, 0
        %v5169 = vperm.slane %v5166, 1
        %v5170 = vperm.slane %v5166, 2
        %v5171 = vperm.slane %v5166, 3
        %v5172 = vperm.slane %v5166, 4
        %v5173 = vperm.slane %v5166, 5
        %v5174 = vperm.slane %v5166, 6
        %v5175 = vperm.slane %v5166, 7
        %v5184 = vsub.f32 %v5070, %v5168
        %v5185 = vsub.f32 %v5073, %v5168
        %v5186 = vsub.f32 %v5076, %v5169
        %v5187 = vsub.f32 %v5079, %v5169
        %v5188 = vsub.f32 %v5082, %v5170
        %v5189 = vsub.f32 %v5085, %v5170
        %v5190 = vsub.f32 %v5088, %v5171
        %v5191 = vsub.f32 %v5091, %v5171
        %v5192 = vsub.f32 %v5094, %v5172
        %v5193 = vsub.f32 %v5097, %v5172
        %v5194 = vsub.f32 %v5100, %v5173
        %v5195 = vsub.f32 %v5103, %v5173
        %v5196 = vsub.f32 %v5106, %v5174
        %v5197 = vsub.f32 %v5109, %v5174
        %v5198 = vsub.f32 %v5112, %v5175
        %v5199 = vsub.f32 %v5115, %v5175
        %v5200 = vmul.f32 %v5184, 1.442695
        %v5201 = vpow.pop %v5200
        %v5202 = vmul.f32 %v5185, 1.442695
        %v5203 = vpow.pop %v5202
        %v5204 = vmul.f32 %v5186, 1.442695
        %v5205 = vpow.pop %v5204
        %v5206 = vmul.f32 %v5187, 1.442695
        %v5207 = vpow.pop %v5206
        %v5208 = vmul.f32 %v5188, 1.442695
        %v5209 = vpow.pop %v5208
        %v5210 = vmul.f32 %v5189, 1.442695
        %v5211 = vpow.pop %v5210
        %v5212 = vmul.f32 %v5190, 1.442695
        %v5213 = vpow.pop %v5212
        %v5214 = vmul.f32 %v5191, 1.442695
        %v5215 = vpow.pop %v5214
        %v5216 = vmul.f32 %v5192, 1.442695
        %v5217 = vpow.pop %v5216
        %v5218 = vmul.f32 %v5193, 1.442695
        %v5219 = vpow.pop %v5218
        %v5220 = vmul.f32 %v5194, 1.442695
        %v5221 = vpow.pop %v5220
        %v5222 = vmul.f32 %v5195, 1.442695
        %v5223 = vpow.pop %v5222
        %v5224 = vmul.f32 %v5196, 1.442695
        %v5225 = vpow.pop %v5224
        %v5226 = vmul.f32 %v5197, 1.442695
        %v5227 = vpow.pop %v5226
        %v5228 = vmul.f32 %v5198, 1.442695
        %v5229 = vpow.pop %v5228
        %v5230 = vmul.f32 %v5199, 1.442695
        %v5231 = vpow.pop %v5230
        %5248 = vset.pattern.permute.xlu0 0
        %5249 = vperm.xlu0 %5248, %v5201
        %v5250 = vpop.permute.xlu0 %5249
        %5251 = vset.pattern.permute.xlu0 0
        %5252 = vperm.xlu0 %5251, %v5203
        %v5253 = vpop.permute.xlu0 %5252
        %5254 = vset.pattern.permute.xlu0 0
        %5255 = vperm.xlu0 %5254, %v5205
        %v5256 = vpop.permute.xlu0 %5255
        %5257 = vset.pattern.permute.xlu0 0
        %5258 = vperm.xlu0 %5257, %v5207
        %v5259 = vpop.permute.xlu0 %5258
        %5260 = vset.pattern.permute.xlu0 0
        %5261 = vperm.xlu0 %5260, %v5209
        %v5262 = vpop.permute.xlu0 %5261
        %5263 = vset.pattern.permute.xlu0 0
        %5264 = vperm.xlu0 %5263, %v5211
        %v5265 = vpop.permute.xlu0 %5264
        %5266 = vset.pattern.permute.xlu0 0
        %5267 = vperm.xlu0 %5266, %v5213
        %v5268 = vpop.permute.xlu0 %5267
        %5269 = vset.pattern.permute.xlu0 0
        %5270 = vperm.xlu0 %5269, %v5215
        %v5271 = vpop.permute.xlu0 %5270
        %5272 = vset.pattern.permute.xlu0 0
        %5273 = vperm.xlu0 %5272, %v5217
        %v5274 = vpop.permute.xlu0 %5273
        %5275 = vset.pattern.permute.xlu0 0
        %5276 = vperm.xlu0 %5275, %v5219
        %v5277 = vpop.permute.xlu0 %5276
        %5278 = vset.pattern.permute.xlu0 0
        %5279 = vperm.xlu0 %5278, %v5221
        %v5280 = vpop.permute.xlu0 %5279
        %5281 = vset.pattern.permute.xlu0 0
        %5282 = vperm.xlu0 %5281, %v5223
        %v5283 = vpop.permute.xlu0 %5282
        %5284 = vset.pattern.permute.xlu0 0
        %5285 = vperm.xlu0 %5284, %v5225
        %v5286 = vpop.permute.xlu0 %5285
        %5287 = vset.pattern.permute.xlu0 0
        %5288 = vperm.xlu0 %5287, %v5227
        %v5289 = vpop.permute.xlu0 %5288
        %5290 = vset.pattern.permute.xlu0 0
        %5291 = vperm.xlu0 %5290, %v5229
        %v5292 = vpop.permute.xlu0 %5291
        %5293 = vset.pattern.permute.xlu0 0
        %5294 = vperm.xlu0 %5293, %v5231
        %v5295 = vpop.permute.xlu0 %5294
        %v5296 = vperm.slane %v5250, %v1310
        %v5297 = vperm.slane %v5253, %v1312
        %v5298 = vsel %vm1314, %v5297, %v5296
        %v5299 = vperm.slane %v5256, %v1310
        %v5300 = vperm.slane %v5259, %v1312
        %v5301 = vsel %vm1314, %v5300, %v5299
        %v5302 = vperm.slane %v5262, %v1310
        %v5303 = vperm.slane %v5265, %v1312
        %v5304 = vsel %vm1314, %v5303, %v5302
        %v5305 = vperm.slane %v5268, %v1310
        %v5306 = vperm.slane %v5271, %v1312
        %v5307 = vsel %vm1314, %v5306, %v5305
        %v5308 = vperm.slane %v5274, %v1310
        %v5309 = vperm.slane %v5277, %v1312
        %v5310 = vsel %vm1314, %v5309, %v5308
        %v5311 = vperm.slane %v5280, %v1310
        %v5312 = vperm.slane %v5283, %v1312
        %v5313 = vsel %vm1314, %v5312, %v5311
        %v5314 = vperm.slane %v5286, %v1310
        %v5315 = vperm.slane %v5289, %v1312
        %v5316 = vsel %vm1314, %v5315, %v5314
        %v5317 = vperm.slane %v5292, %v1310
        %v5318 = vperm.slane %v5295, %v1312
        %v5319 = vsel %vm1314, %v5318, %v5317
        %v5320 = vsel %vm1337, %v5301, %v5298
        %v5321 = vsel %vm1339, %v5304, %v5320
        %v5322 = vsel %vm1341, %v5307, %v5321
        %v5323 = vsel %vm1343, %v5310, %v5322
        %v5324 = vsel %vm1345, %v5313, %v5323
        %v5325 = vsel %vm1347, %v5316, %v5324
        %v5326 = vsel %vm1349, %v5319, %v5325
        %v5328 = vsel %vm1352, %v5326, 0.0
        %5329 = vadd.xlane.f32.xlu0 %v5328
        %v5330 = vpop.xlane.xlu0 %5329
        %v5331 = vrcp.pop %v5330
        %v5333 = vperm.slane %v5331, 0
        %v5334 = vperm.slane %v5331, 1
        %v5335 = vperm.slane %v5331, 2
        %v5336 = vperm.slane %v5331, 3
        %v5337 = vperm.slane %v5331, 4
        %v5338 = vperm.slane %v5331, 5
        %v5339 = vperm.slane %v5331, 6
        %v5340 = vperm.slane %v5331, 7
        %v5349 = vmul.f32 %v5201, %v5333
        %v5350 = vmul.f32 %v5203, %v5333
        %v5351 = vmul.f32 %v5205, %v5334
        %v5352 = vmul.f32 %v5207, %v5334
        %v5353 = vmul.f32 %v5209, %v5335
        %v5354 = vmul.f32 %v5211, %v5335
        %v5355 = vmul.f32 %v5213, %v5336
        %v5356 = vmul.f32 %v5215, %v5336
        %v5357 = vmul.f32 %v5217, %v5337
        %v5358 = vmul.f32 %v5219, %v5337
        %v5359 = vmul.f32 %v5221, %v5338
        %v5360 = vmul.f32 %v5223, %v5338
        %v5361 = vmul.f32 %v5225, %v5339
        %v5362 = vmul.f32 %v5227, %v5339
        %v5363 = vmul.f32 %v5229, %v5340
        %v5364 = vmul.f32 %v5231, %v5340
        %5366 = vset.pattern.permute.xlu0 0
        %5367 = vperm.xlu0 %5366, %v5349
        %v5368 = vpop.permute.xlu0 %5367
        %5371 = vset.pattern.permute.xlu0 0
        %5372 = vperm.xlu0 %5371, %v5350
        %v5373 = vpop.permute.xlu0 %5372
        %5376 = vset.pattern.permute.xlu0 0
        %5377 = vperm.xlu0 %5376, %v5351
        %v5378 = vpop.permute.xlu0 %5377
        %5381 = vset.pattern.permute.xlu0 0
        %5382 = vperm.xlu0 %5381, %v5352
        %v5383 = vpop.permute.xlu0 %5382
        %5386 = vset.pattern.permute.xlu0 0
        %5387 = vperm.xlu0 %5386, %v5353
        %v5388 = vpop.permute.xlu0 %5387
        %5391 = vset.pattern.permute.xlu0 0
        %5392 = vperm.xlu0 %5391, %v5354
        %v5393 = vpop.permute.xlu0 %5392
        %5396 = vset.pattern.permute.xlu0 0
        %5397 = vperm.xlu0 %5396, %v5355
        %v5398 = vpop.permute.xlu0 %5397
        %5401 = vset.pattern.permute.xlu0 0
        %5402 = vperm.xlu0 %5401, %v5356
        %v5403 = vpop.permute.xlu0 %5402
        %5406 = vset.pattern.permute.xlu0 0
        %5407 = vperm.xlu0 %5406, %v5357
        %v5408 = vpop.permute.xlu0 %5407
        %5411 = vset.pattern.permute.xlu0 0
        %5412 = vperm.xlu0 %5411, %v5358
        %v5413 = vpop.permute.xlu0 %5412
        %5416 = vset.pattern.permute.xlu0 0
        %5417 = vperm.xlu0 %5416, %v5359
        %v5418 = vpop.permute.xlu0 %5417
        %5421 = vset.pattern.permute.xlu0 0
        %5422 = vperm.xlu0 %5421, %v5360
        %v5423 = vpop.permute.xlu0 %5422
        %5426 = vset.pattern.permute.xlu0 0
        %5427 = vperm.xlu0 %5426, %v5361
        %v5428 = vpop.permute.xlu0 %5427
        %5431 = vset.pattern.permute.xlu0 0
        %5432 = vperm.xlu0 %5431, %v5362
        %v5433 = vpop.permute.xlu0 %5432
        %5436 = vset.pattern.permute.xlu0 0
        %5437 = vperm.xlu0 %5436, %v5363
        %v5438 = vpop.permute.xlu0 %5437
        %5441 = vset.pattern.permute.xlu0 0
        %5442 = vperm.xlu0 %5441, %v5364
        %v5443 = vpop.permute.xlu0 %5442
        %v5445 = vmul.f32 %v5368, %v3836
        %v5446 = vmul.f32 %v5373, %v3838
        %v5447 = vmul.f32 %v5378, %v3841
        %v5448 = vmul.f32 %v5383, %v3843
        %v5449 = vmul.f32 %v5388, %v3846
        %v5450 = vmul.f32 %v5393, %v3848
        %v5451 = vmul.f32 %v5398, %v3851
        %v5452 = vmul.f32 %v5403, %v3853
        %v5453 = vmul.f32 %v5408, %v3856
        %v5454 = vmul.f32 %v5413, %v3858
        %v5455 = vmul.f32 %v5418, %v3861
        %v5456 = vmul.f32 %v5423, %v3863
        %v5457 = vmul.f32 %v5428, %v3866
        %v5458 = vmul.f32 %v5433, %v3868
        %v5459 = vmul.f32 %v5438, %v3871
        %v5460 = vmul.f32 %v5443, %v3873
        %v5461 = vsel %vm2806, %v5445, 0.0
        %v5462 = vsel %vm2806, %v5446, 0.0
        %v5463 = vadd.f32 %v5461, %v5462
        %v5464 = vrot.slane %v5463, 4
        %v5465 = vadd.f32 %v5463, %v5464
        %v5466 = vrot.slane %v5465, 2
        %v5467 = vadd.f32 %v5465, %v5466
        %v5468 = vrot.slane %v5467, 1
        %v5469 = vadd.f32 %v5467, %v5468
        %v5470 = vsel %vm2806, %v5447, 0.0
        %v5471 = vsel %vm2806, %v5448, 0.0
        %v5472 = vadd.f32 %v5470, %v5471
        %v5473 = vrot.slane %v5472, 4
        %v5474 = vadd.f32 %v5472, %v5473
        %v5475 = vrot.slane %v5474, 2
        %v5476 = vadd.f32 %v5474, %v5475
        %v5477 = vrot.slane %v5476, 1
        %v5478 = vadd.f32 %v5476, %v5477
        %v5479 = vsel %vm2806, %v5449, 0.0
        %v5480 = vsel %vm2806, %v5450, 0.0
        %v5481 = vadd.f32 %v5479, %v5480
        %v5482 = vrot.slane %v5481, 4
        %v5483 = vadd.f32 %v5481, %v5482
        %v5484 = vrot.slane %v5483, 2
        %v5485 = vadd.f32 %v5483, %v5484
        %v5486 = vrot.slane %v5485, 1
        %v5487 = vadd.f32 %v5485, %v5486
        %v5488 = vsel %vm2806, %v5451, 0.0
        %v5489 = vsel %vm2806, %v5452, 0.0
        %v5490 = vadd.f32 %v5488, %v5489
        %v5491 = vrot.slane %v5490, 4
        %v5492 = vadd.f32 %v5490, %v5491
        %v5493 = vrot.slane %v5492, 2
        %v5494 = vadd.f32 %v5492, %v5493
        %v5495 = vrot.slane %v5494, 1
        %v5496 = vadd.f32 %v5494, %v5495
        %v5497 = vsel %vm2806, %v5453, 0.0
        %v5498 = vsel %vm2806, %v5454, 0.0
        %v5499 = vadd.f32 %v5497, %v5498
        %v5500 = vrot.slane %v5499, 4
        %v5501 = vadd.f32 %v5499, %v5500
        %v5502 = vrot.slane %v5501, 2
        %v5503 = vadd.f32 %v5501, %v5502
        %v5504 = vrot.slane %v5503, 1
        %v5505 = vadd.f32 %v5503, %v5504
        %v5506 = vsel %vm2806, %v5455, 0.0
        %v5507 = vsel %vm2806, %v5456, 0.0
        %v5508 = vadd.f32 %v5506, %v5507
        %v5509 = vrot.slane %v5508, 4
        %v5510 = vadd.f32 %v5508, %v5509
        %v5511 = vrot.slane %v5510, 2
        %v5512 = vadd.f32 %v5510, %v5511
        %v5513 = vrot.slane %v5512, 1
        %v5514 = vadd.f32 %v5512, %v5513
        %v5515 = vsel %vm2806, %v5457, 0.0
        %v5516 = vsel %vm2806, %v5458, 0.0
        %v5517 = vadd.f32 %v5515, %v5516
        %v5518 = vrot.slane %v5517, 4
        %v5519 = vadd.f32 %v5517, %v5518
        %v5520 = vrot.slane %v5519, 2
        %v5521 = vadd.f32 %v5519, %v5520
        %v5522 = vrot.slane %v5521, 1
        %v5523 = vadd.f32 %v5521, %v5522
        %v5524 = vsel %vm2806, %v5459, 0.0
        %v5525 = vsel %vm2806, %v5460, 0.0
        %v5526 = vadd.f32 %v5524, %v5525
        %v5527 = vrot.slane %v5526, 4
        %v5528 = vadd.f32 %v5526, %v5527
        %v5529 = vrot.slane %v5528, 2
        %v5530 = vadd.f32 %v5528, %v5529
        %v5531 = vrot.slane %v5530, 1
        %v5532 = vadd.f32 %v5530, %v5531
        %v5533 = vpack.c.bf16 %v5469, %v5469
        %v5534 = vpack.c.bf16 %v5478, %v5478
        %v5535 = vpack.c.bf16 %v5487, %v5487
        %v5536 = vpack.c.bf16 %v5496, %v5496
        %v5537 = vpack.c.bf16 %v5505, %v5505
        %v5538 = vpack.c.bf16 %v5514, %v5514
        %v5539 = vpack.c.bf16 %v5523, %v5523
        %v5540 = vpack.c.bf16 %v5532, %v5532
        %v5549 = vunpack.c.l.b16 %v5533
        %v5550 = vunpack.c.l.b16 %v5534
        %v5551 = vunpack.c.l.b16 %v5535
        %v5552 = vunpack.c.l.b16 %v5536
        %v5553 = vunpack.c.l.b16 %v5537
        %v5554 = vunpack.c.l.b16 %v5538
        %v5555 = vunpack.c.l.b16 %v5539
        %v5556 = vunpack.c.l.b16 %v5540
        %v5557 = vsel %vm1337, %v5550, %v5549
        %v5558 = vsel %vm1339, %v5551, %v5557
        %v5559 = vsel %vm1341, %v5552, %v5558
        %v5560 = vsel %vm1343, %v5553, %v5559
        %v5561 = vsel %vm1345, %v5554, %v5560
        %v5562 = vsel %vm1347, %v5555, %v5561
        %v5563 = vsel %vm1349, %v5556, %v5562
        %v5564 = vpack.c.b16 %v5563, %v5563
        %5565 = vrot.lane.b32.xlu0 %v5564, 80
        %v5566 = vpop.permute.xlu0 %5565
        %v5568 = vsel %vm1244, %v5566, 0
        %v5571 = vsel %vm1760, %v3664, 0
        %5573 = vmatpush.bf16.msra.mxu0 0
        %5574 = vmatpush.bf16.msra.mxu0 0
        %5575 = vmatpush.bf16.msra.mxu0 0
        %5576 = vmatpush.bf16.msra.mxu0 0
        %5577 = vmatpush.bf16.msra.mxu0 0
        %5578 = vmatpush.bf16.msra.mxu0 0
        %5579 = vmatpush.bf16.msra.mxu0 0
        %5580 = vmatpush.bf16.msra.mxu0 %v5571
        %5581 = vmatmul.bf16.gmra.mxu0 %v5568
        %v5582 = vpop.f32.mrf.mxu0
        %v5583 = vadd.f32 0.0, %v5582
        %v5584 = vpop.f32.mrf.mxu0
        %5585 = vdwg.mxu0
        %v5586 = vadd.f32 %v5019, %v5583
        %5587 = vrot.lane.b32.xlu0 %v3899, 104
        %v5588 = vpop.permute.xlu0 %5587
        %5589 = vrot.lane.b32.xlu0 %v3900, 104
        %v5590 = vpop.permute.xlu0 %5589
        %5591 = vrot.lane.b32.xlu0 %v3901, 104
        %v5592 = vpop.permute.xlu0 %5591
        %5593 = vrot.lane.b32.xlu0 %v3902, 104
        %v5594 = vpop.permute.xlu0 %5593
        %5595 = vrot.lane.b32.xlu0 %v3903, 104
        %v5596 = vpop.permute.xlu0 %5595
        %5597 = vrot.lane.b32.xlu0 %v3904, 104
        %v5598 = vpop.permute.xlu0 %5597
        %5599 = vrot.lane.b32.xlu0 %v3905, 104
        %v5600 = vpop.permute.xlu0 %5599
        %5601 = vrot.lane.b32.xlu0 %v3906, 104
        %v5602 = vpop.permute.xlu0 %5601
        %5603 = vrot.lane.b32.xlu0 %v3907, 104
        %v5604 = vpop.permute.xlu0 %5603
        %5605 = vrot.lane.b32.xlu0 %v3908, 104
        %v5606 = vpop.permute.xlu0 %5605
        %5607 = vrot.lane.b32.xlu0 %v3909, 104
        %v5608 = vpop.permute.xlu0 %5607
        %5609 = vrot.lane.b32.xlu0 %v3910, 104
        %v5610 = vpop.permute.xlu0 %5609
        %5611 = vrot.lane.b32.xlu0 %v3911, 104
        %v5612 = vpop.permute.xlu0 %5611
        %5613 = vrot.lane.b32.xlu0 %v3912, 104
        %v5614 = vpop.permute.xlu0 %5613
        %5615 = vrot.lane.b32.xlu0 %v3913, 104
        %v5616 = vpop.permute.xlu0 %5615
        %5617 = vrot.lane.b32.xlu0 %v3914, 104
        %v5618 = vpop.permute.xlu0 %5617
        %v5635 = vsel %vm1244, %v5588, 0.0
        %5636 = vadd.xlane.f32.xlu0 %v5635
        %v5637 = vpop.xlane.xlu0 %5636
        %v5638 = vsel %vm1244, %v5590, 0.0
        %5639 = vadd.xlane.f32.xlu0 %v5638
        %v5640 = vpop.xlane.xlu0 %5639
        %v5641 = vsel %vm1244, %v5592, 0.0
        %5642 = vadd.xlane.f32.xlu0 %v5641
        %v5643 = vpop.xlane.xlu0 %5642
        %v5644 = vsel %vm1244, %v5594, 0.0
        %5645 = vadd.xlane.f32.xlu0 %v5644
        %v5646 = vpop.xlane.xlu0 %5645
        %v5647 = vsel %vm1244, %v5596, 0.0
        %5648 = vadd.xlane.f32.xlu0 %v5647
        %v5649 = vpop.xlane.xlu0 %5648
        %v5650 = vsel %vm1244, %v5598, 0.0
        %5651 = vadd.xlane.f32.xlu0 %v5650
        %v5652 = vpop.xlane.xlu0 %5651
        %v5653 = vsel %vm1244, %v5600, 0.0
        %5654 = vadd.xlane.f32.xlu0 %v5653
        %v5655 = vpop.xlane.xlu0 %5654
        %v5656 = vsel %vm1244, %v5602, 0.0
        %5657 = vadd.xlane.f32.xlu0 %v5656
        %v5658 = vpop.xlane.xlu0 %5657
        %v5659 = vsel %vm1244, %v5604, 0.0
        %5660 = vadd.xlane.f32.xlu0 %v5659
        %v5661 = vpop.xlane.xlu0 %5660
        %v5662 = vsel %vm1244, %v5606, 0.0
        %5663 = vadd.xlane.f32.xlu0 %v5662
        %v5664 = vpop.xlane.xlu0 %5663
        %v5665 = vsel %vm1244, %v5608, 0.0
        %5666 = vadd.xlane.f32.xlu0 %v5665
        %v5667 = vpop.xlane.xlu0 %5666
        %v5668 = vsel %vm1244, %v5610, 0.0
        %5669 = vadd.xlane.f32.xlu0 %v5668
        %v5670 = vpop.xlane.xlu0 %5669
        %v5671 = vsel %vm1244, %v5612, 0.0
        %5672 = vadd.xlane.f32.xlu0 %v5671
        %v5673 = vpop.xlane.xlu0 %5672
        %v5674 = vsel %vm1244, %v5614, 0.0
        %5675 = vadd.xlane.f32.xlu0 %v5674
        %v5676 = vpop.xlane.xlu0 %5675
        %v5677 = vsel %vm1244, %v5616, 0.0
        %5678 = vadd.xlane.f32.xlu0 %v5677
        %v5679 = vpop.xlane.xlu0 %5678
        %v5680 = vsel %vm1244, %v5618, 0.0
        %5681 = vadd.xlane.f32.xlu0 %v5680
        %v5682 = vpop.xlane.xlu0 %5681
        %v5699 = vperm.slane %v5637, %v1310
        %v5700 = vperm.slane %v5640, %v1312
        %v5701 = vsel %vm1314, %v5700, %v5699
        %v5702 = vperm.slane %v5643, %v1310
        %v5703 = vperm.slane %v5646, %v1312
        %v5704 = vsel %vm1314, %v5703, %v5702
        %v5705 = vperm.slane %v5649, %v1310
        %v5706 = vperm.slane %v5652, %v1312
        %v5707 = vsel %vm1314, %v5706, %v5705
        %v5708 = vperm.slane %v5655, %v1310
        %v5709 = vperm.slane %v5658, %v1312
        %v5710 = vsel %vm1314, %v5709, %v5708
        %v5711 = vperm.slane %v5661, %v1310
        %v5712 = vperm.slane %v5664, %v1312
        %v5713 = vsel %vm1314, %v5712, %v5711
        %v5714 = vperm.slane %v5667, %v1310
        %v5715 = vperm.slane %v5670, %v1312
        %v5716 = vsel %vm1314, %v5715, %v5714
        %v5717 = vperm.slane %v5673, %v1310
        %v5718 = vperm.slane %v5676, %v1312
        %v5719 = vsel %vm1314, %v5718, %v5717
        %v5720 = vperm.slane %v5679, %v1310
        %v5721 = vperm.slane %v5682, %v1312
        %v5722 = vsel %vm1314, %v5721, %v5720
        %v5723 = vsel %vm1337, %v5704, %v5701
        %v5724 = vsel %vm1339, %v5707, %v5723
        %v5725 = vsel %vm1341, %v5710, %v5724
        %v5726 = vsel %vm1343, %v5713, %v5725
        %v5727 = vsel %vm1345, %v5716, %v5726
        %v5728 = vsel %vm1347, %v5719, %v5727
        %v5729 = vsel %vm1349, %v5722, %v5728
        %v5731 = vsel %vm1352, %v5729, -inf
        %5732 = vmax.xlane.f32.xlu0 %v5731
        %v5733 = vpop.xlane.xlu0 %5732
        %v5735 = vperm.slane %v5733, 0
        %v5736 = vperm.slane %v5733, 1
        %v5737 = vperm.slane %v5733, 2
        %v5738 = vperm.slane %v5733, 3
        %v5739 = vperm.slane %v5733, 4
        %v5740 = vperm.slane %v5733, 5
        %v5741 = vperm.slane %v5733, 6
        %v5742 = vperm.slane %v5733, 7
        %v5751 = vsub.f32 %v5637, %v5735
        %v5752 = vsub.f32 %v5640, %v5735
        %v5753 = vsub.f32 %v5643, %v5736
        %v5754 = vsub.f32 %v5646, %v5736
        %v5755 = vsub.f32 %v5649, %v5737
        %v5756 = vsub.f32 %v5652, %v5737
        %v5757 = vsub.f32 %v5655, %v5738
        %v5758 = vsub.f32 %v5658, %v5738
        %v5759 = vsub.f32 %v5661, %v5739
        %v5760 = vsub.f32 %v5664, %v5739
        %v5761 = vsub.f32 %v5667, %v5740
        %v5762 = vsub.f32 %v5670, %v5740
        %v5763 = vsub.f32 %v5673, %v5741
        %v5764 = vsub.f32 %v5676, %v5741
        %v5765 = vsub.f32 %v5679, %v5742
        %v5766 = vsub.f32 %v5682, %v5742
        %v5767 = vmul.f32 %v5751, 1.442695
        %v5768 = vpow.pop %v5767
        %v5769 = vmul.f32 %v5752, 1.442695
        %v5770 = vpow.pop %v5769
        %v5771 = vmul.f32 %v5753, 1.442695
        %v5772 = vpow.pop %v5771
        %v5773 = vmul.f32 %v5754, 1.442695
        %v5774 = vpow.pop %v5773
        %v5775 = vmul.f32 %v5755, 1.442695
        %v5776 = vpow.pop %v5775
        %v5777 = vmul.f32 %v5756, 1.442695
        %v5778 = vpow.pop %v5777
        %v5779 = vmul.f32 %v5757, 1.442695
        %v5780 = vpow.pop %v5779
        %v5781 = vmul.f32 %v5758, 1.442695
        %v5782 = vpow.pop %v5781
        %v5783 = vmul.f32 %v5759, 1.442695
        %v5784 = vpow.pop %v5783
        %v5785 = vmul.f32 %v5760, 1.442695
        %v5786 = vpow.pop %v5785
        %v5787 = vmul.f32 %v5761, 1.442695
        %v5788 = vpow.pop %v5787
        %v5789 = vmul.f32 %v5762, 1.442695
        %v5790 = vpow.pop %v5789
        %v5791 = vmul.f32 %v5763, 1.442695
        %v5792 = vpow.pop %v5791
        %v5793 = vmul.f32 %v5764, 1.442695
        %v5794 = vpow.pop %v5793
        %v5795 = vmul.f32 %v5765, 1.442695
        %v5796 = vpow.pop %v5795
        %v5797 = vmul.f32 %v5766, 1.442695
        %v5798 = vpow.pop %v5797
        %5815 = vset.pattern.permute.xlu0 0
        %5816 = vperm.xlu0 %5815, %v5768
        %v5817 = vpop.permute.xlu0 %5816
        %5818 = vset.pattern.permute.xlu0 0
        %5819 = vperm.xlu0 %5818, %v5770
        %v5820 = vpop.permute.xlu0 %5819
        %5821 = vset.pattern.permute.xlu0 0
        %5822 = vperm.xlu0 %5821, %v5772
        %v5823 = vpop.permute.xlu0 %5822
        %5824 = vset.pattern.permute.xlu0 0
        %5825 = vperm.xlu0 %5824, %v5774
        %v5826 = vpop.permute.xlu0 %5825
        %5827 = vset.pattern.permute.xlu0 0
        %5828 = vperm.xlu0 %5827, %v5776
        %v5829 = vpop.permute.xlu0 %5828
        %5830 = vset.pattern.permute.xlu0 0
        %5831 = vperm.xlu0 %5830, %v5778
        %v5832 = vpop.permute.xlu0 %5831
        %5833 = vset.pattern.permute.xlu0 0
        %5834 = vperm.xlu0 %5833, %v5780
        %v5835 = vpop.permute.xlu0 %5834
        %5836 = vset.pattern.permute.xlu0 0
        %5837 = vperm.xlu0 %5836, %v5782
        %v5838 = vpop.permute.xlu0 %5837
        %5839 = vset.pattern.permute.xlu0 0
        %5840 = vperm.xlu0 %5839, %v5784
        %v5841 = vpop.permute.xlu0 %5840
        %5842 = vset.pattern.permute.xlu0 0
        %5843 = vperm.xlu0 %5842, %v5786
        %v5844 = vpop.permute.xlu0 %5843
        %5845 = vset.pattern.permute.xlu0 0
        %5846 = vperm.xlu0 %5845, %v5788
        %v5847 = vpop.permute.xlu0 %5846
        %5848 = vset.pattern.permute.xlu0 0
        %5849 = vperm.xlu0 %5848, %v5790
        %v5850 = vpop.permute.xlu0 %5849
        %5851 = vset.pattern.permute.xlu0 0
        %5852 = vperm.xlu0 %5851, %v5792
        %v5853 = vpop.permute.xlu0 %5852
        %5854 = vset.pattern.permute.xlu0 0
        %5855 = vperm.xlu0 %5854, %v5794
        %v5856 = vpop.permute.xlu0 %5855
        %5857 = vset.pattern.permute.xlu0 0
        %5858 = vperm.xlu0 %5857, %v5796
        %v5859 = vpop.permute.xlu0 %5858
        %5860 = vset.pattern.permute.xlu0 0
        %5861 = vperm.xlu0 %5860, %v5798
        %v5862 = vpop.permute.xlu0 %5861
        %v5863 = vperm.slane %v5817, %v1310
        %v5864 = vperm.slane %v5820, %v1312
        %v5865 = vsel %vm1314, %v5864, %v5863
        %v5866 = vperm.slane %v5823, %v1310
        %v5867 = vperm.slane %v5826, %v1312
        %v5868 = vsel %vm1314, %v5867, %v5866
        %v5869 = vperm.slane %v5829, %v1310
        %v5870 = vperm.slane %v5832, %v1312
        %v5871 = vsel %vm1314, %v5870, %v5869
        %v5872 = vperm.slane %v5835, %v1310
        %v5873 = vperm.slane %v5838, %v1312
        %v5874 = vsel %vm1314, %v5873, %v5872
        %v5875 = vperm.slane %v5841, %v1310
        %v5876 = vperm.slane %v5844, %v1312
        %v5877 = vsel %vm1314, %v5876, %v5875
        %v5878 = vperm.slane %v5847, %v1310
        %v5879 = vperm.slane %v5850, %v1312
        %v5880 = vsel %vm1314, %v5879, %v5878
        %v5881 = vperm.slane %v5853, %v1310
        %v5882 = vperm.slane %v5856, %v1312
        %v5883 = vsel %vm1314, %v5882, %v5881
        %v5884 = vperm.slane %v5859, %v1310
        %v5885 = vperm.slane %v5862, %v1312
        %v5886 = vsel %vm1314, %v5885, %v5884
        %v5887 = vsel %vm1337, %v5868, %v5865
        %v5888 = vsel %vm1339, %v5871, %v5887
        %v5889 = vsel %vm1341, %v5874, %v5888
        %v5890 = vsel %vm1343, %v5877, %v5889
        %v5891 = vsel %vm1345, %v5880, %v5890
        %v5892 = vsel %vm1347, %v5883, %v5891
        %v5893 = vsel %vm1349, %v5886, %v5892
        %v5895 = vsel %vm1352, %v5893, 0.0
        %5896 = vadd.xlane.f32.xlu0 %v5895
        %v5897 = vpop.xlane.xlu0 %5896
        %v5898 = vrcp.pop %v5897
        %v5900 = vperm.slane %v5898, 0
        %v5901 = vperm.slane %v5898, 1
        %v5902 = vperm.slane %v5898, 2
        %v5903 = vperm.slane %v5898, 3
        %v5904 = vperm.slane %v5898, 4
        %v5905 = vperm.slane %v5898, 5
        %v5906 = vperm.slane %v5898, 6
        %v5907 = vperm.slane %v5898, 7
        %v5916 = vmul.f32 %v5768, %v5900
        %v5917 = vmul.f32 %v5770, %v5900
        %v5918 = vmul.f32 %v5772, %v5901
        %v5919 = vmul.f32 %v5774, %v5901
        %v5920 = vmul.f32 %v5776, %v5902
        %v5921 = vmul.f32 %v5778, %v5902
        %v5922 = vmul.f32 %v5780, %v5903
        %v5923 = vmul.f32 %v5782, %v5903
        %v5924 = vmul.f32 %v5784, %v5904
        %v5925 = vmul.f32 %v5786, %v5904
        %v5926 = vmul.f32 %v5788, %v5905
        %v5927 = vmul.f32 %v5790, %v5905
        %v5928 = vmul.f32 %v5792, %v5906
        %v5929 = vmul.f32 %v5794, %v5906
        %v5930 = vmul.f32 %v5796, %v5907
        %v5931 = vmul.f32 %v5798, %v5907
        %5933 = vset.pattern.permute.xlu0 0
        %5934 = vperm.xlu0 %5933, %v5916
        %v5935 = vpop.permute.xlu0 %5934
        %5938 = vset.pattern.permute.xlu0 0
        %5939 = vperm.xlu0 %5938, %v5917
        %v5940 = vpop.permute.xlu0 %5939
        %5943 = vset.pattern.permute.xlu0 0
        %5944 = vperm.xlu0 %5943, %v5918
        %v5945 = vpop.permute.xlu0 %5944
        %5948 = vset.pattern.permute.xlu0 0
        %5949 = vperm.xlu0 %5948, %v5919
        %v5950 = vpop.permute.xlu0 %5949
        %5953 = vset.pattern.permute.xlu0 0
        %5954 = vperm.xlu0 %5953, %v5920
        %v5955 = vpop.permute.xlu0 %5954
        %5958 = vset.pattern.permute.xlu0 0
        %5959 = vperm.xlu0 %5958, %v5921
        %v5960 = vpop.permute.xlu0 %5959
        %5963 = vset.pattern.permute.xlu0 0
        %5964 = vperm.xlu0 %5963, %v5922
        %v5965 = vpop.permute.xlu0 %5964
        %5968 = vset.pattern.permute.xlu0 0
        %5969 = vperm.xlu0 %5968, %v5923
        %v5970 = vpop.permute.xlu0 %5969
        %5973 = vset.pattern.permute.xlu0 0
        %5974 = vperm.xlu0 %5973, %v5924
        %v5975 = vpop.permute.xlu0 %5974
        %5978 = vset.pattern.permute.xlu0 0
        %5979 = vperm.xlu0 %5978, %v5925
        %v5980 = vpop.permute.xlu0 %5979
        %5983 = vset.pattern.permute.xlu0 0
        %5984 = vperm.xlu0 %5983, %v5926
        %v5985 = vpop.permute.xlu0 %5984
        %5988 = vset.pattern.permute.xlu0 0
        %5989 = vperm.xlu0 %5988, %v5927
        %v5990 = vpop.permute.xlu0 %5989
        %5993 = vset.pattern.permute.xlu0 0
        %5994 = vperm.xlu0 %5993, %v5928
        %v5995 = vpop.permute.xlu0 %5994
        %5998 = vset.pattern.permute.xlu0 0
        %5999 = vperm.xlu0 %5998, %v5929
        %v6000 = vpop.permute.xlu0 %5999
        %6003 = vset.pattern.permute.xlu0 0
        %6004 = vperm.xlu0 %6003, %v5930
        %v6005 = vpop.permute.xlu0 %6004
        %6008 = vset.pattern.permute.xlu0 0
        %6009 = vperm.xlu0 %6008, %v5931
        %v6010 = vpop.permute.xlu0 %6009
        %v6012 = vmul.f32 %v5935, %v3836
        %v6013 = vmul.f32 %v5940, %v3838
        %v6014 = vmul.f32 %v5945, %v3841
        %v6015 = vmul.f32 %v5950, %v3843
        %v6016 = vmul.f32 %v5955, %v3846
        %v6017 = vmul.f32 %v5960, %v3848
        %v6018 = vmul.f32 %v5965, %v3851
        %v6019 = vmul.f32 %v5970, %v3853
        %v6020 = vmul.f32 %v5975, %v3856
        %v6021 = vmul.f32 %v5980, %v3858
        %v6022 = vmul.f32 %v5985, %v3861
        %v6023 = vmul.f32 %v5990, %v3863
        %v6024 = vmul.f32 %v5995, %v3866
        %v6025 = vmul.f32 %v6000, %v3868
        %v6026 = vmul.f32 %v6005, %v3871
        %v6027 = vmul.f32 %v6010, %v3873
        %v6028 = vsel %vm3374, %v6012, 0.0
        %v6029 = vsel %vm3374, %v6013, 0.0
        %v6030 = vadd.f32 %v6028, %v6029
        %v6031 = vrot.slane %v6030, 4
        %v6032 = vadd.f32 %v6030, %v6031
        %v6033 = vrot.slane %v6032, 2
        %v6034 = vadd.f32 %v6032, %v6033
        %v6035 = vrot.slane %v6034, 1
        %v6036 = vadd.f32 %v6034, %v6035
        %v6037 = vsel %vm3374, %v6014, 0.0
        %v6038 = vsel %vm3374, %v6015, 0.0
        %v6039 = vadd.f32 %v6037, %v6038
        %v6040 = vrot.slane %v6039, 4
        %v6041 = vadd.f32 %v6039, %v6040
        %v6042 = vrot.slane %v6041, 2
        %v6043 = vadd.f32 %v6041, %v6042
        %v6044 = vrot.slane %v6043, 1
        %v6045 = vadd.f32 %v6043, %v6044
        %v6046 = vsel %vm3374, %v6016, 0.0
        %v6047 = vsel %vm3374, %v6017, 0.0
        %v6048 = vadd.f32 %v6046, %v6047
        %v6049 = vrot.slane %v6048, 4
        %v6050 = vadd.f32 %v6048, %v6049
        %v6051 = vrot.slane %v6050, 2
        %v6052 = vadd.f32 %v6050, %v6051
        %v6053 = vrot.slane %v6052, 1
        %v6054 = vadd.f32 %v6052, %v6053
        %v6055 = vsel %vm3374, %v6018, 0.0
        %v6056 = vsel %vm3374, %v6019, 0.0
        %v6057 = vadd.f32 %v6055, %v6056
        %v6058 = vrot.slane %v6057, 4
        %v6059 = vadd.f32 %v6057, %v6058
        %v6060 = vrot.slane %v6059, 2
        %v6061 = vadd.f32 %v6059, %v6060
        %v6062 = vrot.slane %v6061, 1
        %v6063 = vadd.f32 %v6061, %v6062
        %v6064 = vsel %vm3374, %v6020, 0.0
        %v6065 = vsel %vm3374, %v6021, 0.0
        %v6066 = vadd.f32 %v6064, %v6065
        %v6067 = vrot.slane %v6066, 4
        %v6068 = vadd.f32 %v6066, %v6067
        %v6069 = vrot.slane %v6068, 2
        %v6070 = vadd.f32 %v6068, %v6069
        %v6071 = vrot.slane %v6070, 1
        %v6072 = vadd.f32 %v6070, %v6071
        %v6073 = vsel %vm3374, %v6022, 0.0
        %v6074 = vsel %vm3374, %v6023, 0.0
        %v6075 = vadd.f32 %v6073, %v6074
        %v6076 = vrot.slane %v6075, 4
        %v6077 = vadd.f32 %v6075, %v6076
        %v6078 = vrot.slane %v6077, 2
        %v6079 = vadd.f32 %v6077, %v6078
        %v6080 = vrot.slane %v6079, 1
        %v6081 = vadd.f32 %v6079, %v6080
        %v6082 = vsel %vm3374, %v6024, 0.0
        %v6083 = vsel %vm3374, %v6025, 0.0
        %v6084 = vadd.f32 %v6082, %v6083
        %v6085 = vrot.slane %v6084, 4
        %v6086 = vadd.f32 %v6084, %v6085
        %v6087 = vrot.slane %v6086, 2
        %v6088 = vadd.f32 %v6086, %v6087
        %v6089 = vrot.slane %v6088, 1
        %v6090 = vadd.f32 %v6088, %v6089
        %v6091 = vsel %vm3374, %v6026, 0.0
        %v6092 = vsel %vm3374, %v6027, 0.0
        %v6093 = vadd.f32 %v6091, %v6092
        %v6094 = vrot.slane %v6093, 4
        %v6095 = vadd.f32 %v6093, %v6094
        %v6096 = vrot.slane %v6095, 2
        %v6097 = vadd.f32 %v6095, %v6096
        %v6098 = vrot.slane %v6097, 1
        %v6099 = vadd.f32 %v6097, %v6098
        %v6100 = vpack.c.bf16 %v6036, %v6036
        %v6101 = vpack.c.bf16 %v6045, %v6045
        %v6102 = vpack.c.bf16 %v6054, %v6054
        %v6103 = vpack.c.bf16 %v6063, %v6063
        %v6104 = vpack.c.bf16 %v6072, %v6072
        %v6105 = vpack.c.bf16 %v6081, %v6081
        %v6106 = vpack.c.bf16 %v6090, %v6090
        %v6107 = vpack.c.bf16 %v6099, %v6099
        %v6116 = vunpack.c.l.b16 %v6100
        %v6117 = vunpack.c.l.b16 %v6101
        %v6118 = vunpack.c.l.b16 %v6102
        %v6119 = vunpack.c.l.b16 %v6103
        %v6120 = vunpack.c.l.b16 %v6104
        %v6121 = vunpack.c.l.b16 %v6105
        %v6122 = vunpack.c.l.b16 %v6106
        %v6123 = vunpack.c.l.b16 %v6107
        %v6124 = vsel %vm1337, %v6117, %v6116
        %v6125 = vsel %vm1339, %v6118, %v6124
        %v6126 = vsel %vm1341, %v6119, %v6125
        %v6127 = vsel %vm1343, %v6120, %v6126
        %v6128 = vsel %vm1345, %v6121, %v6127
        %v6129 = vsel %vm1347, %v6122, %v6128
        %v6130 = vsel %vm1349, %v6123, %v6129
        %v6131 = vpack.c.b16 %v6130, %v6130
        %6132 = vrot.lane.b32.xlu0 %v6131, 72
        %v6133 = vpop.permute.xlu0 %6132
        %v6135 = vsel %vm1244, %v6133, 0
        %v6138 = vsel %vm1760, %v3665, 0
        %6140 = vmatpush.bf16.msra.mxu0 0
        %6141 = vmatpush.bf16.msra.mxu0 0
        %6142 = vmatpush.bf16.msra.mxu0 0
        %6143 = vmatpush.bf16.msra.mxu0 0
        %6144 = vmatpush.bf16.msra.mxu0 0
        %6145 = vmatpush.bf16.msra.mxu0 0
        %6146 = vmatpush.bf16.msra.mxu0 0
        %6147 = vmatpush.bf16.msra.mxu0 %v6138
        %6148 = vmatmul.bf16.gmra.mxu0 %v6135
        %v6149 = vpop.f32.mrf.mxu0
        %v6150 = vadd.f32 0.0, %v6149
        %v6151 = vpop.f32.mrf.mxu0
        %6152 = vdwg.mxu0
        %v6153 = vadd.f32 %v5586, %v6150
        %v6154 = vperm.slane %v4215, %v1310
        %v6155 = vperm.slane %v4220, %v1312
        %v6156 = vsel %vm1314, %v6155, %v6154
        %v6157 = vperm.slane %v4225, %v1310
        %v6158 = vperm.slane %v4230, %v1312
        %v6159 = vsel %vm1314, %v6158, %v6157
        %v6160 = vperm.slane %v4235, %v1310
        %v6161 = vperm.slane %v4240, %v1312
        %v6162 = vsel %vm1314, %v6161, %v6160
        %v6163 = vperm.slane %v4245, %v1310
        %v6164 = vperm.slane %v4250, %v1312
        %v6165 = vsel %vm1314, %v6164, %v6163
        %v6166 = vperm.slane %v4255, %v1310
        %v6167 = vperm.slane %v4260, %v1312
        %v6168 = vsel %vm1314, %v6167, %v6166
        %v6169 = vperm.slane %v4265, %v1310
        %v6170 = vperm.slane %v4270, %v1312
        %v6171 = vsel %vm1314, %v6170, %v6169
        %v6172 = vperm.slane %v4275, %v1310
        %v6173 = vperm.slane %v4280, %v1312
        %v6174 = vsel %vm1314, %v6173, %v6172
        %v6175 = vperm.slane %v4285, %v1310
        %v6176 = vperm.slane %v4290, %v1312
        %v6177 = vsel %vm1314, %v6176, %v6175
        %v6186 = vperm.slane %v4801, %v1310
        %v6187 = vperm.slane %v4806, %v1312
        %v6188 = vsel %vm1314, %v6187, %v6186
        %v6189 = vperm.slane %v4811, %v1310
        %v6190 = vperm.slane %v4816, %v1312
        %v6191 = vsel %vm1314, %v6190, %v6189
        %v6192 = vperm.slane %v4821, %v1310
        %v6193 = vperm.slane %v4826, %v1312
        %v6194 = vsel %vm1314, %v6193, %v6192
        %v6195 = vperm.slane %v4831, %v1310
        %v6196 = vperm.slane %v4836, %v1312
        %v6197 = vsel %vm1314, %v6196, %v6195
        %v6198 = vperm.slane %v4841, %v1310
        %v6199 = vperm.slane %v4846, %v1312
        %v6200 = vsel %vm1314, %v6199, %v6198
        %v6201 = vperm.slane %v4851, %v1310
        %v6202 = vperm.slane %v4856, %v1312
        %v6203 = vsel %vm1314, %v6202, %v6201
        %v6204 = vperm.slane %v4861, %v1310
        %v6205 = vperm.slane %v4866, %v1312
        %v6206 = vsel %vm1314, %v6205, %v6204
        %v6207 = vperm.slane %v4871, %v1310
        %v6208 = vperm.slane %v4876, %v1312
        %v6209 = vsel %vm1314, %v6208, %v6207
        %v6218 = vperm.slane %v5368, %v1310
        %v6219 = vperm.slane %v5373, %v1312
        %v6220 = vsel %vm1314, %v6219, %v6218
        %v6221 = vperm.slane %v5378, %v1310
        %v6222 = vperm.slane %v5383, %v1312
        %v6223 = vsel %vm1314, %v6222, %v6221
        %v6224 = vperm.slane %v5388, %v1310
        %v6225 = vperm.slane %v5393, %v1312
        %v6226 = vsel %vm1314, %v6225, %v6224
        %v6227 = vperm.slane %v5398, %v1310
        %v6228 = vperm.slane %v5403, %v1312
        %v6229 = vsel %vm1314, %v6228, %v6227
        %v6230 = vperm.slane %v5408, %v1310
        %v6231 = vperm.slane %v5413, %v1312
        %v6232 = vsel %vm1314, %v6231, %v6230
        %v6233 = vperm.slane %v5418, %v1310
        %v6234 = vperm.slane %v5423, %v1312
        %v6235 = vsel %vm1314, %v6234, %v6233
        %v6236 = vperm.slane %v5428, %v1310
        %v6237 = vperm.slane %v5433, %v1312
        %v6238 = vsel %vm1314, %v6237, %v6236
        %v6239 = vperm.slane %v5438, %v1310
        %v6240 = vperm.slane %v5443, %v1312
        %v6241 = vsel %vm1314, %v6240, %v6239
        %v6250 = vperm.slane %v5935, %v1310
        %v6251 = vperm.slane %v5940, %v1312
        %v6252 = vsel %vm1314, %v6251, %v6250
        %v6253 = vperm.slane %v5945, %v1310
        %v6254 = vperm.slane %v5950, %v1312
        %v6255 = vsel %vm1314, %v6254, %v6253
        %v6256 = vperm.slane %v5955, %v1310
        %v6257 = vperm.slane %v5960, %v1312
        %v6258 = vsel %vm1314, %v6257, %v6256
        %v6259 = vperm.slane %v5965, %v1310
        %v6260 = vperm.slane %v5970, %v1312
        %v6261 = vsel %vm1314, %v6260, %v6259
        %v6262 = vperm.slane %v5975, %v1310
        %v6263 = vperm.slane %v5980, %v1312
        %v6264 = vsel %vm1314, %v6263, %v6262
        %v6265 = vperm.slane %v5985, %v1310
        %v6266 = vperm.slane %v5990, %v1312
        %v6267 = vsel %vm1314, %v6266, %v6265
        %v6268 = vperm.slane %v5995, %v1310
        %v6269 = vperm.slane %v6000, %v1312
        %v6270 = vsel %vm1314, %v6269, %v6268
        %v6271 = vperm.slane %v6005, %v1310
        %v6272 = vperm.slane %v6010, %v1312
        %v6273 = vsel %vm1314, %v6272, %v6271
        %vm6282 = vcmask 1040384
        %v6283 = vsel %vm6282, %v6156, %v6188
        %v6284 = vsel %vm6282, %v6159, %v6191
        %v6285 = vsel %vm6282, %v6162, %v6194
        %v6286 = vsel %vm6282, %v6165, %v6197
        %v6287 = vsel %vm6282, %v6168, %v6200
        %v6288 = vsel %vm6282, %v6171, %v6203
        %v6289 = vsel %vm6282, %v6174, %v6206
        %v6290 = vsel %vm6282, %v6177, %v6209
        %vm6291 = vcmask 1041408
        %v6292 = vsel %vm6291, %v6283, %v6220
        %v6293 = vsel %vm6291, %v6284, %v6223
        %v6294 = vsel %vm6291, %v6285, %v6226
        %v6295 = vsel %vm6291, %v6286, %v6229
        %v6296 = vsel %vm6291, %v6287, %v6232
        %v6297 = vsel %vm6291, %v6288, %v6235
        %v6298 = vsel %vm6291, %v6289, %v6238
        %v6299 = vsel %vm6291, %v6290, %v6241
        %vm6300 = vcmask 1042432
        %v6301 = vsel %vm6300, %v6292, %v6252
        %v6302 = vsel %vm6300, %v6293, %v6255
        %v6303 = vsel %vm6300, %v6294, %v6258
        %v6304 = vsel %vm6300, %v6295, %v6261
        %v6305 = vsel %vm6300, %v6296, %v6264
        %v6306 = vsel %vm6300, %v6297, %v6267
        %v6307 = vsel %vm6300, %v6298, %v6270
        %v6308 = vsel %vm6300, %v6299, %v6273
        %vm6309 = vcmask 125952
        %6310 = vst.msk [vmem:[%s961] sm:$0xf] %vm6309, %v6301
        %6311 = vst.msk [vmem:[%s961 + $0x4] sm:$0xf] %vm6309, %v6302
        %6312 = vst.msk [vmem:[%s961 + $0x8] sm:$0xf] %vm6309, %v6303
        %6313 = vst.msk [vmem:[%s961 + $0xc] sm:$0xf] %vm6309, %v6304
        %6314 = vst.msk [vmem:[%s961 + $0x10] sm:$0xf] %vm6309, %v6305
        %6315 = vst.msk [vmem:[%s961 + $0x14] sm:$0xf] %vm6309, %v6306
        %6316 = vst.msk [vmem:[%s961 + $0x18] sm:$0xf] %vm6309, %v6307
        %6317 = vst.msk [vmem:[%s961 + $0x1c] sm:$0xf] %vm6309, %v6308
        %v6318 = vadd.f32 %v3777, %v6153
        %v6319 = vsel %vm1058, %v6318, 0.0
        %6320 = vadd.xlane.f32.xlu0 %v6319
        %v6321 = vpop.xlane.xlu0 %6320
        %v6322 = vmul.f32 %v6321, %v3511
        %v6323 = vsub.f32 %v6318, %v6322
        %v6324 = vmul.f32 %v6323, %v6323
        %v6325 = vsel %vm1058, %v6324, 0.0
        %6326 = vadd.xlane.f32.xlu0 %v6325
        %v6327 = vpop.xlane.xlu0 %6326
        %v6328 = vmul.f32 %v6327, %v3511
        %v6329 = vadd.f32 %v6328, 1e-05
        %v6330 = vrsqrt.pop %v6329
        %v6331 = vmul.f32 %v6330, %v6329
        %v6332 = vmul.f32 %v6331, %v6330
        %v6333 = vmul.f32 0.5, %v6332
        %v6334 = vsub.f32 1.5, %v6333
        %v6335 = vmul.f32 %v6330, %v6334
        %vm6336 = vweird.f32 %v6329
        %vm6337 = vweird.f32 %v6330
        %vm6338 = vmor %vm6336, %vm6337
        %v6339 = vsel %vm6338, %v6330, %v6335
        %v6340 = vmul.f32 %v6323, %v6339
        %v6341 = vmul.f32 %v6340, %v3771
        %v6342 = vadd.f32 %v6341, %v3775
        %v6343 = vpack.c.bf16 %v6342, %v6342
        %v6345 = vperm.slane %v3673, 0
        %v6351 = vunpack.c.l.b16 %v3669
        %v6352 = vunpack.c.l.b16 %v3670
        %v6353 = vunpack.c.l.b16 %v3671
        %v6354 = vunpack.c.l.b16 %v3672
        %v6355 = vpack.c.b16 %v6352, %v6351
        %v6356 = vpack.c.b16 %v6354, %v6353
        %v6360 = vsel %vm1058, %v6343, 0
        %6362 = vmatpush.bf16.msra.mxu0 0
        %6363 = vmatpush.bf16.msra.mxu0 0
        %6364 = vmatpush.bf16.msra.mxu0 0
        %6365 = vmatpush.bf16.msra.mxu0 0
        %6366 = vmatpush.bf16.msra.mxu0 0
        %6367 = vmatpush.bf16.msra.mxu0 0
        %6368 = vmatpush.bf16.msra.mxu0 %v6356
        %6369 = vmatpush.bf16.msra.mxu0 %v6355
        %6370 = vmatmul.bf16.gmra.mxu0 %v6360
        %v6371 = vpop.f32.mrf.mxu0
        %v6372 = vadd.f32 %v6345, %v6371
        %v6373 = vpop.f32.mrf.mxu0
        %6374 = vdwg.mxu0
        %v6375 = vmax.f32 %v6372, 0.0
        %v6376 = vpack.c.bf16 %v6375, %v6375
        %v6378 = vperm.slane %v3682, 0
        %v6388 = vunpack.c.l.b16 %v3674
        %v6389 = vunpack.c.l.b16 %v3675
        %v6390 = vunpack.c.l.b16 %v3676
        %v6391 = vunpack.c.l.b16 %v3677
        %v6392 = vunpack.c.l.b16 %v3678
        %v6393 = vunpack.c.l.b16 %v3679
        %v6394 = vunpack.c.l.b16 %v3680
        %v6395 = vunpack.c.l.b16 %v3681
        %v6396 = vpack.c.b16 %v6389, %v6388
        %v6397 = vpack.c.b16 %v6391, %v6390
        %v6398 = vpack.c.b16 %v6393, %v6392
        %v6399 = vpack.c.b16 %v6395, %v6394
        %v6405 = vsel %vm3600, %v6376, 0
        %6407 = vmatpush.bf16.msra.mxu0 0
        %6408 = vmatpush.bf16.msra.mxu0 0
        %6409 = vmatpush.bf16.msra.mxu0 0
        %6410 = vmatpush.bf16.msra.mxu0 0
        %6411 = vmatpush.bf16.msra.mxu0 %v6399
        %6412 = vmatpush.bf16.msra.mxu0 %v6398
        %6413 = vmatpush.bf16.msra.mxu0 %v6397
        %6414 = vmatpush.bf16.msra.mxu0 %v6396
        %6415 = vmatmul.bf16.gmra.mxu0 %v6405
        %v6416 = vpop.f32.mrf.mxu0
        %v6417 = vadd.f32 %v6378, %v6416
        %v6418 = vpop.f32.mrf.mxu0
        %6419 = vdwg.mxu0
        %v6420 = vadd.f32 %v6342, %v6417
        %v6421 = vsel %vm1058, %v6420, 0.0
        %6422 = vadd.xlane.f32.xlu0 %v6421
        %v6423 = vpop.xlane.xlu0 %6422
        %v6424 = vmul.f32 %v6423, %v3511
        %v6425 = vsub.f32 %v6420, %v6424
        %v6426 = vmul.f32 %v6425, %v6425
        %v6427 = vsel %vm1058, %v6426, 0.0
        %6428 = vadd.xlane.f32.xlu0 %v6427
        %v6429 = vpop.xlane.xlu0 %6428
        %v6430 = vmul.f32 %v6429, %v3511
        %v6431 = vadd.f32 %v6430, 1e-05
        %v6432 = vrsqrt.pop %v6431
        %v6433 = vmul.f32 %v6432, %v6431
        %v6434 = vmul.f32 %v6433, %v6432
        %v6435 = vmul.f32 0.5, %v6434
        %v6436 = vsub.f32 1.5, %v6435
        %v6437 = vmul.f32 %v6432, %v6436
        %vm6438 = vweird.f32 %v6431
        %vm6439 = vweird.f32 %v6432
        %vm6440 = vmor %vm6438, %vm6439
        %v6441 = vsel %vm6440, %v6432, %v6437
        %v6442 = vmul.f32 %v6425, %v6441
        %v6443 = vmul.f32 %v6442, %v3771
        %v6444 = vadd.f32 %v6443, %v3775
        %6445 = vst.msk [vmem:[%s972] sm:$0xff] %vm1058, %v6444
        %p6446 = scmp.lt.s32.totalorder %s78, 1
        %s6447 = scalar_select %p6446, %s78, 1
        %s6448 = smul.addr %s6447, 8
        %s6449 = scalar_lea.vmem %s61, %s6448
        %s6450 = sand.u32 %s747, 1
        %s6451 = scalar_lea.sflag [#allocation3], %s6450
        %s6452 = sand.u32 %s747, 1
        %s6453 = smul.addr %s6452, 32
        %s6454 = scalar_lea.vmem [#allocation2], %s6453
        // Predicated region
        $region141: #{decoder_pedal_forward.2} parent=139 // pred_check
          %p6455 = pneg %p731
        $region142: #{decoder_pedal_forward.2} parent=139 // pred_check_branch
          %6457 = sbr.rel (%p6455) target = $region144
        $region143: #{decoder_pedal_forward.2} parent=139 // pred_region
          _
        $region144: #{decoder_pedal_forward.2} parent=139 // pred_fallthru
          _
        // Predicated region
        $region145: #{decoder_pedal_forward.2} parent=139 // pred_check
          %p6458 = pneg %p757
        $region146: #{decoder_pedal_forward.2} parent=139 // pred_check_branch
          %6460 = sbr.rel (%p6458) target = $region148
        $region147: #{decoder_pedal_forward.2} parent=139 // pred_region
          %s6461 = smul.u32 8, %s78
          %6463 = vsyncadd %s6451, 0
          %s6464 = smul.addr %s6461, 4
          %s6465 = scalar_lea.hbm %s63, %s6464
          %s6466 = sshll.u32 %s6454, 4
          %s6467 = int_to_ptr.vmem [resolvable:$true] %s6466
          %s6468 = sshll.u32 %s6465, 4
          %s6469 = int_to_ptr.hbm [resolvable:$true] %s6468
          %6474 = dma.vmem_to_hbm [thread:$0]  %s6467, 512, %s6469, %s6451, 64, 64, 4
        $region148: #{decoder_pedal_forward.2} parent=139 // pred_fallthru
          _
      $region140: #{decoder_pedal_forward.2} parent=5 // pred_fallthru
        _
      %p6475 = scmp.le.s32.totalorder 2, %s73
      // Predicated region
      $region149: #{decoder_pedal_forward.2} parent=5 // pred_check
        %p6476 = pneg %p6475
      $region150: #{decoder_pedal_forward.2} parent=5 // pred_check_branch
        %6478 = sbr.rel (%p6476) target = $region152
      $region151: #{decoder_pedal_forward.2} parent=5 // pred_region
        %s6479 = ssub.s32 %s73, 2
        // Predicated region
        $region153: #{decoder_pedal_forward.2} parent=151 // pred_check
          %p6480 = pneg %p737
        $region154: #{decoder_pedal_forward.2} parent=151 // pred_check_branch
          %6482 = sbr.rel (%p6480) target = $region156
        $region155: #{decoder_pedal_forward.2} parent=151 // pred_region
          %p6483 = scmp.lt.s32.totalorder %s79, 1
          %s6484 = scalar_select %p6483, %s79, 1
          %s6485 = smul.addr %s6484, 8
          %s6486 = scalar_lea.vmem %s61, %s6485
        $region156: #{decoder_pedal_forward.2} parent=151 // pred_fallthru
          _
        // Predicated region
        $region157: #{decoder_pedal_forward.2} parent=151 // pred_check
          %p6487 = pneg %p763
        $region158: #{decoder_pedal_forward.2} parent=151 // pred_check_branch
          %6489 = sbr.rel (%p6487) target = $region160
        $region159: #{decoder_pedal_forward.2} parent=151 // pred_region
          %s6490 = sand.u32 %s748, 1
          %s6491 = scalar_lea.sflag [#allocation3], %s6490
          %s6492 = sand.u32 %s748, 1
          %s6493 = smul.addr %s6492, 32
          %s6494 = scalar_lea.vmem [#allocation2], %s6493
          %6496 = dma.done %s6491, 512
        $region160: #{decoder_pedal_forward.2} parent=151 // pred_fallthru
          _
      $region152: #{decoder_pedal_forward.2} parent=5 // pred_fallthru
        _
    $region6: #{decoder_pedal_forward.2} parent=1 // loop_footer
      %s77 = sadd.s32 1, %s73
    $region7: #{decoder_pedal_forward.2} parent=1 // loop_footer_branch
      %72 = sbr.rel target = $region3
    $region8: #{decoder_pedal_forward.2} parent=1 // loop_exit
      _
    %6497 = vsyncpa [#allocation3], 1
    %s6498 = scalar_lea.sflag [#allocation3], 1
    %6499 = vsyncpa %s6498, 1

</llo_original>
